<compile_context>
chip_gen: v7x
topology: tpu7x:2x2x1
jax: 0.10.0
libtpu: 0.0.40
codegen_flags: <defaults>
</compile_context>

<pallas_src>
import functools

import jax
import jax.numpy as jnp
from jax.experimental import pallas as pl
from jax.experimental.pallas import tpu as pltpu


# ----------------------------------------------------------------------------
# Pallas kernel: fused (patches @ W) + bias + ReLU + BatchNorm (eval) epilogue
# Single K step -> no accumulator scratch, no pl.when phases.
# ----------------------------------------------------------------------------
def _conv_block_kernel(x_ref, w_ref, epi_ref, o_ref):
    """One (M_tile, OC_tile) grid step of a conv block.

    x_ref:   (tm, Kp)    bf16 patch tile (full contraction dim)
    w_ref:   (Kp, toc)   bf16 weight tile
    epi_ref: (8, toc)    f32 packed epilogue params: row0=bias, row1=scale, row2=shift
    o_ref:   (tm, toc)   bf16 output tile
    """
    acc = jnp.dot(x_ref[...], w_ref[...], preferred_element_type=jnp.float32)
    p = epi_ref[...]
    y = acc + p[0:1, :]                 # conv bias
    y = jnp.maximum(y, 0.0)             # ReLU (before BN, as in the module)
    y = y * p[1:2, :] + p[2:3, :]       # BatchNorm2d (inference form)
    o_ref[...] = y.astype(o_ref.dtype)


# ----------------------------------------------------------------------------
# Wrapper helpers
# ----------------------------------------------------------------------------
def _round_up(x, m):
    return (x + m - 1) // m * m


def _is_multicore_tc():
    """True on chips with >1 TensorCore per device (v7x) -> split OC axis."""
    try:
        kind = jax.local_devices()[0].device_kind.lower()
    except Exception:
        return False
    return ("v7" in kind) or ("tpu7" in kind)


def _im2col(x_nhwc, kh, kw, stride):
    """Extract conv patches. Returns (N*OH*OW, KH*KW*C), OH, OW (dtype preserved)."""
    n, h, w, c = x_nhwc.shape
    oh = (h - kh) // stride + 1
    ow = (w - kw) // stride + 1
    cols = []
    for i in range(kh):
        for j in range(kw):
            cols.append(
                x_nhwc[:,
                       i:i + (oh - 1) * stride + 1:stride,
                       j:j + (ow - 1) * stride + 1:stride,
                       :]
            )
    # (N, OH, OW, KH*KW, C) -> flatten with (kh, kw, c) ordering innermost
    patches = jnp.stack(cols, axis=3)
    patches = patches.reshape(n * oh * ow, kh * kw * c)
    return patches, oh, ow


def _conv_block(x_nhwc, params, stride):
    """Conv2d -> ReLU -> BatchNorm2d via the fused, single-K-step Pallas kernel.

    x_nhwc is bf16 NHWC with the *real* channel count (no zero-channel carry).
    Returns bf16 NHWC activations with the real OC channel count.
    """
    w, b, gamma, beta, rmean, rvar = params
    oc, ic_w, kh, kw = w.shape
    n, _, _, cin = x_nhwc.shape
    assert cin == ic_w, "channel mismatch between activation and weights"
    eps = 1e-5
    scale = gamma * jax.lax.rsqrt(rvar + eps)
    shift = beta - rmean * scale

    patches, oh, ow = _im2col(x_nhwc, kh, kw, stride)      # bf16, (M, K_raw)
    m, k_raw = patches.shape

    kp = _round_up(k_raw, 128)                 # lane-aligned contraction dim
    ocp = _round_up(oc, 128)                   # lane-dense output channels
    tm = 256 if m >= 256 else 128              # bf16-friendly M tile (mult of 16)
    mp = _round_up(m, tm)

    # Only split OC on multi-TensorCore chips (v7x); keeps stores lane-dense.
    toc = 256 if (_is_multicore_tc() and ocp > 256) else ocp

    patches = jnp.pad(patches, ((0, mp - m), (0, kp - k_raw)))
    w_mat = jnp.transpose(w, (2, 3, 1, 0)).reshape(kh * kw * cin, oc)
    w_mat = jnp.pad(w_mat, ((0, kp - k_raw), (0, ocp - oc))).astype(jnp.bfloat16)

    # Packed epilogue params: row0=bias, row1=scale (1 for padded ch), row2=shift.
    epi = jnp.zeros((8, ocp), jnp.float32)
    epi = epi.at[0, :oc].set(b.astype(jnp.float32))
    epi = epi.at[1, :].set(1.0)
    epi = epi.at[1, :oc].set(scale.astype(jnp.float32))
    epi = epi.at[2, :oc].set(shift.astype(jnp.float32))

    grid = (mp // tm, ocp // toc)

    cost = pl.CostEstimate(
        flops=2 * mp * kp * ocp,
        transcendentals=0,
        bytes_accessed=(mp * kp * 2) + (kp * ocp * 2) + (8 * ocp * 4) + (mp * ocp * 2),
    )

    out = pl.pallas_call(
        _conv_block_kernel,
        out_shape=jax.ShapeDtypeStruct((mp, ocp), jnp.bfloat16),
        grid_spec=pltpu.PrefetchScalarGridSpec(
            num_scalar_prefetch=0,
            grid=grid,
            in_specs=[
                pl.BlockSpec((tm, kp), lambda i, j: (i, 0)),
                pl.BlockSpec((kp, toc), lambda i, j: (0, j)),
                pl.BlockSpec((8, toc), lambda i, j: (0, j)),
            ],
            out_specs=pl.BlockSpec((tm, toc), lambda i, j: (i, j)),
        ),
        compiler_params=pltpu.CompilerParams(
            dimension_semantics=("parallel", "parallel"),
            vmem_limit_bytes=32 * 1024 * 1024,
        ),
        cost_estimate=cost,
    )(patches.astype(jnp.bfloat16), w_mat, epi)

    # Drop padded M rows and padded output channels (the store itself stays
    # lane-dense; the slice is cheap wrapper-side work) so the next block's
    # contraction dim only covers real channels.
    return out[:m, :oc].reshape(n, oh, ow, oc)


def classification_network_forward(x_nchw, params, return_feats=False):
    """Forward pass matching ClassificationNetwork.forward (inference-mode BN)."""
    x = jnp.transpose(x_nchw, (0, 2, 3, 1)).astype(jnp.bfloat16)  # NCHW -> NHWC

    x = _conv_block(x, params["block1"], stride=4)   # Conv(3,64,7,s4)+ReLU+BN
    x = _conv_block(x, params["block2"], stride=2)   # Conv(64,128,3,s2)+ReLU+BN
    x = _conv_block(x, params["block3"], stride=2)   # Conv(128,256,3,s2)+ReLU+BN
    x = _conv_block(x, params["block4"], stride=2)   # Conv(256,512,3,s2)+ReLU+BN

    n, oh, ow, c = x.shape                           # c == 512
    # AdaptiveAvgPool2d((1,1)) + Flatten  (f32 reduction)
    feats = jnp.mean(x.astype(jnp.float32).reshape(n, oh * ow, c), axis=1)

    if return_feats:
        return feats

    # Classifier head left to XLA: (N,512)@(512,num_classes) is far below Pallas
    # per-step overhead and would give a lane-sparse (num_classes<128) store.
    w_cls, b_cls = params["cls"]                     # (num_classes, 512), (num_classes,)
    return feats @ jnp.transpose(w_cls) + b_cls


# ----------------------------------------------------------------------------
# Deterministic parameter construction (mirrors module __init__ shapes)
# ----------------------------------------------------------------------------
def _init_conv_block(key, ic, oc, k):
    kw_, kb, kg, kbe, km, kv = jax.random.split(key, 6)
    fan_in = ic * k * k
    w = jax.random.normal(kw_, (oc, ic, k, k), jnp.float32) * jnp.sqrt(2.0 / fan_in)
    b = jax.random.normal(kb, (oc,), jnp.float32) * 0.01
    gamma = jax.random.uniform(kg, (oc,), jnp.float32, 0.5, 1.5)
    beta = jax.random.normal(kbe, (oc,), jnp.float32) * 0.1
    rmean = jax.random.normal(km, (oc,), jnp.float32) * 0.1
    rvar = jax.random.uniform(kv, (oc,), jnp.float32, 0.5, 1.5)
    return (w, b, gamma, beta, rmean, rvar)


def make_params(key, num_classes):
    k1, k2, k3, k4, kc = jax.random.split(key, 5)
    kcw, kcb = jax.random.split(kc)
    return {
        "block1": _init_conv_block(k1, 3, 64, 7),
        "block2": _init_conv_block(k2, 64, 128, 3),
        "block3": _init_conv_block(k3, 128, 256, 3),
        "block4": _init_conv_block(k4, 256, 512, 3),
        "cls": (
            jax.random.normal(kcw, (num_classes, 512), jnp.float32) * jnp.sqrt(1.0 / 512),
            jax.random.normal(kcb, (num_classes,), jnp.float32) * 0.01,
        ),
    }


if __name__ == "__main__":
    num_classes = 10
    key = jax.random.PRNGKey(0)
    kx, kp = jax.random.split(key)

    # Smallest spatial size that survives the stride chain: 64 -> 15 -> 7 -> 3 -> 1
    x = jax.random.normal(kx, (2, 3, 64, 64), jnp.float32)  # NCHW, PyTorch convention
    params = make_params(kp, num_classes)

    fwd = jax.jit(functools.partial(classification_network_forward, return_feats=False))
    out = fwd(x, params)
    jax.block_until_ready(out)
    assert out.shape == (2, num_classes) and out.dtype == jnp.float32
    assert bool(jnp.all(jnp.isfinite(out)))

    fwd_feats = jax.jit(functools.partial(classification_network_forward, return_feats=True))
    feats = fwd_feats(x, params)
    jax.block_until_ready(feats)
    assert feats.shape == (2, 512) and feats.dtype == jnp.float32
    assert bool(jnp.all(jnp.isfinite(feats)))

    print("KERNEL_OK")
</pallas_src>

<mosaic_0001>
module attributes {stable_mosaic.version = 11 : i64} {
  func.func @_conv_block_kernel(%arg0: i32, %arg1: i32, %arg2: memref<256x256xbf16, #tpu.memory_space<vmem>>, %arg3: memref<256x128xbf16, #tpu.memory_space<vmem>>, %arg4: memref<8x128xf32, #tpu.memory_space<vmem>>, %arg5: memref<256x128xbf16, #tpu.memory_space<vmem>>) attributes {dimension_semantics = [#tpu.dimension_semantics<parallel>, #tpu.dimension_semantics<parallel>], iteration_bounds = array<i64: 2, 1>, scalar_prefetch = 0 : i64, scratch_operands = 0 : i64, tpu.core_type = #tpu.core_type<tc>, window_params = [{transform_indices = @transform_0, window_bounds = array<i64: 256, 256>}, {transform_indices = @transform_1, window_bounds = array<i64: 256, 128>}, {transform_indices = @transform_2, window_bounds = array<i64: 8, 128>}, {transform_indices = @transform_3, window_bounds = array<i64: 256, 128>}]} {
    %c0 = arith.constant 0 : index
    %c0_0 = arith.constant 0 : index
    %0 = vector.load %arg2[%c0, %c0_0] : memref<256x256xbf16, #tpu.memory_space<vmem>>, vector<256x256xbf16>
    %c0_1 = arith.constant 0 : index
    %c0_2 = arith.constant 0 : index
    %1 = vector.load %arg3[%c0_1, %c0_2] : memref<256x128xbf16, #tpu.memory_space<vmem>>, vector<256x128xbf16>
    %cst = arith.constant dense<0.000000e+00> : vector<256x128xf32>
    %2 = tpu.matmul %0, %1, %cst {dimension_numbers = #tpu.dot_dimension_numbers<[1], [0], [0], [1], [0, 0, 1, 1], [], []>} : vector<256x256xbf16>, vector<256x128xbf16>, vector<256x128xf32> -> vector<256x128xf32>
    %c0_3 = arith.constant 0 : index
    %c0_4 = arith.constant 0 : index
    %3 = vector.load %arg4[%c0_3, %c0_4] : memref<8x128xf32, #tpu.memory_space<vmem>>, vector<8x128xf32>
    %4 = vector.extract_strided_slice %3 {offsets = [0, 0], sizes = [1, 128], strides = [1, 1]} : vector<8x128xf32> to vector<1x128xf32>
    %5 = vector.broadcast %4 : vector<1x128xf32> to vector<256x128xf32>
    %6 = arith.addf %2, %5 : vector<256x128xf32>
    %cst_5 = arith.constant 0.000000e+00 : f32
    %7 = vector.broadcast %cst_5 : f32 to vector<256x128xf32>
    %8 = arith.maximumf %6, %7 : vector<256x128xf32>
    %9 = vector.extract_strided_slice %3 {offsets = [1, 0], sizes = [1, 128], strides = [1, 1]} : vector<8x128xf32> to vector<1x128xf32>
    %10 = vector.broadcast %9 : vector<1x128xf32> to vector<256x128xf32>
    %11 = arith.mulf %8, %10 : vector<256x128xf32>
    %12 = vector.extract_strided_slice %3 {offsets = [2, 0], sizes = [1, 128], strides = [1, 1]} : vector<8x128xf32> to vector<1x128xf32>
    %13 = vector.broadcast %12 : vector<1x128xf32> to vector<256x128xf32>
    %14 = arith.addf %11, %13 : vector<256x128xf32>
    %15 = arith.truncf %14 : vector<256x128xf32> to vector<256x128xbf16>
    %c0_6 = arith.constant 0 : index
    %c0_7 = arith.constant 0 : index
    %16 = vector.load %arg5[%c0_6, %c0_7] : memref<256x128xbf16, #tpu.memory_space<vmem>>, vector<256x128xbf16>
    tpu.vector_store %arg5[%c0_6, %c0_7], %15 {strides = array<i32>} : memref<256x128xbf16, #tpu.memory_space<vmem>>, vector<256x128xbf16>,
    return
  }
  func.func @transform_0(%arg0: i32, %arg1: i32) -> (i32, i32) {
    %c0_i32 = arith.constant 0 : i32
    %c0_i32_0 = arith.constant 0 : i32
    return %arg0, %c0_i32 : i32, i32
  }
  func.func @transform_1(%arg0: i32, %arg1: i32) -> (i32, i32) {
    %c0_i32 = arith.constant 0 : i32
    %c0_i32_0 = arith.constant 0 : i32
    return %c0_i32, %arg1 : i32, i32
  }
  func.func @transform_2(%arg0: i32, %arg1: i32) -> (i32, i32) {
    %c0_i32 = arith.constant 0 : i32
    %c0_i32_0 = arith.constant 0 : i32
    return %c0_i32, %arg1 : i32, i32
  }
  func.func @transform_3(%arg0: i32, %arg1: i32) -> (i32, i32) {
    %c0_i32 = arith.constant 0 : i32
    return %arg0, %arg1 : i32, i32
  }
}

module attributes {stable_mosaic.version = 11 : i64} {
  func.func @_conv_block_kernel(%arg0: i32, %arg1: i32, %arg2: memref<128x640xbf16, #tpu.memory_space<vmem>>, %arg3: memref<640x128xbf16, #tpu.memory_space<vmem>>, %arg4: memref<8x128xf32, #tpu.memory_space<vmem>>, %arg5: memref<128x128xbf16, #tpu.memory_space<vmem>>) attributes {dimension_semantics = [#tpu.dimension_semantics<parallel>, #tpu.dimension_semantics<parallel>], iteration_bounds = array<i64: 1, 1>, scalar_prefetch = 0 : i64, scratch_operands = 0 : i64, tpu.core_type = #tpu.core_type<tc>, window_params = [{transform_indices = @transform_0, window_bounds = array<i64: 128, 640>}, {transform_indices = @transform_1, window_bounds = array<i64: 640, 128>}, {transform_indices = @transform_2, window_bounds = array<i64: 8, 128>}, {transform_indices = @transform_3, window_bounds = array<i64: 128, 128>}]} {
    %c0 = arith.constant 0 : index
    %c0_0 = arith.constant 0 : index
    %0 = vector.load %arg2[%c0, %c0_0] : memref<128x640xbf16, #tpu.memory_space<vmem>>, vector<128x640xbf16>
    %c0_1 = arith.constant 0 : index
    %c0_2 = arith.constant 0 : index
    %1 = vector.load %arg3[%c0_1, %c0_2] : memref<640x128xbf16, #tpu.memory_space<vmem>>, vector<640x128xbf16>
    %cst = arith.constant dense<0.000000e+00> : vector<128x128xf32>
    %2 = tpu.matmul %0, %1, %cst {dimension_numbers = #tpu.dot_dimension_numbers<[1], [0], [0], [1], [0, 0, 1, 1], [], []>} : vector<128x640xbf16>, vector<640x128xbf16>, vector<128x128xf32> -> vector<128x128xf32>
    %c0_3 = arith.constant 0 : index
    %c0_4 = arith.constant 0 : index
    %3 = vector.load %arg4[%c0_3, %c0_4] : memref<8x128xf32, #tpu.memory_space<vmem>>, vector<8x128xf32>
    %4 = vector.extract_strided_slice %3 {offsets = [0, 0], sizes = [1, 128], strides = [1, 1]} : vector<8x128xf32> to vector<1x128xf32>
    %5 = vector.broadcast %4 : vector<1x128xf32> to vector<128x128xf32>
    %6 = arith.addf %2, %5 : vector<128x128xf32>
    %cst_5 = arith.constant 0.000000e+00 : f32
    %7 = vector.broadcast %cst_5 : f32 to vector<128x128xf32>
    %8 = arith.maximumf %6, %7 : vector<128x128xf32>
    %9 = vector.extract_strided_slice %3 {offsets = [1, 0], sizes = [1, 128], strides = [1, 1]} : vector<8x128xf32> to vector<1x128xf32>
    %10 = vector.broadcast %9 : vector<1x128xf32> to vector<128x128xf32>
    %11 = arith.mulf %8, %10 : vector<128x128xf32>
    %12 = vector.extract_strided_slice %3 {offsets = [2, 0], sizes = [1, 128], strides = [1, 1]} : vector<8x128xf32> to vector<1x128xf32>
    %13 = vector.broadcast %12 : vector<1x128xf32> to vector<128x128xf32>
    %14 = arith.addf %11, %13 : vector<128x128xf32>
    %15 = arith.truncf %14 : vector<128x128xf32> to vector<128x128xbf16>
    %c0_6 = arith.constant 0 : index
    %c0_7 = arith.constant 0 : index
    %16 = vector.load %arg5[%c0_6, %c0_7] : memref<128x128xbf16, #tpu.memory_space<vmem>>, vector<128x128xbf16>
    tpu.vector_store %arg5[%c0_6, %c0_7], %15 {strides = array<i32>} : memref<128x128xbf16, #tpu.memory_space<vmem>>, vector<128x128xbf16>,
    return
  }
  func.func @transform_0(%arg0: i32, %arg1: i32) -> (i32, i32) {
    %c0_i32 = arith.constant 0 : i32
    %c0_i32_0 = arith.constant 0 : i32
    return %arg0, %c0_i32 : i32, i32
  }
  func.func @transform_1(%arg0: i32, %arg1: i32) -> (i32, i32) {
    %c0_i32 = arith.constant 0 : i32
    %c0_i32_0 = arith.constant 0 : i32
    return %c0_i32, %arg1 : i32, i32
  }
  func.func @transform_2(%arg0: i32, %arg1: i32) -> (i32, i32) {
    %c0_i32 = arith.constant 0 : i32
    %c0_i32_0 = arith.constant 0 : i32
    return %c0_i32, %arg1 : i32, i32
  }
  func.func @transform_3(%arg0: i32, %arg1: i32) -> (i32, i32) {
    %c0_i32 = arith.constant 0 : i32
    return %arg0, %arg1 : i32, i32
  }
}

module attributes {stable_mosaic.version = 11 : i64} {
  func.func @_conv_block_kernel(%arg0: i32, %arg1: i32, %arg2: memref<128x1152xbf16, #tpu.memory_space<vmem>>, %arg3: memref<1152x256xbf16, #tpu.memory_space<vmem>>, %arg4: memref<8x256xf32, #tpu.memory_space<vmem>>, %arg5: memref<128x256xbf16, #tpu.memory_space<vmem>>) attributes {dimension_semantics = [#tpu.dimension_semantics<parallel>, #tpu.dimension_semantics<parallel>], iteration_bounds = array<i64: 1, 1>, scalar_prefetch = 0 : i64, scratch_operands = 0 : i64, tpu.core_type = #tpu.core_type<tc>, window_params = [{transform_indices = @transform_0, window_bounds = array<i64: 128, 1152>}, {transform_indices = @transform_1, window_bounds = array<i64: 1152, 256>}, {transform_indices = @transform_2, window_bounds = array<i64: 8, 256>}, {transform_indices = @transform_3, window_bounds = array<i64: 128, 256>}]} {
    %c0 = arith.constant 0 : index
    %c0_0 = arith.constant 0 : index
    %0 = vector.load %arg2[%c0, %c0_0] : memref<128x1152xbf16, #tpu.memory_space<vmem>>, vector<128x1152xbf16>
    %c0_1 = arith.constant 0 : index
    %c0_2 = arith.constant 0 : index
    %1 = vector.load %arg3[%c0_1, %c0_2] : memref<1152x256xbf16, #tpu.memory_space<vmem>>, vector<1152x256xbf16>
    %cst = arith.constant dense<0.000000e+00> : vector<128x256xf32>
    %2 = tpu.matmul %0, %1, %cst {dimension_numbers = #tpu.dot_dimension_numbers<[1], [0], [0], [1], [0, 0, 1, 1], [], []>} : vector<128x1152xbf16>, vector<1152x256xbf16>, vector<128x256xf32> -> vector<128x256xf32>
    %c0_3 = arith.constant 0 : index
    %c0_4 = arith.constant 0 : index
    %3 = vector.load %arg4[%c0_3, %c0_4] : memref<8x256xf32, #tpu.memory_space<vmem>>, vector<8x256xf32>
    %4 = vector.extract_strided_slice %3 {offsets = [0, 0], sizes = [1, 256], strides = [1, 1]} : vector<8x256xf32> to vector<1x256xf32>
    %5 = vector.broadcast %4 : vector<1x256xf32> to vector<128x256xf32>
    %6 = arith.addf %2, %5 : vector<128x256xf32>
    %cst_5 = arith.constant 0.000000e+00 : f32
    %7 = vector.broadcast %cst_5 : f32 to vector<128x256xf32>
    %8 = arith.maximumf %6, %7 : vector<128x256xf32>
    %9 = vector.extract_strided_slice %3 {offsets = [1, 0], sizes = [1, 256], strides = [1, 1]} : vector<8x256xf32> to vector<1x256xf32>
    %10 = vector.broadcast %9 : vector<1x256xf32> to vector<128x256xf32>
    %11 = arith.mulf %8, %10 : vector<128x256xf32>
    %12 = vector.extract_strided_slice %3 {offsets = [2, 0], sizes = [1, 256], strides = [1, 1]} : vector<8x256xf32> to vector<1x256xf32>
    %13 = vector.broadcast %12 : vector<1x256xf32> to vector<128x256xf32>
    %14 = arith.addf %11, %13 : vector<128x256xf32>
    %15 = arith.truncf %14 : vector<128x256xf32> to vector<128x256xbf16>
    %c0_6 = arith.constant 0 : index
    %c0_7 = arith.constant 0 : index
    %16 = vector.load %arg5[%c0_6, %c0_7] : memref<128x256xbf16, #tpu.memory_space<vmem>>, vector<128x256xbf16>
    tpu.vector_store %arg5[%c0_6, %c0_7], %15 {strides = array<i32>} : memref<128x256xbf16, #tpu.memory_space<vmem>>, vector<128x256xbf16>,
    return
  }
  func.func @transform_0(%arg0: i32, %arg1: i32) -> (i32, i32) {
    %c0_i32 = arith.constant 0 : i32
    %c0_i32_0 = arith.constant 0 : i32
    return %arg0, %c0_i32 : i32, i32
  }
  func.func @transform_1(%arg0: i32, %arg1: i32) -> (i32, i32) {
    %c0_i32 = arith.constant 0 : i32
    %c0_i32_0 = arith.constant 0 : i32
    return %c0_i32, %arg1 : i32, i32
  }
  func.func @transform_2(%arg0: i32, %arg1: i32) -> (i32, i32) {
    %c0_i32 = arith.constant 0 : i32
    %c0_i32_0 = arith.constant 0 : i32
    return %c0_i32, %arg1 : i32, i32
  }
  func.func @transform_3(%arg0: i32, %arg1: i32) -> (i32, i32) {
    %c0_i32 = arith.constant 0 : i32
    return %arg0, %arg1 : i32, i32
  }
}

module attributes {stable_mosaic.version = 11 : i64} {
  func.func @_conv_block_kernel(%arg0: i32, %arg1: i32, %arg2: memref<128x2304xbf16, #tpu.memory_space<vmem>>, %arg3: memref<2304x512xbf16, #tpu.memory_space<vmem>>, %arg4: memref<8x512xf32, #tpu.memory_space<vmem>>, %arg5: memref<128x512xbf16, #tpu.memory_space<vmem>>) attributes {dimension_semantics = [#tpu.dimension_semantics<parallel>, #tpu.dimension_semantics<parallel>], iteration_bounds = array<i64: 1, 1>, scalar_prefetch = 0 : i64, scratch_operands = 0 : i64, tpu.core_type = #tpu.core_type<tc>, window_params = [{transform_indices = @transform_0, window_bounds = array<i64: 128, 2304>}, {transform_indices = @transform_1, window_bounds = array<i64: 2304, 512>}, {transform_indices = @transform_2, window_bounds = array<i64: 8, 512>}, {transform_indices = @transform_3, window_bounds = array<i64: 128, 512>}]} {
    %c0 = arith.constant 0 : index
    %c0_0 = arith.constant 0 : index
    %0 = vector.load %arg2[%c0, %c0_0] : memref<128x2304xbf16, #tpu.memory_space<vmem>>, vector<128x2304xbf16>
    %c0_1 = arith.constant 0 : index
    %c0_2 = arith.constant 0 : index
    %1 = vector.load %arg3[%c0_1, %c0_2] : memref<2304x512xbf16, #tpu.memory_space<vmem>>, vector<2304x512xbf16>
    %cst = arith.constant dense<0.000000e+00> : vector<128x512xf32>
    %2 = tpu.matmul %0, %1, %cst {dimension_numbers = #tpu.dot_dimension_numbers<[1], [0], [0], [1], [0, 0, 1, 1], [], []>} : vector<128x2304xbf16>, vector<2304x512xbf16>, vector<128x512xf32> -> vector<128x512xf32>
    %c0_3 = arith.constant 0 : index
    %c0_4 = arith.constant 0 : index
    %3 = vector.load %arg4[%c0_3, %c0_4] : memref<8x512xf32, #tpu.memory_space<vmem>>, vector<8x512xf32>
    %4 = vector.extract_strided_slice %3 {offsets = [0, 0], sizes = [1, 512], strides = [1, 1]} : vector<8x512xf32> to vector<1x512xf32>
    %5 = vector.broadcast %4 : vector<1x512xf32> to vector<128x512xf32>
    %6 = arith.addf %2, %5 : vector<128x512xf32>
    %cst_5 = arith.constant 0.000000e+00 : f32
    %7 = vector.broadcast %cst_5 : f32 to vector<128x512xf32>
    %8 = arith.maximumf %6, %7 : vector<128x512xf32>
    %9 = vector.extract_strided_slice %3 {offsets = [1, 0], sizes = [1, 512], strides = [1, 1]} : vector<8x512xf32> to vector<1x512xf32>
    %10 = vector.broadcast %9 : vector<1x512xf32> to vector<128x512xf32>
    %11 = arith.mulf %8, %10 : vector<128x512xf32>
    %12 = vector.extract_strided_slice %3 {offsets = [2, 0], sizes = [1, 512], strides = [1, 1]} : vector<8x512xf32> to vector<1x512xf32>
    %13 = vector.broadcast %12 : vector<1x512xf32> to vector<128x512xf32>
    %14 = arith.addf %11, %13 : vector<128x512xf32>
    %15 = arith.truncf %14 : vector<128x512xf32> to vector<128x512xbf16>
    %c0_6 = arith.constant 0 : index
    %c0_7 = arith.constant 0 : index
    %16 = vector.load %arg5[%c0_6, %c0_7] : memref<128x512xbf16, #tpu.memory_space<vmem>>, vector<128x512xbf16>
    tpu.vector_store %arg5[%c0_6, %c0_7], %15 {strides = array<i32>} : memref<128x512xbf16, #tpu.memory_space<vmem>>, vector<128x512xbf16>,
    return
  }
  func.func @transform_0(%arg0: i32, %arg1: i32) -> (i32, i32) {
    %c0_i32 = arith.constant 0 : i32
    %c0_i32_0 = arith.constant 0 : i32
    return %arg0, %c0_i32 : i32, i32
  }
  func.func @transform_1(%arg0: i32, %arg1: i32) -> (i32, i32) {
    %c0_i32 = arith.constant 0 : i32
    %c0_i32_0 = arith.constant 0 : i32
    return %c0_i32, %arg1 : i32, i32
  }
  func.func @transform_2(%arg0: i32, %arg1: i32) -> (i32, i32) {
    %c0_i32 = arith.constant 0 : i32
    %c0_i32_0 = arith.constant 0 : i32
    return %c0_i32, %arg1 : i32, i32
  }
  func.func @transform_3(%arg0: i32, %arg1: i32) -> (i32, i32) {
    %c0_i32 = arith.constant 0 : i32
    return %arg0, %arg1 : i32, i32
  }
}

</mosaic_0001>

<llo_original>
// kernel: classification_network_forward.4
$region0: #{classification_network_forward.4}
  #allocation0 [shape = 'u32[]', space=smem, size = 0x4, offset = 0x4, fixed_abs, tag = 'smem constant byte address 0x4 - core index']
  #allocation1 [shape = 'u32[144,128]{1,0:T(1,128)}', space=vmem, size = 0x12000, scoped, tag = 'internal scratch']
  %s0 = inlined_call_operand.vmem [shape: bf16[512,256], index: 0, kind: input, shape index: {}]
  %s1 = inlined_call_operand.vmem [shape: bf16[256,128], index: 1, kind: input, shape index: {}]
  %s2 = inlined_call_operand.vmem [shape: f32[8,128], index: 2, kind: input, shape index: {}]
  %s3 = inlined_call_operand.vmem [shape: bf16[512,128], index: 3, kind: output, shape index: {}]
  %s4 = sld [smem:[#allocation0]]
  $region45: #{classification_network_forward.4} parent=0
    _
  %s6 = ssub.s32 1, %s4
  %s7 = scalar_select 0, %s6, %s4
  loop: start=0, step=1, limit=4
  $region2: #{classification_network_forward.4} parent=0 // loop_pre_header
    _
  $region3: #{classification_network_forward.4} parent=0 // loop_header
    %s9 = sphi 0, %s13
    %p10 = scmp.ge.s32.totalorder %s9, 4
    %s16 = sphi 0, %s28
    %s17 = sphi 0, %s24
    %s18 = sphi 0, %s16
    %s19 = sphi 0, %s17
    %s20 = sphi 0, %s18
    %s21 = sphi 0, %s19
    %s31 = sphi 0, %s33
    %s34 = sphi 0, %s31
    %s35 = sphi 0, %s34
    %s51 = sphi 0, %s35
    %s57 = sphi 0, %s59
    %s60 = sphi 0, %s57
    %s61 = sphi 0, %s60
    %s77 = sphi 0, %s61
    %s83 = sphi 0, %s85
    %s86 = sphi 0, %s83
    %s87 = sphi 0, %s86
    %s103 = sphi 0, %s87
    %s111 = sphi 0, %s113
    %s114 = sphi 0, %s111
    %s115 = sphi 0, %s114
    %s131 = sphi 0, %s115
  $region4: #{classification_network_forward.4} parent=0 // loop_header_branch
    %12 = sbr.rel (%p10) target = $region8
  $region5: #{classification_network_forward.4} parent=0 // loop_body
    %s14 = ssub.s32 %s9, 1
    %s15 = ssub.s32 %s9, 2
    %s22 = sadd.s32 1, %s17
    %p23 = scmp.ge.s32.totalorder %s22, 1
    %s24 = scalar_select %p23, 0, %s22
    %s25 = sadd.s32 1, %s16
    %s26 = scalar_select %p23, %s25, %s16
    %p27 = scmp.ge.s32.totalorder %s26, 2
    %s28 = scalar_select %p27, 0, %s26
    %s29 = ssub.s32 %s16, %s28
    %p30 = scmp.eq.s32.totalorder %s29, 0
    %s32 = sadd.s32 %s31, 1
    %s33 = scalar_select %p30, %s31, %s32
    %p36 = pneg %p30
    %p37 = scmp.eq.s32.totalorder %s9, 1
    %p38 = por %p36, %p37
    %p39 = scmp.ne.s32.totalorder %s31, %s34
    %p40 = scmp.eq.s32.totalorder %s9, 0
    %p41 = por %p39, %p40
    %p42 = scmp.ne.s32.totalorder %s31, %s34
    %p43 = scmp.eq.s32.totalorder %s14, 1
    %p44 = por %p42, %p43
    %p45 = scmp.ne.s32.totalorder %s34, %s35
    %p46 = scmp.eq.s32.totalorder %s14, 0
    %p47 = por %p45, %p46
    %p48 = scmp.ne.s32.totalorder %s34, %s35
    %p49 = scmp.eq.s32.totalorder %s15, 1
    %p50 = por %p48, %p49
    %p52 = scmp.ne.s32.totalorder %s35, %s51
    %p53 = scmp.eq.s32.totalorder %s15, 0
    %p54 = por %p52, %p53
    %s55 = ssub.s32 %s17, %s24
    %p56 = scmp.eq.s32.totalorder %s55, 0
    %s58 = sadd.s32 %s57, 1
    %s59 = scalar_select %p56, %s57, %s58
    %p62 = pneg %p56
    %p63 = scmp.eq.s32.totalorder %s9, 1
    %p64 = por %p62, %p63
    %p65 = scmp.ne.s32.totalorder %s57, %s60
    %p66 = scmp.eq.s32.totalorder %s9, 0
    %p67 = por %p65, %p66
    %p68 = scmp.ne.s32.totalorder %s57, %s60
    %p69 = scmp.eq.s32.totalorder %s14, 1
    %p70 = por %p68, %p69
    %p71 = scmp.ne.s32.totalorder %s60, %s61
    %p72 = scmp.eq.s32.totalorder %s14, 0
    %p73 = por %p71, %p72
    %p74 = scmp.ne.s32.totalorder %s60, %s61
    %p75 = scmp.eq.s32.totalorder %s15, 1
    %p76 = por %p74, %p75
    %p78 = scmp.ne.s32.totalorder %s61, %s77
    %p79 = scmp.eq.s32.totalorder %s15, 0
    %p80 = por %p78, %p79
    %s81 = ssub.s32 %s17, %s24
    %p82 = scmp.eq.s32.totalorder %s81, 0
    %s84 = sadd.s32 %s83, 1
    %s85 = scalar_select %p82, %s83, %s84
    %p88 = pneg %p82
    %p89 = scmp.eq.s32.totalorder %s9, 1
    %p90 = por %p88, %p89
    %p91 = scmp.ne.s32.totalorder %s83, %s86
    %p92 = scmp.eq.s32.totalorder %s9, 0
    %p93 = por %p91, %p92
    %p94 = scmp.ne.s32.totalorder %s83, %s86
    %p95 = scmp.eq.s32.totalorder %s14, 1
    %p96 = por %p94, %p95
    %p97 = scmp.ne.s32.totalorder %s86, %s87
    %p98 = scmp.eq.s32.totalorder %s14, 0
    %p99 = por %p97, %p98
    %p100 = scmp.ne.s32.totalorder %s86, %s87
    %p101 = scmp.eq.s32.totalorder %s15, 1
    %p102 = por %p100, %p101
    %p104 = scmp.ne.s32.totalorder %s87, %s103
    %p105 = scmp.eq.s32.totalorder %s15, 0
    %p106 = por %p104, %p105
    %s107 = ssub.s32 %s16, %s28
    %s108 = ssub.s32 %s17, %s24
    %s109 = sor.u32 %s107, %s108
    %p110 = scmp.eq.s32.totalorder %s109, 0
    %s112 = sadd.s32 %s111, 1
    %s113 = scalar_select %p110, %s111, %s112
    %p116 = pneg %p110
    %p117 = scmp.eq.s32.totalorder %s9, 1
    %p118 = por %p116, %p117
    %p119 = scmp.ne.s32.totalorder %s111, %s114
    %p120 = scmp.eq.s32.totalorder %s9, 0
    %p121 = por %p119, %p120
    %p122 = scmp.ne.s32.totalorder %s111, %s114
    %p123 = scmp.eq.s32.totalorder %s14, 1
    %p124 = por %p122, %p123
    %p125 = scmp.ne.s32.totalorder %s114, %s115
    %p126 = scmp.eq.s32.totalorder %s14, 0
    %p127 = por %p125, %p126
    %p128 = scmp.ne.s32.totalorder %s114, %s115
    %p129 = scmp.eq.s32.totalorder %s15, 1
    %p130 = por %p128, %p129
    %p132 = scmp.ne.s32.totalorder %s115, %s131
    %p133 = scmp.eq.s32.totalorder %s15, 0
    %p134 = por %p132, %p133
    %p135 = scmp.le.s32.totalorder 1, %s9
    %p136 = scmp.lt.s32.totalorder %s9, 3
    %p137 = pnand %p135, %p136
    %p138 = pneg %p137
    // Predicated region
    $region9: #{classification_network_forward.4} parent=5 // pred_check
      _
    $region10: #{classification_network_forward.4} parent=5 // pred_check_branch
      %140 = sbr.rel (%p137) target = $region12
    $region11: #{classification_network_forward.4} parent=5 // pred_region
      %s141 = ssub.s32 %s9, 1
      // Predicated region
      $region13: #{classification_network_forward.4} parent=11 // pred_check
        %p142 = pneg %p73
      $region14: #{classification_network_forward.4} parent=11 // pred_check_branch
        %144 = sbr.rel (%p142) target = $region16
      $region15: #{classification_network_forward.4} parent=11 // pred_region
        %p145 = scmp.lt.s32.totalorder %s19, 0
        %s146 = scalar_select %p145, %s19, 0
        %s147 = smul.addr %s146, 4
        %s148 = scalar_lea.vmem %s1, %s147
      $region16: #{classification_network_forward.4} parent=11 // pred_fallthru
        _
      // Predicated region
      $region17: #{classification_network_forward.4} parent=11 // pred_check
        %p149 = pneg %p99
      $region18: #{classification_network_forward.4} parent=11 // pred_check_branch
        %151 = sbr.rel (%p149) target = $region20
      $region19: #{classification_network_forward.4} parent=11 // pred_region
        %p152 = scmp.lt.s32.totalorder %s19, 0
        %s153 = scalar_select %p152, %s19, 0
        %s154 = smul.addr %s153, 8
        %s155 = scalar_lea.vmem %s2, %s154
      $region20: #{classification_network_forward.4} parent=11 // pred_fallthru
        _
    $region12: #{classification_network_forward.4} parent=5 // pred_fallthru
      _
    %p156 = scmp.lt.s32.totalorder %s9, 2
    // Predicated region
    $region21: #{classification_network_forward.4} parent=5 // pred_check
      %p157 = pneg %p156
    $region22: #{classification_network_forward.4} parent=5 // pred_check_branch
      %159 = sbr.rel (%p157) target = $region24
    $region23: #{classification_network_forward.4} parent=5 // pred_region
      // Predicated region
      $region25: #{classification_network_forward.4} parent=23 // pred_check
        %p160 = pneg %p41
      $region26: #{classification_network_forward.4} parent=23 // pred_check_branch
        %162 = sbr.rel (%p160) target = $region28
      $region27: #{classification_network_forward.4} parent=23 // pred_region
        %s163 = smul.u32 32, %s16
        %p164 = scmp.lt.s32.totalorder %s163, 63
        %s165 = scalar_select %p164, %s163, 63
        %s166 = smul.addr %s165, 2
        %s167 = smul.addr %s166, 4
        %s168 = scalar_lea.vmem %s0, %s167
        %s169 = smul.u32 32, %s16
      $region28: #{classification_network_forward.4} parent=23 // pred_fallthru
        _
    $region24: #{classification_network_forward.4} parent=5 // pred_fallthru
      _
    %p170 = scmp.le.s32.totalorder 1, %s9
    %p171 = scmp.lt.s32.totalorder %s9, 3
    %p172 = pnand %p170, %p171
    %p173 = pneg %p172
    // Predicated region
    $region29: #{classification_network_forward.4} parent=5 // pred_check
      _
    $region30: #{classification_network_forward.4} parent=5 // pred_check_branch
      %175 = sbr.rel (%p172) target = $region32
    $region31: #{classification_network_forward.4} parent=5 // pred_region
      %s176 = ssub.s32 %s9, 1
      %s177 = smul.u32 32, %s18
      %p178 = scmp.lt.s32.totalorder %s177, 63
      %s179 = scalar_select %p178, %s177, 63
      %s180 = smul.addr %s179, 2
      %s181 = smul.addr %s180, 4
      %s182 = scalar_lea.vmem %s0, %s181
      %p183 = pneg %p47
      %p184 = pneg %p44
      %p185 = scmp.lt.s32.totalorder %s19, 0
      %s186 = scalar_select %p185, %s19, 0
      %s187 = smul.addr %s186, 4
      %s188 = scalar_lea.vmem %s1, %s187
      %p189 = pneg %p73
      %p190 = pneg %p70
      %p191 = scmp.lt.s32.totalorder %s19, 0
      %s192 = scalar_select %p191, %s19, 0
      %s193 = smul.addr %s192, 8
      %s194 = scalar_lea.vmem %s2, %s193
      %p195 = pneg %p99
      %p196 = pneg %p96
      %p197 = pneg %p127
      %p198 = pneg %p124
      %s199 = smul.u32 32, %s18
      %p200 = scmp.lt.s32.totalorder %s199, 63
      %s201 = scalar_select %p200, %s199, 63
      %p202 = scmp.lt.s32.totalorder %s19, 0
      %s203 = scalar_select %p202, %s19, 0
      %s204 = sadd.s32 %s203, %s201
      %s205 = smul.addr %s204, 4
      %s206 = scalar_lea.vmem %s3, %s205
      %s207 = smul.u32 32, %s18
      %p208 = scmp.lt.s32.totalorder %s207, 63
      %s209 = scalar_select %p208, %s207, 63
      %s210 = smul.addr %s209, 2
      %s211 = smul.addr %s210, 4
      %s212 = scalar_lea.vmem %s0, %s211
      %s213 = smul.u32 32, %s18
      %p214 = scmp.lt.s32.totalorder %s19, 0
      %s215 = scalar_select %p214, %s19, 0
      %s216 = smul.addr %s215, 4
      %s217 = scalar_lea.vmem %s1, %s216
      %p218 = scmp.lt.s32.totalorder %s19, 0
      %s219 = scalar_select %p218, %s19, 0
      %s220 = smul.addr %s219, 8
      %s221 = scalar_lea.vmem %s2, %s220
      %s222 = smul.u32 32, %s18
      %p223 = scmp.lt.s32.totalorder %s222, 63
      %s224 = scalar_select %p223, %s222, 63
      %p225 = scmp.lt.s32.totalorder %s19, 0
      %s226 = scalar_select %p225, %s19, 0
      %s227 = sadd.s32 %s226, %s224
      %s228 = smul.addr %s227, 4
      %s229 = scalar_lea.vmem %s3, %s228
      %s230 = smul.u32 32, %s18
      %v232 = vld [vmem:[%s212] sm:$0xff]
      %v233 = vld [vmem:[%s212 + $0x8] sm:$0xff]
      %v234 = vld [vmem:[%s212 + $0x10] sm:$0xff]
      %v235 = vld [vmem:[%s212 + $0x18] sm:$0xff]
      %v236 = vld [vmem:[%s212 + $0x20] sm:$0xff]
      %v237 = vld [vmem:[%s212 + $0x28] sm:$0xff]
      %v238 = vld [vmem:[%s212 + $0x30] sm:$0xff]
      %v239 = vld [vmem:[%s212 + $0x38] sm:$0xff]
      %v240 = vld [vmem:[%s212 + $0x40] sm:$0xff]
      %v241 = vld [vmem:[%s212 + $0x48] sm:$0xff]
      %v242 = vld [vmem:[%s212 + $0x50] sm:$0xff]
      %v243 = vld [vmem:[%s212 + $0x58] sm:$0xff]
      %v244 = vld [vmem:[%s212 + $0x60] sm:$0xff]
      %v245 = vld [vmem:[%s212 + $0x68] sm:$0xff]
      %v246 = vld [vmem:[%s212 + $0x70] sm:$0xff]
      %v247 = vld [vmem:[%s212 + $0x78] sm:$0xff]
      %v248 = vld [vmem:[%s212 + $0x80] sm:$0xff]
      %v249 = vld [vmem:[%s212 + $0x88] sm:$0xff]
      %v250 = vld [vmem:[%s212 + $0x90] sm:$0xff]
      %v251 = vld [vmem:[%s212 + $0x98] sm:$0xff]
      %v252 = vld [vmem:[%s212 + $0xa0] sm:$0xff]
      %v253 = vld [vmem:[%s212 + $0xa8] sm:$0xff]
      %v254 = vld [vmem:[%s212 + $0xb0] sm:$0xff]
      %v255 = vld [vmem:[%s212 + $0xb8] sm:$0xff]
      %v256 = vld [vmem:[%s212 + $0xc0] sm:$0xff]
      %v257 = vld [vmem:[%s212 + $0xc8] sm:$0xff]
      %v258 = vld [vmem:[%s212 + $0xd0] sm:$0xff]
      %v259 = vld [vmem:[%s212 + $0xd8] sm:$0xff]
      %v260 = vld [vmem:[%s212 + $0xe0] sm:$0xff]
      %v261 = vld [vmem:[%s212 + $0xe8] sm:$0xff]
      %v262 = vld [vmem:[%s212 + $0xf0] sm:$0xff]
      %v263 = vld [vmem:[%s212 + $0xf8] sm:$0xff]
      %v264 = vld [vmem:[%s217] sm:$0xf]
      %v265 = vld [vmem:[%s217 + $0x4] sm:$0xf]
      %v266 = vld [vmem:[%s217 + $0x8] sm:$0xf]
      %v267 = vld [vmem:[%s217 + $0xc] sm:$0xf]
      %v268 = vld [vmem:[%s217 + $0x10] sm:$0xf]
      %v269 = vld [vmem:[%s217 + $0x14] sm:$0xf]
      %v270 = vld [vmem:[%s217 + $0x18] sm:$0xf]
      %v271 = vld [vmem:[%s217 + $0x1c] sm:$0xf]
      %v272 = vld [vmem:[%s217 + $0x20] sm:$0xf]
      %v273 = vld [vmem:[%s217 + $0x24] sm:$0xf]
      %v274 = vld [vmem:[%s217 + $0x28] sm:$0xf]
      %v275 = vld [vmem:[%s217 + $0x2c] sm:$0xf]
      %v276 = vld [vmem:[%s217 + $0x30] sm:$0xf]
      %v277 = vld [vmem:[%s217 + $0x34] sm:$0xf]
      %v278 = vld [vmem:[%s217 + $0x38] sm:$0xf]
      %v279 = vld [vmem:[%s217 + $0x3c] sm:$0xf]
      %v280 = vld [vmem:[%s217 + $0x40] sm:$0xf]
      %v281 = vld [vmem:[%s217 + $0x44] sm:$0xf]
      %v282 = vld [vmem:[%s217 + $0x48] sm:$0xf]
      %v283 = vld [vmem:[%s217 + $0x4c] sm:$0xf]
      %v284 = vld [vmem:[%s217 + $0x50] sm:$0xf]
      %v285 = vld [vmem:[%s217 + $0x54] sm:$0xf]
      %v286 = vld [vmem:[%s217 + $0x58] sm:$0xf]
      %v287 = vld [vmem:[%s217 + $0x5c] sm:$0xf]
      %v288 = vld [vmem:[%s217 + $0x60] sm:$0xf]
      %v289 = vld [vmem:[%s217 + $0x64] sm:$0xf]
      %v290 = vld [vmem:[%s217 + $0x68] sm:$0xf]
      %v291 = vld [vmem:[%s217 + $0x6c] sm:$0xf]
      %v292 = vld [vmem:[%s217 + $0x70] sm:$0xf]
      %v293 = vld [vmem:[%s217 + $0x74] sm:$0xf]
      %v294 = vld [vmem:[%s217 + $0x78] sm:$0xf]
      %v295 = vld [vmem:[%s217 + $0x7c] sm:$0xf]
      %v296 = vld [vmem:[%s221] sm:$0xff]
      %v297 = vlaneseq
      %v298 = vshrl.u32 %v297, 7
      %v299 = vsub.s32 0, %v298
      %v300 = vrot.slane %v296, %v299
      %v333 = vunpack.c.l.b16 %v232
      %v334 = vunpack.c.h.b16 %v232
      %v335 = vunpack.c.l.b16 %v233
      %v336 = vunpack.c.h.b16 %v233
      %v337 = vunpack.c.l.b16 %v234
      %v338 = vunpack.c.h.b16 %v234
      %v339 = vunpack.c.l.b16 %v235
      %v340 = vunpack.c.h.b16 %v235
      %v341 = vunpack.c.l.b16 %v236
      %v342 = vunpack.c.h.b16 %v236
      %v343 = vunpack.c.l.b16 %v237
      %v344 = vunpack.c.h.b16 %v237
      %v345 = vunpack.c.l.b16 %v238
      %v346 = vunpack.c.h.b16 %v238
      %v347 = vunpack.c.l.b16 %v239
      %v348 = vunpack.c.h.b16 %v239
      %v349 = vunpack.c.l.b16 %v240
      %v350 = vunpack.c.h.b16 %v240
      %v351 = vunpack.c.l.b16 %v241
      %v352 = vunpack.c.h.b16 %v241
      %v353 = vunpack.c.l.b16 %v242
      %v354 = vunpack.c.h.b16 %v242
      %v355 = vunpack.c.l.b16 %v243
      %v356 = vunpack.c.h.b16 %v243
      %v357 = vunpack.c.l.b16 %v244
      %v358 = vunpack.c.h.b16 %v244
      %v359 = vunpack.c.l.b16 %v245
      %v360 = vunpack.c.h.b16 %v245
      %v361 = vunpack.c.l.b16 %v246
      %v362 = vunpack.c.h.b16 %v246
      %v363 = vunpack.c.l.b16 %v247
      %v364 = vunpack.c.h.b16 %v247
      %v365 = vunpack.c.l.b16 %v248
      %v366 = vunpack.c.h.b16 %v248
      %v367 = vunpack.c.l.b16 %v249
      %v368 = vunpack.c.h.b16 %v249
      %v369 = vunpack.c.l.b16 %v250
      %v370 = vunpack.c.h.b16 %v250
      %v371 = vunpack.c.l.b16 %v251
      %v372 = vunpack.c.h.b16 %v251
      %v373 = vunpack.c.l.b16 %v252
      %v374 = vunpack.c.h.b16 %v252
      %v375 = vunpack.c.l.b16 %v253
      %v376 = vunpack.c.h.b16 %v253
      %v377 = vunpack.c.l.b16 %v254
      %v378 = vunpack.c.h.b16 %v254
      %v379 = vunpack.c.l.b16 %v255
      %v380 = vunpack.c.h.b16 %v255
      %v381 = vunpack.c.l.b16 %v256
      %v382 = vunpack.c.h.b16 %v256
      %v383 = vunpack.c.l.b16 %v257
      %v384 = vunpack.c.h.b16 %v257
      %v385 = vunpack.c.l.b16 %v258
      %v386 = vunpack.c.h.b16 %v258
      %v387 = vunpack.c.l.b16 %v259
      %v388 = vunpack.c.h.b16 %v259
      %v389 = vunpack.c.l.b16 %v260
      %v390 = vunpack.c.h.b16 %v260
      %v391 = vunpack.c.l.b16 %v261
      %v392 = vunpack.c.h.b16 %v261
      %v393 = vunpack.c.l.b16 %v262
      %v394 = vunpack.c.h.b16 %v262
      %v395 = vunpack.c.l.b16 %v263
      %v396 = vunpack.c.h.b16 %v263
      %v397 = vpack.c.b16 %v335, %v333
      %v398 = vpack.c.b16 %v336, %v334
      %v399 = vpack.c.b16 %v339, %v337
      %v400 = vpack.c.b16 %v340, %v338
      %v401 = vpack.c.b16 %v343, %v341
      %v402 = vpack.c.b16 %v344, %v342
      %v403 = vpack.c.b16 %v347, %v345
      %v404 = vpack.c.b16 %v348, %v346
      %v405 = vpack.c.b16 %v351, %v349
      %v406 = vpack.c.b16 %v352, %v350
      %v407 = vpack.c.b16 %v355, %v353
      %v408 = vpack.c.b16 %v356, %v354
      %v409 = vpack.c.b16 %v359, %v357
      %v410 = vpack.c.b16 %v360, %v358
      %v411 = vpack.c.b16 %v363, %v361
      %v412 = vpack.c.b16 %v364, %v362
      %v413 = vpack.c.b16 %v367, %v365
      %v414 = vpack.c.b16 %v368, %v366
      %v415 = vpack.c.b16 %v371, %v369
      %v416 = vpack.c.b16 %v372, %v370
      %v417 = vpack.c.b16 %v375, %v373
      %v418 = vpack.c.b16 %v376, %v374
      %v419 = vpack.c.b16 %v379, %v377
      %v420 = vpack.c.b16 %v380, %v378
      %v421 = vpack.c.b16 %v383, %v381
      %v422 = vpack.c.b16 %v384, %v382
      %v423 = vpack.c.b16 %v387, %v385
      %v424 = vpack.c.b16 %v388, %v386
      %v425 = vpack.c.b16 %v391, %v389
      %v426 = vpack.c.b16 %v392, %v390
      %v427 = vpack.c.b16 %v395, %v393
      %v428 = vpack.c.b16 %v396, %v394
      %v493 = vunpack.c.l.b16 %v264
      %v494 = vunpack.c.l.b16 %v265
      %v495 = vunpack.c.l.b16 %v266
      %v496 = vunpack.c.l.b16 %v267
      %v497 = vunpack.c.l.b16 %v268
      %v498 = vunpack.c.l.b16 %v269
      %v499 = vunpack.c.l.b16 %v270
      %v500 = vunpack.c.l.b16 %v271
      %v501 = vunpack.c.l.b16 %v272
      %v502 = vunpack.c.l.b16 %v273
      %v503 = vunpack.c.l.b16 %v274
      %v504 = vunpack.c.l.b16 %v275
      %v505 = vunpack.c.l.b16 %v276
      %v506 = vunpack.c.l.b16 %v277
      %v507 = vunpack.c.l.b16 %v278
      %v508 = vunpack.c.l.b16 %v279
      %v509 = vunpack.c.l.b16 %v280
      %v510 = vunpack.c.l.b16 %v281
      %v511 = vunpack.c.l.b16 %v282
      %v512 = vunpack.c.l.b16 %v283
      %v513 = vunpack.c.l.b16 %v284
      %v514 = vunpack.c.l.b16 %v285
      %v515 = vunpack.c.l.b16 %v286
      %v516 = vunpack.c.l.b16 %v287
      %v517 = vunpack.c.l.b16 %v288
      %v518 = vunpack.c.l.b16 %v289
      %v519 = vunpack.c.l.b16 %v290
      %v520 = vunpack.c.l.b16 %v291
      %v521 = vunpack.c.l.b16 %v292
      %v522 = vunpack.c.l.b16 %v293
      %v523 = vunpack.c.l.b16 %v294
      %v524 = vunpack.c.l.b16 %v295
      %v525 = vpack.c.b16 %v494, %v493
      %v526 = vpack.c.b16 %v496, %v495
      %v527 = vpack.c.b16 %v498, %v497
      %v528 = vpack.c.b16 %v500, %v499
      %v529 = vpack.c.b16 %v502, %v501
      %v530 = vpack.c.b16 %v504, %v503
      %v531 = vpack.c.b16 %v506, %v505
      %v532 = vpack.c.b16 %v508, %v507
      %v533 = vpack.c.b16 %v510, %v509
      %v534 = vpack.c.b16 %v512, %v511
      %v535 = vpack.c.b16 %v514, %v513
      %v536 = vpack.c.b16 %v516, %v515
      %v537 = vpack.c.b16 %v518, %v517
      %v538 = vpack.c.b16 %v520, %v519
      %v539 = vpack.c.b16 %v522, %v521
      %v540 = vpack.c.b16 %v524, %v523
      %557 = vmatprep.subr.bf16.mxu0 0
      %558 = vmatpush1.bf16.msra.mxu0 %v525
      %559 = vmatprep.subr.bf16.mxu0 0
      %560 = vmatpush1.bf16.msra.mxu0 %v526
      %561 = vmatprep.subr.bf16.mxu0 0
      %562 = vmatpush1.bf16.msra.mxu0 %v527
      %563 = vmatprep.subr.bf16.mxu0 0
      %564 = vmatpush1.bf16.msra.mxu0 %v528
      %565 = vmatprep.subr.bf16.mxu0 0
      %566 = vmatpush1.bf16.msra.mxu0 %v529
      %567 = vmatprep.subr.bf16.mxu0 0
      %568 = vmatpush1.bf16.msra.mxu0 %v530
      %569 = vmatprep.subr.bf16.mxu0 0
      %570 = vmatpush1.bf16.msra.mxu0 %v531
      %571 = vmatprep.subr.bf16.mxu0 0
      %572 = vmatpush1.bf16.msra.mxu0 %v532
      %573 = vmatprep.subr.bf16.mxu0 0
      %574 = vmatpush1.bf16.msra.mxu0 %v533
      %575 = vmatprep.subr.bf16.mxu0 0
      %576 = vmatpush1.bf16.msra.mxu0 %v534
      %577 = vmatprep.subr.bf16.mxu0 0
      %578 = vmatpush1.bf16.msra.mxu0 %v535
      %579 = vmatprep.subr.bf16.mxu0 0
      %580 = vmatpush1.bf16.msra.mxu0 %v536
      %581 = vmatprep.subr.bf16.mxu0 0
      %582 = vmatpush1.bf16.msra.mxu0 %v537
      %583 = vmatprep.subr.bf16.mxu0 0
      %584 = vmatpush1.bf16.msra.mxu0 %v538
      %585 = vmatprep.subr.bf16.mxu0 0
      %586 = vmatpush1.bf16.msra.mxu0 %v539
      %587 = vmatprep.subr.bf16.mxu0 0
      %588 = vmatpush1.bf16.msra.mxu0 %v540
      %589 = vmatprep.mubr.bf16.mxu0 %v398
      %590 = vmatmul.mubr.bf16.gmra.mrb[0].mxu0 %v397
      %v591 = vpop.f32.mrb[0].mxu0
      %v592 = vadd.f32 %v300, %v591
      %v593 = vpop.f32.mrb[0].mxu0
      %v594 = vpop.f32.mrb[0].mxu0
      %v595 = vadd.f32 %v300, %v594
      %v596 = vpop.f32.mrb[0].mxu0
      %597 = vmatprep.mubr.bf16.mxu0 %v400
      %598 = vmatmul.mubr.bf16.gmra.mrb[0].mxu0 %v399
      %v599 = vpop.f32.mrb[0].mxu0
      %v600 = vadd.f32 %v300, %v599
      %v601 = vpop.f32.mrb[0].mxu0
      %v602 = vpop.f32.mrb[0].mxu0
      %v603 = vadd.f32 %v300, %v602
      %v604 = vpop.f32.mrb[0].mxu0
      %605 = vmatprep.mubr.bf16.mxu0 %v402
      %606 = vmatmul.mubr.bf16.gmra.mrb[0].mxu0 %v401
      %v607 = vpop.f32.mrb[0].mxu0
      %v608 = vadd.f32 %v300, %v607
      %v609 = vpop.f32.mrb[0].mxu0
      %v610 = vpop.f32.mrb[0].mxu0
      %v611 = vadd.f32 %v300, %v610
      %v612 = vpop.f32.mrb[0].mxu0
      %613 = vmatprep.mubr.bf16.mxu0 %v404
      %614 = vmatmul.mubr.bf16.gmra.mrb[0].mxu0 %v403
      %v615 = vpop.f32.mrb[0].mxu0
      %v616 = vadd.f32 %v300, %v615
      %v617 = vpop.f32.mrb[0].mxu0
      %v618 = vpop.f32.mrb[0].mxu0
      %v619 = vadd.f32 %v300, %v618
      %v620 = vpop.f32.mrb[0].mxu0
      %621 = vmatprep.mubr.bf16.mxu0 %v406
      %622 = vmatmul.mubr.bf16.gmra.mrb[0].mxu0 %v405
      %v623 = vpop.f32.mrb[0].mxu0
      %v624 = vadd.f32 %v300, %v623
      %v625 = vpop.f32.mrb[0].mxu0
      %v626 = vpop.f32.mrb[0].mxu0
      %v627 = vadd.f32 %v300, %v626
      %v628 = vpop.f32.mrb[0].mxu0
      %629 = vmatprep.mubr.bf16.mxu0 %v408
      %630 = vmatmul.mubr.bf16.gmra.mrb[0].mxu0 %v407
      %v631 = vpop.f32.mrb[0].mxu0
      %v632 = vadd.f32 %v300, %v631
      %v633 = vpop.f32.mrb[0].mxu0
      %v634 = vpop.f32.mrb[0].mxu0
      %v635 = vadd.f32 %v300, %v634
      %v636 = vpop.f32.mrb[0].mxu0
      %637 = vmatprep.mubr.bf16.mxu0 %v410
      %638 = vmatmul.mubr.bf16.gmra.mrb[0].mxu0 %v409
      %v639 = vpop.f32.mrb[0].mxu0
      %v640 = vadd.f32 %v300, %v639
      %v641 = vpop.f32.mrb[0].mxu0
      %v642 = vpop.f32.mrb[0].mxu0
      %v643 = vadd.f32 %v300, %v642
      %v644 = vpop.f32.mrb[0].mxu0
      %645 = vmatprep.mubr.bf16.mxu0 %v412
      %646 = vmatmul.mubr.bf16.gmra.mrb[0].mxu0 %v411
      %v647 = vpop.f32.mrb[0].mxu0
      %v648 = vadd.f32 %v300, %v647
      %v649 = vpop.f32.mrb[0].mxu0
      %v650 = vpop.f32.mrb[0].mxu0
      %v651 = vadd.f32 %v300, %v650
      %v652 = vpop.f32.mrb[0].mxu0
      %653 = vmatprep.mubr.bf16.mxu0 %v414
      %654 = vmatmul.mubr.bf16.gmra.mrb[0].mxu0 %v413
      %v655 = vpop.f32.mrb[0].mxu0
      %v656 = vadd.f32 %v300, %v655
      %v657 = vpop.f32.mrb[0].mxu0
      %v658 = vpop.f32.mrb[0].mxu0
      %v659 = vadd.f32 %v300, %v658
      %v660 = vpop.f32.mrb[0].mxu0
      %661 = vmatprep.mubr.bf16.mxu0 %v416
      %662 = vmatmul.mubr.bf16.gmra.mrb[0].mxu0 %v415
      %v663 = vpop.f32.mrb[0].mxu0
      %v664 = vadd.f32 %v300, %v663
      %v665 = vpop.f32.mrb[0].mxu0
      %v666 = vpop.f32.mrb[0].mxu0
      %v667 = vadd.f32 %v300, %v666
      %v668 = vpop.f32.mrb[0].mxu0
      %669 = vmatprep.mubr.bf16.mxu0 %v418
      %670 = vmatmul.mubr.bf16.gmra.mrb[0].mxu0 %v417
      %v671 = vpop.f32.mrb[0].mxu0
      %v672 = vadd.f32 %v300, %v671
      %v673 = vpop.f32.mrb[0].mxu0
      %v674 = vpop.f32.mrb[0].mxu0
      %v675 = vadd.f32 %v300, %v674
      %v676 = vpop.f32.mrb[0].mxu0
      %677 = vmatprep.mubr.bf16.mxu0 %v420
      %678 = vmatmul.mubr.bf16.gmra.mrb[0].mxu0 %v419
      %v679 = vpop.f32.mrb[0].mxu0
      %v680 = vadd.f32 %v300, %v679
      %v681 = vpop.f32.mrb[0].mxu0
      %v682 = vpop.f32.mrb[0].mxu0
      %v683 = vadd.f32 %v300, %v682
      %v684 = vpop.f32.mrb[0].mxu0
      %685 = vmatprep.mubr.bf16.mxu0 %v422
      %686 = vmatmul.mubr.bf16.gmra.mrb[0].mxu0 %v421
      %v687 = vpop.f32.mrb[0].mxu0
      %v688 = vadd.f32 %v300, %v687
      %v689 = vpop.f32.mrb[0].mxu0
      %v690 = vpop.f32.mrb[0].mxu0
      %v691 = vadd.f32 %v300, %v690
      %v692 = vpop.f32.mrb[0].mxu0
      %693 = vmatprep.mubr.bf16.mxu0 %v424
      %694 = vmatmul.mubr.bf16.gmra.mrb[0].mxu0 %v423
      %v695 = vpop.f32.mrb[0].mxu0
      %v696 = vadd.f32 %v300, %v695
      %v697 = vpop.f32.mrb[0].mxu0
      %v698 = vpop.f32.mrb[0].mxu0
      %v699 = vadd.f32 %v300, %v698
      %v700 = vpop.f32.mrb[0].mxu0
      %701 = vmatprep.mubr.bf16.mxu0 %v426
      %702 = vmatmul.mubr.bf16.gmra.mrb[0].mxu0 %v425
      %v703 = vpop.f32.mrb[0].mxu0
      %v704 = vadd.f32 %v300, %v703
      %v705 = vpop.f32.mrb[0].mxu0
      %v706 = vpop.f32.mrb[0].mxu0
      %v707 = vadd.f32 %v300, %v706
      %v708 = vpop.f32.mrb[0].mxu0
      %709 = vmatprep.mubr.bf16.mxu0 %v428
      %710 = vmatmul.mubr.bf16.gmra.mrb[0].mxu0 %v427
      %v711 = vpop.f32.mrb[0].mxu0
      %v712 = vadd.f32 %v300, %v711
      %v713 = vpop.f32.mrb[0].mxu0
      %v714 = vpop.f32.mrb[0].mxu0
      %v715 = vadd.f32 %v300, %v714
      %v716 = vpop.f32.mrb[0].mxu0
      %717 = vdwg.mxu0
      %v718 = vmax.f32 %v592, 0.0
      %v719 = vmax.f32 %v595, 0.0
      %v720 = vmax.f32 %v600, 0.0
      %v721 = vmax.f32 %v603, 0.0
      %v722 = vmax.f32 %v608, 0.0
      %v723 = vmax.f32 %v611, 0.0
      %v724 = vmax.f32 %v616, 0.0
      %v725 = vmax.f32 %v619, 0.0
      %v726 = vmax.f32 %v624, 0.0
      %v727 = vmax.f32 %v627, 0.0
      %v728 = vmax.f32 %v632, 0.0
      %v729 = vmax.f32 %v635, 0.0
      %v730 = vmax.f32 %v640, 0.0
      %v731 = vmax.f32 %v643, 0.0
      %v732 = vmax.f32 %v648, 0.0
      %v733 = vmax.f32 %v651, 0.0
      %v734 = vmax.f32 %v656, 0.0
      %v735 = vmax.f32 %v659, 0.0
      %v736 = vmax.f32 %v664, 0.0
      %v737 = vmax.f32 %v667, 0.0
      %v738 = vmax.f32 %v672, 0.0
      %v739 = vmax.f32 %v675, 0.0
      %v740 = vmax.f32 %v680, 0.0
      %v741 = vmax.f32 %v683, 0.0
      %v742 = vmax.f32 %v688, 0.0
      %v743 = vmax.f32 %v691, 0.0
      %v744 = vmax.f32 %v696, 0.0
      %v745 = vmax.f32 %v699, 0.0
      %v746 = vmax.f32 %v704, 0.0
      %v747 = vmax.f32 %v707, 0.0
      %v748 = vmax.f32 %v712, 0.0
      %v749 = vmax.f32 %v715, 0.0
      %v750 = vlaneseq
      %v751 = vshrl.u32 %v750, 7
      %v752 = vsub.s32 1, %v751
      %v753 = vrot.slane %v296, %v752
      %v754 = vmul.f32 %v718, %v753
      %v755 = vmul.f32 %v719, %v753
      %v756 = vmul.f32 %v720, %v753
      %v757 = vmul.f32 %v721, %v753
      %v758 = vmul.f32 %v722, %v753
      %v759 = vmul.f32 %v723, %v753
      %v760 = vmul.f32 %v724, %v753
      %v761 = vmul.f32 %v725, %v753
      %v762 = vmul.f32 %v726, %v753
      %v763 = vmul.f32 %v727, %v753
      %v764 = vmul.f32 %v728, %v753
      %v765 = vmul.f32 %v729, %v753
      %v766 = vmul.f32 %v730, %v753
      %v767 = vmul.f32 %v731, %v753
      %v768 = vmul.f32 %v732, %v753
      %v769 = vmul.f32 %v733, %v753
      %v770 = vmul.f32 %v734, %v753
      %v771 = vmul.f32 %v735, %v753
      %v772 = vmul.f32 %v736, %v753
      %v773 = vmul.f32 %v737, %v753
      %v774 = vmul.f32 %v738, %v753
      %v775 = vmul.f32 %v739, %v753
      %v776 = vmul.f32 %v740, %v753
      %v777 = vmul.f32 %v741, %v753
      %v778 = vmul.f32 %v742, %v753
      %v779 = vmul.f32 %v743, %v753
      %v780 = vmul.f32 %v744, %v753
      %v781 = vmul.f32 %v745, %v753
      %v782 = vmul.f32 %v746, %v753
      %v783 = vmul.f32 %v747, %v753
      %v784 = vmul.f32 %v748, %v753
      %v785 = vmul.f32 %v749, %v753
      %v786 = vlaneseq
      %v787 = vshrl.u32 %v786, 7
      %v788 = vsub.s32 2, %v787
      %v789 = vrot.slane %v296, %v788
      %v790 = vadd.f32 %v754, %v789
      %v791 = vadd.f32 %v755, %v789
      %v792 = vadd.f32 %v756, %v789
      %v793 = vadd.f32 %v757, %v789
      %v794 = vadd.f32 %v758, %v789
      %v795 = vadd.f32 %v759, %v789
      %v796 = vadd.f32 %v760, %v789
      %v797 = vadd.f32 %v761, %v789
      %v798 = vadd.f32 %v762, %v789
      %v799 = vadd.f32 %v763, %v789
      %v800 = vadd.f32 %v764, %v789
      %v801 = vadd.f32 %v765, %v789
      %v802 = vadd.f32 %v766, %v789
      %v803 = vadd.f32 %v767, %v789
      %v804 = vadd.f32 %v768, %v789
      %v805 = vadd.f32 %v769, %v789
      %v806 = vadd.f32 %v770, %v789
      %v807 = vadd.f32 %v771, %v789
      %v808 = vadd.f32 %v772, %v789
      %v809 = vadd.f32 %v773, %v789
      %v810 = vadd.f32 %v774, %v789
      %v811 = vadd.f32 %v775, %v789
      %v812 = vadd.f32 %v776, %v789
      %v813 = vadd.f32 %v777, %v789
      %v814 = vadd.f32 %v778, %v789
      %v815 = vadd.f32 %v779, %v789
      %v816 = vadd.f32 %v780, %v789
      %v817 = vadd.f32 %v781, %v789
      %v818 = vadd.f32 %v782, %v789
      %v819 = vadd.f32 %v783, %v789
      %v820 = vadd.f32 %v784, %v789
      %v821 = vadd.f32 %v785, %v789
      %v822 = vpack.c.bf16 %v791, %v790
      %v823 = vpack.c.bf16 %v793, %v792
      %v824 = vpack.c.bf16 %v795, %v794
      %v825 = vpack.c.bf16 %v797, %v796
      %v826 = vpack.c.bf16 %v799, %v798
      %v827 = vpack.c.bf16 %v801, %v800
      %v828 = vpack.c.bf16 %v803, %v802
      %v829 = vpack.c.bf16 %v805, %v804
      %v830 = vpack.c.bf16 %v807, %v806
      %v831 = vpack.c.bf16 %v809, %v808
      %v832 = vpack.c.bf16 %v811, %v810
      %v833 = vpack.c.bf16 %v813, %v812
      %v834 = vpack.c.bf16 %v815, %v814
      %v835 = vpack.c.bf16 %v817, %v816
      %v836 = vpack.c.bf16 %v819, %v818
      %v837 = vpack.c.bf16 %v821, %v820
      %v854 = vunpack.c.l.b16 %v822
      %v855 = vunpack.c.h.b16 %v822
      %v856 = vunpack.c.l.b16 %v823
      %v857 = vunpack.c.h.b16 %v823
      %v858 = vunpack.c.l.b16 %v824
      %v859 = vunpack.c.h.b16 %v824
      %v860 = vunpack.c.l.b16 %v825
      %v861 = vunpack.c.h.b16 %v825
      %v862 = vunpack.c.l.b16 %v826
      %v863 = vunpack.c.h.b16 %v826
      %v864 = vunpack.c.l.b16 %v827
      %v865 = vunpack.c.h.b16 %v827
      %v866 = vunpack.c.l.b16 %v828
      %v867 = vunpack.c.h.b16 %v828
      %v868 = vunpack.c.l.b16 %v829
      %v869 = vunpack.c.h.b16 %v829
      %v870 = vunpack.c.l.b16 %v830
      %v871 = vunpack.c.h.b16 %v830
      %v872 = vunpack.c.l.b16 %v831
      %v873 = vunpack.c.h.b16 %v831
      %v874 = vunpack.c.l.b16 %v832
      %v875 = vunpack.c.h.b16 %v832
      %v876 = vunpack.c.l.b16 %v833
      %v877 = vunpack.c.h.b16 %v833
      %v878 = vunpack.c.l.b16 %v834
      %v879 = vunpack.c.h.b16 %v834
      %v880 = vunpack.c.l.b16 %v835
      %v881 = vunpack.c.h.b16 %v835
      %v882 = vunpack.c.l.b16 %v836
      %v883 = vunpack.c.h.b16 %v836
      %v884 = vunpack.c.l.b16 %v837
      %v885 = vunpack.c.h.b16 %v837
      %v886 = vpack.c.b16 %v854, %v854
      %v887 = vpack.c.b16 %v855, %v855
      %v888 = vpack.c.b16 %v856, %v856
      %v889 = vpack.c.b16 %v857, %v857
      %v890 = vpack.c.b16 %v858, %v858
      %v891 = vpack.c.b16 %v859, %v859
      %v892 = vpack.c.b16 %v860, %v860
      %v893 = vpack.c.b16 %v861, %v861
      %v894 = vpack.c.b16 %v862, %v862
      %v895 = vpack.c.b16 %v863, %v863
      %v896 = vpack.c.b16 %v864, %v864
      %v897 = vpack.c.b16 %v865, %v865
      %v898 = vpack.c.b16 %v866, %v866
      %v899 = vpack.c.b16 %v867, %v867
      %v900 = vpack.c.b16 %v868, %v868
      %v901 = vpack.c.b16 %v869, %v869
      %v902 = vpack.c.b16 %v870, %v870
      %v903 = vpack.c.b16 %v871, %v871
      %v904 = vpack.c.b16 %v872, %v872
      %v905 = vpack.c.b16 %v873, %v873
      %v906 = vpack.c.b16 %v874, %v874
      %v907 = vpack.c.b16 %v875, %v875
      %v908 = vpack.c.b16 %v876, %v876
      %v909 = vpack.c.b16 %v877, %v877
      %v910 = vpack.c.b16 %v878, %v878
      %v911 = vpack.c.b16 %v879, %v879
      %v912 = vpack.c.b16 %v880, %v880
      %v913 = vpack.c.b16 %v881, %v881
      %v914 = vpack.c.b16 %v882, %v882
      %v915 = vpack.c.b16 %v883, %v883
      %v916 = vpack.c.b16 %v884, %v884
      %v917 = vpack.c.b16 %v885, %v885
      %950 = vst [vmem:[%s229] sm:$0xf] %v886
      %951 = vst [vmem:[%s229 + $0x4] sm:$0xf] %v887
      %952 = vst [vmem:[%s229 + $0x8] sm:$0xf] %v888
      %953 = vst [vmem:[%s229 + $0xc] sm:$0xf] %v889
      %954 = vst [vmem:[%s229 + $0x10] sm:$0xf] %v890
      %955 = vst [vmem:[%s229 + $0x14] sm:$0xf] %v891
      %956 = vst [vmem:[%s229 + $0x18] sm:$0xf] %v892
      %957 = vst [vmem:[%s229 + $0x1c] sm:$0xf] %v893
      %958 = vst [vmem:[%s229 + $0x20] sm:$0xf] %v894
      %959 = vst [vmem:[%s229 + $0x24] sm:$0xf] %v895
      %960 = vst [vmem:[%s229 + $0x28] sm:$0xf] %v896
      %961 = vst [vmem:[%s229 + $0x2c] sm:$0xf] %v897
      %962 = vst [vmem:[%s229 + $0x30] sm:$0xf] %v898
      %963 = vst [vmem:[%s229 + $0x34] sm:$0xf] %v899
      %964 = vst [vmem:[%s229 + $0x38] sm:$0xf] %v900
      %965 = vst [vmem:[%s229 + $0x3c] sm:$0xf] %v901
      %966 = vst [vmem:[%s229 + $0x40] sm:$0xf] %v902
      %967 = vst [vmem:[%s229 + $0x44] sm:$0xf] %v903
      %968 = vst [vmem:[%s229 + $0x48] sm:$0xf] %v904
      %969 = vst [vmem:[%s229 + $0x4c] sm:$0xf] %v905
      %970 = vst [vmem:[%s229 + $0x50] sm:$0xf] %v906
      %971 = vst [vmem:[%s229 + $0x54] sm:$0xf] %v907
      %972 = vst [vmem:[%s229 + $0x58] sm:$0xf] %v908
      %973 = vst [vmem:[%s229 + $0x5c] sm:$0xf] %v909
      %974 = vst [vmem:[%s229 + $0x60] sm:$0xf] %v910
      %975 = vst [vmem:[%s229 + $0x64] sm:$0xf] %v911
      %976 = vst [vmem:[%s229 + $0x68] sm:$0xf] %v912
      %977 = vst [vmem:[%s229 + $0x6c] sm:$0xf] %v913
      %978 = vst [vmem:[%s229 + $0x70] sm:$0xf] %v914
      %979 = vst [vmem:[%s229 + $0x74] sm:$0xf] %v915
      %980 = vst [vmem:[%s229 + $0x78] sm:$0xf] %v916
      %981 = vst [vmem:[%s229 + $0x7c] sm:$0xf] %v917
      %s982 = smul.u32 32, %s18
      %p983 = scmp.lt.s32.totalorder %s982, 63
      %s984 = scalar_select %p983, %s982, 63
      %p985 = scmp.lt.s32.totalorder %s19, 0
      %s986 = scalar_select %p985, %s19, 0
      %s987 = sadd.s32 %s986, %s984
      %s988 = smul.addr %s987, 4
      %s989 = scalar_lea.vmem %s3, %s988
      // Predicated region
      $region33: #{classification_network_forward.4} parent=31 // pred_check
        %p990 = pneg %p124
      $region34: #{classification_network_forward.4} parent=31 // pred_check_branch
        %992 = sbr.rel (%p990) target = $region36
      $region35: #{classification_network_forward.4} parent=31 // pred_region
        %s993 = smul.u32 32, %s18
      $region36: #{classification_network_forward.4} parent=31 // pred_fallthru
        _
    $region32: #{classification_network_forward.4} parent=5 // pred_fallthru
      _
    %p994 = scmp.le.s32.totalorder 2, %s9
    // Predicated region
    $region37: #{classification_network_forward.4} parent=5 // pred_check
      %p995 = pneg %p994
    $region38: #{classification_network_forward.4} parent=5 // pred_check_branch
      %997 = sbr.rel (%p995) target = $region40
    $region39: #{classification_network_forward.4} parent=5 // pred_region
      %s998 = ssub.s32 %s9, 2
      // Predicated region
      $region41: #{classification_network_forward.4} parent=39 // pred_check
        %p999 = pneg %p130
      $region42: #{classification_network_forward.4} parent=39 // pred_check_branch
        %1001 = sbr.rel (%p999) target = $region44
      $region43: #{classification_network_forward.4} parent=39 // pred_region
        %s1002 = smul.u32 32, %s20
        %p1003 = scmp.lt.s32.totalorder %s1002, 63
        %s1004 = scalar_select %p1003, %s1002, 63
        %p1005 = scmp.lt.s32.totalorder %s21, 0
        %s1006 = scalar_select %p1005, %s21, 0
        %s1007 = sadd.s32 %s1006, %s1004
        %s1008 = smul.addr %s1007, 4
        %s1009 = scalar_lea.vmem %s3, %s1008
      $region44: #{classification_network_forward.4} parent=39 // pred_fallthru
        _
    $region40: #{classification_network_forward.4} parent=5 // pred_fallthru
      _
  $region6: #{classification_network_forward.4} parent=0 // loop_footer
    %s13 = sadd.s32 1, %s9
  $region7: #{classification_network_forward.4} parent=0 // loop_footer_branch
    %8 = sbr.rel target = $region3
  $region8: #{classification_network_forward.4} parent=0 // loop_exit
    _

// kernel: classification_network_forward.5
$region0: #{classification_network_forward.5}
  #allocation0 [shape = 'u32[]', space=smem, size = 0x4, offset = 0x4, fixed_abs, tag = 'smem constant byte address 0x4 - core index']
  #allocation1 [shape = 'u32[144,128]{1,0:T(1,128)}', space=vmem, size = 0x12000, scoped, tag = 'internal scratch']
  %s0 = inlined_call_operand.vmem [shape: bf16[128,640], index: 0, kind: input, shape index: {}]
  %s1 = inlined_call_operand.vmem [shape: bf16[640,128], index: 1, kind: input, shape index: {}]
  %s2 = inlined_call_operand.vmem [shape: f32[8,128], index: 2, kind: input, shape index: {}]
  %s3 = inlined_call_operand.vmem [shape: bf16[128,128], index: 3, kind: output, shape index: {}]
  %s4 = sld [smem:[#allocation0]]
  $region22: #{classification_network_forward.5} parent=0
    _
  %s6 = ssub.s32 1, %s4
  %s7 = scalar_select 0, %s6, %s4
  // Predicated region
  $region2: #{classification_network_forward.5} parent=0 // pred_check
    _
  $region3: #{classification_network_forward.5} parent=0 // pred_check_branch
    %9 = sbr.rel (0) target = $region5
  $region4: #{classification_network_forward.5} parent=0 // pred_region
    _
  $region5: #{classification_network_forward.5} parent=0 // pred_fallthru
    _
  // Predicated region
  $region6: #{classification_network_forward.5} parent=0 // pred_check
    _
  $region7: #{classification_network_forward.5} parent=0 // pred_check_branch
    %11 = sbr.rel (0) target = $region9
  $region8: #{classification_network_forward.5} parent=0 // pred_region
    _
  $region9: #{classification_network_forward.5} parent=0 // pred_fallthru
    _
  // Predicated region
  $region10: #{classification_network_forward.5} parent=0 // pred_check
    _
  $region11: #{classification_network_forward.5} parent=0 // pred_check_branch
    %13 = sbr.rel (0) target = $region13
  $region12: #{classification_network_forward.5} parent=0 // pred_region
    _
  $region13: #{classification_network_forward.5} parent=0 // pred_fallthru
    _
  %v15 = vld [vmem:[%s0] sm:$0xff]
  %v16 = vld [vmem:[%s0 + $0x8] sm:$0xff]
  %v17 = vld [vmem:[%s0 + $0x10] sm:$0xf]
  %v18 = vld [vmem:[%s0 + $0x14] sm:$0xff]
  %v19 = vld [vmem:[%s0 + $0x1c] sm:$0xff]
  %v20 = vld [vmem:[%s0 + $0x24] sm:$0xf]
  %v21 = vld [vmem:[%s0 + $0x28] sm:$0xff]
  %v22 = vld [vmem:[%s0 + $0x30] sm:$0xff]
  %v23 = vld [vmem:[%s0 + $0x38] sm:$0xf]
  %v24 = vld [vmem:[%s0 + $0x3c] sm:$0xff]
  %v25 = vld [vmem:[%s0 + $0x44] sm:$0xff]
  %v26 = vld [vmem:[%s0 + $0x4c] sm:$0xf]
  %v27 = vld [vmem:[%s0 + $0x50] sm:$0xff]
  %v28 = vld [vmem:[%s0 + $0x58] sm:$0xff]
  %v29 = vld [vmem:[%s0 + $0x60] sm:$0xf]
  %v30 = vld [vmem:[%s0 + $0x64] sm:$0xff]
  %v31 = vld [vmem:[%s0 + $0x6c] sm:$0xff]
  %v32 = vld [vmem:[%s0 + $0x74] sm:$0xf]
  %v33 = vld [vmem:[%s0 + $0x78] sm:$0xff]
  %v34 = vld [vmem:[%s0 + $0x80] sm:$0xff]
  %v35 = vld [vmem:[%s0 + $0x88] sm:$0xf]
  %v36 = vld [vmem:[%s0 + $0x8c] sm:$0xff]
  %v37 = vld [vmem:[%s0 + $0x94] sm:$0xff]
  %v38 = vld [vmem:[%s0 + $0x9c] sm:$0xf]
  %v39 = vld [vmem:[%s0 + $0xa0] sm:$0xff]
  %v40 = vld [vmem:[%s0 + $0xa8] sm:$0xff]
  %v41 = vld [vmem:[%s0 + $0xb0] sm:$0xf]
  %v42 = vld [vmem:[%s0 + $0xb4] sm:$0xff]
  %v43 = vld [vmem:[%s0 + $0xbc] sm:$0xff]
  %v44 = vld [vmem:[%s0 + $0xc4] sm:$0xf]
  %v45 = vld [vmem:[%s0 + $0xc8] sm:$0xff]
  %v46 = vld [vmem:[%s0 + $0xd0] sm:$0xff]
  %v47 = vld [vmem:[%s0 + $0xd8] sm:$0xf]
  %v48 = vld [vmem:[%s0 + $0xdc] sm:$0xff]
  %v49 = vld [vmem:[%s0 + $0xe4] sm:$0xff]
  %v50 = vld [vmem:[%s0 + $0xec] sm:$0xf]
  %v51 = vld [vmem:[%s0 + $0xf0] sm:$0xff]
  %v52 = vld [vmem:[%s0 + $0xf8] sm:$0xff]
  %v53 = vld [vmem:[%s0 + $0x100] sm:$0xf]
  %v54 = vld [vmem:[%s0 + $0x104] sm:$0xff]
  %v55 = vld [vmem:[%s0 + $0x10c] sm:$0xff]
  %v56 = vld [vmem:[%s0 + $0x114] sm:$0xf]
  %v57 = vld [vmem:[%s0 + $0x118] sm:$0xff]
  %v58 = vld [vmem:[%s0 + $0x120] sm:$0xff]
  %v59 = vld [vmem:[%s0 + $0x128] sm:$0xf]
  %v60 = vld [vmem:[%s0 + $0x12c] sm:$0xff]
  %v61 = vld [vmem:[%s0 + $0x134] sm:$0xff]
  %v62 = vld [vmem:[%s0 + $0x13c] sm:$0xf]
  %v63 = vld [vmem:[%s1] sm:$0xf]
  %v64 = vld [vmem:[%s1 + $0x4] sm:$0xf]
  %v65 = vld [vmem:[%s1 + $0x8] sm:$0xf]
  %v66 = vld [vmem:[%s1 + $0xc] sm:$0xf]
  %v67 = vld [vmem:[%s1 + $0x10] sm:$0xf]
  %v68 = vld [vmem:[%s1 + $0x14] sm:$0xf]
  %v69 = vld [vmem:[%s1 + $0x18] sm:$0xf]
  %v70 = vld [vmem:[%s1 + $0x1c] sm:$0xf]
  %v71 = vld [vmem:[%s1 + $0x20] sm:$0xf]
  %v72 = vld [vmem:[%s1 + $0x24] sm:$0xf]
  %v73 = vld [vmem:[%s1 + $0x28] sm:$0xf]
  %v74 = vld [vmem:[%s1 + $0x2c] sm:$0xf]
  %v75 = vld [vmem:[%s1 + $0x30] sm:$0xf]
  %v76 = vld [vmem:[%s1 + $0x34] sm:$0xf]
  %v77 = vld [vmem:[%s1 + $0x38] sm:$0xf]
  %v78 = vld [vmem:[%s1 + $0x3c] sm:$0xf]
  %v79 = vld [vmem:[%s1 + $0x40] sm:$0xf]
  %v80 = vld [vmem:[%s1 + $0x44] sm:$0xf]
  %v81 = vld [vmem:[%s1 + $0x48] sm:$0xf]
  %v82 = vld [vmem:[%s1 + $0x4c] sm:$0xf]
  %v83 = vld [vmem:[%s1 + $0x50] sm:$0xf]
  %v84 = vld [vmem:[%s1 + $0x54] sm:$0xf]
  %v85 = vld [vmem:[%s1 + $0x58] sm:$0xf]
  %v86 = vld [vmem:[%s1 + $0x5c] sm:$0xf]
  %v87 = vld [vmem:[%s1 + $0x60] sm:$0xf]
  %v88 = vld [vmem:[%s1 + $0x64] sm:$0xf]
  %v89 = vld [vmem:[%s1 + $0x68] sm:$0xf]
  %v90 = vld [vmem:[%s1 + $0x6c] sm:$0xf]
  %v91 = vld [vmem:[%s1 + $0x70] sm:$0xf]
  %v92 = vld [vmem:[%s1 + $0x74] sm:$0xf]
  %v93 = vld [vmem:[%s1 + $0x78] sm:$0xf]
  %v94 = vld [vmem:[%s1 + $0x7c] sm:$0xf]
  %v95 = vld [vmem:[%s1 + $0x80] sm:$0xf]
  %v96 = vld [vmem:[%s1 + $0x84] sm:$0xf]
  %v97 = vld [vmem:[%s1 + $0x88] sm:$0xf]
  %v98 = vld [vmem:[%s1 + $0x8c] sm:$0xf]
  %v99 = vld [vmem:[%s1 + $0x90] sm:$0xf]
  %v100 = vld [vmem:[%s1 + $0x94] sm:$0xf]
  %v101 = vld [vmem:[%s1 + $0x98] sm:$0xf]
  %v102 = vld [vmem:[%s1 + $0x9c] sm:$0xf]
  %v103 = vld [vmem:[%s1 + $0xa0] sm:$0xf]
  %v104 = vld [vmem:[%s1 + $0xa4] sm:$0xf]
  %v105 = vld [vmem:[%s1 + $0xa8] sm:$0xf]
  %v106 = vld [vmem:[%s1 + $0xac] sm:$0xf]
  %v107 = vld [vmem:[%s1 + $0xb0] sm:$0xf]
  %v108 = vld [vmem:[%s1 + $0xb4] sm:$0xf]
  %v109 = vld [vmem:[%s1 + $0xb8] sm:$0xf]
  %v110 = vld [vmem:[%s1 + $0xbc] sm:$0xf]
  %v111 = vld [vmem:[%s1 + $0xc0] sm:$0xf]
  %v112 = vld [vmem:[%s1 + $0xc4] sm:$0xf]
  %v113 = vld [vmem:[%s1 + $0xc8] sm:$0xf]
  %v114 = vld [vmem:[%s1 + $0xcc] sm:$0xf]
  %v115 = vld [vmem:[%s1 + $0xd0] sm:$0xf]
  %v116 = vld [vmem:[%s1 + $0xd4] sm:$0xf]
  %v117 = vld [vmem:[%s1 + $0xd8] sm:$0xf]
  %v118 = vld [vmem:[%s1 + $0xdc] sm:$0xf]
  %v119 = vld [vmem:[%s1 + $0xe0] sm:$0xf]
  %v120 = vld [vmem:[%s1 + $0xe4] sm:$0xf]
  %v121 = vld [vmem:[%s1 + $0xe8] sm:$0xf]
  %v122 = vld [vmem:[%s1 + $0xec] sm:$0xf]
  %v123 = vld [vmem:[%s1 + $0xf0] sm:$0xf]
  %v124 = vld [vmem:[%s1 + $0xf4] sm:$0xf]
  %v125 = vld [vmem:[%s1 + $0xf8] sm:$0xf]
  %v126 = vld [vmem:[%s1 + $0xfc] sm:$0xf]
  %v127 = vld [vmem:[%s1 + $0x100] sm:$0xf]
  %v128 = vld [vmem:[%s1 + $0x104] sm:$0xf]
  %v129 = vld [vmem:[%s1 + $0x108] sm:$0xf]
  %v130 = vld [vmem:[%s1 + $0x10c] sm:$0xf]
  %v131 = vld [vmem:[%s1 + $0x110] sm:$0xf]
  %v132 = vld [vmem:[%s1 + $0x114] sm:$0xf]
  %v133 = vld [vmem:[%s1 + $0x118] sm:$0xf]
  %v134 = vld [vmem:[%s1 + $0x11c] sm:$0xf]
  %v135 = vld [vmem:[%s1 + $0x120] sm:$0xf]
  %v136 = vld [vmem:[%s1 + $0x124] sm:$0xf]
  %v137 = vld [vmem:[%s1 + $0x128] sm:$0xf]
  %v138 = vld [vmem:[%s1 + $0x12c] sm:$0xf]
  %v139 = vld [vmem:[%s1 + $0x130] sm:$0xf]
  %v140 = vld [vmem:[%s1 + $0x134] sm:$0xf]
  %v141 = vld [vmem:[%s1 + $0x138] sm:$0xf]
  %v142 = vld [vmem:[%s1 + $0x13c] sm:$0xf]
  %v143 = vld [vmem:[%s2] sm:$0xff]
  %v144 = vlaneseq
  %v145 = vshrl.u32 %v144, 7
  %v146 = vsub.s32 0, %v145
  %v147 = vrot.slane %v143, %v146
  %v196 = vunpack.c.l.b16 %v15
  %v197 = vunpack.c.h.b16 %v15
  %v198 = vunpack.c.l.b16 %v16
  %v199 = vunpack.c.h.b16 %v16
  %v200 = vunpack.c.l.b16 %v17
  %v201 = vunpack.c.l.b16 %v18
  %v202 = vunpack.c.h.b16 %v18
  %v203 = vunpack.c.l.b16 %v19
  %v204 = vunpack.c.h.b16 %v19
  %v205 = vunpack.c.l.b16 %v20
  %v206 = vunpack.c.l.b16 %v21
  %v207 = vunpack.c.h.b16 %v21
  %v208 = vunpack.c.l.b16 %v22
  %v209 = vunpack.c.h.b16 %v22
  %v210 = vunpack.c.l.b16 %v23
  %v211 = vunpack.c.l.b16 %v24
  %v212 = vunpack.c.h.b16 %v24
  %v213 = vunpack.c.l.b16 %v25
  %v214 = vunpack.c.h.b16 %v25
  %v215 = vunpack.c.l.b16 %v26
  %v216 = vunpack.c.l.b16 %v27
  %v217 = vunpack.c.h.b16 %v27
  %v218 = vunpack.c.l.b16 %v28
  %v219 = vunpack.c.h.b16 %v28
  %v220 = vunpack.c.l.b16 %v29
  %v221 = vunpack.c.l.b16 %v30
  %v222 = vunpack.c.h.b16 %v30
  %v223 = vunpack.c.l.b16 %v31
  %v224 = vunpack.c.h.b16 %v31
  %v225 = vunpack.c.l.b16 %v32
  %v226 = vunpack.c.l.b16 %v33
  %v227 = vunpack.c.h.b16 %v33
  %v228 = vunpack.c.l.b16 %v34
  %v229 = vunpack.c.h.b16 %v34
  %v230 = vunpack.c.l.b16 %v35
  %v231 = vunpack.c.l.b16 %v36
  %v232 = vunpack.c.h.b16 %v36
  %v233 = vunpack.c.l.b16 %v37
  %v234 = vunpack.c.h.b16 %v37
  %v235 = vunpack.c.l.b16 %v38
  %v236 = vunpack.c.l.b16 %v39
  %v237 = vunpack.c.h.b16 %v39
  %v238 = vunpack.c.l.b16 %v40
  %v239 = vunpack.c.h.b16 %v40
  %v240 = vunpack.c.l.b16 %v41
  %v241 = vunpack.c.l.b16 %v42
  %v242 = vunpack.c.h.b16 %v42
  %v243 = vunpack.c.l.b16 %v43
  %v244 = vunpack.c.h.b16 %v43
  %v245 = vunpack.c.l.b16 %v44
  %v246 = vunpack.c.l.b16 %v45
  %v247 = vunpack.c.h.b16 %v45
  %v248 = vunpack.c.l.b16 %v46
  %v249 = vunpack.c.h.b16 %v46
  %v250 = vunpack.c.l.b16 %v47
  %v251 = vunpack.c.l.b16 %v48
  %v252 = vunpack.c.h.b16 %v48
  %v253 = vunpack.c.l.b16 %v49
  %v254 = vunpack.c.h.b16 %v49
  %v255 = vunpack.c.l.b16 %v50
  %v256 = vunpack.c.l.b16 %v51
  %v257 = vunpack.c.h.b16 %v51
  %v258 = vunpack.c.l.b16 %v52
  %v259 = vunpack.c.h.b16 %v52
  %v260 = vunpack.c.l.b16 %v53
  %v261 = vunpack.c.l.b16 %v54
  %v262 = vunpack.c.h.b16 %v54
  %v263 = vunpack.c.l.b16 %v55
  %v264 = vunpack.c.h.b16 %v55
  %v265 = vunpack.c.l.b16 %v56
  %v266 = vunpack.c.l.b16 %v57
  %v267 = vunpack.c.h.b16 %v57
  %v268 = vunpack.c.l.b16 %v58
  %v269 = vunpack.c.h.b16 %v58
  %v270 = vunpack.c.l.b16 %v59
  %v271 = vunpack.c.l.b16 %v60
  %v272 = vunpack.c.h.b16 %v60
  %v273 = vunpack.c.l.b16 %v61
  %v274 = vunpack.c.h.b16 %v61
  %v275 = vunpack.c.l.b16 %v62
  %v276 = vpack.c.b16 %v201, %v196
  %v277 = vpack.c.b16 %v202, %v197
  %v278 = vpack.c.b16 %v203, %v198
  %v279 = vpack.c.b16 %v204, %v199
  %v280 = vpack.c.b16 %v205, %v200
  %v281 = vpack.c.b16 %v211, %v206
  %v282 = vpack.c.b16 %v212, %v207
  %v283 = vpack.c.b16 %v213, %v208
  %v284 = vpack.c.b16 %v214, %v209
  %v285 = vpack.c.b16 %v215, %v210
  %v286 = vpack.c.b16 %v221, %v216
  %v287 = vpack.c.b16 %v222, %v217
  %v288 = vpack.c.b16 %v223, %v218
  %v289 = vpack.c.b16 %v224, %v219
  %v290 = vpack.c.b16 %v225, %v220
  %v291 = vpack.c.b16 %v231, %v226
  %v292 = vpack.c.b16 %v232, %v227
  %v293 = vpack.c.b16 %v233, %v228
  %v294 = vpack.c.b16 %v234, %v229
  %v295 = vpack.c.b16 %v235, %v230
  %v296 = vpack.c.b16 %v241, %v236
  %v297 = vpack.c.b16 %v242, %v237
  %v298 = vpack.c.b16 %v243, %v238
  %v299 = vpack.c.b16 %v244, %v239
  %v300 = vpack.c.b16 %v245, %v240
  %v301 = vpack.c.b16 %v251, %v246
  %v302 = vpack.c.b16 %v252, %v247
  %v303 = vpack.c.b16 %v253, %v248
  %v304 = vpack.c.b16 %v254, %v249
  %v305 = vpack.c.b16 %v255, %v250
  %v306 = vpack.c.b16 %v261, %v256
  %v307 = vpack.c.b16 %v262, %v257
  %v308 = vpack.c.b16 %v263, %v258
  %v309 = vpack.c.b16 %v264, %v259
  %v310 = vpack.c.b16 %v265, %v260
  %v311 = vpack.c.b16 %v271, %v266
  %v312 = vpack.c.b16 %v272, %v267
  %v313 = vpack.c.b16 %v273, %v268
  %v314 = vpack.c.b16 %v274, %v269
  %v315 = vpack.c.b16 %v275, %v270
  %v436 = vunpack.c.l.b16 %v63
  %v437 = vunpack.c.l.b16 %v64
  %v438 = vunpack.c.l.b16 %v65
  %v439 = vunpack.c.l.b16 %v66
  %v440 = vunpack.c.l.b16 %v67
  %v441 = vunpack.c.l.b16 %v68
  %v442 = vunpack.c.l.b16 %v69
  %v443 = vunpack.c.l.b16 %v70
  %v444 = vunpack.c.l.b16 %v71
  %v445 = vunpack.c.l.b16 %v72
  %v446 = vunpack.c.l.b16 %v73
  %v447 = vunpack.c.l.b16 %v74
  %v448 = vunpack.c.l.b16 %v75
  %v449 = vunpack.c.l.b16 %v76
  %v450 = vunpack.c.l.b16 %v77
  %v451 = vunpack.c.l.b16 %v78
  %v452 = vunpack.c.l.b16 %v79
  %v453 = vunpack.c.l.b16 %v80
  %v454 = vunpack.c.l.b16 %v81
  %v455 = vunpack.c.l.b16 %v82
  %v456 = vunpack.c.l.b16 %v83
  %v457 = vunpack.c.l.b16 %v84
  %v458 = vunpack.c.l.b16 %v85
  %v459 = vunpack.c.l.b16 %v86
  %v460 = vunpack.c.l.b16 %v87
  %v461 = vunpack.c.l.b16 %v88
  %v462 = vunpack.c.l.b16 %v89
  %v463 = vunpack.c.l.b16 %v90
  %v464 = vunpack.c.l.b16 %v91
  %v465 = vunpack.c.l.b16 %v92
  %v466 = vunpack.c.l.b16 %v93
  %v467 = vunpack.c.l.b16 %v94
  %v468 = vunpack.c.l.b16 %v95
  %v469 = vunpack.c.l.b16 %v96
  %v470 = vunpack.c.l.b16 %v97
  %v471 = vunpack.c.l.b16 %v98
  %v472 = vunpack.c.l.b16 %v99
  %v473 = vunpack.c.l.b16 %v100
  %v474 = vunpack.c.l.b16 %v101
  %v475 = vunpack.c.l.b16 %v102
  %v476 = vunpack.c.l.b16 %v103
  %v477 = vunpack.c.l.b16 %v104
  %v478 = vunpack.c.l.b16 %v105
  %v479 = vunpack.c.l.b16 %v106
  %v480 = vunpack.c.l.b16 %v107
  %v481 = vunpack.c.l.b16 %v108
  %v482 = vunpack.c.l.b16 %v109
  %v483 = vunpack.c.l.b16 %v110
  %v484 = vunpack.c.l.b16 %v111
  %v485 = vunpack.c.l.b16 %v112
  %v486 = vunpack.c.l.b16 %v113
  %v487 = vunpack.c.l.b16 %v114
  %v488 = vunpack.c.l.b16 %v115
  %v489 = vunpack.c.l.b16 %v116
  %v490 = vunpack.c.l.b16 %v117
  %v491 = vunpack.c.l.b16 %v118
  %v492 = vunpack.c.l.b16 %v119
  %v493 = vunpack.c.l.b16 %v120
  %v494 = vunpack.c.l.b16 %v121
  %v495 = vunpack.c.l.b16 %v122
  %v496 = vunpack.c.l.b16 %v123
  %v497 = vunpack.c.l.b16 %v124
  %v498 = vunpack.c.l.b16 %v125
  %v499 = vunpack.c.l.b16 %v126
  %v500 = vunpack.c.l.b16 %v127
  %v501 = vunpack.c.l.b16 %v128
  %v502 = vunpack.c.l.b16 %v129
  %v503 = vunpack.c.l.b16 %v130
  %v504 = vunpack.c.l.b16 %v131
  %v505 = vunpack.c.l.b16 %v132
  %v506 = vunpack.c.l.b16 %v133
  %v507 = vunpack.c.l.b16 %v134
  %v508 = vunpack.c.l.b16 %v135
  %v509 = vunpack.c.l.b16 %v136
  %v510 = vunpack.c.l.b16 %v137
  %v511 = vunpack.c.l.b16 %v138
  %v512 = vunpack.c.l.b16 %v139
  %v513 = vunpack.c.l.b16 %v140
  %v514 = vunpack.c.l.b16 %v141
  %v515 = vunpack.c.l.b16 %v142
  %v516 = vpack.c.b16 %v437, %v436
  %v517 = vpack.c.b16 %v439, %v438
  %v518 = vpack.c.b16 %v441, %v440
  %v519 = vpack.c.b16 %v443, %v442
  %v520 = vpack.c.b16 %v445, %v444
  %v521 = vpack.c.b16 %v447, %v446
  %v522 = vpack.c.b16 %v449, %v448
  %v523 = vpack.c.b16 %v451, %v450
  %v524 = vpack.c.b16 %v453, %v452
  %v525 = vpack.c.b16 %v455, %v454
  %v526 = vpack.c.b16 %v457, %v456
  %v527 = vpack.c.b16 %v459, %v458
  %v528 = vpack.c.b16 %v461, %v460
  %v529 = vpack.c.b16 %v463, %v462
  %v530 = vpack.c.b16 %v465, %v464
  %v531 = vpack.c.b16 %v467, %v466
  %v532 = vpack.c.b16 %v469, %v468
  %v533 = vpack.c.b16 %v471, %v470
  %v534 = vpack.c.b16 %v473, %v472
  %v535 = vpack.c.b16 %v475, %v474
  %v536 = vpack.c.b16 %v477, %v476
  %v537 = vpack.c.b16 %v479, %v478
  %v538 = vpack.c.b16 %v481, %v480
  %v539 = vpack.c.b16 %v483, %v482
  %v540 = vpack.c.b16 %v485, %v484
  %v541 = vpack.c.b16 %v487, %v486
  %v542 = vpack.c.b16 %v489, %v488
  %v543 = vpack.c.b16 %v491, %v490
  %v544 = vpack.c.b16 %v493, %v492
  %v545 = vpack.c.b16 %v495, %v494
  %v546 = vpack.c.b16 %v497, %v496
  %v547 = vpack.c.b16 %v499, %v498
  %v548 = vpack.c.b16 %v501, %v500
  %v549 = vpack.c.b16 %v503, %v502
  %v550 = vpack.c.b16 %v505, %v504
  %v551 = vpack.c.b16 %v507, %v506
  %v552 = vpack.c.b16 %v509, %v508
  %v553 = vpack.c.b16 %v511, %v510
  %v554 = vpack.c.b16 %v513, %v512
  %v555 = vpack.c.b16 %v515, %v514
  %596 = vmatprep.subr.bf16.mxu0 0
  %597 = vmatpush1.bf16.msra.mxu0 %v516
  %598 = vmatprep.subr.bf16.mxu0 0
  %599 = vmatpush1.bf16.msra.mxu0 %v517
  %600 = vmatprep.subr.bf16.mxu0 0
  %601 = vmatpush1.bf16.msra.mxu0 %v518
  %602 = vmatprep.subr.bf16.mxu0 0
  %603 = vmatpush1.bf16.msra.mxu0 %v519
  %604 = vmatprep.subr.bf16.mxu0 0
  %605 = vmatpush1.bf16.msra.mxu0 %v520
  %606 = vmatprep.subr.bf16.mxu0 0
  %607 = vmatpush1.bf16.msra.mxu0 %v521
  %608 = vmatprep.subr.bf16.mxu0 0
  %609 = vmatpush1.bf16.msra.mxu0 %v522
  %610 = vmatprep.subr.bf16.mxu0 0
  %611 = vmatpush1.bf16.msra.mxu0 %v523
  %612 = vmatprep.subr.bf16.mxu0 0
  %613 = vmatpush1.bf16.msra.mxu0 %v524
  %614 = vmatprep.subr.bf16.mxu0 0
  %615 = vmatpush1.bf16.msra.mxu0 %v525
  %616 = vmatprep.subr.bf16.mxu0 0
  %617 = vmatpush1.bf16.msra.mxu0 %v526
  %618 = vmatprep.subr.bf16.mxu0 0
  %619 = vmatpush1.bf16.msra.mxu0 %v527
  %620 = vmatprep.subr.bf16.mxu0 0
  %621 = vmatpush1.bf16.msra.mxu0 %v528
  %622 = vmatprep.subr.bf16.mxu0 0
  %623 = vmatpush1.bf16.msra.mxu0 %v529
  %624 = vmatprep.subr.bf16.mxu0 0
  %625 = vmatpush1.bf16.msra.mxu0 %v530
  %626 = vmatprep.subr.bf16.mxu0 0
  %627 = vmatpush1.bf16.msra.mxu0 %v531
  %628 = vmatprep.mubr.bf16.mxu0 %v277
  %629 = vmatmul.mubr.bf16.gmra.mrb[0].mxu0 %v276
  %v630 = vpop.f32.mrb[0].mxu0
  %v631 = vadd.f32 %v147, %v630
  %v632 = vpop.f32.mrb[0].mxu0
  %v633 = vpop.f32.mrb[0].mxu0
  %v634 = vadd.f32 %v147, %v633
  %v635 = vpop.f32.mrb[0].mxu0
  %636 = vmatprep.mubr.bf16.mxu0 %v282
  %637 = vmatmul.mubr.bf16.gmra.mrb[0].mxu0 %v281
  %v638 = vpop.f32.mrb[0].mxu0
  %v639 = vadd.f32 %v147, %v638
  %v640 = vpop.f32.mrb[0].mxu0
  %v641 = vpop.f32.mrb[0].mxu0
  %v642 = vadd.f32 %v147, %v641
  %v643 = vpop.f32.mrb[0].mxu0
  %644 = vmatprep.mubr.bf16.mxu0 %v287
  %645 = vmatmul.mubr.bf16.gmra.mrb[0].mxu0 %v286
  %v646 = vpop.f32.mrb[0].mxu0
  %v647 = vadd.f32 %v147, %v646
  %v648 = vpop.f32.mrb[0].mxu0
  %v649 = vpop.f32.mrb[0].mxu0
  %v650 = vadd.f32 %v147, %v649
  %v651 = vpop.f32.mrb[0].mxu0
  %652 = vmatprep.mubr.bf16.mxu0 %v292
  %653 = vmatmul.mubr.bf16.gmra.mrb[0].mxu0 %v291
  %v654 = vpop.f32.mrb[0].mxu0
  %v655 = vadd.f32 %v147, %v654
  %v656 = vpop.f32.mrb[0].mxu0
  %v657 = vpop.f32.mrb[0].mxu0
  %v658 = vadd.f32 %v147, %v657
  %v659 = vpop.f32.mrb[0].mxu0
  %660 = vmatprep.mubr.bf16.mxu0 %v297
  %661 = vmatmul.mubr.bf16.gmra.mrb[0].mxu0 %v296
  %v662 = vpop.f32.mrb[0].mxu0
  %v663 = vadd.f32 %v147, %v662
  %v664 = vpop.f32.mrb[0].mxu0
  %v665 = vpop.f32.mrb[0].mxu0
  %v666 = vadd.f32 %v147, %v665
  %v667 = vpop.f32.mrb[0].mxu0
  %668 = vmatprep.mubr.bf16.mxu0 %v302
  %669 = vmatmul.mubr.bf16.gmra.mrb[0].mxu0 %v301
  %v670 = vpop.f32.mrb[0].mxu0
  %v671 = vadd.f32 %v147, %v670
  %v672 = vpop.f32.mrb[0].mxu0
  %v673 = vpop.f32.mrb[0].mxu0
  %v674 = vadd.f32 %v147, %v673
  %v675 = vpop.f32.mrb[0].mxu0
  %676 = vmatprep.mubr.bf16.mxu0 %v307
  %677 = vmatmul.mubr.bf16.gmra.mrb[0].mxu0 %v306
  %v678 = vpop.f32.mrb[0].mxu0
  %v679 = vadd.f32 %v147, %v678
  %v680 = vpop.f32.mrb[0].mxu0
  %v681 = vpop.f32.mrb[0].mxu0
  %v682 = vadd.f32 %v147, %v681
  %v683 = vpop.f32.mrb[0].mxu0
  %684 = vmatprep.mubr.bf16.mxu0 %v312
  %685 = vmatmul.mubr.bf16.gmra.mrb[0].mxu0 %v311
  %v686 = vpop.f32.mrb[0].mxu0
  %v687 = vadd.f32 %v147, %v686
  %v688 = vpop.f32.mrb[0].mxu0
  %v689 = vpop.f32.mrb[0].mxu0
  %v690 = vadd.f32 %v147, %v689
  %v691 = vpop.f32.mrb[0].mxu0
  %692 = vdwg.mxu0
  %693 = vmatprep.subr.bf16.mxu0 0
  %694 = vmatpush1.bf16.msra.mxu0 %v532
  %695 = vmatprep.subr.bf16.mxu0 0
  %696 = vmatpush1.bf16.msra.mxu0 %v533
  %697 = vmatprep.subr.bf16.mxu0 0
  %698 = vmatpush1.bf16.msra.mxu0 %v534
  %699 = vmatprep.subr.bf16.mxu0 0
  %700 = vmatpush1.bf16.msra.mxu0 %v535
  %701 = vmatprep.subr.bf16.mxu0 0
  %702 = vmatpush1.bf16.msra.mxu0 %v536
  %703 = vmatprep.subr.bf16.mxu0 0
  %704 = vmatpush1.bf16.msra.mxu0 %v537
  %705 = vmatprep.subr.bf16.mxu0 0
  %706 = vmatpush1.bf16.msra.mxu0 %v538
  %707 = vmatprep.subr.bf16.mxu0 0
  %708 = vmatpush1.bf16.msra.mxu0 %v539
  %709 = vmatprep.subr.bf16.mxu0 0
  %710 = vmatpush1.bf16.msra.mxu0 %v540
  %711 = vmatprep.subr.bf16.mxu0 0
  %712 = vmatpush1.bf16.msra.mxu0 %v541
  %713 = vmatprep.subr.bf16.mxu0 0
  %714 = vmatpush1.bf16.msra.mxu0 %v542
  %715 = vmatprep.subr.bf16.mxu0 0
  %716 = vmatpush1.bf16.msra.mxu0 %v543
  %717 = vmatprep.subr.bf16.mxu0 0
  %718 = vmatpush1.bf16.msra.mxu0 %v544
  %719 = vmatprep.subr.bf16.mxu0 0
  %720 = vmatpush1.bf16.msra.mxu0 %v545
  %721 = vmatprep.subr.bf16.mxu0 0
  %722 = vmatpush1.bf16.msra.mxu0 %v546
  %723 = vmatprep.subr.bf16.mxu0 0
  %724 = vmatpush1.bf16.msra.mxu0 %v547
  %725 = vmatprep.mubr.bf16.mxu0 %v279
  %726 = vmatmul.mubr.bf16.gmra.mrb[0].mxu0 %v278
  %v727 = vpop.f32.mrb[0].mxu0
  %v728 = vadd.f32 %v631, %v727
  %v729 = vpop.f32.mrb[0].mxu0
  %v730 = vpop.f32.mrb[0].mxu0
  %v731 = vadd.f32 %v634, %v730
  %v732 = vpop.f32.mrb[0].mxu0
  %733 = vmatprep.mubr.bf16.mxu0 %v284
  %734 = vmatmul.mubr.bf16.gmra.mrb[0].mxu0 %v283
  %v735 = vpop.f32.mrb[0].mxu0
  %v736 = vadd.f32 %v639, %v735
  %v737 = vpop.f32.mrb[0].mxu0
  %v738 = vpop.f32.mrb[0].mxu0
  %v739 = vadd.f32 %v642, %v738
  %v740 = vpop.f32.mrb[0].mxu0
  %741 = vmatprep.mubr.bf16.mxu0 %v289
  %742 = vmatmul.mubr.bf16.gmra.mrb[0].mxu0 %v288
  %v743 = vpop.f32.mrb[0].mxu0
  %v744 = vadd.f32 %v647, %v743
  %v745 = vpop.f32.mrb[0].mxu0
  %v746 = vpop.f32.mrb[0].mxu0
  %v747 = vadd.f32 %v650, %v746
  %v748 = vpop.f32.mrb[0].mxu0
  %749 = vmatprep.mubr.bf16.mxu0 %v294
  %750 = vmatmul.mubr.bf16.gmra.mrb[0].mxu0 %v293
  %v751 = vpop.f32.mrb[0].mxu0
  %v752 = vadd.f32 %v655, %v751
  %v753 = vpop.f32.mrb[0].mxu0
  %v754 = vpop.f32.mrb[0].mxu0
  %v755 = vadd.f32 %v658, %v754
  %v756 = vpop.f32.mrb[0].mxu0
  %757 = vmatprep.mubr.bf16.mxu0 %v299
  %758 = vmatmul.mubr.bf16.gmra.mrb[0].mxu0 %v298
  %v759 = vpop.f32.mrb[0].mxu0
  %v760 = vadd.f32 %v663, %v759
  %v761 = vpop.f32.mrb[0].mxu0
  %v762 = vpop.f32.mrb[0].mxu0
  %v763 = vadd.f32 %v666, %v762
  %v764 = vpop.f32.mrb[0].mxu0
  %765 = vmatprep.mubr.bf16.mxu0 %v304
  %766 = vmatmul.mubr.bf16.gmra.mrb[0].mxu0 %v303
  %v767 = vpop.f32.mrb[0].mxu0
  %v768 = vadd.f32 %v671, %v767
  %v769 = vpop.f32.mrb[0].mxu0
  %v770 = vpop.f32.mrb[0].mxu0
  %v771 = vadd.f32 %v674, %v770
  %v772 = vpop.f32.mrb[0].mxu0
  %773 = vmatprep.mubr.bf16.mxu0 %v309
  %774 = vmatmul.mubr.bf16.gmra.mrb[0].mxu0 %v308
  %v775 = vpop.f32.mrb[0].mxu0
  %v776 = vadd.f32 %v679, %v775
  %v777 = vpop.f32.mrb[0].mxu0
  %v778 = vpop.f32.mrb[0].mxu0
  %v779 = vadd.f32 %v682, %v778
  %v780 = vpop.f32.mrb[0].mxu0
  %781 = vmatprep.mubr.bf16.mxu0 %v314
  %782 = vmatmul.mubr.bf16.gmra.mrb[0].mxu0 %v313
  %v783 = vpop.f32.mrb[0].mxu0
  %v784 = vadd.f32 %v687, %v783
  %v785 = vpop.f32.mrb[0].mxu0
  %v786 = vpop.f32.mrb[0].mxu0
  %v787 = vadd.f32 %v690, %v786
  %v788 = vpop.f32.mrb[0].mxu0
  %789 = vdwg.mxu0
  %790 = vmatprep.subr.bf16.mxu0 0
  %791 = vmatpush1.bf16.msra.mxu0 %v548
  %792 = vmatprep.subr.bf16.mxu0 0
  %793 = vmatpush1.bf16.msra.mxu0 %v549
  %794 = vmatprep.subr.bf16.mxu0 0
  %795 = vmatpush1.bf16.msra.mxu0 %v550
  %796 = vmatprep.subr.bf16.mxu0 0
  %797 = vmatpush1.bf16.msra.mxu0 %v551
  %798 = vmatprep.subr.bf16.mxu0 0
  %799 = vmatpush1.bf16.msra.mxu0 %v552
  %800 = vmatprep.subr.bf16.mxu0 0
  %801 = vmatpush1.bf16.msra.mxu0 %v553
  %802 = vmatprep.subr.bf16.mxu0 0
  %803 = vmatpush1.bf16.msra.mxu0 %v554
  %804 = vmatprep.subr.bf16.mxu0 0
  %805 = vmatpush1.bf16.msra.mxu0 %v555
  %806 = vmatprep.subr.bf16.mxu0 0
  %807 = vmatpush1.bf16.msra.mxu0 0
  %808 = vmatprep.subr.bf16.mxu0 0
  %809 = vmatpush1.bf16.msra.mxu0 0
  %810 = vmatprep.subr.bf16.mxu0 0
  %811 = vmatpush1.bf16.msra.mxu0 0
  %812 = vmatprep.subr.bf16.mxu0 0
  %813 = vmatpush1.bf16.msra.mxu0 0
  %814 = vmatprep.subr.bf16.mxu0 0
  %815 = vmatpush1.bf16.msra.mxu0 0
  %816 = vmatprep.subr.bf16.mxu0 0
  %817 = vmatpush1.bf16.msra.mxu0 0
  %818 = vmatprep.subr.bf16.mxu0 0
  %819 = vmatpush1.bf16.msra.mxu0 0
  %820 = vmatprep.subr.bf16.mxu0 0
  %821 = vmatpush1.bf16.msra.mxu0 0
  %822 = vmatprep.mubr.bf16.mxu0 0
  %823 = vmatmul.mubr.bf16.gmra.mrb[0].mxu0 %v280
  %v824 = vpop.f32.mrb[0].mxu0
  %v825 = vadd.f32 %v728, %v824
  %v826 = vpop.f32.mrb[0].mxu0
  %v827 = vpop.f32.mrb[0].mxu0
  %v828 = vadd.f32 %v731, %v827
  %v829 = vpop.f32.mrb[0].mxu0
  %830 = vmatprep.mubr.bf16.mxu0 0
  %831 = vmatmul.mubr.bf16.gmra.mrb[0].mxu0 %v285
  %v832 = vpop.f32.mrb[0].mxu0
  %v833 = vadd.f32 %v736, %v832
  %v834 = vpop.f32.mrb[0].mxu0
  %v835 = vpop.f32.mrb[0].mxu0
  %v836 = vadd.f32 %v739, %v835
  %v837 = vpop.f32.mrb[0].mxu0
  %838 = vmatprep.mubr.bf16.mxu0 0
  %839 = vmatmul.mubr.bf16.gmra.mrb[0].mxu0 %v290
  %v840 = vpop.f32.mrb[0].mxu0
  %v841 = vadd.f32 %v744, %v840
  %v842 = vpop.f32.mrb[0].mxu0
  %v843 = vpop.f32.mrb[0].mxu0
  %v844 = vadd.f32 %v747, %v843
  %v845 = vpop.f32.mrb[0].mxu0
  %846 = vmatprep.mubr.bf16.mxu0 0
  %847 = vmatmul.mubr.bf16.gmra.mrb[0].mxu0 %v295
  %v848 = vpop.f32.mrb[0].mxu0
  %v849 = vadd.f32 %v752, %v848
  %v850 = vpop.f32.mrb[0].mxu0
  %v851 = vpop.f32.mrb[0].mxu0
  %v852 = vadd.f32 %v755, %v851
  %v853 = vpop.f32.mrb[0].mxu0
  %854 = vmatprep.mubr.bf16.mxu0 0
  %855 = vmatmul.mubr.bf16.gmra.mrb[0].mxu0 %v300
  %v856 = vpop.f32.mrb[0].mxu0
  %v857 = vadd.f32 %v760, %v856
  %v858 = vpop.f32.mrb[0].mxu0
  %v859 = vpop.f32.mrb[0].mxu0
  %v860 = vadd.f32 %v763, %v859
  %v861 = vpop.f32.mrb[0].mxu0
  %862 = vmatprep.mubr.bf16.mxu0 0
  %863 = vmatmul.mubr.bf16.gmra.mrb[0].mxu0 %v305
  %v864 = vpop.f32.mrb[0].mxu0
  %v865 = vadd.f32 %v768, %v864
  %v866 = vpop.f32.mrb[0].mxu0
  %v867 = vpop.f32.mrb[0].mxu0
  %v868 = vadd.f32 %v771, %v867
  %v869 = vpop.f32.mrb[0].mxu0
  %870 = vmatprep.mubr.bf16.mxu0 0
  %871 = vmatmul.mubr.bf16.gmra.mrb[0].mxu0 %v310
  %v872 = vpop.f32.mrb[0].mxu0
  %v873 = vadd.f32 %v776, %v872
  %v874 = vpop.f32.mrb[0].mxu0
  %v875 = vpop.f32.mrb[0].mxu0
  %v876 = vadd.f32 %v779, %v875
  %v877 = vpop.f32.mrb[0].mxu0
  %878 = vmatprep.mubr.bf16.mxu0 0
  %879 = vmatmul.mubr.bf16.gmra.mrb[0].mxu0 %v315
  %v880 = vpop.f32.mrb[0].mxu0
  %v881 = vadd.f32 %v784, %v880
  %v882 = vpop.f32.mrb[0].mxu0
  %v883 = vpop.f32.mrb[0].mxu0
  %v884 = vadd.f32 %v787, %v883
  %v885 = vpop.f32.mrb[0].mxu0
  %886 = vdwg.mxu0
  %v887 = vmax.f32 %v825, 0.0
  %v888 = vmax.f32 %v828, 0.0
  %v889 = vmax.f32 %v833, 0.0
  %v890 = vmax.f32 %v836, 0.0
  %v891 = vmax.f32 %v841, 0.0
  %v892 = vmax.f32 %v844, 0.0
  %v893 = vmax.f32 %v849, 0.0
  %v894 = vmax.f32 %v852, 0.0
  %v895 = vmax.f32 %v857, 0.0
  %v896 = vmax.f32 %v860, 0.0
  %v897 = vmax.f32 %v865, 0.0
  %v898 = vmax.f32 %v868, 0.0
  %v899 = vmax.f32 %v873, 0.0
  %v900 = vmax.f32 %v876, 0.0
  %v901 = vmax.f32 %v881, 0.0
  %v902 = vmax.f32 %v884, 0.0
  %v903 = vlaneseq
  %v904 = vshrl.u32 %v903, 7
  %v905 = vsub.s32 1, %v904
  %v906 = vrot.slane %v143, %v905
  %v907 = vmul.f32 %v887, %v906
  %v908 = vmul.f32 %v888, %v906
  %v909 = vmul.f32 %v889, %v906
  %v910 = vmul.f32 %v890, %v906
  %v911 = vmul.f32 %v891, %v906
  %v912 = vmul.f32 %v892, %v906
  %v913 = vmul.f32 %v893, %v906
  %v914 = vmul.f32 %v894, %v906
  %v915 = vmul.f32 %v895, %v906
  %v916 = vmul.f32 %v896, %v906
  %v917 = vmul.f32 %v897, %v906
  %v918 = vmul.f32 %v898, %v906
  %v919 = vmul.f32 %v899, %v906
  %v920 = vmul.f32 %v900, %v906
  %v921 = vmul.f32 %v901, %v906
  %v922 = vmul.f32 %v902, %v906
  %v923 = vlaneseq
  %v924 = vshrl.u32 %v923, 7
  %v925 = vsub.s32 2, %v924
  %v926 = vrot.slane %v143, %v925
  %v927 = vadd.f32 %v907, %v926
  %v928 = vadd.f32 %v908, %v926
  %v929 = vadd.f32 %v909, %v926
  %v930 = vadd.f32 %v910, %v926
  %v931 = vadd.f32 %v911, %v926
  %v932 = vadd.f32 %v912, %v926
  %v933 = vadd.f32 %v913, %v926
  %v934 = vadd.f32 %v914, %v926
  %v935 = vadd.f32 %v915, %v926
  %v936 = vadd.f32 %v916, %v926
  %v937 = vadd.f32 %v917, %v926
  %v938 = vadd.f32 %v918, %v926
  %v939 = vadd.f32 %v919, %v926
  %v940 = vadd.f32 %v920, %v926
  %v941 = vadd.f32 %v921, %v926
  %v942 = vadd.f32 %v922, %v926
  %v943 = vpack.c.bf16 %v928, %v927
  %v944 = vpack.c.bf16 %v930, %v929
  %v945 = vpack.c.bf16 %v932, %v931
  %v946 = vpack.c.bf16 %v934, %v933
  %v947 = vpack.c.bf16 %v936, %v935
  %v948 = vpack.c.bf16 %v938, %v937
  %v949 = vpack.c.bf16 %v940, %v939
  %v950 = vpack.c.bf16 %v942, %v941
  %v959 = vunpack.c.l.b16 %v943
  %v960 = vunpack.c.h.b16 %v943
  %v961 = vunpack.c.l.b16 %v944
  %v962 = vunpack.c.h.b16 %v944
  %v963 = vunpack.c.l.b16 %v945
  %v964 = vunpack.c.h.b16 %v945
  %v965 = vunpack.c.l.b16 %v946
  %v966 = vunpack.c.h.b16 %v946
  %v967 = vunpack.c.l.b16 %v947
  %v968 = vunpack.c.h.b16 %v947
  %v969 = vunpack.c.l.b16 %v948
  %v970 = vunpack.c.h.b16 %v948
  %v971 = vunpack.c.l.b16 %v949
  %v972 = vunpack.c.h.b16 %v949
  %v973 = vunpack.c.l.b16 %v950
  %v974 = vunpack.c.h.b16 %v950
  %v975 = vpack.c.b16 %v959, %v959
  %v976 = vpack.c.b16 %v960, %v960
  %v977 = vpack.c.b16 %v961, %v961
  %v978 = vpack.c.b16 %v962, %v962
  %v979 = vpack.c.b16 %v963, %v963
  %v980 = vpack.c.b16 %v964, %v964
  %v981 = vpack.c.b16 %v965, %v965
  %v982 = vpack.c.b16 %v966, %v966
  %v983 = vpack.c.b16 %v967, %v967
  %v984 = vpack.c.b16 %v968, %v968
  %v985 = vpack.c.b16 %v969, %v969
  %v986 = vpack.c.b16 %v970, %v970
  %v987 = vpack.c.b16 %v971, %v971
  %v988 = vpack.c.b16 %v972, %v972
  %v989 = vpack.c.b16 %v973, %v973
  %v990 = vpack.c.b16 %v974, %v974
  %1007 = vst [vmem:[%s3] sm:$0xf] %v975
  %1008 = vst [vmem:[%s3 + $0x4] sm:$0xf] %v976
  %1009 = vst [vmem:[%s3 + $0x8] sm:$0xf] %v977
  %1010 = vst [vmem:[%s3 + $0xc] sm:$0xf] %v978
  %1011 = vst [vmem:[%s3 + $0x10] sm:$0xf] %v979
  %1012 = vst [vmem:[%s3 + $0x14] sm:$0xf] %v980
  %1013 = vst [vmem:[%s3 + $0x18] sm:$0xf] %v981
  %1014 = vst [vmem:[%s3 + $0x1c] sm:$0xf] %v982
  %1015 = vst [vmem:[%s3 + $0x20] sm:$0xf] %v983
  %1016 = vst [vmem:[%s3 + $0x24] sm:$0xf] %v984
  %1017 = vst [vmem:[%s3 + $0x28] sm:$0xf] %v985
  %1018 = vst [vmem:[%s3 + $0x2c] sm:$0xf] %v986
  %1019 = vst [vmem:[%s3 + $0x30] sm:$0xf] %v987
  %1020 = vst [vmem:[%s3 + $0x34] sm:$0xf] %v988
  %1021 = vst [vmem:[%s3 + $0x38] sm:$0xf] %v989
  %1022 = vst [vmem:[%s3 + $0x3c] sm:$0xf] %v990
  // Predicated region
  $region14: #{classification_network_forward.5} parent=0 // pred_check
    _
  $region15: #{classification_network_forward.5} parent=0 // pred_check_branch
    %1024 = sbr.rel (0) target = $region17
  $region16: #{classification_network_forward.5} parent=0 // pred_region
    _
  $region17: #{classification_network_forward.5} parent=0 // pred_fallthru
    _
  // Predicated region
  $region18: #{classification_network_forward.5} parent=0 // pred_check
    _
  $region19: #{classification_network_forward.5} parent=0 // pred_check_branch
    %1026 = sbr.rel (0) target = $region21
  $region20: #{classification_network_forward.5} parent=0 // pred_region
    _
  $region21: #{classification_network_forward.5} parent=0 // pred_fallthru
    _

// kernel: classification_network_forward.6
$region0: #{classification_network_forward.6}
  #allocation0 [shape = 'u32[]', space=smem, size = 0x4, offset = 0x4, fixed_abs, tag = 'smem constant byte address 0x4 - core index']
  #allocation1 [shape = 'u32[144,128]{1,0:T(1,128)}', space=vmem, size = 0x12000, scoped, tag = 'internal scratch']
  %s0 = inlined_call_operand.vmem [shape: bf16[128,1152], index: 0, kind: input, shape index: {}]
  %s1 = inlined_call_operand.vmem [shape: bf16[1152,256], index: 1, kind: input, shape index: {}]
  %s2 = inlined_call_operand.vmem [shape: f32[8,256], index: 2, kind: input, shape index: {}]
  %s3 = inlined_call_operand.vmem [shape: bf16[128,256], index: 3, kind: output, shape index: {}]
  %s4 = sld [smem:[#allocation0]]
  $region22: #{classification_network_forward.6} parent=0
    _
  %s6 = ssub.s32 1, %s4
  %s7 = scalar_select 0, %s6, %s4
  // Predicated region
  $region2: #{classification_network_forward.6} parent=0 // pred_check
    _
  $region3: #{classification_network_forward.6} parent=0 // pred_check_branch
    %9 = sbr.rel (0) target = $region5
  $region4: #{classification_network_forward.6} parent=0 // pred_region
    _
  $region5: #{classification_network_forward.6} parent=0 // pred_fallthru
    _
  // Predicated region
  $region6: #{classification_network_forward.6} parent=0 // pred_check
    _
  $region7: #{classification_network_forward.6} parent=0 // pred_check_branch
    %11 = sbr.rel (0) target = $region9
  $region8: #{classification_network_forward.6} parent=0 // pred_region
    _
  $region9: #{classification_network_forward.6} parent=0 // pred_fallthru
    _
  // Predicated region
  $region10: #{classification_network_forward.6} parent=0 // pred_check
    _
  $region11: #{classification_network_forward.6} parent=0 // pred_check_branch
    %13 = sbr.rel (0) target = $region13
  $region12: #{classification_network_forward.6} parent=0 // pred_region
    _
  $region13: #{classification_network_forward.6} parent=0 // pred_fallthru
    _
  %v15 = vld [vmem:[%s0] sm:$0xff]
  %v16 = vld [vmem:[%s0 + $0x8] sm:$0xff]
  %v17 = vld [vmem:[%s0 + $0x10] sm:$0xff]
  %v18 = vld [vmem:[%s0 + $0x18] sm:$0xff]
  %v19 = vld [vmem:[%s0 + $0x20] sm:$0xf]
  %v20 = vld [vmem:[%s0 + $0x24] sm:$0xff]
  %v21 = vld [vmem:[%s0 + $0x2c] sm:$0xff]
  %v22 = vld [vmem:[%s0 + $0x34] sm:$0xff]
  %v23 = vld [vmem:[%s0 + $0x3c] sm:$0xff]
  %v24 = vld [vmem:[%s0 + $0x44] sm:$0xf]
  %v25 = vld [vmem:[%s0 + $0x48] sm:$0xff]
  %v26 = vld [vmem:[%s0 + $0x50] sm:$0xff]
  %v27 = vld [vmem:[%s0 + $0x58] sm:$0xff]
  %v28 = vld [vmem:[%s0 + $0x60] sm:$0xff]
  %v29 = vld [vmem:[%s0 + $0x68] sm:$0xf]
  %v30 = vld [vmem:[%s0 + $0x6c] sm:$0xff]
  %v31 = vld [vmem:[%s0 + $0x74] sm:$0xff]
  %v32 = vld [vmem:[%s0 + $0x7c] sm:$0xff]
  %v33 = vld [vmem:[%s0 + $0x84] sm:$0xff]
  %v34 = vld [vmem:[%s0 + $0x8c] sm:$0xf]
  %v35 = vld [vmem:[%s0 + $0x90] sm:$0xff]
  %v36 = vld [vmem:[%s0 + $0x98] sm:$0xff]
  %v37 = vld [vmem:[%s0 + $0xa0] sm:$0xff]
  %v38 = vld [vmem:[%s0 + $0xa8] sm:$0xff]
  %v39 = vld [vmem:[%s0 + $0xb0] sm:$0xf]
  %v40 = vld [vmem:[%s0 + $0xb4] sm:$0xff]
  %v41 = vld [vmem:[%s0 + $0xbc] sm:$0xff]
  %v42 = vld [vmem:[%s0 + $0xc4] sm:$0xff]
  %v43 = vld [vmem:[%s0 + $0xcc] sm:$0xff]
  %v44 = vld [vmem:[%s0 + $0xd4] sm:$0xf]
  %v45 = vld [vmem:[%s0 + $0xd8] sm:$0xff]
  %v46 = vld [vmem:[%s0 + $0xe0] sm:$0xff]
  %v47 = vld [vmem:[%s0 + $0xe8] sm:$0xff]
  %v48 = vld [vmem:[%s0 + $0xf0] sm:$0xff]
  %v49 = vld [vmem:[%s0 + $0xf8] sm:$0xf]
  %v50 = vld [vmem:[%s0 + $0xfc] sm:$0xff]
  %v51 = vld [vmem:[%s0 + $0x104] sm:$0xff]
  %v52 = vld [vmem:[%s0 + $0x10c] sm:$0xff]
  %v53 = vld [vmem:[%s0 + $0x114] sm:$0xff]
  %v54 = vld [vmem:[%s0 + $0x11c] sm:$0xf]
  %v55 = vld [vmem:[%s0 + $0x120] sm:$0xff]
  %v56 = vld [vmem:[%s0 + $0x128] sm:$0xff]
  %v57 = vld [vmem:[%s0 + $0x130] sm:$0xff]
  %v58 = vld [vmem:[%s0 + $0x138] sm:$0xff]
  %v59 = vld [vmem:[%s0 + $0x140] sm:$0xf]
  %v60 = vld [vmem:[%s0 + $0x144] sm:$0xff]
  %v61 = vld [vmem:[%s0 + $0x14c] sm:$0xff]
  %v62 = vld [vmem:[%s0 + $0x154] sm:$0xff]
  %v63 = vld [vmem:[%s0 + $0x15c] sm:$0xff]
  %v64 = vld [vmem:[%s0 + $0x164] sm:$0xf]
  %v65 = vld [vmem:[%s0 + $0x168] sm:$0xff]
  %v66 = vld [vmem:[%s0 + $0x170] sm:$0xff]
  %v67 = vld [vmem:[%s0 + $0x178] sm:$0xff]
  %v68 = vld [vmem:[%s0 + $0x180] sm:$0xff]
  %v69 = vld [vmem:[%s0 + $0x188] sm:$0xf]
  %v70 = vld [vmem:[%s0 + $0x18c] sm:$0xff]
  %v71 = vld [vmem:[%s0 + $0x194] sm:$0xff]
  %v72 = vld [vmem:[%s0 + $0x19c] sm:$0xff]
  %v73 = vld [vmem:[%s0 + $0x1a4] sm:$0xff]
  %v74 = vld [vmem:[%s0 + $0x1ac] sm:$0xf]
  %v75 = vld [vmem:[%s0 + $0x1b0] sm:$0xff]
  %v76 = vld [vmem:[%s0 + $0x1b8] sm:$0xff]
  %v77 = vld [vmem:[%s0 + $0x1c0] sm:$0xff]
  %v78 = vld [vmem:[%s0 + $0x1c8] sm:$0xff]
  %v79 = vld [vmem:[%s0 + $0x1d0] sm:$0xf]
  %v80 = vld [vmem:[%s0 + $0x1d4] sm:$0xff]
  %v81 = vld [vmem:[%s0 + $0x1dc] sm:$0xff]
  %v82 = vld [vmem:[%s0 + $0x1e4] sm:$0xff]
  %v83 = vld [vmem:[%s0 + $0x1ec] sm:$0xff]
  %v84 = vld [vmem:[%s0 + $0x1f4] sm:$0xf]
  %v85 = vld [vmem:[%s0 + $0x1f8] sm:$0xff]
  %v86 = vld [vmem:[%s0 + $0x200] sm:$0xff]
  %v87 = vld [vmem:[%s0 + $0x208] sm:$0xff]
  %v88 = vld [vmem:[%s0 + $0x210] sm:$0xff]
  %v89 = vld [vmem:[%s0 + $0x218] sm:$0xf]
  %v90 = vld [vmem:[%s0 + $0x21c] sm:$0xff]
  %v91 = vld [vmem:[%s0 + $0x224] sm:$0xff]
  %v92 = vld [vmem:[%s0 + $0x22c] sm:$0xff]
  %v93 = vld [vmem:[%s0 + $0x234] sm:$0xff]
  %v94 = vld [vmem:[%s0 + $0x23c] sm:$0xf]
  %v95 = vld [vmem:[%s1] sm:$0xff]
  %v96 = vld [vmem:[%s1 + $0x8] sm:$0xff]
  %v97 = vld [vmem:[%s1 + $0x10] sm:$0xff]
  %v98 = vld [vmem:[%s1 + $0x18] sm:$0xff]
  %v99 = vld [vmem:[%s1 + $0x20] sm:$0xff]
  %v100 = vld [vmem:[%s1 + $0x28] sm:$0xff]
  %v101 = vld [vmem:[%s1 + $0x30] sm:$0xff]
  %v102 = vld [vmem:[%s1 + $0x38] sm:$0xff]
  %v103 = vld [vmem:[%s1 + $0x40] sm:$0xff]
  %v104 = vld [vmem:[%s1 + $0x48] sm:$0xff]
  %v105 = vld [vmem:[%s1 + $0x50] sm:$0xff]
  %v106 = vld [vmem:[%s1 + $0x58] sm:$0xff]
  %v107 = vld [vmem:[%s1 + $0x60] sm:$0xff]
  %v108 = vld [vmem:[%s1 + $0x68] sm:$0xff]
  %v109 = vld [vmem:[%s1 + $0x70] sm:$0xff]
  %v110 = vld [vmem:[%s1 + $0x78] sm:$0xff]
  %v111 = vld [vmem:[%s1 + $0x80] sm:$0xff]
  %v112 = vld [vmem:[%s1 + $0x88] sm:$0xff]
  %v113 = vld [vmem:[%s1 + $0x90] sm:$0xff]
  %v114 = vld [vmem:[%s1 + $0x98] sm:$0xff]
  %v115 = vld [vmem:[%s1 + $0xa0] sm:$0xff]
  %v116 = vld [vmem:[%s1 + $0xa8] sm:$0xff]
  %v117 = vld [vmem:[%s1 + $0xb0] sm:$0xff]
  %v118 = vld [vmem:[%s1 + $0xb8] sm:$0xff]
  %v119 = vld [vmem:[%s1 + $0xc0] sm:$0xff]
  %v120 = vld [vmem:[%s1 + $0xc8] sm:$0xff]
  %v121 = vld [vmem:[%s1 + $0xd0] sm:$0xff]
  %v122 = vld [vmem:[%s1 + $0xd8] sm:$0xff]
  %v123 = vld [vmem:[%s1 + $0xe0] sm:$0xff]
  %v124 = vld [vmem:[%s1 + $0xe8] sm:$0xff]
  %v125 = vld [vmem:[%s1 + $0xf0] sm:$0xff]
  %v126 = vld [vmem:[%s1 + $0xf8] sm:$0xff]
  %v127 = vld [vmem:[%s1 + $0x100] sm:$0xff]
  %v128 = vld [vmem:[%s1 + $0x108] sm:$0xff]
  %v129 = vld [vmem:[%s1 + $0x110] sm:$0xff]
  %v130 = vld [vmem:[%s1 + $0x118] sm:$0xff]
  %v131 = vld [vmem:[%s1 + $0x120] sm:$0xff]
  %v132 = vld [vmem:[%s1 + $0x128] sm:$0xff]
  %v133 = vld [vmem:[%s1 + $0x130] sm:$0xff]
  %v134 = vld [vmem:[%s1 + $0x138] sm:$0xff]
  %v135 = vld [vmem:[%s1 + $0x140] sm:$0xff]
  %v136 = vld [vmem:[%s1 + $0x148] sm:$0xff]
  %v137 = vld [vmem:[%s1 + $0x150] sm:$0xff]
  %v138 = vld [vmem:[%s1 + $0x158] sm:$0xff]
  %v139 = vld [vmem:[%s1 + $0x160] sm:$0xff]
  %v140 = vld [vmem:[%s1 + $0x168] sm:$0xff]
  %v141 = vld [vmem:[%s1 + $0x170] sm:$0xff]
  %v142 = vld [vmem:[%s1 + $0x178] sm:$0xff]
  %v143 = vld [vmem:[%s1 + $0x180] sm:$0xff]
  %v144 = vld [vmem:[%s1 + $0x188] sm:$0xff]
  %v145 = vld [vmem:[%s1 + $0x190] sm:$0xff]
  %v146 = vld [vmem:[%s1 + $0x198] sm:$0xff]
  %v147 = vld [vmem:[%s1 + $0x1a0] sm:$0xff]
  %v148 = vld [vmem:[%s1 + $0x1a8] sm:$0xff]
  %v149 = vld [vmem:[%s1 + $0x1b0] sm:$0xff]
  %v150 = vld [vmem:[%s1 + $0x1b8] sm:$0xff]
  %v151 = vld [vmem:[%s1 + $0x1c0] sm:$0xff]
  %v152 = vld [vmem:[%s1 + $0x1c8] sm:$0xff]
  %v153 = vld [vmem:[%s1 + $0x1d0] sm:$0xff]
  %v154 = vld [vmem:[%s1 + $0x1d8] sm:$0xff]
  %v155 = vld [vmem:[%s1 + $0x1e0] sm:$0xff]
  %v156 = vld [vmem:[%s1 + $0x1e8] sm:$0xff]
  %v157 = vld [vmem:[%s1 + $0x1f0] sm:$0xff]
  %v158 = vld [vmem:[%s1 + $0x1f8] sm:$0xff]
  %v159 = vld [vmem:[%s1 + $0x200] sm:$0xff]
  %v160 = vld [vmem:[%s1 + $0x208] sm:$0xff]
  %v161 = vld [vmem:[%s1 + $0x210] sm:$0xff]
  %v162 = vld [vmem:[%s1 + $0x218] sm:$0xff]
  %v163 = vld [vmem:[%s1 + $0x220] sm:$0xff]
  %v164 = vld [vmem:[%s1 + $0x228] sm:$0xff]
  %v165 = vld [vmem:[%s1 + $0x230] sm:$0xff]
  %v166 = vld [vmem:[%s1 + $0x238] sm:$0xff]
  %v167 = vld [vmem:[%s1 + $0x240] sm:$0xff]
  %v168 = vld [vmem:[%s1 + $0x248] sm:$0xff]
  %v169 = vld [vmem:[%s1 + $0x250] sm:$0xff]
  %v170 = vld [vmem:[%s1 + $0x258] sm:$0xff]
  %v171 = vld [vmem:[%s1 + $0x260] sm:$0xff]
  %v172 = vld [vmem:[%s1 + $0x268] sm:$0xff]
  %v173 = vld [vmem:[%s1 + $0x270] sm:$0xff]
  %v174 = vld [vmem:[%s1 + $0x278] sm:$0xff]
  %v175 = vld [vmem:[%s1 + $0x280] sm:$0xff]
  %v176 = vld [vmem:[%s1 + $0x288] sm:$0xff]
  %v177 = vld [vmem:[%s1 + $0x290] sm:$0xff]
  %v178 = vld [vmem:[%s1 + $0x298] sm:$0xff]
  %v179 = vld [vmem:[%s1 + $0x2a0] sm:$0xff]
  %v180 = vld [vmem:[%s1 + $0x2a8] sm:$0xff]
  %v181 = vld [vmem:[%s1 + $0x2b0] sm:$0xff]
  %v182 = vld [vmem:[%s1 + $0x2b8] sm:$0xff]
  %v183 = vld [vmem:[%s1 + $0x2c0] sm:$0xff]
  %v184 = vld [vmem:[%s1 + $0x2c8] sm:$0xff]
  %v185 = vld [vmem:[%s1 + $0x2d0] sm:$0xff]
  %v186 = vld [vmem:[%s1 + $0x2d8] sm:$0xff]
  %v187 = vld [vmem:[%s1 + $0x2e0] sm:$0xff]
  %v188 = vld [vmem:[%s1 + $0x2e8] sm:$0xff]
  %v189 = vld [vmem:[%s1 + $0x2f0] sm:$0xff]
  %v190 = vld [vmem:[%s1 + $0x2f8] sm:$0xff]
  %v191 = vld [vmem:[%s1 + $0x300] sm:$0xff]
  %v192 = vld [vmem:[%s1 + $0x308] sm:$0xff]
  %v193 = vld [vmem:[%s1 + $0x310] sm:$0xff]
  %v194 = vld [vmem:[%s1 + $0x318] sm:$0xff]
  %v195 = vld [vmem:[%s1 + $0x320] sm:$0xff]
  %v196 = vld [vmem:[%s1 + $0x328] sm:$0xff]
  %v197 = vld [vmem:[%s1 + $0x330] sm:$0xff]
  %v198 = vld [vmem:[%s1 + $0x338] sm:$0xff]
  %v199 = vld [vmem:[%s1 + $0x340] sm:$0xff]
  %v200 = vld [vmem:[%s1 + $0x348] sm:$0xff]
  %v201 = vld [vmem:[%s1 + $0x350] sm:$0xff]
  %v202 = vld [vmem:[%s1 + $0x358] sm:$0xff]
  %v203 = vld [vmem:[%s1 + $0x360] sm:$0xff]
  %v204 = vld [vmem:[%s1 + $0x368] sm:$0xff]
  %v205 = vld [vmem:[%s1 + $0x370] sm:$0xff]
  %v206 = vld [vmem:[%s1 + $0x378] sm:$0xff]
  %v207 = vld [vmem:[%s1 + $0x380] sm:$0xff]
  %v208 = vld [vmem:[%s1 + $0x388] sm:$0xff]
  %v209 = vld [vmem:[%s1 + $0x390] sm:$0xff]
  %v210 = vld [vmem:[%s1 + $0x398] sm:$0xff]
  %v211 = vld [vmem:[%s1 + $0x3a0] sm:$0xff]
  %v212 = vld [vmem:[%s1 + $0x3a8] sm:$0xff]
  %v213 = vld [vmem:[%s1 + $0x3b0] sm:$0xff]
  %v214 = vld [vmem:[%s1 + $0x3b8] sm:$0xff]
  %v215 = vld [vmem:[%s1 + $0x3c0] sm:$0xff]
  %v216 = vld [vmem:[%s1 + $0x3c8] sm:$0xff]
  %v217 = vld [vmem:[%s1 + $0x3d0] sm:$0xff]
  %v218 = vld [vmem:[%s1 + $0x3d8] sm:$0xff]
  %v219 = vld [vmem:[%s1 + $0x3e0] sm:$0xff]
  %v220 = vld [vmem:[%s1 + $0x3e8] sm:$0xff]
  %v221 = vld [vmem:[%s1 + $0x3f0] sm:$0xff]
  %v222 = vld [vmem:[%s1 + $0x3f8] sm:$0xff]
  %v223 = vld [vmem:[%s1 + $0x400] sm:$0xff]
  %v224 = vld [vmem:[%s1 + $0x408] sm:$0xff]
  %v225 = vld [vmem:[%s1 + $0x410] sm:$0xff]
  %v226 = vld [vmem:[%s1 + $0x418] sm:$0xff]
  %v227 = vld [vmem:[%s1 + $0x420] sm:$0xff]
  %v228 = vld [vmem:[%s1 + $0x428] sm:$0xff]
  %v229 = vld [vmem:[%s1 + $0x430] sm:$0xff]
  %v230 = vld [vmem:[%s1 + $0x438] sm:$0xff]
  %v231 = vld [vmem:[%s1 + $0x440] sm:$0xff]
  %v232 = vld [vmem:[%s1 + $0x448] sm:$0xff]
  %v233 = vld [vmem:[%s1 + $0x450] sm:$0xff]
  %v234 = vld [vmem:[%s1 + $0x458] sm:$0xff]
  %v235 = vld [vmem:[%s1 + $0x460] sm:$0xff]
  %v236 = vld [vmem:[%s1 + $0x468] sm:$0xff]
  %v237 = vld [vmem:[%s1 + $0x470] sm:$0xff]
  %v238 = vld [vmem:[%s1 + $0x478] sm:$0xff]
  %v239 = vld [vmem:[%s2] sm:$0xff]
  %v240 = vld [vmem:[%s2 + $0x8] sm:$0xff]
  %v241 = vlaneseq
  %v242 = vshrl.u32 %v241, 7
  %v243 = vsub.s32 0, %v242
  %v244 = vrot.slane %v239, %v243
  %v245 = vlaneseq
  %v246 = vshrl.u32 %v245, 7
  %v247 = vsub.s32 0, %v246
  %v248 = vrot.slane %v240, %v247
  %v329 = vunpack.c.l.b16 %v15
  %v330 = vunpack.c.h.b16 %v15
  %v331 = vunpack.c.l.b16 %v16
  %v332 = vunpack.c.h.b16 %v16
  %v333 = vunpack.c.l.b16 %v17
  %v334 = vunpack.c.h.b16 %v17
  %v335 = vunpack.c.l.b16 %v18
  %v336 = vunpack.c.h.b16 %v18
  %v337 = vunpack.c.l.b16 %v19
  %v338 = vunpack.c.l.b16 %v20
  %v339 = vunpack.c.h.b16 %v20
  %v340 = vunpack.c.l.b16 %v21
  %v341 = vunpack.c.h.b16 %v21
  %v342 = vunpack.c.l.b16 %v22
  %v343 = vunpack.c.h.b16 %v22
  %v344 = vunpack.c.l.b16 %v23
  %v345 = vunpack.c.h.b16 %v23
  %v346 = vunpack.c.l.b16 %v24
  %v347 = vunpack.c.l.b16 %v25
  %v348 = vunpack.c.h.b16 %v25
  %v349 = vunpack.c.l.b16 %v26
  %v350 = vunpack.c.h.b16 %v26
  %v351 = vunpack.c.l.b16 %v27
  %v352 = vunpack.c.h.b16 %v27
  %v353 = vunpack.c.l.b16 %v28
  %v354 = vunpack.c.h.b16 %v28
  %v355 = vunpack.c.l.b16 %v29
  %v356 = vunpack.c.l.b16 %v30
  %v357 = vunpack.c.h.b16 %v30
  %v358 = vunpack.c.l.b16 %v31
  %v359 = vunpack.c.h.b16 %v31
  %v360 = vunpack.c.l.b16 %v32
  %v361 = vunpack.c.h.b16 %v32
  %v362 = vunpack.c.l.b16 %v33
  %v363 = vunpack.c.h.b16 %v33
  %v364 = vunpack.c.l.b16 %v34
  %v365 = vunpack.c.l.b16 %v35
  %v366 = vunpack.c.h.b16 %v35
  %v367 = vunpack.c.l.b16 %v36
  %v368 = vunpack.c.h.b16 %v36
  %v369 = vunpack.c.l.b16 %v37
  %v370 = vunpack.c.h.b16 %v37
  %v371 = vunpack.c.l.b16 %v38
  %v372 = vunpack.c.h.b16 %v38
  %v373 = vunpack.c.l.b16 %v39
  %v374 = vunpack.c.l.b16 %v40
  %v375 = vunpack.c.h.b16 %v40
  %v376 = vunpack.c.l.b16 %v41
  %v377 = vunpack.c.h.b16 %v41
  %v378 = vunpack.c.l.b16 %v42
  %v379 = vunpack.c.h.b16 %v42
  %v380 = vunpack.c.l.b16 %v43
  %v381 = vunpack.c.h.b16 %v43
  %v382 = vunpack.c.l.b16 %v44
  %v383 = vunpack.c.l.b16 %v45
  %v384 = vunpack.c.h.b16 %v45
  %v385 = vunpack.c.l.b16 %v46
  %v386 = vunpack.c.h.b16 %v46
  %v387 = vunpack.c.l.b16 %v47
  %v388 = vunpack.c.h.b16 %v47
  %v389 = vunpack.c.l.b16 %v48
  %v390 = vunpack.c.h.b16 %v48
  %v391 = vunpack.c.l.b16 %v49
  %v392 = vunpack.c.l.b16 %v50
  %v393 = vunpack.c.h.b16 %v50
  %v394 = vunpack.c.l.b16 %v51
  %v395 = vunpack.c.h.b16 %v51
  %v396 = vunpack.c.l.b16 %v52
  %v397 = vunpack.c.h.b16 %v52
  %v398 = vunpack.c.l.b16 %v53
  %v399 = vunpack.c.h.b16 %v53
  %v400 = vunpack.c.l.b16 %v54
  %v401 = vunpack.c.l.b16 %v55
  %v402 = vunpack.c.h.b16 %v55
  %v403 = vunpack.c.l.b16 %v56
  %v404 = vunpack.c.h.b16 %v56
  %v405 = vunpack.c.l.b16 %v57
  %v406 = vunpack.c.h.b16 %v57
  %v407 = vunpack.c.l.b16 %v58
  %v408 = vunpack.c.h.b16 %v58
  %v409 = vunpack.c.l.b16 %v59
  %v410 = vunpack.c.l.b16 %v60
  %v411 = vunpack.c.h.b16 %v60
  %v412 = vunpack.c.l.b16 %v61
  %v413 = vunpack.c.h.b16 %v61
  %v414 = vunpack.c.l.b16 %v62
  %v415 = vunpack.c.h.b16 %v62
  %v416 = vunpack.c.l.b16 %v63
  %v417 = vunpack.c.h.b16 %v63
  %v418 = vunpack.c.l.b16 %v64
  %v419 = vunpack.c.l.b16 %v65
  %v420 = vunpack.c.h.b16 %v65
  %v421 = vunpack.c.l.b16 %v66
  %v422 = vunpack.c.h.b16 %v66
  %v423 = vunpack.c.l.b16 %v67
  %v424 = vunpack.c.h.b16 %v67
  %v425 = vunpack.c.l.b16 %v68
  %v426 = vunpack.c.h.b16 %v68
  %v427 = vunpack.c.l.b16 %v69
  %v428 = vunpack.c.l.b16 %v70
  %v429 = vunpack.c.h.b16 %v70
  %v430 = vunpack.c.l.b16 %v71
  %v431 = vunpack.c.h.b16 %v71
  %v432 = vunpack.c.l.b16 %v72
  %v433 = vunpack.c.h.b16 %v72
  %v434 = vunpack.c.l.b16 %v73
  %v435 = vunpack.c.h.b16 %v73
  %v436 = vunpack.c.l.b16 %v74
  %v437 = vunpack.c.l.b16 %v75
  %v438 = vunpack.c.h.b16 %v75
  %v439 = vunpack.c.l.b16 %v76
  %v440 = vunpack.c.h.b16 %v76
  %v441 = vunpack.c.l.b16 %v77
  %v442 = vunpack.c.h.b16 %v77
  %v443 = vunpack.c.l.b16 %v78
  %v444 = vunpack.c.h.b16 %v78
  %v445 = vunpack.c.l.b16 %v79
  %v446 = vunpack.c.l.b16 %v80
  %v447 = vunpack.c.h.b16 %v80
  %v448 = vunpack.c.l.b16 %v81
  %v449 = vunpack.c.h.b16 %v81
  %v450 = vunpack.c.l.b16 %v82
  %v451 = vunpack.c.h.b16 %v82
  %v452 = vunpack.c.l.b16 %v83
  %v453 = vunpack.c.h.b16 %v83
  %v454 = vunpack.c.l.b16 %v84
  %v455 = vunpack.c.l.b16 %v85
  %v456 = vunpack.c.h.b16 %v85
  %v457 = vunpack.c.l.b16 %v86
  %v458 = vunpack.c.h.b16 %v86
  %v459 = vunpack.c.l.b16 %v87
  %v460 = vunpack.c.h.b16 %v87
  %v461 = vunpack.c.l.b16 %v88
  %v462 = vunpack.c.h.b16 %v88
  %v463 = vunpack.c.l.b16 %v89
  %v464 = vunpack.c.l.b16 %v90
  %v465 = vunpack.c.h.b16 %v90
  %v466 = vunpack.c.l.b16 %v91
  %v467 = vunpack.c.h.b16 %v91
  %v468 = vunpack.c.l.b16 %v92
  %v469 = vunpack.c.h.b16 %v92
  %v470 = vunpack.c.l.b16 %v93
  %v471 = vunpack.c.h.b16 %v93
  %v472 = vunpack.c.l.b16 %v94
  %v473 = vpack.c.b16 %v338, %v329
  %v474 = vpack.c.b16 %v339, %v330
  %v475 = vpack.c.b16 %v340, %v331
  %v476 = vpack.c.b16 %v341, %v332
  %v477 = vpack.c.b16 %v342, %v333
  %v478 = vpack.c.b16 %v343, %v334
  %v479 = vpack.c.b16 %v344, %v335
  %v480 = vpack.c.b16 %v345, %v336
  %v481 = vpack.c.b16 %v346, %v337
  %v482 = vpack.c.b16 %v356, %v347
  %v483 = vpack.c.b16 %v357, %v348
  %v484 = vpack.c.b16 %v358, %v349
  %v485 = vpack.c.b16 %v359, %v350
  %v486 = vpack.c.b16 %v360, %v351
  %v487 = vpack.c.b16 %v361, %v352
  %v488 = vpack.c.b16 %v362, %v353
  %v489 = vpack.c.b16 %v363, %v354
  %v490 = vpack.c.b16 %v364, %v355
  %v491 = vpack.c.b16 %v374, %v365
  %v492 = vpack.c.b16 %v375, %v366
  %v493 = vpack.c.b16 %v376, %v367
  %v494 = vpack.c.b16 %v377, %v368
  %v495 = vpack.c.b16 %v378, %v369
  %v496 = vpack.c.b16 %v379, %v370
  %v497 = vpack.c.b16 %v380, %v371
  %v498 = vpack.c.b16 %v381, %v372
  %v499 = vpack.c.b16 %v382, %v373
  %v500 = vpack.c.b16 %v392, %v383
  %v501 = vpack.c.b16 %v393, %v384
  %v502 = vpack.c.b16 %v394, %v385
  %v503 = vpack.c.b16 %v395, %v386
  %v504 = vpack.c.b16 %v396, %v387
  %v505 = vpack.c.b16 %v397, %v388
  %v506 = vpack.c.b16 %v398, %v389
  %v507 = vpack.c.b16 %v399, %v390
  %v508 = vpack.c.b16 %v400, %v391
  %v509 = vpack.c.b16 %v410, %v401
  %v510 = vpack.c.b16 %v411, %v402
  %v511 = vpack.c.b16 %v412, %v403
  %v512 = vpack.c.b16 %v413, %v404
  %v513 = vpack.c.b16 %v414, %v405
  %v514 = vpack.c.b16 %v415, %v406
  %v515 = vpack.c.b16 %v416, %v407
  %v516 = vpack.c.b16 %v417, %v408
  %v517 = vpack.c.b16 %v418, %v409
  %v518 = vpack.c.b16 %v428, %v419
  %v519 = vpack.c.b16 %v429, %v420
  %v520 = vpack.c.b16 %v430, %v421
  %v521 = vpack.c.b16 %v431, %v422
  %v522 = vpack.c.b16 %v432, %v423
  %v523 = vpack.c.b16 %v433, %v424
  %v524 = vpack.c.b16 %v434, %v425
  %v525 = vpack.c.b16 %v435, %v426
  %v526 = vpack.c.b16 %v436, %v427
  %v527 = vpack.c.b16 %v446, %v437
  %v528 = vpack.c.b16 %v447, %v438
  %v529 = vpack.c.b16 %v448, %v439
  %v530 = vpack.c.b16 %v449, %v440
  %v531 = vpack.c.b16 %v450, %v441
  %v532 = vpack.c.b16 %v451, %v442
  %v533 = vpack.c.b16 %v452, %v443
  %v534 = vpack.c.b16 %v453, %v444
  %v535 = vpack.c.b16 %v454, %v445
  %v536 = vpack.c.b16 %v464, %v455
  %v537 = vpack.c.b16 %v465, %v456
  %v538 = vpack.c.b16 %v466, %v457
  %v539 = vpack.c.b16 %v467, %v458
  %v540 = vpack.c.b16 %v468, %v459
  %v541 = vpack.c.b16 %v469, %v460
  %v542 = vpack.c.b16 %v470, %v461
  %v543 = vpack.c.b16 %v471, %v462
  %v544 = vpack.c.b16 %v472, %v463
  %v761 = vunpack.c.l.b16 %v95
  %v762 = vunpack.c.h.b16 %v95
  %v763 = vunpack.c.l.b16 %v96
  %v764 = vunpack.c.h.b16 %v96
  %v765 = vunpack.c.l.b16 %v97
  %v766 = vunpack.c.h.b16 %v97
  %v767 = vunpack.c.l.b16 %v98
  %v768 = vunpack.c.h.b16 %v98
  %v769 = vunpack.c.l.b16 %v99
  %v770 = vunpack.c.h.b16 %v99
  %v771 = vunpack.c.l.b16 %v100
  %v772 = vunpack.c.h.b16 %v100
  %v773 = vunpack.c.l.b16 %v101
  %v774 = vunpack.c.h.b16 %v101
  %v775 = vunpack.c.l.b16 %v102
  %v776 = vunpack.c.h.b16 %v102
  %v777 = vunpack.c.l.b16 %v103
  %v778 = vunpack.c.h.b16 %v103
  %v779 = vunpack.c.l.b16 %v104
  %v780 = vunpack.c.h.b16 %v104
  %v781 = vunpack.c.l.b16 %v105
  %v782 = vunpack.c.h.b16 %v105
  %v783 = vunpack.c.l.b16 %v106
  %v784 = vunpack.c.h.b16 %v106
  %v785 = vunpack.c.l.b16 %v107
  %v786 = vunpack.c.h.b16 %v107
  %v787 = vunpack.c.l.b16 %v108
  %v788 = vunpack.c.h.b16 %v108
  %v789 = vunpack.c.l.b16 %v109
  %v790 = vunpack.c.h.b16 %v109
  %v791 = vunpack.c.l.b16 %v110
  %v792 = vunpack.c.h.b16 %v110
  %v793 = vunpack.c.l.b16 %v111
  %v794 = vunpack.c.h.b16 %v111
  %v795 = vunpack.c.l.b16 %v112
  %v796 = vunpack.c.h.b16 %v112
  %v797 = vunpack.c.l.b16 %v113
  %v798 = vunpack.c.h.b16 %v113
  %v799 = vunpack.c.l.b16 %v114
  %v800 = vunpack.c.h.b16 %v114
  %v801 = vunpack.c.l.b16 %v115
  %v802 = vunpack.c.h.b16 %v115
  %v803 = vunpack.c.l.b16 %v116
  %v804 = vunpack.c.h.b16 %v116
  %v805 = vunpack.c.l.b16 %v117
  %v806 = vunpack.c.h.b16 %v117
  %v807 = vunpack.c.l.b16 %v118
  %v808 = vunpack.c.h.b16 %v118
  %v809 = vunpack.c.l.b16 %v119
  %v810 = vunpack.c.h.b16 %v119
  %v811 = vunpack.c.l.b16 %v120
  %v812 = vunpack.c.h.b16 %v120
  %v813 = vunpack.c.l.b16 %v121
  %v814 = vunpack.c.h.b16 %v121
  %v815 = vunpack.c.l.b16 %v122
  %v816 = vunpack.c.h.b16 %v122
  %v817 = vunpack.c.l.b16 %v123
  %v818 = vunpack.c.h.b16 %v123
  %v819 = vunpack.c.l.b16 %v124
  %v820 = vunpack.c.h.b16 %v124
  %v821 = vunpack.c.l.b16 %v125
  %v822 = vunpack.c.h.b16 %v125
  %v823 = vunpack.c.l.b16 %v126
  %v824 = vunpack.c.h.b16 %v126
  %v825 = vunpack.c.l.b16 %v127
  %v826 = vunpack.c.h.b16 %v127
  %v827 = vunpack.c.l.b16 %v128
  %v828 = vunpack.c.h.b16 %v128
  %v829 = vunpack.c.l.b16 %v129
  %v830 = vunpack.c.h.b16 %v129
  %v831 = vunpack.c.l.b16 %v130
  %v832 = vunpack.c.h.b16 %v130
  %v833 = vunpack.c.l.b16 %v131
  %v834 = vunpack.c.h.b16 %v131
  %v835 = vunpack.c.l.b16 %v132
  %v836 = vunpack.c.h.b16 %v132
  %v837 = vunpack.c.l.b16 %v133
  %v838 = vunpack.c.h.b16 %v133
  %v839 = vunpack.c.l.b16 %v134
  %v840 = vunpack.c.h.b16 %v134
  %v841 = vunpack.c.l.b16 %v135
  %v842 = vunpack.c.h.b16 %v135
  %v843 = vunpack.c.l.b16 %v136
  %v844 = vunpack.c.h.b16 %v136
  %v845 = vunpack.c.l.b16 %v137
  %v846 = vunpack.c.h.b16 %v137
  %v847 = vunpack.c.l.b16 %v138
  %v848 = vunpack.c.h.b16 %v138
  %v849 = vunpack.c.l.b16 %v139
  %v850 = vunpack.c.h.b16 %v139
  %v851 = vunpack.c.l.b16 %v140
  %v852 = vunpack.c.h.b16 %v140
  %v853 = vunpack.c.l.b16 %v141
  %v854 = vunpack.c.h.b16 %v141
  %v855 = vunpack.c.l.b16 %v142
  %v856 = vunpack.c.h.b16 %v142
  %v857 = vunpack.c.l.b16 %v143
  %v858 = vunpack.c.h.b16 %v143
  %v859 = vunpack.c.l.b16 %v144
  %v860 = vunpack.c.h.b16 %v144
  %v861 = vunpack.c.l.b16 %v145
  %v862 = vunpack.c.h.b16 %v145
  %v863 = vunpack.c.l.b16 %v146
  %v864 = vunpack.c.h.b16 %v146
  %v865 = vunpack.c.l.b16 %v147
  %v866 = vunpack.c.h.b16 %v147
  %v867 = vunpack.c.l.b16 %v148
  %v868 = vunpack.c.h.b16 %v148
  %v869 = vunpack.c.l.b16 %v149
  %v870 = vunpack.c.h.b16 %v149
  %v871 = vunpack.c.l.b16 %v150
  %v872 = vunpack.c.h.b16 %v150
  %v873 = vunpack.c.l.b16 %v151
  %v874 = vunpack.c.h.b16 %v151
  %v875 = vunpack.c.l.b16 %v152
  %v876 = vunpack.c.h.b16 %v152
  %v877 = vunpack.c.l.b16 %v153
  %v878 = vunpack.c.h.b16 %v153
  %v879 = vunpack.c.l.b16 %v154
  %v880 = vunpack.c.h.b16 %v154
  %v881 = vunpack.c.l.b16 %v155
  %v882 = vunpack.c.h.b16 %v155
  %v883 = vunpack.c.l.b16 %v156
  %v884 = vunpack.c.h.b16 %v156
  %v885 = vunpack.c.l.b16 %v157
  %v886 = vunpack.c.h.b16 %v157
  %v887 = vunpack.c.l.b16 %v158
  %v888 = vunpack.c.h.b16 %v158
  %v889 = vunpack.c.l.b16 %v159
  %v890 = vunpack.c.h.b16 %v159
  %v891 = vunpack.c.l.b16 %v160
  %v892 = vunpack.c.h.b16 %v160
  %v893 = vunpack.c.l.b16 %v161
  %v894 = vunpack.c.h.b16 %v161
  %v895 = vunpack.c.l.b16 %v162
  %v896 = vunpack.c.h.b16 %v162
  %v897 = vunpack.c.l.b16 %v163
  %v898 = vunpack.c.h.b16 %v163
  %v899 = vunpack.c.l.b16 %v164
  %v900 = vunpack.c.h.b16 %v164
  %v901 = vunpack.c.l.b16 %v165
  %v902 = vunpack.c.h.b16 %v165
  %v903 = vunpack.c.l.b16 %v166
  %v904 = vunpack.c.h.b16 %v166
  %v905 = vunpack.c.l.b16 %v167
  %v906 = vunpack.c.h.b16 %v167
  %v907 = vunpack.c.l.b16 %v168
  %v908 = vunpack.c.h.b16 %v168
  %v909 = vunpack.c.l.b16 %v169
  %v910 = vunpack.c.h.b16 %v169
  %v911 = vunpack.c.l.b16 %v170
  %v912 = vunpack.c.h.b16 %v170
  %v913 = vunpack.c.l.b16 %v171
  %v914 = vunpack.c.h.b16 %v171
  %v915 = vunpack.c.l.b16 %v172
  %v916 = vunpack.c.h.b16 %v172
  %v917 = vunpack.c.l.b16 %v173
  %v918 = vunpack.c.h.b16 %v173
  %v919 = vunpack.c.l.b16 %v174
  %v920 = vunpack.c.h.b16 %v174
  %v921 = vunpack.c.l.b16 %v175
  %v922 = vunpack.c.h.b16 %v175
  %v923 = vunpack.c.l.b16 %v176
  %v924 = vunpack.c.h.b16 %v176
  %v925 = vunpack.c.l.b16 %v177
  %v926 = vunpack.c.h.b16 %v177
  %v927 = vunpack.c.l.b16 %v178
  %v928 = vunpack.c.h.b16 %v178
  %v929 = vunpack.c.l.b16 %v179
  %v930 = vunpack.c.h.b16 %v179
  %v931 = vunpack.c.l.b16 %v180
  %v932 = vunpack.c.h.b16 %v180
  %v933 = vunpack.c.l.b16 %v181
  %v934 = vunpack.c.h.b16 %v181
  %v935 = vunpack.c.l.b16 %v182
  %v936 = vunpack.c.h.b16 %v182
  %v937 = vunpack.c.l.b16 %v183
  %v938 = vunpack.c.h.b16 %v183
  %v939 = vunpack.c.l.b16 %v184
  %v940 = vunpack.c.h.b16 %v184
  %v941 = vunpack.c.l.b16 %v185
  %v942 = vunpack.c.h.b16 %v185
  %v943 = vunpack.c.l.b16 %v186
  %v944 = vunpack.c.h.b16 %v186
  %v945 = vunpack.c.l.b16 %v187
  %v946 = vunpack.c.h.b16 %v187
  %v947 = vunpack.c.l.b16 %v188
  %v948 = vunpack.c.h.b16 %v188
  %v949 = vunpack.c.l.b16 %v189
  %v950 = vunpack.c.h.b16 %v189
  %v951 = vunpack.c.l.b16 %v190
  %v952 = vunpack.c.h.b16 %v190
  %v953 = vunpack.c.l.b16 %v191
  %v954 = vunpack.c.h.b16 %v191
  %v955 = vunpack.c.l.b16 %v192
  %v956 = vunpack.c.h.b16 %v192
  %v957 = vunpack.c.l.b16 %v193
  %v958 = vunpack.c.h.b16 %v193
  %v959 = vunpack.c.l.b16 %v194
  %v960 = vunpack.c.h.b16 %v194
  %v961 = vunpack.c.l.b16 %v195
  %v962 = vunpack.c.h.b16 %v195
  %v963 = vunpack.c.l.b16 %v196
  %v964 = vunpack.c.h.b16 %v196
  %v965 = vunpack.c.l.b16 %v197
  %v966 = vunpack.c.h.b16 %v197
  %v967 = vunpack.c.l.b16 %v198
  %v968 = vunpack.c.h.b16 %v198
  %v969 = vunpack.c.l.b16 %v199
  %v970 = vunpack.c.h.b16 %v199
  %v971 = vunpack.c.l.b16 %v200
  %v972 = vunpack.c.h.b16 %v200
  %v973 = vunpack.c.l.b16 %v201
  %v974 = vunpack.c.h.b16 %v201
  %v975 = vunpack.c.l.b16 %v202
  %v976 = vunpack.c.h.b16 %v202
  %v977 = vunpack.c.l.b16 %v203
  %v978 = vunpack.c.h.b16 %v203
  %v979 = vunpack.c.l.b16 %v204
  %v980 = vunpack.c.h.b16 %v204
  %v981 = vunpack.c.l.b16 %v205
  %v982 = vunpack.c.h.b16 %v205
  %v983 = vunpack.c.l.b16 %v206
  %v984 = vunpack.c.h.b16 %v206
  %v985 = vunpack.c.l.b16 %v207
  %v986 = vunpack.c.h.b16 %v207
  %v987 = vunpack.c.l.b16 %v208
  %v988 = vunpack.c.h.b16 %v208
  %v989 = vunpack.c.l.b16 %v209
  %v990 = vunpack.c.h.b16 %v209
  %v991 = vunpack.c.l.b16 %v210
  %v992 = vunpack.c.h.b16 %v210
  %v993 = vunpack.c.l.b16 %v211
  %v994 = vunpack.c.h.b16 %v211
  %v995 = vunpack.c.l.b16 %v212
  %v996 = vunpack.c.h.b16 %v212
  %v997 = vunpack.c.l.b16 %v213
  %v998 = vunpack.c.h.b16 %v213
  %v999 = vunpack.c.l.b16 %v214
  %v1000 = vunpack.c.h.b16 %v214
  %v1001 = vunpack.c.l.b16 %v215
  %v1002 = vunpack.c.h.b16 %v215
  %v1003 = vunpack.c.l.b16 %v216
  %v1004 = vunpack.c.h.b16 %v216
  %v1005 = vunpack.c.l.b16 %v217
  %v1006 = vunpack.c.h.b16 %v217
  %v1007 = vunpack.c.l.b16 %v218
  %v1008 = vunpack.c.h.b16 %v218
  %v1009 = vunpack.c.l.b16 %v219
  %v1010 = vunpack.c.h.b16 %v219
  %v1011 = vunpack.c.l.b16 %v220
  %v1012 = vunpack.c.h.b16 %v220
  %v1013 = vunpack.c.l.b16 %v221
  %v1014 = vunpack.c.h.b16 %v221
  %v1015 = vunpack.c.l.b16 %v222
  %v1016 = vunpack.c.h.b16 %v222
  %v1017 = vunpack.c.l.b16 %v223
  %v1018 = vunpack.c.h.b16 %v223
  %v1019 = vunpack.c.l.b16 %v224
  %v1020 = vunpack.c.h.b16 %v224
  %v1021 = vunpack.c.l.b16 %v225
  %v1022 = vunpack.c.h.b16 %v225
  %v1023 = vunpack.c.l.b16 %v226
  %v1024 = vunpack.c.h.b16 %v226
  %v1025 = vunpack.c.l.b16 %v227
  %v1026 = vunpack.c.h.b16 %v227
  %v1027 = vunpack.c.l.b16 %v228
  %v1028 = vunpack.c.h.b16 %v228
  %v1029 = vunpack.c.l.b16 %v229
  %v1030 = vunpack.c.h.b16 %v229
  %v1031 = vunpack.c.l.b16 %v230
  %v1032 = vunpack.c.h.b16 %v230
  %v1033 = vunpack.c.l.b16 %v231
  %v1034 = vunpack.c.h.b16 %v231
  %v1035 = vunpack.c.l.b16 %v232
  %v1036 = vunpack.c.h.b16 %v232
  %v1037 = vunpack.c.l.b16 %v233
  %v1038 = vunpack.c.h.b16 %v233
  %v1039 = vunpack.c.l.b16 %v234
  %v1040 = vunpack.c.h.b16 %v234
  %v1041 = vunpack.c.l.b16 %v235
  %v1042 = vunpack.c.h.b16 %v235
  %v1043 = vunpack.c.l.b16 %v236
  %v1044 = vunpack.c.h.b16 %v236
  %v1045 = vunpack.c.l.b16 %v237
  %v1046 = vunpack.c.h.b16 %v237
  %v1047 = vunpack.c.l.b16 %v238
  %v1048 = vunpack.c.h.b16 %v238
  %v1049 = vpack.c.b16 %v763, %v761
  %v1050 = vpack.c.b16 %v764, %v762
  %v1051 = vpack.c.b16 %v767, %v765
  %v1052 = vpack.c.b16 %v768, %v766
  %v1053 = vpack.c.b16 %v771, %v769
  %v1054 = vpack.c.b16 %v772, %v770
  %v1055 = vpack.c.b16 %v775, %v773
  %v1056 = vpack.c.b16 %v776, %v774
  %v1057 = vpack.c.b16 %v779, %v777
  %v1058 = vpack.c.b16 %v780, %v778
  %v1059 = vpack.c.b16 %v783, %v781
  %v1060 = vpack.c.b16 %v784, %v782
  %v1061 = vpack.c.b16 %v787, %v785
  %v1062 = vpack.c.b16 %v788, %v786
  %v1063 = vpack.c.b16 %v791, %v789
  %v1064 = vpack.c.b16 %v792, %v790
  %v1065 = vpack.c.b16 %v795, %v793
  %v1066 = vpack.c.b16 %v796, %v794
  %v1067 = vpack.c.b16 %v799, %v797
  %v1068 = vpack.c.b16 %v800, %v798
  %v1069 = vpack.c.b16 %v803, %v801
  %v1070 = vpack.c.b16 %v804, %v802
  %v1071 = vpack.c.b16 %v807, %v805
  %v1072 = vpack.c.b16 %v808, %v806
  %v1073 = vpack.c.b16 %v811, %v809
  %v1074 = vpack.c.b16 %v812, %v810
  %v1075 = vpack.c.b16 %v815, %v813
  %v1076 = vpack.c.b16 %v816, %v814
  %v1077 = vpack.c.b16 %v819, %v817
  %v1078 = vpack.c.b16 %v820, %v818
  %v1079 = vpack.c.b16 %v823, %v821
  %v1080 = vpack.c.b16 %v824, %v822
  %v1081 = vpack.c.b16 %v827, %v825
  %v1082 = vpack.c.b16 %v828, %v826
  %v1083 = vpack.c.b16 %v831, %v829
  %v1084 = vpack.c.b16 %v832, %v830
  %v1085 = vpack.c.b16 %v835, %v833
  %v1086 = vpack.c.b16 %v836, %v834
  %v1087 = vpack.c.b16 %v839, %v837
  %v1088 = vpack.c.b16 %v840, %v838
  %v1089 = vpack.c.b16 %v843, %v841
  %v1090 = vpack.c.b16 %v844, %v842
  %v1091 = vpack.c.b16 %v847, %v845
  %v1092 = vpack.c.b16 %v848, %v846
  %v1093 = vpack.c.b16 %v851, %v849
  %v1094 = vpack.c.b16 %v852, %v850
  %v1095 = vpack.c.b16 %v855, %v853
  %v1096 = vpack.c.b16 %v856, %v854
  %v1097 = vpack.c.b16 %v859, %v857
  %v1098 = vpack.c.b16 %v860, %v858
  %v1099 = vpack.c.b16 %v863, %v861
  %v1100 = vpack.c.b16 %v864, %v862
  %v1101 = vpack.c.b16 %v867, %v865
  %v1102 = vpack.c.b16 %v868, %v866
  %v1103 = vpack.c.b16 %v871, %v869
  %v1104 = vpack.c.b16 %v872, %v870
  %v1105 = vpack.c.b16 %v875, %v873
  %v1106 = vpack.c.b16 %v876, %v874
  %v1107 = vpack.c.b16 %v879, %v877
  %v1108 = vpack.c.b16 %v880, %v878
  %v1109 = vpack.c.b16 %v883, %v881
  %v1110 = vpack.c.b16 %v884, %v882
  %v1111 = vpack.c.b16 %v887, %v885
  %v1112 = vpack.c.b16 %v888, %v886
  %v1113 = vpack.c.b16 %v891, %v889
  %v1114 = vpack.c.b16 %v892, %v890
  %v1115 = vpack.c.b16 %v895, %v893
  %v1116 = vpack.c.b16 %v896, %v894
  %v1117 = vpack.c.b16 %v899, %v897
  %v1118 = vpack.c.b16 %v900, %v898
  %v1119 = vpack.c.b16 %v903, %v901
  %v1120 = vpack.c.b16 %v904, %v902
  %v1121 = vpack.c.b16 %v907, %v905
  %v1122 = vpack.c.b16 %v908, %v906
  %v1123 = vpack.c.b16 %v911, %v909
  %v1124 = vpack.c.b16 %v912, %v910
  %v1125 = vpack.c.b16 %v915, %v913
  %v1126 = vpack.c.b16 %v916, %v914
  %v1127 = vpack.c.b16 %v919, %v917
  %v1128 = vpack.c.b16 %v920, %v918
  %v1129 = vpack.c.b16 %v923, %v921
  %v1130 = vpack.c.b16 %v924, %v922
  %v1131 = vpack.c.b16 %v927, %v925
  %v1132 = vpack.c.b16 %v928, %v926
  %v1133 = vpack.c.b16 %v931, %v929
  %v1134 = vpack.c.b16 %v932, %v930
  %v1135 = vpack.c.b16 %v935, %v933
  %v1136 = vpack.c.b16 %v936, %v934
  %v1137 = vpack.c.b16 %v939, %v937
  %v1138 = vpack.c.b16 %v940, %v938
  %v1139 = vpack.c.b16 %v943, %v941
  %v1140 = vpack.c.b16 %v944, %v942
  %v1141 = vpack.c.b16 %v947, %v945
  %v1142 = vpack.c.b16 %v948, %v946
  %v1143 = vpack.c.b16 %v951, %v949
  %v1144 = vpack.c.b16 %v952, %v950
  %v1145 = vpack.c.b16 %v955, %v953
  %v1146 = vpack.c.b16 %v956, %v954
  %v1147 = vpack.c.b16 %v959, %v957
  %v1148 = vpack.c.b16 %v960, %v958
  %v1149 = vpack.c.b16 %v963, %v961
  %v1150 = vpack.c.b16 %v964, %v962
  %v1151 = vpack.c.b16 %v967, %v965
  %v1152 = vpack.c.b16 %v968, %v966
  %v1153 = vpack.c.b16 %v971, %v969
  %v1154 = vpack.c.b16 %v972, %v970
  %v1155 = vpack.c.b16 %v975, %v973
  %v1156 = vpack.c.b16 %v976, %v974
  %v1157 = vpack.c.b16 %v979, %v977
  %v1158 = vpack.c.b16 %v980, %v978
  %v1159 = vpack.c.b16 %v983, %v981
  %v1160 = vpack.c.b16 %v984, %v982
  %v1161 = vpack.c.b16 %v987, %v985
  %v1162 = vpack.c.b16 %v988, %v986
  %v1163 = vpack.c.b16 %v991, %v989
  %v1164 = vpack.c.b16 %v992, %v990
  %v1165 = vpack.c.b16 %v995, %v993
  %v1166 = vpack.c.b16 %v996, %v994
  %v1167 = vpack.c.b16 %v999, %v997
  %v1168 = vpack.c.b16 %v1000, %v998
  %v1169 = vpack.c.b16 %v1003, %v1001
  %v1170 = vpack.c.b16 %v1004, %v1002
  %v1171 = vpack.c.b16 %v1007, %v1005
  %v1172 = vpack.c.b16 %v1008, %v1006
  %v1173 = vpack.c.b16 %v1011, %v1009
  %v1174 = vpack.c.b16 %v1012, %v1010
  %v1175 = vpack.c.b16 %v1015, %v1013
  %v1176 = vpack.c.b16 %v1016, %v1014
  %v1177 = vpack.c.b16 %v1019, %v1017
  %v1178 = vpack.c.b16 %v1020, %v1018
  %v1179 = vpack.c.b16 %v1023, %v1021
  %v1180 = vpack.c.b16 %v1024, %v1022
  %v1181 = vpack.c.b16 %v1027, %v1025
  %v1182 = vpack.c.b16 %v1028, %v1026
  %v1183 = vpack.c.b16 %v1031, %v1029
  %v1184 = vpack.c.b16 %v1032, %v1030
  %v1185 = vpack.c.b16 %v1035, %v1033
  %v1186 = vpack.c.b16 %v1036, %v1034
  %v1187 = vpack.c.b16 %v1039, %v1037
  %v1188 = vpack.c.b16 %v1040, %v1038
  %v1189 = vpack.c.b16 %v1043, %v1041
  %v1190 = vpack.c.b16 %v1044, %v1042
  %v1191 = vpack.c.b16 %v1047, %v1045
  %v1192 = vpack.c.b16 %v1048, %v1046
  %1337 = vmatprep.subr.bf16.mxu0 %v1050
  %1338 = vmatpush1.bf16.msra.mxu0 %v1049
  %1339 = vmatprep.subr.bf16.mxu0 %v1052
  %1340 = vmatpush1.bf16.msra.mxu0 %v1051
  %1341 = vmatprep.subr.bf16.mxu0 %v1054
  %1342 = vmatpush1.bf16.msra.mxu0 %v1053
  %1343 = vmatprep.subr.bf16.mxu0 %v1056
  %1344 = vmatpush1.bf16.msra.mxu0 %v1055
  %1345 = vmatprep.subr.bf16.mxu0 %v1058
  %1346 = vmatpush1.bf16.msra.mxu0 %v1057
  %1347 = vmatprep.subr.bf16.mxu0 %v1060
  %1348 = vmatpush1.bf16.msra.mxu0 %v1059
  %1349 = vmatprep.subr.bf16.mxu0 %v1062
  %1350 = vmatpush1.bf16.msra.mxu0 %v1061
  %1351 = vmatprep.subr.bf16.mxu0 %v1064
  %1352 = vmatpush1.bf16.msra.mxu0 %v1063
  %1353 = vmatprep.subr.bf16.mxu0 %v1066
  %1354 = vmatpush1.bf16.msra.mxu0 %v1065
  %1355 = vmatprep.subr.bf16.mxu0 %v1068
  %1356 = vmatpush1.bf16.msra.mxu0 %v1067
  %1357 = vmatprep.subr.bf16.mxu0 %v1070
  %1358 = vmatpush1.bf16.msra.mxu0 %v1069
  %1359 = vmatprep.subr.bf16.mxu0 %v1072
  %1360 = vmatpush1.bf16.msra.mxu0 %v1071
  %1361 = vmatprep.subr.bf16.mxu0 %v1074
  %1362 = vmatpush1.bf16.msra.mxu0 %v1073
  %1363 = vmatprep.subr.bf16.mxu0 %v1076
  %1364 = vmatpush1.bf16.msra.mxu0 %v1075
  %1365 = vmatprep.subr.bf16.mxu0 %v1078
  %1366 = vmatpush1.bf16.msra.mxu0 %v1077
  %1367 = vmatprep.subr.bf16.mxu0 %v1080
  %1368 = vmatpush1.bf16.msra.mxu0 %v1079
  %1369 = vmatprep.mubr.bf16.mxu0 %v474
  %1370 = vmatmul.mubr.bf16.gmra.mrb[0].mxu0 %v473
  %v1371 = vpop.f32.mrb[0].mxu0
  %v1372 = vadd.f32 %v244, %v1371
  %v1373 = vpop.f32.mrb[0].mxu0
  %v1374 = vadd.f32 %v248, %v1373
  %v1375 = vpop.f32.mrb[0].mxu0
  %v1376 = vadd.f32 %v244, %v1375
  %v1377 = vpop.f32.mrb[0].mxu0
  %v1378 = vadd.f32 %v248, %v1377
  %1379 = vmatprep.mubr.bf16.mxu0 %v483
  %1380 = vmatmul.mubr.bf16.gmra.mrb[0].mxu0 %v482
  %v1381 = vpop.f32.mrb[0].mxu0
  %v1382 = vadd.f32 %v244, %v1381
  %v1383 = vpop.f32.mrb[0].mxu0
  %v1384 = vadd.f32 %v248, %v1383
  %v1385 = vpop.f32.mrb[0].mxu0
  %v1386 = vadd.f32 %v244, %v1385
  %v1387 = vpop.f32.mrb[0].mxu0
  %v1388 = vadd.f32 %v248, %v1387
  %1389 = vmatprep.mubr.bf16.mxu0 %v492
  %1390 = vmatmul.mubr.bf16.gmra.mrb[0].mxu0 %v491
  %v1391 = vpop.f32.mrb[0].mxu0
  %v1392 = vadd.f32 %v244, %v1391
  %v1393 = vpop.f32.mrb[0].mxu0
  %v1394 = vadd.f32 %v248, %v1393
  %v1395 = vpop.f32.mrb[0].mxu0
  %v1396 = vadd.f32 %v244, %v1395
  %v1397 = vpop.f32.mrb[0].mxu0
  %v1398 = vadd.f32 %v248, %v1397
  %1399 = vmatprep.mubr.bf16.mxu0 %v501
  %1400 = vmatmul.mubr.bf16.gmra.mrb[0].mxu0 %v500
  %v1401 = vpop.f32.mrb[0].mxu0
  %v1402 = vadd.f32 %v244, %v1401
  %v1403 = vpop.f32.mrb[0].mxu0
  %v1404 = vadd.f32 %v248, %v1403
  %v1405 = vpop.f32.mrb[0].mxu0
  %v1406 = vadd.f32 %v244, %v1405
  %v1407 = vpop.f32.mrb[0].mxu0
  %v1408 = vadd.f32 %v248, %v1407
  %1409 = vmatprep.mubr.bf16.mxu0 %v510
  %1410 = vmatmul.mubr.bf16.gmra.mrb[0].mxu0 %v509
  %v1411 = vpop.f32.mrb[0].mxu0
  %v1412 = vadd.f32 %v244, %v1411
  %v1413 = vpop.f32.mrb[0].mxu0
  %v1414 = vadd.f32 %v248, %v1413
  %v1415 = vpop.f32.mrb[0].mxu0
  %v1416 = vadd.f32 %v244, %v1415
  %v1417 = vpop.f32.mrb[0].mxu0
  %v1418 = vadd.f32 %v248, %v1417
  %1419 = vmatprep.mubr.bf16.mxu0 %v519
  %1420 = vmatmul.mubr.bf16.gmra.mrb[0].mxu0 %v518
  %v1421 = vpop.f32.mrb[0].mxu0
  %v1422 = vadd.f32 %v244, %v1421
  %v1423 = vpop.f32.mrb[0].mxu0
  %v1424 = vadd.f32 %v248, %v1423
  %v1425 = vpop.f32.mrb[0].mxu0
  %v1426 = vadd.f32 %v244, %v1425
  %v1427 = vpop.f32.mrb[0].mxu0
  %v1428 = vadd.f32 %v248, %v1427
  %1429 = vmatprep.mubr.bf16.mxu0 %v528
  %1430 = vmatmul.mubr.bf16.gmra.mrb[0].mxu0 %v527
  %v1431 = vpop.f32.mrb[0].mxu0
  %v1432 = vadd.f32 %v244, %v1431
  %v1433 = vpop.f32.mrb[0].mxu0
  %v1434 = vadd.f32 %v248, %v1433
  %v1435 = vpop.f32.mrb[0].mxu0
  %v1436 = vadd.f32 %v244, %v1435
  %v1437 = vpop.f32.mrb[0].mxu0
  %v1438 = vadd.f32 %v248, %v1437
  %1439 = vmatprep.mubr.bf16.mxu0 %v537
  %1440 = vmatmul.mubr.bf16.gmra.mrb[0].mxu0 %v536
  %v1441 = vpop.f32.mrb[0].mxu0
  %v1442 = vadd.f32 %v244, %v1441
  %v1443 = vpop.f32.mrb[0].mxu0
  %v1444 = vadd.f32 %v248, %v1443
  %v1445 = vpop.f32.mrb[0].mxu0
  %v1446 = vadd.f32 %v244, %v1445
  %v1447 = vpop.f32.mrb[0].mxu0
  %v1448 = vadd.f32 %v248, %v1447
  %1449 = vdwg.mxu0
  %1450 = vmatprep.subr.bf16.mxu0 %v1082
  %1451 = vmatpush1.bf16.msra.mxu0 %v1081
  %1452 = vmatprep.subr.bf16.mxu0 %v1084
  %1453 = vmatpush1.bf16.msra.mxu0 %v1083
  %1454 = vmatprep.subr.bf16.mxu0 %v1086
  %1455 = vmatpush1.bf16.msra.mxu0 %v1085
  %1456 = vmatprep.subr.bf16.mxu0 %v1088
  %1457 = vmatpush1.bf16.msra.mxu0 %v1087
  %1458 = vmatprep.subr.bf16.mxu0 %v1090
  %1459 = vmatpush1.bf16.msra.mxu0 %v1089
  %1460 = vmatprep.subr.bf16.mxu0 %v1092
  %1461 = vmatpush1.bf16.msra.mxu0 %v1091
  %1462 = vmatprep.subr.bf16.mxu0 %v1094
  %1463 = vmatpush1.bf16.msra.mxu0 %v1093
  %1464 = vmatprep.subr.bf16.mxu0 %v1096
  %1465 = vmatpush1.bf16.msra.mxu0 %v1095
  %1466 = vmatprep.subr.bf16.mxu0 %v1098
  %1467 = vmatpush1.bf16.msra.mxu0 %v1097
  %1468 = vmatprep.subr.bf16.mxu0 %v1100
  %1469 = vmatpush1.bf16.msra.mxu0 %v1099
  %1470 = vmatprep.subr.bf16.mxu0 %v1102
  %1471 = vmatpush1.bf16.msra.mxu0 %v1101
  %1472 = vmatprep.subr.bf16.mxu0 %v1104
  %1473 = vmatpush1.bf16.msra.mxu0 %v1103
  %1474 = vmatprep.subr.bf16.mxu0 %v1106
  %1475 = vmatpush1.bf16.msra.mxu0 %v1105
  %1476 = vmatprep.subr.bf16.mxu0 %v1108
  %1477 = vmatpush1.bf16.msra.mxu0 %v1107
  %1478 = vmatprep.subr.bf16.mxu0 %v1110
  %1479 = vmatpush1.bf16.msra.mxu0 %v1109
  %1480 = vmatprep.subr.bf16.mxu0 %v1112
  %1481 = vmatpush1.bf16.msra.mxu0 %v1111
  %1482 = vmatprep.mubr.bf16.mxu0 %v476
  %1483 = vmatmul.mubr.bf16.gmra.mrb[0].mxu0 %v475
  %v1484 = vpop.f32.mrb[0].mxu0
  %v1485 = vadd.f32 %v1372, %v1484
  %v1486 = vpop.f32.mrb[0].mxu0
  %v1487 = vadd.f32 %v1374, %v1486
  %v1488 = vpop.f32.mrb[0].mxu0
  %v1489 = vadd.f32 %v1376, %v1488
  %v1490 = vpop.f32.mrb[0].mxu0
  %v1491 = vadd.f32 %v1378, %v1490
  %1492 = vmatprep.mubr.bf16.mxu0 %v485
  %1493 = vmatmul.mubr.bf16.gmra.mrb[0].mxu0 %v484
  %v1494 = vpop.f32.mrb[0].mxu0
  %v1495 = vadd.f32 %v1382, %v1494
  %v1496 = vpop.f32.mrb[0].mxu0
  %v1497 = vadd.f32 %v1384, %v1496
  %v1498 = vpop.f32.mrb[0].mxu0
  %v1499 = vadd.f32 %v1386, %v1498
  %v1500 = vpop.f32.mrb[0].mxu0
  %v1501 = vadd.f32 %v1388, %v1500
  %1502 = vmatprep.mubr.bf16.mxu0 %v494
  %1503 = vmatmul.mubr.bf16.gmra.mrb[0].mxu0 %v493
  %v1504 = vpop.f32.mrb[0].mxu0
  %v1505 = vadd.f32 %v1392, %v1504
  %v1506 = vpop.f32.mrb[0].mxu0
  %v1507 = vadd.f32 %v1394, %v1506
  %v1508 = vpop.f32.mrb[0].mxu0
  %v1509 = vadd.f32 %v1396, %v1508
  %v1510 = vpop.f32.mrb[0].mxu0
  %v1511 = vadd.f32 %v1398, %v1510
  %1512 = vmatprep.mubr.bf16.mxu0 %v503
  %1513 = vmatmul.mubr.bf16.gmra.mrb[0].mxu0 %v502
  %v1514 = vpop.f32.mrb[0].mxu0
  %v1515 = vadd.f32 %v1402, %v1514
  %v1516 = vpop.f32.mrb[0].mxu0
  %v1517 = vadd.f32 %v1404, %v1516
  %v1518 = vpop.f32.mrb[0].mxu0
  %v1519 = vadd.f32 %v1406, %v1518
  %v1520 = vpop.f32.mrb[0].mxu0
  %v1521 = vadd.f32 %v1408, %v1520
  %1522 = vmatprep.mubr.bf16.mxu0 %v512
  %1523 = vmatmul.mubr.bf16.gmra.mrb[0].mxu0 %v511
  %v1524 = vpop.f32.mrb[0].mxu0
  %v1525 = vadd.f32 %v1412, %v1524
  %v1526 = vpop.f32.mrb[0].mxu0
  %v1527 = vadd.f32 %v1414, %v1526
  %v1528 = vpop.f32.mrb[0].mxu0
  %v1529 = vadd.f32 %v1416, %v1528
  %v1530 = vpop.f32.mrb[0].mxu0
  %v1531 = vadd.f32 %v1418, %v1530
  %1532 = vmatprep.mubr.bf16.mxu0 %v521
  %1533 = vmatmul.mubr.bf16.gmra.mrb[0].mxu0 %v520
  %v1534 = vpop.f32.mrb[0].mxu0
  %v1535 = vadd.f32 %v1422, %v1534
  %v1536 = vpop.f32.mrb[0].mxu0
  %v1537 = vadd.f32 %v1424, %v1536
  %v1538 = vpop.f32.mrb[0].mxu0
  %v1539 = vadd.f32 %v1426, %v1538
  %v1540 = vpop.f32.mrb[0].mxu0
  %v1541 = vadd.f32 %v1428, %v1540
  %1542 = vmatprep.mubr.bf16.mxu0 %v530
  %1543 = vmatmul.mubr.bf16.gmra.mrb[0].mxu0 %v529
  %v1544 = vpop.f32.mrb[0].mxu0
  %v1545 = vadd.f32 %v1432, %v1544
  %v1546 = vpop.f32.mrb[0].mxu0
  %v1547 = vadd.f32 %v1434, %v1546
  %v1548 = vpop.f32.mrb[0].mxu0
  %v1549 = vadd.f32 %v1436, %v1548
  %v1550 = vpop.f32.mrb[0].mxu0
  %v1551 = vadd.f32 %v1438, %v1550
  %1552 = vmatprep.mubr.bf16.mxu0 %v539
  %1553 = vmatmul.mubr.bf16.gmra.mrb[0].mxu0 %v538
  %v1554 = vpop.f32.mrb[0].mxu0
  %v1555 = vadd.f32 %v1442, %v1554
  %v1556 = vpop.f32.mrb[0].mxu0
  %v1557 = vadd.f32 %v1444, %v1556
  %v1558 = vpop.f32.mrb[0].mxu0
  %v1559 = vadd.f32 %v1446, %v1558
  %v1560 = vpop.f32.mrb[0].mxu0
  %v1561 = vadd.f32 %v1448, %v1560
  %1562 = vdwg.mxu0
  %1563 = vmatprep.subr.bf16.mxu0 %v1114
  %1564 = vmatpush1.bf16.msra.mxu0 %v1113
  %1565 = vmatprep.subr.bf16.mxu0 %v1116
  %1566 = vmatpush1.bf16.msra.mxu0 %v1115
  %1567 = vmatprep.subr.bf16.mxu0 %v1118
  %1568 = vmatpush1.bf16.msra.mxu0 %v1117
  %1569 = vmatprep.subr.bf16.mxu0 %v1120
  %1570 = vmatpush1.bf16.msra.mxu0 %v1119
  %1571 = vmatprep.subr.bf16.mxu0 %v1122
  %1572 = vmatpush1.bf16.msra.mxu0 %v1121
  %1573 = vmatprep.subr.bf16.mxu0 %v1124
  %1574 = vmatpush1.bf16.msra.mxu0 %v1123
  %1575 = vmatprep.subr.bf16.mxu0 %v1126
  %1576 = vmatpush1.bf16.msra.mxu0 %v1125
  %1577 = vmatprep.subr.bf16.mxu0 %v1128
  %1578 = vmatpush1.bf16.msra.mxu0 %v1127
  %1579 = vmatprep.subr.bf16.mxu0 %v1130
  %1580 = vmatpush1.bf16.msra.mxu0 %v1129
  %1581 = vmatprep.subr.bf16.mxu0 %v1132
  %1582 = vmatpush1.bf16.msra.mxu0 %v1131
  %1583 = vmatprep.subr.bf16.mxu0 %v1134
  %1584 = vmatpush1.bf16.msra.mxu0 %v1133
  %1585 = vmatprep.subr.bf16.mxu0 %v1136
  %1586 = vmatpush1.bf16.msra.mxu0 %v1135
  %1587 = vmatprep.subr.bf16.mxu0 %v1138
  %1588 = vmatpush1.bf16.msra.mxu0 %v1137
  %1589 = vmatprep.subr.bf16.mxu0 %v1140
  %1590 = vmatpush1.bf16.msra.mxu0 %v1139
  %1591 = vmatprep.subr.bf16.mxu0 %v1142
  %1592 = vmatpush1.bf16.msra.mxu0 %v1141
  %1593 = vmatprep.subr.bf16.mxu0 %v1144
  %1594 = vmatpush1.bf16.msra.mxu0 %v1143
  %1595 = vmatprep.mubr.bf16.mxu0 %v478
  %1596 = vmatmul.mubr.bf16.gmra.mrb[0].mxu0 %v477
  %v1597 = vpop.f32.mrb[0].mxu0
  %v1598 = vadd.f32 %v1485, %v1597
  %v1599 = vpop.f32.mrb[0].mxu0
  %v1600 = vadd.f32 %v1487, %v1599
  %v1601 = vpop.f32.mrb[0].mxu0
  %v1602 = vadd.f32 %v1489, %v1601
  %v1603 = vpop.f32.mrb[0].mxu0
  %v1604 = vadd.f32 %v1491, %v1603
  %1605 = vmatprep.mubr.bf16.mxu0 %v487
  %1606 = vmatmul.mubr.bf16.gmra.mrb[0].mxu0 %v486
  %v1607 = vpop.f32.mrb[0].mxu0
  %v1608 = vadd.f32 %v1495, %v1607
  %v1609 = vpop.f32.mrb[0].mxu0
  %v1610 = vadd.f32 %v1497, %v1609
  %v1611 = vpop.f32.mrb[0].mxu0
  %v1612 = vadd.f32 %v1499, %v1611
  %v1613 = vpop.f32.mrb[0].mxu0
  %v1614 = vadd.f32 %v1501, %v1613
  %1615 = vmatprep.mubr.bf16.mxu0 %v496
  %1616 = vmatmul.mubr.bf16.gmra.mrb[0].mxu0 %v495
  %v1617 = vpop.f32.mrb[0].mxu0
  %v1618 = vadd.f32 %v1505, %v1617
  %v1619 = vpop.f32.mrb[0].mxu0
  %v1620 = vadd.f32 %v1507, %v1619
  %v1621 = vpop.f32.mrb[0].mxu0
  %v1622 = vadd.f32 %v1509, %v1621
  %v1623 = vpop.f32.mrb[0].mxu0
  %v1624 = vadd.f32 %v1511, %v1623
  %1625 = vmatprep.mubr.bf16.mxu0 %v505
  %1626 = vmatmul.mubr.bf16.gmra.mrb[0].mxu0 %v504
  %v1627 = vpop.f32.mrb[0].mxu0
  %v1628 = vadd.f32 %v1515, %v1627
  %v1629 = vpop.f32.mrb[0].mxu0
  %v1630 = vadd.f32 %v1517, %v1629
  %v1631 = vpop.f32.mrb[0].mxu0
  %v1632 = vadd.f32 %v1519, %v1631
  %v1633 = vpop.f32.mrb[0].mxu0
  %v1634 = vadd.f32 %v1521, %v1633
  %1635 = vmatprep.mubr.bf16.mxu0 %v514
  %1636 = vmatmul.mubr.bf16.gmra.mrb[0].mxu0 %v513
  %v1637 = vpop.f32.mrb[0].mxu0
  %v1638 = vadd.f32 %v1525, %v1637
  %v1639 = vpop.f32.mrb[0].mxu0
  %v1640 = vadd.f32 %v1527, %v1639
  %v1641 = vpop.f32.mrb[0].mxu0
  %v1642 = vadd.f32 %v1529, %v1641
  %v1643 = vpop.f32.mrb[0].mxu0
  %v1644 = vadd.f32 %v1531, %v1643
  %1645 = vmatprep.mubr.bf16.mxu0 %v523
  %1646 = vmatmul.mubr.bf16.gmra.mrb[0].mxu0 %v522
  %v1647 = vpop.f32.mrb[0].mxu0
  %v1648 = vadd.f32 %v1535, %v1647
  %v1649 = vpop.f32.mrb[0].mxu0
  %v1650 = vadd.f32 %v1537, %v1649
  %v1651 = vpop.f32.mrb[0].mxu0
  %v1652 = vadd.f32 %v1539, %v1651
  %v1653 = vpop.f32.mrb[0].mxu0
  %v1654 = vadd.f32 %v1541, %v1653
  %1655 = vmatprep.mubr.bf16.mxu0 %v532
  %1656 = vmatmul.mubr.bf16.gmra.mrb[0].mxu0 %v531
  %v1657 = vpop.f32.mrb[0].mxu0
  %v1658 = vadd.f32 %v1545, %v1657
  %v1659 = vpop.f32.mrb[0].mxu0
  %v1660 = vadd.f32 %v1547, %v1659
  %v1661 = vpop.f32.mrb[0].mxu0
  %v1662 = vadd.f32 %v1549, %v1661
  %v1663 = vpop.f32.mrb[0].mxu0
  %v1664 = vadd.f32 %v1551, %v1663
  %1665 = vmatprep.mubr.bf16.mxu0 %v541
  %1666 = vmatmul.mubr.bf16.gmra.mrb[0].mxu0 %v540
  %v1667 = vpop.f32.mrb[0].mxu0
  %v1668 = vadd.f32 %v1555, %v1667
  %v1669 = vpop.f32.mrb[0].mxu0
  %v1670 = vadd.f32 %v1557, %v1669
  %v1671 = vpop.f32.mrb[0].mxu0
  %v1672 = vadd.f32 %v1559, %v1671
  %v1673 = vpop.f32.mrb[0].mxu0
  %v1674 = vadd.f32 %v1561, %v1673
  %1675 = vdwg.mxu0
  %1676 = vmatprep.subr.bf16.mxu0 %v1146
  %1677 = vmatpush1.bf16.msra.mxu0 %v1145
  %1678 = vmatprep.subr.bf16.mxu0 %v1148
  %1679 = vmatpush1.bf16.msra.mxu0 %v1147
  %1680 = vmatprep.subr.bf16.mxu0 %v1150
  %1681 = vmatpush1.bf16.msra.mxu0 %v1149
  %1682 = vmatprep.subr.bf16.mxu0 %v1152
  %1683 = vmatpush1.bf16.msra.mxu0 %v1151
  %1684 = vmatprep.subr.bf16.mxu0 %v1154
  %1685 = vmatpush1.bf16.msra.mxu0 %v1153
  %1686 = vmatprep.subr.bf16.mxu0 %v1156
  %1687 = vmatpush1.bf16.msra.mxu0 %v1155
  %1688 = vmatprep.subr.bf16.mxu0 %v1158
  %1689 = vmatpush1.bf16.msra.mxu0 %v1157
  %1690 = vmatprep.subr.bf16.mxu0 %v1160
  %1691 = vmatpush1.bf16.msra.mxu0 %v1159
  %1692 = vmatprep.subr.bf16.mxu0 %v1162
  %1693 = vmatpush1.bf16.msra.mxu0 %v1161
  %1694 = vmatprep.subr.bf16.mxu0 %v1164
  %1695 = vmatpush1.bf16.msra.mxu0 %v1163
  %1696 = vmatprep.subr.bf16.mxu0 %v1166
  %1697 = vmatpush1.bf16.msra.mxu0 %v1165
  %1698 = vmatprep.subr.bf16.mxu0 %v1168
  %1699 = vmatpush1.bf16.msra.mxu0 %v1167
  %1700 = vmatprep.subr.bf16.mxu0 %v1170
  %1701 = vmatpush1.bf16.msra.mxu0 %v1169
  %1702 = vmatprep.subr.bf16.mxu0 %v1172
  %1703 = vmatpush1.bf16.msra.mxu0 %v1171
  %1704 = vmatprep.subr.bf16.mxu0 %v1174
  %1705 = vmatpush1.bf16.msra.mxu0 %v1173
  %1706 = vmatprep.subr.bf16.mxu0 %v1176
  %1707 = vmatpush1.bf16.msra.mxu0 %v1175
  %1708 = vmatprep.mubr.bf16.mxu0 %v480
  %1709 = vmatmul.mubr.bf16.gmra.mrb[0].mxu0 %v479
  %v1710 = vpop.f32.mrb[0].mxu0
  %v1711 = vadd.f32 %v1598, %v1710
  %v1712 = vpop.f32.mrb[0].mxu0
  %v1713 = vadd.f32 %v1600, %v1712
  %v1714 = vpop.f32.mrb[0].mxu0
  %v1715 = vadd.f32 %v1602, %v1714
  %v1716 = vpop.f32.mrb[0].mxu0
  %v1717 = vadd.f32 %v1604, %v1716
  %1718 = vmatprep.mubr.bf16.mxu0 %v489
  %1719 = vmatmul.mubr.bf16.gmra.mrb[0].mxu0 %v488
  %v1720 = vpop.f32.mrb[0].mxu0
  %v1721 = vadd.f32 %v1608, %v1720
  %v1722 = vpop.f32.mrb[0].mxu0
  %v1723 = vadd.f32 %v1610, %v1722
  %v1724 = vpop.f32.mrb[0].mxu0
  %v1725 = vadd.f32 %v1612, %v1724
  %v1726 = vpop.f32.mrb[0].mxu0
  %v1727 = vadd.f32 %v1614, %v1726
  %1728 = vmatprep.mubr.bf16.mxu0 %v498
  %1729 = vmatmul.mubr.bf16.gmra.mrb[0].mxu0 %v497
  %v1730 = vpop.f32.mrb[0].mxu0
  %v1731 = vadd.f32 %v1618, %v1730
  %v1732 = vpop.f32.mrb[0].mxu0
  %v1733 = vadd.f32 %v1620, %v1732
  %v1734 = vpop.f32.mrb[0].mxu0
  %v1735 = vadd.f32 %v1622, %v1734
  %v1736 = vpop.f32.mrb[0].mxu0
  %v1737 = vadd.f32 %v1624, %v1736
  %1738 = vmatprep.mubr.bf16.mxu0 %v507
  %1739 = vmatmul.mubr.bf16.gmra.mrb[0].mxu0 %v506
  %v1740 = vpop.f32.mrb[0].mxu0
  %v1741 = vadd.f32 %v1628, %v1740
  %v1742 = vpop.f32.mrb[0].mxu0
  %v1743 = vadd.f32 %v1630, %v1742
  %v1744 = vpop.f32.mrb[0].mxu0
  %v1745 = vadd.f32 %v1632, %v1744
  %v1746 = vpop.f32.mrb[0].mxu0
  %v1747 = vadd.f32 %v1634, %v1746
  %1748 = vmatprep.mubr.bf16.mxu0 %v516
  %1749 = vmatmul.mubr.bf16.gmra.mrb[0].mxu0 %v515
  %v1750 = vpop.f32.mrb[0].mxu0
  %v1751 = vadd.f32 %v1638, %v1750
  %v1752 = vpop.f32.mrb[0].mxu0
  %v1753 = vadd.f32 %v1640, %v1752
  %v1754 = vpop.f32.mrb[0].mxu0
  %v1755 = vadd.f32 %v1642, %v1754
  %v1756 = vpop.f32.mrb[0].mxu0
  %v1757 = vadd.f32 %v1644, %v1756
  %1758 = vmatprep.mubr.bf16.mxu0 %v525
  %1759 = vmatmul.mubr.bf16.gmra.mrb[0].mxu0 %v524
  %v1760 = vpop.f32.mrb[0].mxu0
  %v1761 = vadd.f32 %v1648, %v1760
  %v1762 = vpop.f32.mrb[0].mxu0
  %v1763 = vadd.f32 %v1650, %v1762
  %v1764 = vpop.f32.mrb[0].mxu0
  %v1765 = vadd.f32 %v1652, %v1764
  %v1766 = vpop.f32.mrb[0].mxu0
  %v1767 = vadd.f32 %v1654, %v1766
  %1768 = vmatprep.mubr.bf16.mxu0 %v534
  %1769 = vmatmul.mubr.bf16.gmra.mrb[0].mxu0 %v533
  %v1770 = vpop.f32.mrb[0].mxu0
  %v1771 = vadd.f32 %v1658, %v1770
  %v1772 = vpop.f32.mrb[0].mxu0
  %v1773 = vadd.f32 %v1660, %v1772
  %v1774 = vpop.f32.mrb[0].mxu0
  %v1775 = vadd.f32 %v1662, %v1774
  %v1776 = vpop.f32.mrb[0].mxu0
  %v1777 = vadd.f32 %v1664, %v1776
  %1778 = vmatprep.mubr.bf16.mxu0 %v543
  %1779 = vmatmul.mubr.bf16.gmra.mrb[0].mxu0 %v542
  %v1780 = vpop.f32.mrb[0].mxu0
  %v1781 = vadd.f32 %v1668, %v1780
  %v1782 = vpop.f32.mrb[0].mxu0
  %v1783 = vadd.f32 %v1670, %v1782
  %v1784 = vpop.f32.mrb[0].mxu0
  %v1785 = vadd.f32 %v1672, %v1784
  %v1786 = vpop.f32.mrb[0].mxu0
  %v1787 = vadd.f32 %v1674, %v1786
  %1788 = vdwg.mxu0
  %1789 = vmatprep.subr.bf16.mxu0 %v1178
  %1790 = vmatpush1.bf16.msra.mxu0 %v1177
  %1791 = vmatprep.subr.bf16.mxu0 %v1180
  %1792 = vmatpush1.bf16.msra.mxu0 %v1179
  %1793 = vmatprep.subr.bf16.mxu0 %v1182
  %1794 = vmatpush1.bf16.msra.mxu0 %v1181
  %1795 = vmatprep.subr.bf16.mxu0 %v1184
  %1796 = vmatpush1.bf16.msra.mxu0 %v1183
  %1797 = vmatprep.subr.bf16.mxu0 %v1186
  %1798 = vmatpush1.bf16.msra.mxu0 %v1185
  %1799 = vmatprep.subr.bf16.mxu0 %v1188
  %1800 = vmatpush1.bf16.msra.mxu0 %v1187
  %1801 = vmatprep.subr.bf16.mxu0 %v1190
  %1802 = vmatpush1.bf16.msra.mxu0 %v1189
  %1803 = vmatprep.subr.bf16.mxu0 %v1192
  %1804 = vmatpush1.bf16.msra.mxu0 %v1191
  %1805 = vmatprep.subr.bf16.mxu0 0
  %1806 = vmatpush1.bf16.msra.mxu0 0
  %1807 = vmatprep.subr.bf16.mxu0 0
  %1808 = vmatpush1.bf16.msra.mxu0 0
  %1809 = vmatprep.subr.bf16.mxu0 0
  %1810 = vmatpush1.bf16.msra.mxu0 0
  %1811 = vmatprep.subr.bf16.mxu0 0
  %1812 = vmatpush1.bf16.msra.mxu0 0
  %1813 = vmatprep.subr.bf16.mxu0 0
  %1814 = vmatpush1.bf16.msra.mxu0 0
  %1815 = vmatprep.subr.bf16.mxu0 0
  %1816 = vmatpush1.bf16.msra.mxu0 0
  %1817 = vmatprep.subr.bf16.mxu0 0
  %1818 = vmatpush1.bf16.msra.mxu0 0
  %1819 = vmatprep.subr.bf16.mxu0 0
  %1820 = vmatpush1.bf16.msra.mxu0 0
  %1821 = vmatprep.mubr.bf16.mxu0 0
  %1822 = vmatmul.mubr.bf16.gmra.mrb[0].mxu0 %v481
  %v1823 = vpop.f32.mrb[0].mxu0
  %v1824 = vadd.f32 %v1711, %v1823
  %v1825 = vpop.f32.mrb[0].mxu0
  %v1826 = vadd.f32 %v1713, %v1825
  %v1827 = vpop.f32.mrb[0].mxu0
  %v1828 = vadd.f32 %v1715, %v1827
  %v1829 = vpop.f32.mrb[0].mxu0
  %v1830 = vadd.f32 %v1717, %v1829
  %1831 = vmatprep.mubr.bf16.mxu0 0
  %1832 = vmatmul.mubr.bf16.gmra.mrb[0].mxu0 %v490
  %v1833 = vpop.f32.mrb[0].mxu0
  %v1834 = vadd.f32 %v1721, %v1833
  %v1835 = vpop.f32.mrb[0].mxu0
  %v1836 = vadd.f32 %v1723, %v1835
  %v1837 = vpop.f32.mrb[0].mxu0
  %v1838 = vadd.f32 %v1725, %v1837
  %v1839 = vpop.f32.mrb[0].mxu0
  %v1840 = vadd.f32 %v1727, %v1839
  %1841 = vmatprep.mubr.bf16.mxu0 0
  %1842 = vmatmul.mubr.bf16.gmra.mrb[0].mxu0 %v499
  %v1843 = vpop.f32.mrb[0].mxu0
  %v1844 = vadd.f32 %v1731, %v1843
  %v1845 = vpop.f32.mrb[0].mxu0
  %v1846 = vadd.f32 %v1733, %v1845
  %v1847 = vpop.f32.mrb[0].mxu0
  %v1848 = vadd.f32 %v1735, %v1847
  %v1849 = vpop.f32.mrb[0].mxu0
  %v1850 = vadd.f32 %v1737, %v1849
  %1851 = vmatprep.mubr.bf16.mxu0 0
  %1852 = vmatmul.mubr.bf16.gmra.mrb[0].mxu0 %v508
  %v1853 = vpop.f32.mrb[0].mxu0
  %v1854 = vadd.f32 %v1741, %v1853
  %v1855 = vpop.f32.mrb[0].mxu0
  %v1856 = vadd.f32 %v1743, %v1855
  %v1857 = vpop.f32.mrb[0].mxu0
  %v1858 = vadd.f32 %v1745, %v1857
  %v1859 = vpop.f32.mrb[0].mxu0
  %v1860 = vadd.f32 %v1747, %v1859
  %1861 = vmatprep.mubr.bf16.mxu0 0
  %1862 = vmatmul.mubr.bf16.gmra.mrb[0].mxu0 %v517
  %v1863 = vpop.f32.mrb[0].mxu0
  %v1864 = vadd.f32 %v1751, %v1863
  %v1865 = vpop.f32.mrb[0].mxu0
  %v1866 = vadd.f32 %v1753, %v1865
  %v1867 = vpop.f32.mrb[0].mxu0
  %v1868 = vadd.f32 %v1755, %v1867
  %v1869 = vpop.f32.mrb[0].mxu0
  %v1870 = vadd.f32 %v1757, %v1869
  %1871 = vmatprep.mubr.bf16.mxu0 0
  %1872 = vmatmul.mubr.bf16.gmra.mrb[0].mxu0 %v526
  %v1873 = vpop.f32.mrb[0].mxu0
  %v1874 = vadd.f32 %v1761, %v1873
  %v1875 = vpop.f32.mrb[0].mxu0
  %v1876 = vadd.f32 %v1763, %v1875
  %v1877 = vpop.f32.mrb[0].mxu0
  %v1878 = vadd.f32 %v1765, %v1877
  %v1879 = vpop.f32.mrb[0].mxu0
  %v1880 = vadd.f32 %v1767, %v1879
  %1881 = vmatprep.mubr.bf16.mxu0 0
  %1882 = vmatmul.mubr.bf16.gmra.mrb[0].mxu0 %v535
  %v1883 = vpop.f32.mrb[0].mxu0
  %v1884 = vadd.f32 %v1771, %v1883
  %v1885 = vpop.f32.mrb[0].mxu0
  %v1886 = vadd.f32 %v1773, %v1885
  %v1887 = vpop.f32.mrb[0].mxu0
  %v1888 = vadd.f32 %v1775, %v1887
  %v1889 = vpop.f32.mrb[0].mxu0
  %v1890 = vadd.f32 %v1777, %v1889
  %1891 = vmatprep.mubr.bf16.mxu0 0
  %1892 = vmatmul.mubr.bf16.gmra.mrb[0].mxu0 %v544
  %v1893 = vpop.f32.mrb[0].mxu0
  %v1894 = vadd.f32 %v1781, %v1893
  %v1895 = vpop.f32.mrb[0].mxu0
  %v1896 = vadd.f32 %v1783, %v1895
  %v1897 = vpop.f32.mrb[0].mxu0
  %v1898 = vadd.f32 %v1785, %v1897
  %v1899 = vpop.f32.mrb[0].mxu0
  %v1900 = vadd.f32 %v1787, %v1899
  %1901 = vdwg.mxu0
  %v1902 = vmax.f32 %v1824, 0.0
  %v1903 = vmax.f32 %v1826, 0.0
  %v1904 = vmax.f32 %v1828, 0.0
  %v1905 = vmax.f32 %v1830, 0.0
  %v1906 = vmax.f32 %v1834, 0.0
  %v1907 = vmax.f32 %v1836, 0.0
  %v1908 = vmax.f32 %v1838, 0.0
  %v1909 = vmax.f32 %v1840, 0.0
  %v1910 = vmax.f32 %v1844, 0.0
  %v1911 = vmax.f32 %v1846, 0.0
  %v1912 = vmax.f32 %v1848, 0.0
  %v1913 = vmax.f32 %v1850, 0.0
  %v1914 = vmax.f32 %v1854, 0.0
  %v1915 = vmax.f32 %v1856, 0.0
  %v1916 = vmax.f32 %v1858, 0.0
  %v1917 = vmax.f32 %v1860, 0.0
  %v1918 = vmax.f32 %v1864, 0.0
  %v1919 = vmax.f32 %v1866, 0.0
  %v1920 = vmax.f32 %v1868, 0.0
  %v1921 = vmax.f32 %v1870, 0.0
  %v1922 = vmax.f32 %v1874, 0.0
  %v1923 = vmax.f32 %v1876, 0.0
  %v1924 = vmax.f32 %v1878, 0.0
  %v1925 = vmax.f32 %v1880, 0.0
  %v1926 = vmax.f32 %v1884, 0.0
  %v1927 = vmax.f32 %v1886, 0.0
  %v1928 = vmax.f32 %v1888, 0.0
  %v1929 = vmax.f32 %v1890, 0.0
  %v1930 = vmax.f32 %v1894, 0.0
  %v1931 = vmax.f32 %v1896, 0.0
  %v1932 = vmax.f32 %v1898, 0.0
  %v1933 = vmax.f32 %v1900, 0.0
  %v1934 = vlaneseq
  %v1935 = vshrl.u32 %v1934, 7
  %v1936 = vsub.s32 1, %v1935
  %v1937 = vrot.slane %v239, %v1936
  %v1938 = vlaneseq
  %v1939 = vshrl.u32 %v1938, 7
  %v1940 = vsub.s32 1, %v1939
  %v1941 = vrot.slane %v240, %v1940
  %v1942 = vmul.f32 %v1902, %v1937
  %v1943 = vmul.f32 %v1903, %v1941
  %v1944 = vmul.f32 %v1904, %v1937
  %v1945 = vmul.f32 %v1905, %v1941
  %v1946 = vmul.f32 %v1906, %v1937
  %v1947 = vmul.f32 %v1907, %v1941
  %v1948 = vmul.f32 %v1908, %v1937
  %v1949 = vmul.f32 %v1909, %v1941
  %v1950 = vmul.f32 %v1910, %v1937
  %v1951 = vmul.f32 %v1911, %v1941
  %v1952 = vmul.f32 %v1912, %v1937
  %v1953 = vmul.f32 %v1913, %v1941
  %v1954 = vmul.f32 %v1914, %v1937
  %v1955 = vmul.f32 %v1915, %v1941
  %v1956 = vmul.f32 %v1916, %v1937
  %v1957 = vmul.f32 %v1917, %v1941
  %v1958 = vmul.f32 %v1918, %v1937
  %v1959 = vmul.f32 %v1919, %v1941
  %v1960 = vmul.f32 %v1920, %v1937
  %v1961 = vmul.f32 %v1921, %v1941
  %v1962 = vmul.f32 %v1922, %v1937
  %v1963 = vmul.f32 %v1923, %v1941
  %v1964 = vmul.f32 %v1924, %v1937
  %v1965 = vmul.f32 %v1925, %v1941
  %v1966 = vmul.f32 %v1926, %v1937
  %v1967 = vmul.f32 %v1927, %v1941
  %v1968 = vmul.f32 %v1928, %v1937
  %v1969 = vmul.f32 %v1929, %v1941
  %v1970 = vmul.f32 %v1930, %v1937
  %v1971 = vmul.f32 %v1931, %v1941
  %v1972 = vmul.f32 %v1932, %v1937
  %v1973 = vmul.f32 %v1933, %v1941
  %v1974 = vlaneseq
  %v1975 = vshrl.u32 %v1974, 7
  %v1976 = vsub.s32 2, %v1975
  %v1977 = vrot.slane %v239, %v1976
  %v1978 = vlaneseq
  %v1979 = vshrl.u32 %v1978, 7
  %v1980 = vsub.s32 2, %v1979
  %v1981 = vrot.slane %v240, %v1980
  %v1982 = vadd.f32 %v1942, %v1977
  %v1983 = vadd.f32 %v1943, %v1981
  %v1984 = vadd.f32 %v1944, %v1977
  %v1985 = vadd.f32 %v1945, %v1981
  %v1986 = vadd.f32 %v1946, %v1977
  %v1987 = vadd.f32 %v1947, %v1981
  %v1988 = vadd.f32 %v1948, %v1977
  %v1989 = vadd.f32 %v1949, %v1981
  %v1990 = vadd.f32 %v1950, %v1977
  %v1991 = vadd.f32 %v1951, %v1981
  %v1992 = vadd.f32 %v1952, %v1977
  %v1993 = vadd.f32 %v1953, %v1981
  %v1994 = vadd.f32 %v1954, %v1977
  %v1995 = vadd.f32 %v1955, %v1981
  %v1996 = vadd.f32 %v1956, %v1977
  %v1997 = vadd.f32 %v1957, %v1981
  %v1998 = vadd.f32 %v1958, %v1977
  %v1999 = vadd.f32 %v1959, %v1981
  %v2000 = vadd.f32 %v1960, %v1977
  %v2001 = vadd.f32 %v1961, %v1981
  %v2002 = vadd.f32 %v1962, %v1977
  %v2003 = vadd.f32 %v1963, %v1981
  %v2004 = vadd.f32 %v1964, %v1977
  %v2005 = vadd.f32 %v1965, %v1981
  %v2006 = vadd.f32 %v1966, %v1977
  %v2007 = vadd.f32 %v1967, %v1981
  %v2008 = vadd.f32 %v1968, %v1977
  %v2009 = vadd.f32 %v1969, %v1981
  %v2010 = vadd.f32 %v1970, %v1977
  %v2011 = vadd.f32 %v1971, %v1981
  %v2012 = vadd.f32 %v1972, %v1977
  %v2013 = vadd.f32 %v1973, %v1981
  %v2014 = vpack.c.bf16 %v1984, %v1982
  %v2015 = vpack.c.bf16 %v1985, %v1983
  %v2016 = vpack.c.bf16 %v1988, %v1986
  %v2017 = vpack.c.bf16 %v1989, %v1987
  %v2018 = vpack.c.bf16 %v1992, %v1990
  %v2019 = vpack.c.bf16 %v1993, %v1991
  %v2020 = vpack.c.bf16 %v1996, %v1994
  %v2021 = vpack.c.bf16 %v1997, %v1995
  %v2022 = vpack.c.bf16 %v2000, %v1998
  %v2023 = vpack.c.bf16 %v2001, %v1999
  %v2024 = vpack.c.bf16 %v2004, %v2002
  %v2025 = vpack.c.bf16 %v2005, %v2003
  %v2026 = vpack.c.bf16 %v2008, %v2006
  %v2027 = vpack.c.bf16 %v2009, %v2007
  %v2028 = vpack.c.bf16 %v2012, %v2010
  %v2029 = vpack.c.bf16 %v2013, %v2011
  %v2046 = vunpack.c.l.b16 %v2014
  %v2047 = vunpack.c.l.b16 %v2015
  %v2048 = vunpack.c.h.b16 %v2014
  %v2049 = vunpack.c.h.b16 %v2015
  %v2050 = vunpack.c.l.b16 %v2016
  %v2051 = vunpack.c.l.b16 %v2017
  %v2052 = vunpack.c.h.b16 %v2016
  %v2053 = vunpack.c.h.b16 %v2017
  %v2054 = vunpack.c.l.b16 %v2018
  %v2055 = vunpack.c.l.b16 %v2019
  %v2056 = vunpack.c.h.b16 %v2018
  %v2057 = vunpack.c.h.b16 %v2019
  %v2058 = vunpack.c.l.b16 %v2020
  %v2059 = vunpack.c.l.b16 %v2021
  %v2060 = vunpack.c.h.b16 %v2020
  %v2061 = vunpack.c.h.b16 %v2021
  %v2062 = vunpack.c.l.b16 %v2022
  %v2063 = vunpack.c.l.b16 %v2023
  %v2064 = vunpack.c.h.b16 %v2022
  %v2065 = vunpack.c.h.b16 %v2023
  %v2066 = vunpack.c.l.b16 %v2024
  %v2067 = vunpack.c.l.b16 %v2025
  %v2068 = vunpack.c.h.b16 %v2024
  %v2069 = vunpack.c.h.b16 %v2025
  %v2070 = vunpack.c.l.b16 %v2026
  %v2071 = vunpack.c.l.b16 %v2027
  %v2072 = vunpack.c.h.b16 %v2026
  %v2073 = vunpack.c.h.b16 %v2027
  %v2074 = vunpack.c.l.b16 %v2028
  %v2075 = vunpack.c.l.b16 %v2029
  %v2076 = vunpack.c.h.b16 %v2028
  %v2077 = vunpack.c.h.b16 %v2029
  %v2078 = vpack.c.b16 %v2047, %v2046
  %v2079 = vpack.c.b16 %v2049, %v2048
  %v2080 = vpack.c.b16 %v2051, %v2050
  %v2081 = vpack.c.b16 %v2053, %v2052
  %v2082 = vpack.c.b16 %v2055, %v2054
  %v2083 = vpack.c.b16 %v2057, %v2056
  %v2084 = vpack.c.b16 %v2059, %v2058
  %v2085 = vpack.c.b16 %v2061, %v2060
  %v2086 = vpack.c.b16 %v2063, %v2062
  %v2087 = vpack.c.b16 %v2065, %v2064
  %v2088 = vpack.c.b16 %v2067, %v2066
  %v2089 = vpack.c.b16 %v2069, %v2068
  %v2090 = vpack.c.b16 %v2071, %v2070
  %v2091 = vpack.c.b16 %v2073, %v2072
  %v2092 = vpack.c.b16 %v2075, %v2074
  %v2093 = vpack.c.b16 %v2077, %v2076
  %2110 = vst [vmem:[%s3] sm:$0xff] %v2078
  %2111 = vst [vmem:[%s3 + $0x8] sm:$0xff] %v2079
  %2112 = vst [vmem:[%s3 + $0x10] sm:$0xff] %v2080
  %2113 = vst [vmem:[%s3 + $0x18] sm:$0xff] %v2081
  %2114 = vst [vmem:[%s3 + $0x20] sm:$0xff] %v2082
  %2115 = vst [vmem:[%s3 + $0x28] sm:$0xff] %v2083
  %2116 = vst [vmem:[%s3 + $0x30] sm:$0xff] %v2084
  %2117 = vst [vmem:[%s3 + $0x38] sm:$0xff] %v2085
  %2118 = vst [vmem:[%s3 + $0x40] sm:$0xff] %v2086
  %2119 = vst [vmem:[%s3 + $0x48] sm:$0xff] %v2087
  %2120 = vst [vmem:[%s3 + $0x50] sm:$0xff] %v2088
  %2121 = vst [vmem:[%s3 + $0x58] sm:$0xff] %v2089
  %2122 = vst [vmem:[%s3 + $0x60] sm:$0xff] %v2090
  %2123 = vst [vmem:[%s3 + $0x68] sm:$0xff] %v2091
  %2124 = vst [vmem:[%s3 + $0x70] sm:$0xff] %v2092
  %2125 = vst [vmem:[%s3 + $0x78] sm:$0xff] %v2093
  // Predicated region
  $region14: #{classification_network_forward.6} parent=0 // pred_check
    _
  $region15: #{classification_network_forward.6} parent=0 // pred_check_branch
    %2127 = sbr.rel (0) target = $region17
  $region16: #{classification_network_forward.6} parent=0 // pred_region
    _
  $region17: #{classification_network_forward.6} parent=0 // pred_fallthru
    _
  // Predicated region
  $region18: #{classification_network_forward.6} parent=0 // pred_check
    _
  $region19: #{classification_network_forward.6} parent=0 // pred_check_branch
    %2129 = sbr.rel (0) target = $region21
  $region20: #{classification_network_forward.6} parent=0 // pred_region
    _
  $region21: #{classification_network_forward.6} parent=0 // pred_fallthru
    _

// kernel: classification_network_forward.7
$region0: #{classification_network_forward.7}
  #allocation0 [shape = 'u32[]', space=smem, size = 0x4, offset = 0x4, fixed_abs, tag = 'smem constant byte address 0x4 - core index']
  #allocation1 [shape = 'u32[144,128]{1,0:T(1,128)}', space=vmem, size = 0x12000, scoped, tag = 'internal scratch']
  %s0 = inlined_call_operand.vmem [shape: bf16[128,2304], index: 0, kind: input, shape index: {}]
  %s1 = inlined_call_operand.vmem [shape: bf16[2304,512], index: 1, kind: input, shape index: {}]
  %s2 = inlined_call_operand.vmem [shape: f32[8,512], index: 2, kind: input, shape index: {}]
  %s3 = inlined_call_operand.vmem [shape: bf16[128,512], index: 3, kind: output, shape index: {}]
  %s4 = sld [smem:[#allocation0]]
  $region22: #{classification_network_forward.7} parent=0
    _
  %s6 = ssub.s32 1, %s4
  %s7 = scalar_select 0, %s6, %s4
  // Predicated region
  $region2: #{classification_network_forward.7} parent=0 // pred_check
    _
  $region3: #{classification_network_forward.7} parent=0 // pred_check_branch
    %9 = sbr.rel (0) target = $region5
  $region4: #{classification_network_forward.7} parent=0 // pred_region
    _
  $region5: #{classification_network_forward.7} parent=0 // pred_fallthru
    _
  // Predicated region
  $region6: #{classification_network_forward.7} parent=0 // pred_check
    _
  $region7: #{classification_network_forward.7} parent=0 // pred_check_branch
    %11 = sbr.rel (0) target = $region9
  $region8: #{classification_network_forward.7} parent=0 // pred_region
    _
  $region9: #{classification_network_forward.7} parent=0 // pred_fallthru
    _
  // Predicated region
  $region10: #{classification_network_forward.7} parent=0 // pred_check
    _
  $region11: #{classification_network_forward.7} parent=0 // pred_check_branch
    %13 = sbr.rel (0) target = $region13
  $region12: #{classification_network_forward.7} parent=0 // pred_region
    _
  $region13: #{classification_network_forward.7} parent=0 // pred_fallthru
    _
  %v14 = vld [vmem:[%s0] sm:$0xff]
  %v15 = vld [vmem:[%s0 + $0x8] sm:$0xff]
  %v16 = vld [vmem:[%s0 + $0x10] sm:$0xff]
  %v17 = vld [vmem:[%s0 + $0x18] sm:$0xff]
  %v18 = vld [vmem:[%s0 + $0x20] sm:$0xff]
  %v19 = vld [vmem:[%s0 + $0x28] sm:$0xff]
  %v20 = vld [vmem:[%s0 + $0x30] sm:$0xff]
  %v21 = vld [vmem:[%s0 + $0x38] sm:$0xff]
  %v22 = vld [vmem:[%s0 + $0x40] sm:$0xff]
  %v23 = vld [vmem:[%s0 + $0x48] sm:$0xff]
  %v24 = vld [vmem:[%s0 + $0x50] sm:$0xff]
  %v25 = vld [vmem:[%s0 + $0x58] sm:$0xff]
  %v26 = vld [vmem:[%s0 + $0x60] sm:$0xff]
  %v27 = vld [vmem:[%s0 + $0x68] sm:$0xff]
  %v28 = vld [vmem:[%s0 + $0x70] sm:$0xff]
  %v29 = vld [vmem:[%s0 + $0x78] sm:$0xff]
  %v30 = vld [vmem:[%s0 + $0x80] sm:$0xff]
  %v31 = vld [vmem:[%s0 + $0x88] sm:$0xff]
  %v32 = vld [vmem:[%s0 + $0x90] sm:$0xff]
  %v33 = vld [vmem:[%s0 + $0x98] sm:$0xff]
  %v34 = vld [vmem:[%s0 + $0xa0] sm:$0xff]
  %v35 = vld [vmem:[%s0 + $0xa8] sm:$0xff]
  %v36 = vld [vmem:[%s0 + $0xb0] sm:$0xff]
  %v37 = vld [vmem:[%s0 + $0xb8] sm:$0xff]
  %v38 = vld [vmem:[%s0 + $0xc0] sm:$0xff]
  %v39 = vld [vmem:[%s0 + $0xc8] sm:$0xff]
  %v40 = vld [vmem:[%s0 + $0xd0] sm:$0xff]
  %v41 = vld [vmem:[%s0 + $0xd8] sm:$0xff]
  %v42 = vld [vmem:[%s0 + $0xe0] sm:$0xff]
  %v43 = vld [vmem:[%s0 + $0xe8] sm:$0xff]
  %v44 = vld [vmem:[%s0 + $0xf0] sm:$0xff]
  %v45 = vld [vmem:[%s0 + $0xf8] sm:$0xff]
  %v46 = vld [vmem:[%s0 + $0x100] sm:$0xff]
  %v47 = vld [vmem:[%s0 + $0x108] sm:$0xff]
  %v48 = vld [vmem:[%s0 + $0x110] sm:$0xff]
  %v49 = vld [vmem:[%s0 + $0x118] sm:$0xff]
  %v50 = vld [vmem:[%s0 + $0x120] sm:$0xff]
  %v51 = vld [vmem:[%s0 + $0x128] sm:$0xff]
  %v52 = vld [vmem:[%s0 + $0x130] sm:$0xff]
  %v53 = vld [vmem:[%s0 + $0x138] sm:$0xff]
  %v54 = vld [vmem:[%s0 + $0x140] sm:$0xff]
  %v55 = vld [vmem:[%s0 + $0x148] sm:$0xff]
  %v56 = vld [vmem:[%s0 + $0x150] sm:$0xff]
  %v57 = vld [vmem:[%s0 + $0x158] sm:$0xff]
  %v58 = vld [vmem:[%s0 + $0x160] sm:$0xff]
  %v59 = vld [vmem:[%s0 + $0x168] sm:$0xff]
  %v60 = vld [vmem:[%s0 + $0x170] sm:$0xff]
  %v61 = vld [vmem:[%s0 + $0x178] sm:$0xff]
  %v62 = vld [vmem:[%s0 + $0x180] sm:$0xff]
  %v63 = vld [vmem:[%s0 + $0x188] sm:$0xff]
  %v64 = vld [vmem:[%s0 + $0x190] sm:$0xff]
  %v65 = vld [vmem:[%s0 + $0x198] sm:$0xff]
  %v66 = vld [vmem:[%s0 + $0x1a0] sm:$0xff]
  %v67 = vld [vmem:[%s0 + $0x1a8] sm:$0xff]
  %v68 = vld [vmem:[%s0 + $0x1b0] sm:$0xff]
  %v69 = vld [vmem:[%s0 + $0x1b8] sm:$0xff]
  %v70 = vld [vmem:[%s0 + $0x1c0] sm:$0xff]
  %v71 = vld [vmem:[%s0 + $0x1c8] sm:$0xff]
  %v72 = vld [vmem:[%s0 + $0x1d0] sm:$0xff]
  %v73 = vld [vmem:[%s0 + $0x1d8] sm:$0xff]
  %v74 = vld [vmem:[%s0 + $0x1e0] sm:$0xff]
  %v75 = vld [vmem:[%s0 + $0x1e8] sm:$0xff]
  %v76 = vld [vmem:[%s0 + $0x1f0] sm:$0xff]
  %v77 = vld [vmem:[%s0 + $0x1f8] sm:$0xff]
  %v78 = vld [vmem:[%s0 + $0x200] sm:$0xff]
  %v79 = vld [vmem:[%s0 + $0x208] sm:$0xff]
  %v80 = vld [vmem:[%s0 + $0x210] sm:$0xff]
  %v81 = vld [vmem:[%s0 + $0x218] sm:$0xff]
  %v82 = vld [vmem:[%s0 + $0x220] sm:$0xff]
  %v83 = vld [vmem:[%s0 + $0x228] sm:$0xff]
  %v84 = vld [vmem:[%s0 + $0x230] sm:$0xff]
  %v85 = vld [vmem:[%s0 + $0x238] sm:$0xff]
  %v86 = vld [vmem:[%s0 + $0x240] sm:$0xff]
  %v87 = vld [vmem:[%s0 + $0x248] sm:$0xff]
  %v88 = vld [vmem:[%s0 + $0x250] sm:$0xff]
  %v89 = vld [vmem:[%s0 + $0x258] sm:$0xff]
  %v90 = vld [vmem:[%s0 + $0x260] sm:$0xff]
  %v91 = vld [vmem:[%s0 + $0x268] sm:$0xff]
  %v92 = vld [vmem:[%s0 + $0x270] sm:$0xff]
  %v93 = vld [vmem:[%s0 + $0x278] sm:$0xff]
  %v94 = vld [vmem:[%s0 + $0x280] sm:$0xff]
  %v95 = vld [vmem:[%s0 + $0x288] sm:$0xff]
  %v96 = vld [vmem:[%s0 + $0x290] sm:$0xff]
  %v97 = vld [vmem:[%s0 + $0x298] sm:$0xff]
  %v98 = vld [vmem:[%s0 + $0x2a0] sm:$0xff]
  %v99 = vld [vmem:[%s0 + $0x2a8] sm:$0xff]
  %v100 = vld [vmem:[%s0 + $0x2b0] sm:$0xff]
  %v101 = vld [vmem:[%s0 + $0x2b8] sm:$0xff]
  %v102 = vld [vmem:[%s0 + $0x2c0] sm:$0xff]
  %v103 = vld [vmem:[%s0 + $0x2c8] sm:$0xff]
  %v104 = vld [vmem:[%s0 + $0x2d0] sm:$0xff]
  %v105 = vld [vmem:[%s0 + $0x2d8] sm:$0xff]
  %v106 = vld [vmem:[%s0 + $0x2e0] sm:$0xff]
  %v107 = vld [vmem:[%s0 + $0x2e8] sm:$0xff]
  %v108 = vld [vmem:[%s0 + $0x2f0] sm:$0xff]
  %v109 = vld [vmem:[%s0 + $0x2f8] sm:$0xff]
  %v110 = vld [vmem:[%s0 + $0x300] sm:$0xff]
  %v111 = vld [vmem:[%s0 + $0x308] sm:$0xff]
  %v112 = vld [vmem:[%s0 + $0x310] sm:$0xff]
  %v113 = vld [vmem:[%s0 + $0x318] sm:$0xff]
  %v114 = vld [vmem:[%s0 + $0x320] sm:$0xff]
  %v115 = vld [vmem:[%s0 + $0x328] sm:$0xff]
  %v116 = vld [vmem:[%s0 + $0x330] sm:$0xff]
  %v117 = vld [vmem:[%s0 + $0x338] sm:$0xff]
  %v118 = vld [vmem:[%s0 + $0x340] sm:$0xff]
  %v119 = vld [vmem:[%s0 + $0x348] sm:$0xff]
  %v120 = vld [vmem:[%s0 + $0x350] sm:$0xff]
  %v121 = vld [vmem:[%s0 + $0x358] sm:$0xff]
  %v122 = vld [vmem:[%s0 + $0x360] sm:$0xff]
  %v123 = vld [vmem:[%s0 + $0x368] sm:$0xff]
  %v124 = vld [vmem:[%s0 + $0x370] sm:$0xff]
  %v125 = vld [vmem:[%s0 + $0x378] sm:$0xff]
  %v126 = vld [vmem:[%s0 + $0x380] sm:$0xff]
  %v127 = vld [vmem:[%s0 + $0x388] sm:$0xff]
  %v128 = vld [vmem:[%s0 + $0x390] sm:$0xff]
  %v129 = vld [vmem:[%s0 + $0x398] sm:$0xff]
  %v130 = vld [vmem:[%s0 + $0x3a0] sm:$0xff]
  %v131 = vld [vmem:[%s0 + $0x3a8] sm:$0xff]
  %v132 = vld [vmem:[%s0 + $0x3b0] sm:$0xff]
  %v133 = vld [vmem:[%s0 + $0x3b8] sm:$0xff]
  %v134 = vld [vmem:[%s0 + $0x3c0] sm:$0xff]
  %v135 = vld [vmem:[%s0 + $0x3c8] sm:$0xff]
  %v136 = vld [vmem:[%s0 + $0x3d0] sm:$0xff]
  %v137 = vld [vmem:[%s0 + $0x3d8] sm:$0xff]
  %v138 = vld [vmem:[%s0 + $0x3e0] sm:$0xff]
  %v139 = vld [vmem:[%s0 + $0x3e8] sm:$0xff]
  %v140 = vld [vmem:[%s0 + $0x3f0] sm:$0xff]
  %v141 = vld [vmem:[%s0 + $0x3f8] sm:$0xff]
  %v142 = vld [vmem:[%s0 + $0x400] sm:$0xff]
  %v143 = vld [vmem:[%s0 + $0x408] sm:$0xff]
  %v144 = vld [vmem:[%s0 + $0x410] sm:$0xff]
  %v145 = vld [vmem:[%s0 + $0x418] sm:$0xff]
  %v146 = vld [vmem:[%s0 + $0x420] sm:$0xff]
  %v147 = vld [vmem:[%s0 + $0x428] sm:$0xff]
  %v148 = vld [vmem:[%s0 + $0x430] sm:$0xff]
  %v149 = vld [vmem:[%s0 + $0x438] sm:$0xff]
  %v150 = vld [vmem:[%s0 + $0x440] sm:$0xff]
  %v151 = vld [vmem:[%s0 + $0x448] sm:$0xff]
  %v152 = vld [vmem:[%s0 + $0x450] sm:$0xff]
  %v153 = vld [vmem:[%s0 + $0x458] sm:$0xff]
  %v154 = vld [vmem:[%s0 + $0x460] sm:$0xff]
  %v155 = vld [vmem:[%s0 + $0x468] sm:$0xff]
  %v156 = vld [vmem:[%s0 + $0x470] sm:$0xff]
  %v157 = vld [vmem:[%s0 + $0x478] sm:$0xff]
  %v158 = vld [vmem:[%s1] sm:$0xff]
  %v159 = vld [vmem:[%s1 + $0x8] sm:$0xff]
  %v160 = vld [vmem:[%s1 + $0x10] sm:$0xff]
  %v161 = vld [vmem:[%s1 + $0x18] sm:$0xff]
  %v162 = vld [vmem:[%s1 + $0x20] sm:$0xff]
  %v163 = vld [vmem:[%s1 + $0x28] sm:$0xff]
  %v164 = vld [vmem:[%s1 + $0x30] sm:$0xff]
  %v165 = vld [vmem:[%s1 + $0x38] sm:$0xff]
  %v166 = vld [vmem:[%s1 + $0x40] sm:$0xff]
  %v167 = vld [vmem:[%s1 + $0x48] sm:$0xff]
  %v168 = vld [vmem:[%s1 + $0x50] sm:$0xff]
  %v169 = vld [vmem:[%s1 + $0x58] sm:$0xff]
  %v170 = vld [vmem:[%s1 + $0x60] sm:$0xff]
  %v171 = vld [vmem:[%s1 + $0x68] sm:$0xff]
  %v172 = vld [vmem:[%s1 + $0x70] sm:$0xff]
  %v173 = vld [vmem:[%s1 + $0x78] sm:$0xff]
  %v174 = vld [vmem:[%s1 + $0x80] sm:$0xff]
  %v175 = vld [vmem:[%s1 + $0x88] sm:$0xff]
  %v176 = vld [vmem:[%s1 + $0x90] sm:$0xff]
  %v177 = vld [vmem:[%s1 + $0x98] sm:$0xff]
  %v178 = vld [vmem:[%s1 + $0xa0] sm:$0xff]
  %v179 = vld [vmem:[%s1 + $0xa8] sm:$0xff]
  %v180 = vld [vmem:[%s1 + $0xb0] sm:$0xff]
  %v181 = vld [vmem:[%s1 + $0xb8] sm:$0xff]
  %v182 = vld [vmem:[%s1 + $0xc0] sm:$0xff]
  %v183 = vld [vmem:[%s1 + $0xc8] sm:$0xff]
  %v184 = vld [vmem:[%s1 + $0xd0] sm:$0xff]
  %v185 = vld [vmem:[%s1 + $0xd8] sm:$0xff]
  %v186 = vld [vmem:[%s1 + $0xe0] sm:$0xff]
  %v187 = vld [vmem:[%s1 + $0xe8] sm:$0xff]
  %v188 = vld [vmem:[%s1 + $0xf0] sm:$0xff]
  %v189 = vld [vmem:[%s1 + $0xf8] sm:$0xff]
  %v190 = vld [vmem:[%s1 + $0x100] sm:$0xff]
  %v191 = vld [vmem:[%s1 + $0x108] sm:$0xff]
  %v192 = vld [vmem:[%s1 + $0x110] sm:$0xff]
  %v193 = vld [vmem:[%s1 + $0x118] sm:$0xff]
  %v194 = vld [vmem:[%s1 + $0x120] sm:$0xff]
  %v195 = vld [vmem:[%s1 + $0x128] sm:$0xff]
  %v196 = vld [vmem:[%s1 + $0x130] sm:$0xff]
  %v197 = vld [vmem:[%s1 + $0x138] sm:$0xff]
  %v198 = vld [vmem:[%s1 + $0x140] sm:$0xff]
  %v199 = vld [vmem:[%s1 + $0x148] sm:$0xff]
  %v200 = vld [vmem:[%s1 + $0x150] sm:$0xff]
  %v201 = vld [vmem:[%s1 + $0x158] sm:$0xff]
  %v202 = vld [vmem:[%s1 + $0x160] sm:$0xff]
  %v203 = vld [vmem:[%s1 + $0x168] sm:$0xff]
  %v204 = vld [vmem:[%s1 + $0x170] sm:$0xff]
  %v205 = vld [vmem:[%s1 + $0x178] sm:$0xff]
  %v206 = vld [vmem:[%s1 + $0x180] sm:$0xff]
  %v207 = vld [vmem:[%s1 + $0x188] sm:$0xff]
  %v208 = vld [vmem:[%s1 + $0x190] sm:$0xff]
  %v209 = vld [vmem:[%s1 + $0x198] sm:$0xff]
  %v210 = vld [vmem:[%s1 + $0x1a0] sm:$0xff]
  %v211 = vld [vmem:[%s1 + $0x1a8] sm:$0xff]
  %v212 = vld [vmem:[%s1 + $0x1b0] sm:$0xff]
  %v213 = vld [vmem:[%s1 + $0x1b8] sm:$0xff]
  %v214 = vld [vmem:[%s1 + $0x1c0] sm:$0xff]
  %v215 = vld [vmem:[%s1 + $0x1c8] sm:$0xff]
  %v216 = vld [vmem:[%s1 + $0x1d0] sm:$0xff]
  %v217 = vld [vmem:[%s1 + $0x1d8] sm:$0xff]
  %v218 = vld [vmem:[%s1 + $0x1e0] sm:$0xff]
  %v219 = vld [vmem:[%s1 + $0x1e8] sm:$0xff]
  %v220 = vld [vmem:[%s1 + $0x1f0] sm:$0xff]
  %v221 = vld [vmem:[%s1 + $0x1f8] sm:$0xff]
  %v222 = vld [vmem:[%s1 + $0x200] sm:$0xff]
  %v223 = vld [vmem:[%s1 + $0x208] sm:$0xff]
  %v224 = vld [vmem:[%s1 + $0x210] sm:$0xff]
  %v225 = vld [vmem:[%s1 + $0x218] sm:$0xff]
  %v226 = vld [vmem:[%s1 + $0x220] sm:$0xff]
  %v227 = vld [vmem:[%s1 + $0x228] sm:$0xff]
  %v228 = vld [vmem:[%s1 + $0x230] sm:$0xff]
  %v229 = vld [vmem:[%s1 + $0x238] sm:$0xff]
  %v230 = vld [vmem:[%s1 + $0x240] sm:$0xff]
  %v231 = vld [vmem:[%s1 + $0x248] sm:$0xff]
  %v232 = vld [vmem:[%s1 + $0x250] sm:$0xff]
  %v233 = vld [vmem:[%s1 + $0x258] sm:$0xff]
  %v234 = vld [vmem:[%s1 + $0x260] sm:$0xff]
  %v235 = vld [vmem:[%s1 + $0x268] sm:$0xff]
  %v236 = vld [vmem:[%s1 + $0x270] sm:$0xff]
  %v237 = vld [vmem:[%s1 + $0x278] sm:$0xff]
  %v238 = vld [vmem:[%s1 + $0x280] sm:$0xff]
  %v239 = vld [vmem:[%s1 + $0x288] sm:$0xff]
  %v240 = vld [vmem:[%s1 + $0x290] sm:$0xff]
  %v241 = vld [vmem:[%s1 + $0x298] sm:$0xff]
  %v242 = vld [vmem:[%s1 + $0x2a0] sm:$0xff]
  %v243 = vld [vmem:[%s1 + $0x2a8] sm:$0xff]
  %v244 = vld [vmem:[%s1 + $0x2b0] sm:$0xff]
  %v245 = vld [vmem:[%s1 + $0x2b8] sm:$0xff]
  %v246 = vld [vmem:[%s1 + $0x2c0] sm:$0xff]
  %v247 = vld [vmem:[%s1 + $0x2c8] sm:$0xff]
  %v248 = vld [vmem:[%s1 + $0x2d0] sm:$0xff]
  %v249 = vld [vmem:[%s1 + $0x2d8] sm:$0xff]
  %v250 = vld [vmem:[%s1 + $0x2e0] sm:$0xff]
  %v251 = vld [vmem:[%s1 + $0x2e8] sm:$0xff]
  %v252 = vld [vmem:[%s1 + $0x2f0] sm:$0xff]
  %v253 = vld [vmem:[%s1 + $0x2f8] sm:$0xff]
  %v254 = vld [vmem:[%s1 + $0x300] sm:$0xff]
  %v255 = vld [vmem:[%s1 + $0x308] sm:$0xff]
  %v256 = vld [vmem:[%s1 + $0x310] sm:$0xff]
  %v257 = vld [vmem:[%s1 + $0x318] sm:$0xff]
  %v258 = vld [vmem:[%s1 + $0x320] sm:$0xff]
  %v259 = vld [vmem:[%s1 + $0x328] sm:$0xff]
  %v260 = vld [vmem:[%s1 + $0x330] sm:$0xff]
  %v261 = vld [vmem:[%s1 + $0x338] sm:$0xff]
  %v262 = vld [vmem:[%s1 + $0x340] sm:$0xff]
  %v263 = vld [vmem:[%s1 + $0x348] sm:$0xff]
  %v264 = vld [vmem:[%s1 + $0x350] sm:$0xff]
  %v265 = vld [vmem:[%s1 + $0x358] sm:$0xff]
  %v266 = vld [vmem:[%s1 + $0x360] sm:$0xff]
  %v267 = vld [vmem:[%s1 + $0x368] sm:$0xff]
  %v268 = vld [vmem:[%s1 + $0x370] sm:$0xff]
  %v269 = vld [vmem:[%s1 + $0x378] sm:$0xff]
  %v270 = vld [vmem:[%s1 + $0x380] sm:$0xff]
  %v271 = vld [vmem:[%s1 + $0x388] sm:$0xff]
  %v272 = vld [vmem:[%s1 + $0x390] sm:$0xff]
  %v273 = vld [vmem:[%s1 + $0x398] sm:$0xff]
  %v274 = vld [vmem:[%s1 + $0x3a0] sm:$0xff]
  %v275 = vld [vmem:[%s1 + $0x3a8] sm:$0xff]
  %v276 = vld [vmem:[%s1 + $0x3b0] sm:$0xff]
  %v277 = vld [vmem:[%s1 + $0x3b8] sm:$0xff]
  %v278 = vld [vmem:[%s1 + $0x3c0] sm:$0xff]
  %v279 = vld [vmem:[%s1 + $0x3c8] sm:$0xff]
  %v280 = vld [vmem:[%s1 + $0x3d0] sm:$0xff]
  %v281 = vld [vmem:[%s1 + $0x3d8] sm:$0xff]
  %v282 = vld [vmem:[%s1 + $0x3e0] sm:$0xff]
  %v283 = vld [vmem:[%s1 + $0x3e8] sm:$0xff]
  %v284 = vld [vmem:[%s1 + $0x3f0] sm:$0xff]
  %v285 = vld [vmem:[%s1 + $0x3f8] sm:$0xff]
  %v286 = vld [vmem:[%s1 + $0x400] sm:$0xff]
  %v287 = vld [vmem:[%s1 + $0x408] sm:$0xff]
  %v288 = vld [vmem:[%s1 + $0x410] sm:$0xff]
  %v289 = vld [vmem:[%s1 + $0x418] sm:$0xff]
  %v290 = vld [vmem:[%s1 + $0x420] sm:$0xff]
  %v291 = vld [vmem:[%s1 + $0x428] sm:$0xff]
  %v292 = vld [vmem:[%s1 + $0x430] sm:$0xff]
  %v293 = vld [vmem:[%s1 + $0x438] sm:$0xff]
  %v294 = vld [vmem:[%s1 + $0x440] sm:$0xff]
  %v295 = vld [vmem:[%s1 + $0x448] sm:$0xff]
  %v296 = vld [vmem:[%s1 + $0x450] sm:$0xff]
  %v297 = vld [vmem:[%s1 + $0x458] sm:$0xff]
  %v298 = vld [vmem:[%s1 + $0x460] sm:$0xff]
  %v299 = vld [vmem:[%s1 + $0x468] sm:$0xff]
  %v300 = vld [vmem:[%s1 + $0x470] sm:$0xff]
  %v301 = vld [vmem:[%s1 + $0x478] sm:$0xff]
  %v302 = vld [vmem:[%s1 + $0x480] sm:$0xff]
  %v303 = vld [vmem:[%s1 + $0x488] sm:$0xff]
  %v304 = vld [vmem:[%s1 + $0x490] sm:$0xff]
  %v305 = vld [vmem:[%s1 + $0x498] sm:$0xff]
  %v306 = vld [vmem:[%s1 + $0x4a0] sm:$0xff]
  %v307 = vld [vmem:[%s1 + $0x4a8] sm:$0xff]
  %v308 = vld [vmem:[%s1 + $0x4b0] sm:$0xff]
  %v309 = vld [vmem:[%s1 + $0x4b8] sm:$0xff]
  %v310 = vld [vmem:[%s1 + $0x4c0] sm:$0xff]
  %v311 = vld [vmem:[%s1 + $0x4c8] sm:$0xff]
  %v312 = vld [vmem:[%s1 + $0x4d0] sm:$0xff]
  %v313 = vld [vmem:[%s1 + $0x4d8] sm:$0xff]
  %v314 = vld [vmem:[%s1 + $0x4e0] sm:$0xff]
  %v315 = vld [vmem:[%s1 + $0x4e8] sm:$0xff]
  %v316 = vld [vmem:[%s1 + $0x4f0] sm:$0xff]
  %v317 = vld [vmem:[%s1 + $0x4f8] sm:$0xff]
  %v318 = vld [vmem:[%s1 + $0x500] sm:$0xff]
  %v319 = vld [vmem:[%s1 + $0x508] sm:$0xff]
  %v320 = vld [vmem:[%s1 + $0x510] sm:$0xff]
  %v321 = vld [vmem:[%s1 + $0x518] sm:$0xff]
  %v322 = vld [vmem:[%s1 + $0x520] sm:$0xff]
  %v323 = vld [vmem:[%s1 + $0x528] sm:$0xff]
  %v324 = vld [vmem:[%s1 + $0x530] sm:$0xff]
  %v325 = vld [vmem:[%s1 + $0x538] sm:$0xff]
  %v326 = vld [vmem:[%s1 + $0x540] sm:$0xff]
  %v327 = vld [vmem:[%s1 + $0x548] sm:$0xff]
  %v328 = vld [vmem:[%s1 + $0x550] sm:$0xff]
  %v329 = vld [vmem:[%s1 + $0x558] sm:$0xff]
  %v330 = vld [vmem:[%s1 + $0x560] sm:$0xff]
  %v331 = vld [vmem:[%s1 + $0x568] sm:$0xff]
  %v332 = vld [vmem:[%s1 + $0x570] sm:$0xff]
  %v333 = vld [vmem:[%s1 + $0x578] sm:$0xff]
  %v334 = vld [vmem:[%s1 + $0x580] sm:$0xff]
  %v335 = vld [vmem:[%s1 + $0x588] sm:$0xff]
  %v336 = vld [vmem:[%s1 + $0x590] sm:$0xff]
  %v337 = vld [vmem:[%s1 + $0x598] sm:$0xff]
  %v338 = vld [vmem:[%s1 + $0x5a0] sm:$0xff]
  %v339 = vld [vmem:[%s1 + $0x5a8] sm:$0xff]
  %v340 = vld [vmem:[%s1 + $0x5b0] sm:$0xff]
  %v341 = vld [vmem:[%s1 + $0x5b8] sm:$0xff]
  %v342 = vld [vmem:[%s1 + $0x5c0] sm:$0xff]
  %v343 = vld [vmem:[%s1 + $0x5c8] sm:$0xff]
  %v344 = vld [vmem:[%s1 + $0x5d0] sm:$0xff]
  %v345 = vld [vmem:[%s1 + $0x5d8] sm:$0xff]
  %v346 = vld [vmem:[%s1 + $0x5e0] sm:$0xff]
  %v347 = vld [vmem:[%s1 + $0x5e8] sm:$0xff]
  %v348 = vld [vmem:[%s1 + $0x5f0] sm:$0xff]
  %v349 = vld [vmem:[%s1 + $0x5f8] sm:$0xff]
  %v350 = vld [vmem:[%s1 + $0x600] sm:$0xff]
  %v351 = vld [vmem:[%s1 + $0x608] sm:$0xff]
  %v352 = vld [vmem:[%s1 + $0x610] sm:$0xff]
  %v353 = vld [vmem:[%s1 + $0x618] sm:$0xff]
  %v354 = vld [vmem:[%s1 + $0x620] sm:$0xff]
  %v355 = vld [vmem:[%s1 + $0x628] sm:$0xff]
  %v356 = vld [vmem:[%s1 + $0x630] sm:$0xff]
  %v357 = vld [vmem:[%s1 + $0x638] sm:$0xff]
  %v358 = vld [vmem:[%s1 + $0x640] sm:$0xff]
  %v359 = vld [vmem:[%s1 + $0x648] sm:$0xff]
  %v360 = vld [vmem:[%s1 + $0x650] sm:$0xff]
  %v361 = vld [vmem:[%s1 + $0x658] sm:$0xff]
  %v362 = vld [vmem:[%s1 + $0x660] sm:$0xff]
  %v363 = vld [vmem:[%s1 + $0x668] sm:$0xff]
  %v364 = vld [vmem:[%s1 + $0x670] sm:$0xff]
  %v365 = vld [vmem:[%s1 + $0x678] sm:$0xff]
  %v366 = vld [vmem:[%s1 + $0x680] sm:$0xff]
  %v367 = vld [vmem:[%s1 + $0x688] sm:$0xff]
  %v368 = vld [vmem:[%s1 + $0x690] sm:$0xff]
  %v369 = vld [vmem:[%s1 + $0x698] sm:$0xff]
  %v370 = vld [vmem:[%s1 + $0x6a0] sm:$0xff]
  %v371 = vld [vmem:[%s1 + $0x6a8] sm:$0xff]
  %v372 = vld [vmem:[%s1 + $0x6b0] sm:$0xff]
  %v373 = vld [vmem:[%s1 + $0x6b8] sm:$0xff]
  %v374 = vld [vmem:[%s1 + $0x6c0] sm:$0xff]
  %v375 = vld [vmem:[%s1 + $0x6c8] sm:$0xff]
  %v376 = vld [vmem:[%s1 + $0x6d0] sm:$0xff]
  %v377 = vld [vmem:[%s1 + $0x6d8] sm:$0xff]
  %v378 = vld [vmem:[%s1 + $0x6e0] sm:$0xff]
  %v379 = vld [vmem:[%s1 + $0x6e8] sm:$0xff]
  %v380 = vld [vmem:[%s1 + $0x6f0] sm:$0xff]
  %v381 = vld [vmem:[%s1 + $0x6f8] sm:$0xff]
  %v382 = vld [vmem:[%s1 + $0x700] sm:$0xff]
  %v383 = vld [vmem:[%s1 + $0x708] sm:$0xff]
  %v384 = vld [vmem:[%s1 + $0x710] sm:$0xff]
  %v385 = vld [vmem:[%s1 + $0x718] sm:$0xff]
  %v386 = vld [vmem:[%s1 + $0x720] sm:$0xff]
  %v387 = vld [vmem:[%s1 + $0x728] sm:$0xff]
  %v388 = vld [vmem:[%s1 + $0x730] sm:$0xff]
  %v389 = vld [vmem:[%s1 + $0x738] sm:$0xff]
  %v390 = vld [vmem:[%s1 + $0x740] sm:$0xff]
  %v391 = vld [vmem:[%s1 + $0x748] sm:$0xff]
  %v392 = vld [vmem:[%s1 + $0x750] sm:$0xff]
  %v393 = vld [vmem:[%s1 + $0x758] sm:$0xff]
  %v394 = vld [vmem:[%s1 + $0x760] sm:$0xff]
  %v395 = vld [vmem:[%s1 + $0x768] sm:$0xff]
  %v396 = vld [vmem:[%s1 + $0x770] sm:$0xff]
  %v397 = vld [vmem:[%s1 + $0x778] sm:$0xff]
  %v398 = vld [vmem:[%s1 + $0x780] sm:$0xff]
  %v399 = vld [vmem:[%s1 + $0x788] sm:$0xff]
  %v400 = vld [vmem:[%s1 + $0x790] sm:$0xff]
  %v401 = vld [vmem:[%s1 + $0x798] sm:$0xff]
  %v402 = vld [vmem:[%s1 + $0x7a0] sm:$0xff]
  %v403 = vld [vmem:[%s1 + $0x7a8] sm:$0xff]
  %v404 = vld [vmem:[%s1 + $0x7b0] sm:$0xff]
  %v405 = vld [vmem:[%s1 + $0x7b8] sm:$0xff]
  %v406 = vld [vmem:[%s1 + $0x7c0] sm:$0xff]
  %v407 = vld [vmem:[%s1 + $0x7c8] sm:$0xff]
  %v408 = vld [vmem:[%s1 + $0x7d0] sm:$0xff]
  %v409 = vld [vmem:[%s1 + $0x7d8] sm:$0xff]
  %v410 = vld [vmem:[%s1 + $0x7e0] sm:$0xff]
  %v411 = vld [vmem:[%s1 + $0x7e8] sm:$0xff]
  %v412 = vld [vmem:[%s1 + $0x7f0] sm:$0xff]
  %v413 = vld [vmem:[%s1 + $0x7f8] sm:$0xff]
  %v414 = vld [vmem:[%s1 + $0x800] sm:$0xff]
  %v415 = vld [vmem:[%s1 + $0x808] sm:$0xff]
  %v416 = vld [vmem:[%s1 + $0x810] sm:$0xff]
  %v417 = vld [vmem:[%s1 + $0x818] sm:$0xff]
  %v418 = vld [vmem:[%s1 + $0x820] sm:$0xff]
  %v419 = vld [vmem:[%s1 + $0x828] sm:$0xff]
  %v420 = vld [vmem:[%s1 + $0x830] sm:$0xff]
  %v421 = vld [vmem:[%s1 + $0x838] sm:$0xff]
  %v422 = vld [vmem:[%s1 + $0x840] sm:$0xff]
  %v423 = vld [vmem:[%s1 + $0x848] sm:$0xff]
  %v424 = vld [vmem:[%s1 + $0x850] sm:$0xff]
  %v425 = vld [vmem:[%s1 + $0x858] sm:$0xff]
  %v426 = vld [vmem:[%s1 + $0x860] sm:$0xff]
  %v427 = vld [vmem:[%s1 + $0x868] sm:$0xff]
  %v428 = vld [vmem:[%s1 + $0x870] sm:$0xff]
  %v429 = vld [vmem:[%s1 + $0x878] sm:$0xff]
  %v430 = vld [vmem:[%s1 + $0x880] sm:$0xff]
  %v431 = vld [vmem:[%s1 + $0x888] sm:$0xff]
  %v432 = vld [vmem:[%s1 + $0x890] sm:$0xff]
  %v433 = vld [vmem:[%s1 + $0x898] sm:$0xff]
  %v434 = vld [vmem:[%s1 + $0x8a0] sm:$0xff]
  %v435 = vld [vmem:[%s1 + $0x8a8] sm:$0xff]
  %v436 = vld [vmem:[%s1 + $0x8b0] sm:$0xff]
  %v437 = vld [vmem:[%s1 + $0x8b8] sm:$0xff]
  %v438 = vld [vmem:[%s1 + $0x8c0] sm:$0xff]
  %v439 = vld [vmem:[%s1 + $0x8c8] sm:$0xff]
  %v440 = vld [vmem:[%s1 + $0x8d0] sm:$0xff]
  %v441 = vld [vmem:[%s1 + $0x8d8] sm:$0xff]
  %v442 = vld [vmem:[%s1 + $0x8e0] sm:$0xff]
  %v443 = vld [vmem:[%s1 + $0x8e8] sm:$0xff]
  %v444 = vld [vmem:[%s1 + $0x8f0] sm:$0xff]
  %v445 = vld [vmem:[%s1 + $0x8f8] sm:$0xff]
  %v446 = vld [vmem:[%s1 + $0x900] sm:$0xff]
  %v447 = vld [vmem:[%s1 + $0x908] sm:$0xff]
  %v448 = vld [vmem:[%s1 + $0x910] sm:$0xff]
  %v449 = vld [vmem:[%s1 + $0x918] sm:$0xff]
  %v450 = vld [vmem:[%s1 + $0x920] sm:$0xff]
  %v451 = vld [vmem:[%s1 + $0x928] sm:$0xff]
  %v452 = vld [vmem:[%s1 + $0x930] sm:$0xff]
  %v453 = vld [vmem:[%s1 + $0x938] sm:$0xff]
  %v454 = vld [vmem:[%s1 + $0x940] sm:$0xff]
  %v455 = vld [vmem:[%s1 + $0x948] sm:$0xff]
  %v456 = vld [vmem:[%s1 + $0x950] sm:$0xff]
  %v457 = vld [vmem:[%s1 + $0x958] sm:$0xff]
  %v458 = vld [vmem:[%s1 + $0x960] sm:$0xff]
  %v459 = vld [vmem:[%s1 + $0x968] sm:$0xff]
  %v460 = vld [vmem:[%s1 + $0x970] sm:$0xff]
  %v461 = vld [vmem:[%s1 + $0x978] sm:$0xff]
  %v462 = vld [vmem:[%s1 + $0x980] sm:$0xff]
  %v463 = vld [vmem:[%s1 + $0x988] sm:$0xff]
  %v464 = vld [vmem:[%s1 + $0x990] sm:$0xff]
  %v465 = vld [vmem:[%s1 + $0x998] sm:$0xff]
  %v466 = vld [vmem:[%s1 + $0x9a0] sm:$0xff]
  %v467 = vld [vmem:[%s1 + $0x9a8] sm:$0xff]
  %v468 = vld [vmem:[%s1 + $0x9b0] sm:$0xff]
  %v469 = vld [vmem:[%s1 + $0x9b8] sm:$0xff]
  %v470 = vld [vmem:[%s1 + $0x9c0] sm:$0xff]
  %v471 = vld [vmem:[%s1 + $0x9c8] sm:$0xff]
  %v472 = vld [vmem:[%s1 + $0x9d0] sm:$0xff]
  %v473 = vld [vmem:[%s1 + $0x9d8] sm:$0xff]
  %v474 = vld [vmem:[%s1 + $0x9e0] sm:$0xff]
  %v475 = vld [vmem:[%s1 + $0x9e8] sm:$0xff]
  %v476 = vld [vmem:[%s1 + $0x9f0] sm:$0xff]
  %v477 = vld [vmem:[%s1 + $0x9f8] sm:$0xff]
  %v478 = vld [vmem:[%s1 + $0xa00] sm:$0xff]
  %v479 = vld [vmem:[%s1 + $0xa08] sm:$0xff]
  %v480 = vld [vmem:[%s1 + $0xa10] sm:$0xff]
  %v481 = vld [vmem:[%s1 + $0xa18] sm:$0xff]
  %v482 = vld [vmem:[%s1 + $0xa20] sm:$0xff]
  %v483 = vld [vmem:[%s1 + $0xa28] sm:$0xff]
  %v484 = vld [vmem:[%s1 + $0xa30] sm:$0xff]
  %v485 = vld [vmem:[%s1 + $0xa38] sm:$0xff]
  %v486 = vld [vmem:[%s1 + $0xa40] sm:$0xff]
  %v487 = vld [vmem:[%s1 + $0xa48] sm:$0xff]
  %v488 = vld [vmem:[%s1 + $0xa50] sm:$0xff]
  %v489 = vld [vmem:[%s1 + $0xa58] sm:$0xff]
  %v490 = vld [vmem:[%s1 + $0xa60] sm:$0xff]
  %v491 = vld [vmem:[%s1 + $0xa68] sm:$0xff]
  %v492 = vld [vmem:[%s1 + $0xa70] sm:$0xff]
  %v493 = vld [vmem:[%s1 + $0xa78] sm:$0xff]
  %v494 = vld [vmem:[%s1 + $0xa80] sm:$0xff]
  %v495 = vld [vmem:[%s1 + $0xa88] sm:$0xff]
  %v496 = vld [vmem:[%s1 + $0xa90] sm:$0xff]
  %v497 = vld [vmem:[%s1 + $0xa98] sm:$0xff]
  %v498 = vld [vmem:[%s1 + $0xaa0] sm:$0xff]
  %v499 = vld [vmem:[%s1 + $0xaa8] sm:$0xff]
  %v500 = vld [vmem:[%s1 + $0xab0] sm:$0xff]
  %v501 = vld [vmem:[%s1 + $0xab8] sm:$0xff]
  %v502 = vld [vmem:[%s1 + $0xac0] sm:$0xff]
  %v503 = vld [vmem:[%s1 + $0xac8] sm:$0xff]
  %v504 = vld [vmem:[%s1 + $0xad0] sm:$0xff]
  %v505 = vld [vmem:[%s1 + $0xad8] sm:$0xff]
  %v506 = vld [vmem:[%s1 + $0xae0] sm:$0xff]
  %v507 = vld [vmem:[%s1 + $0xae8] sm:$0xff]
  %v508 = vld [vmem:[%s1 + $0xaf0] sm:$0xff]
  %v509 = vld [vmem:[%s1 + $0xaf8] sm:$0xff]
  %v510 = vld [vmem:[%s1 + $0xb00] sm:$0xff]
  %v511 = vld [vmem:[%s1 + $0xb08] sm:$0xff]
  %v512 = vld [vmem:[%s1 + $0xb10] sm:$0xff]
  %v513 = vld [vmem:[%s1 + $0xb18] sm:$0xff]
  %v514 = vld [vmem:[%s1 + $0xb20] sm:$0xff]
  %v515 = vld [vmem:[%s1 + $0xb28] sm:$0xff]
  %v516 = vld [vmem:[%s1 + $0xb30] sm:$0xff]
  %v517 = vld [vmem:[%s1 + $0xb38] sm:$0xff]
  %v518 = vld [vmem:[%s1 + $0xb40] sm:$0xff]
  %v519 = vld [vmem:[%s1 + $0xb48] sm:$0xff]
  %v520 = vld [vmem:[%s1 + $0xb50] sm:$0xff]
  %v521 = vld [vmem:[%s1 + $0xb58] sm:$0xff]
  %v522 = vld [vmem:[%s1 + $0xb60] sm:$0xff]
  %v523 = vld [vmem:[%s1 + $0xb68] sm:$0xff]
  %v524 = vld [vmem:[%s1 + $0xb70] sm:$0xff]
  %v525 = vld [vmem:[%s1 + $0xb78] sm:$0xff]
  %v526 = vld [vmem:[%s1 + $0xb80] sm:$0xff]
  %v527 = vld [vmem:[%s1 + $0xb88] sm:$0xff]
  %v528 = vld [vmem:[%s1 + $0xb90] sm:$0xff]
  %v529 = vld [vmem:[%s1 + $0xb98] sm:$0xff]
  %v530 = vld [vmem:[%s1 + $0xba0] sm:$0xff]
  %v531 = vld [vmem:[%s1 + $0xba8] sm:$0xff]
  %v532 = vld [vmem:[%s1 + $0xbb0] sm:$0xff]
  %v533 = vld [vmem:[%s1 + $0xbb8] sm:$0xff]
  %v534 = vld [vmem:[%s1 + $0xbc0] sm:$0xff]
  %v535 = vld [vmem:[%s1 + $0xbc8] sm:$0xff]
  %v536 = vld [vmem:[%s1 + $0xbd0] sm:$0xff]
  %v537 = vld [vmem:[%s1 + $0xbd8] sm:$0xff]
  %v538 = vld [vmem:[%s1 + $0xbe0] sm:$0xff]
  %v539 = vld [vmem:[%s1 + $0xbe8] sm:$0xff]
  %v540 = vld [vmem:[%s1 + $0xbf0] sm:$0xff]
  %v541 = vld [vmem:[%s1 + $0xbf8] sm:$0xff]
  %v542 = vld [vmem:[%s1 + $0xc00] sm:$0xff]
  %v543 = vld [vmem:[%s1 + $0xc08] sm:$0xff]
  %v544 = vld [vmem:[%s1 + $0xc10] sm:$0xff]
  %v545 = vld [vmem:[%s1 + $0xc18] sm:$0xff]
  %v546 = vld [vmem:[%s1 + $0xc20] sm:$0xff]
  %v547 = vld [vmem:[%s1 + $0xc28] sm:$0xff]
  %v548 = vld [vmem:[%s1 + $0xc30] sm:$0xff]
  %v549 = vld [vmem:[%s1 + $0xc38] sm:$0xff]
  %v550 = vld [vmem:[%s1 + $0xc40] sm:$0xff]
  %v551 = vld [vmem:[%s1 + $0xc48] sm:$0xff]
  %v552 = vld [vmem:[%s1 + $0xc50] sm:$0xff]
  %v553 = vld [vmem:[%s1 + $0xc58] sm:$0xff]
  %v554 = vld [vmem:[%s1 + $0xc60] sm:$0xff]
  %v555 = vld [vmem:[%s1 + $0xc68] sm:$0xff]
  %v556 = vld [vmem:[%s1 + $0xc70] sm:$0xff]
  %v557 = vld [vmem:[%s1 + $0xc78] sm:$0xff]
  %v558 = vld [vmem:[%s1 + $0xc80] sm:$0xff]
  %v559 = vld [vmem:[%s1 + $0xc88] sm:$0xff]
  %v560 = vld [vmem:[%s1 + $0xc90] sm:$0xff]
  %v561 = vld [vmem:[%s1 + $0xc98] sm:$0xff]
  %v562 = vld [vmem:[%s1 + $0xca0] sm:$0xff]
  %v563 = vld [vmem:[%s1 + $0xca8] sm:$0xff]
  %v564 = vld [vmem:[%s1 + $0xcb0] sm:$0xff]
  %v565 = vld [vmem:[%s1 + $0xcb8] sm:$0xff]
  %v566 = vld [vmem:[%s1 + $0xcc0] sm:$0xff]
  %v567 = vld [vmem:[%s1 + $0xcc8] sm:$0xff]
  %v568 = vld [vmem:[%s1 + $0xcd0] sm:$0xff]
  %v569 = vld [vmem:[%s1 + $0xcd8] sm:$0xff]
  %v570 = vld [vmem:[%s1 + $0xce0] sm:$0xff]
  %v571 = vld [vmem:[%s1 + $0xce8] sm:$0xff]
  %v572 = vld [vmem:[%s1 + $0xcf0] sm:$0xff]
  %v573 = vld [vmem:[%s1 + $0xcf8] sm:$0xff]
  %v574 = vld [vmem:[%s1 + $0xd00] sm:$0xff]
  %v575 = vld [vmem:[%s1 + $0xd08] sm:$0xff]
  %v576 = vld [vmem:[%s1 + $0xd10] sm:$0xff]
  %v577 = vld [vmem:[%s1 + $0xd18] sm:$0xff]
  %v578 = vld [vmem:[%s1 + $0xd20] sm:$0xff]
  %v579 = vld [vmem:[%s1 + $0xd28] sm:$0xff]
  %v580 = vld [vmem:[%s1 + $0xd30] sm:$0xff]
  %v581 = vld [vmem:[%s1 + $0xd38] sm:$0xff]
  %v582 = vld [vmem:[%s1 + $0xd40] sm:$0xff]
  %v583 = vld [vmem:[%s1 + $0xd48] sm:$0xff]
  %v584 = vld [vmem:[%s1 + $0xd50] sm:$0xff]
  %v585 = vld [vmem:[%s1 + $0xd58] sm:$0xff]
  %v586 = vld [vmem:[%s1 + $0xd60] sm:$0xff]
  %v587 = vld [vmem:[%s1 + $0xd68] sm:$0xff]
  %v588 = vld [vmem:[%s1 + $0xd70] sm:$0xff]
  %v589 = vld [vmem:[%s1 + $0xd78] sm:$0xff]
  %v590 = vld [vmem:[%s1 + $0xd80] sm:$0xff]
  %v591 = vld [vmem:[%s1 + $0xd88] sm:$0xff]
  %v592 = vld [vmem:[%s1 + $0xd90] sm:$0xff]
  %v593 = vld [vmem:[%s1 + $0xd98] sm:$0xff]
  %v594 = vld [vmem:[%s1 + $0xda0] sm:$0xff]
  %v595 = vld [vmem:[%s1 + $0xda8] sm:$0xff]
  %v596 = vld [vmem:[%s1 + $0xdb0] sm:$0xff]
  %v597 = vld [vmem:[%s1 + $0xdb8] sm:$0xff]
  %v598 = vld [vmem:[%s1 + $0xdc0] sm:$0xff]
  %v599 = vld [vmem:[%s1 + $0xdc8] sm:$0xff]
  %v600 = vld [vmem:[%s1 + $0xdd0] sm:$0xff]
  %v601 = vld [vmem:[%s1 + $0xdd8] sm:$0xff]
  %v602 = vld [vmem:[%s1 + $0xde0] sm:$0xff]
  %v603 = vld [vmem:[%s1 + $0xde8] sm:$0xff]
  %v604 = vld [vmem:[%s1 + $0xdf0] sm:$0xff]
  %v605 = vld [vmem:[%s1 + $0xdf8] sm:$0xff]
  %v606 = vld [vmem:[%s1 + $0xe00] sm:$0xff]
  %v607 = vld [vmem:[%s1 + $0xe08] sm:$0xff]
  %v608 = vld [vmem:[%s1 + $0xe10] sm:$0xff]
  %v609 = vld [vmem:[%s1 + $0xe18] sm:$0xff]
  %v610 = vld [vmem:[%s1 + $0xe20] sm:$0xff]
  %v611 = vld [vmem:[%s1 + $0xe28] sm:$0xff]
  %v612 = vld [vmem:[%s1 + $0xe30] sm:$0xff]
  %v613 = vld [vmem:[%s1 + $0xe38] sm:$0xff]
  %v614 = vld [vmem:[%s1 + $0xe40] sm:$0xff]
  %v615 = vld [vmem:[%s1 + $0xe48] sm:$0xff]
  %v616 = vld [vmem:[%s1 + $0xe50] sm:$0xff]
  %v617 = vld [vmem:[%s1 + $0xe58] sm:$0xff]
  %v618 = vld [vmem:[%s1 + $0xe60] sm:$0xff]
  %v619 = vld [vmem:[%s1 + $0xe68] sm:$0xff]
  %v620 = vld [vmem:[%s1 + $0xe70] sm:$0xff]
  %v621 = vld [vmem:[%s1 + $0xe78] sm:$0xff]
  %v622 = vld [vmem:[%s1 + $0xe80] sm:$0xff]
  %v623 = vld [vmem:[%s1 + $0xe88] sm:$0xff]
  %v624 = vld [vmem:[%s1 + $0xe90] sm:$0xff]
  %v625 = vld [vmem:[%s1 + $0xe98] sm:$0xff]
  %v626 = vld [vmem:[%s1 + $0xea0] sm:$0xff]
  %v627 = vld [vmem:[%s1 + $0xea8] sm:$0xff]
  %v628 = vld [vmem:[%s1 + $0xeb0] sm:$0xff]
  %v629 = vld [vmem:[%s1 + $0xeb8] sm:$0xff]
  %v630 = vld [vmem:[%s1 + $0xec0] sm:$0xff]
  %v631 = vld [vmem:[%s1 + $0xec8] sm:$0xff]
  %v632 = vld [vmem:[%s1 + $0xed0] sm:$0xff]
  %v633 = vld [vmem:[%s1 + $0xed8] sm:$0xff]
  %v634 = vld [vmem:[%s1 + $0xee0] sm:$0xff]
  %v635 = vld [vmem:[%s1 + $0xee8] sm:$0xff]
  %v636 = vld [vmem:[%s1 + $0xef0] sm:$0xff]
  %v637 = vld [vmem:[%s1 + $0xef8] sm:$0xff]
  %v638 = vld [vmem:[%s1 + $0xf00] sm:$0xff]
  %v639 = vld [vmem:[%s1 + $0xf08] sm:$0xff]
  %v640 = vld [vmem:[%s1 + $0xf10] sm:$0xff]
  %v641 = vld [vmem:[%s1 + $0xf18] sm:$0xff]
  %v642 = vld [vmem:[%s1 + $0xf20] sm:$0xff]
  %v643 = vld [vmem:[%s1 + $0xf28] sm:$0xff]
  %v644 = vld [vmem:[%s1 + $0xf30] sm:$0xff]
  %v645 = vld [vmem:[%s1 + $0xf38] sm:$0xff]
  %v646 = vld [vmem:[%s1 + $0xf40] sm:$0xff]
  %v647 = vld [vmem:[%s1 + $0xf48] sm:$0xff]
  %v648 = vld [vmem:[%s1 + $0xf50] sm:$0xff]
  %v649 = vld [vmem:[%s1 + $0xf58] sm:$0xff]
  %v650 = vld [vmem:[%s1 + $0xf60] sm:$0xff]
  %v651 = vld [vmem:[%s1 + $0xf68] sm:$0xff]
  %v652 = vld [vmem:[%s1 + $0xf70] sm:$0xff]
  %v653 = vld [vmem:[%s1 + $0xf78] sm:$0xff]
  %v654 = vld [vmem:[%s1 + $0xf80] sm:$0xff]
  %v655 = vld [vmem:[%s1 + $0xf88] sm:$0xff]
  %v656 = vld [vmem:[%s1 + $0xf90] sm:$0xff]
  %v657 = vld [vmem:[%s1 + $0xf98] sm:$0xff]
  %v658 = vld [vmem:[%s1 + $0xfa0] sm:$0xff]
  %v659 = vld [vmem:[%s1 + $0xfa8] sm:$0xff]
  %v660 = vld [vmem:[%s1 + $0xfb0] sm:$0xff]
  %v661 = vld [vmem:[%s1 + $0xfb8] sm:$0xff]
  %v662 = vld [vmem:[%s1 + $0xfc0] sm:$0xff]
  %v663 = vld [vmem:[%s1 + $0xfc8] sm:$0xff]
  %v664 = vld [vmem:[%s1 + $0xfd0] sm:$0xff]
  %v665 = vld [vmem:[%s1 + $0xfd8] sm:$0xff]
  %v666 = vld [vmem:[%s1 + $0xfe0] sm:$0xff]
  %v667 = vld [vmem:[%s1 + $0xfe8] sm:$0xff]
  %v668 = vld [vmem:[%s1 + $0xff0] sm:$0xff]
  %v669 = vld [vmem:[%s1 + $0xff8] sm:$0xff]
  %v670 = vld [vmem:[%s1 + $0x1000] sm:$0xff]
  %v671 = vld [vmem:[%s1 + $0x1008] sm:$0xff]
  %v672 = vld [vmem:[%s1 + $0x1010] sm:$0xff]
  %v673 = vld [vmem:[%s1 + $0x1018] sm:$0xff]
  %v674 = vld [vmem:[%s1 + $0x1020] sm:$0xff]
  %v675 = vld [vmem:[%s1 + $0x1028] sm:$0xff]
  %v676 = vld [vmem:[%s1 + $0x1030] sm:$0xff]
  %v677 = vld [vmem:[%s1 + $0x1038] sm:$0xff]
  %v678 = vld [vmem:[%s1 + $0x1040] sm:$0xff]
  %v679 = vld [vmem:[%s1 + $0x1048] sm:$0xff]
  %v680 = vld [vmem:[%s1 + $0x1050] sm:$0xff]
  %v681 = vld [vmem:[%s1 + $0x1058] sm:$0xff]
  %v682 = vld [vmem:[%s1 + $0x1060] sm:$0xff]
  %v683 = vld [vmem:[%s1 + $0x1068] sm:$0xff]
  %v684 = vld [vmem:[%s1 + $0x1070] sm:$0xff]
  %v685 = vld [vmem:[%s1 + $0x1078] sm:$0xff]
  %v686 = vld [vmem:[%s1 + $0x1080] sm:$0xff]
  %v687 = vld [vmem:[%s1 + $0x1088] sm:$0xff]
  %v688 = vld [vmem:[%s1 + $0x1090] sm:$0xff]
  %v689 = vld [vmem:[%s1 + $0x1098] sm:$0xff]
  %v690 = vld [vmem:[%s1 + $0x10a0] sm:$0xff]
  %v691 = vld [vmem:[%s1 + $0x10a8] sm:$0xff]
  %v692 = vld [vmem:[%s1 + $0x10b0] sm:$0xff]
  %v693 = vld [vmem:[%s1 + $0x10b8] sm:$0xff]
  %v694 = vld [vmem:[%s1 + $0x10c0] sm:$0xff]
  %v695 = vld [vmem:[%s1 + $0x10c8] sm:$0xff]
  %v696 = vld [vmem:[%s1 + $0x10d0] sm:$0xff]
  %v697 = vld [vmem:[%s1 + $0x10d8] sm:$0xff]
  %v698 = vld [vmem:[%s1 + $0x10e0] sm:$0xff]
  %v699 = vld [vmem:[%s1 + $0x10e8] sm:$0xff]
  %v700 = vld [vmem:[%s1 + $0x10f0] sm:$0xff]
  %v701 = vld [vmem:[%s1 + $0x10f8] sm:$0xff]
  %v702 = vld [vmem:[%s1 + $0x1100] sm:$0xff]
  %v703 = vld [vmem:[%s1 + $0x1108] sm:$0xff]
  %v704 = vld [vmem:[%s1 + $0x1110] sm:$0xff]
  %v705 = vld [vmem:[%s1 + $0x1118] sm:$0xff]
  %v706 = vld [vmem:[%s1 + $0x1120] sm:$0xff]
  %v707 = vld [vmem:[%s1 + $0x1128] sm:$0xff]
  %v708 = vld [vmem:[%s1 + $0x1130] sm:$0xff]
  %v709 = vld [vmem:[%s1 + $0x1138] sm:$0xff]
  %v710 = vld [vmem:[%s1 + $0x1140] sm:$0xff]
  %v711 = vld [vmem:[%s1 + $0x1148] sm:$0xff]
  %v712 = vld [vmem:[%s1 + $0x1150] sm:$0xff]
  %v713 = vld [vmem:[%s1 + $0x1158] sm:$0xff]
  %v714 = vld [vmem:[%s1 + $0x1160] sm:$0xff]
  %v715 = vld [vmem:[%s1 + $0x1168] sm:$0xff]
  %v716 = vld [vmem:[%s1 + $0x1170] sm:$0xff]
  %v717 = vld [vmem:[%s1 + $0x1178] sm:$0xff]
  %v718 = vld [vmem:[%s1 + $0x1180] sm:$0xff]
  %v719 = vld [vmem:[%s1 + $0x1188] sm:$0xff]
  %v720 = vld [vmem:[%s1 + $0x1190] sm:$0xff]
  %v721 = vld [vmem:[%s1 + $0x1198] sm:$0xff]
  %v722 = vld [vmem:[%s1 + $0x11a0] sm:$0xff]
  %v723 = vld [vmem:[%s1 + $0x11a8] sm:$0xff]
  %v724 = vld [vmem:[%s1 + $0x11b0] sm:$0xff]
  %v725 = vld [vmem:[%s1 + $0x11b8] sm:$0xff]
  %v726 = vld [vmem:[%s1 + $0x11c0] sm:$0xff]
  %v727 = vld [vmem:[%s1 + $0x11c8] sm:$0xff]
  %v728 = vld [vmem:[%s1 + $0x11d0] sm:$0xff]
  %v729 = vld [vmem:[%s1 + $0x11d8] sm:$0xff]
  %v730 = vld [vmem:[%s1 + $0x11e0] sm:$0xff]
  %v731 = vld [vmem:[%s1 + $0x11e8] sm:$0xff]
  %v732 = vld [vmem:[%s1 + $0x11f0] sm:$0xff]
  %v733 = vld [vmem:[%s1 + $0x11f8] sm:$0xff]
  %v734 = vld [vmem:[%s2] sm:$0xff]
  %v735 = vld [vmem:[%s2 + $0x8] sm:$0xff]
  %v736 = vld [vmem:[%s2 + $0x10] sm:$0xff]
  %v737 = vld [vmem:[%s2 + $0x18] sm:$0xff]
  %v738 = vlaneseq
  %v739 = vshrl.u32 %v738, 7
  %v740 = vsub.s32 0, %v739
  %v741 = vrot.slane %v734, %v740
  %v742 = vlaneseq
  %v743 = vshrl.u32 %v742, 7
  %v744 = vsub.s32 0, %v743
  %v745 = vrot.slane %v735, %v744
  %v746 = vlaneseq
  %v747 = vshrl.u32 %v746, 7
  %v748 = vsub.s32 0, %v747
  %v749 = vrot.slane %v736, %v748
  %v750 = vlaneseq
  %v751 = vshrl.u32 %v750, 7
  %v752 = vsub.s32 0, %v751
  %v753 = vrot.slane %v737, %v752
  %v898 = vunpack.c.l.b16 %v14
  %v899 = vunpack.c.h.b16 %v14
  %v900 = vunpack.c.l.b16 %v15
  %v901 = vunpack.c.h.b16 %v15
  %v902 = vunpack.c.l.b16 %v16
  %v903 = vunpack.c.h.b16 %v16
  %v904 = vunpack.c.l.b16 %v17
  %v905 = vunpack.c.h.b16 %v17
  %v906 = vunpack.c.l.b16 %v18
  %v907 = vunpack.c.h.b16 %v18
  %v908 = vunpack.c.l.b16 %v19
  %v909 = vunpack.c.h.b16 %v19
  %v910 = vunpack.c.l.b16 %v20
  %v911 = vunpack.c.h.b16 %v20
  %v912 = vunpack.c.l.b16 %v21
  %v913 = vunpack.c.h.b16 %v21
  %v914 = vunpack.c.l.b16 %v22
  %v915 = vunpack.c.h.b16 %v22
  %v916 = vunpack.c.l.b16 %v23
  %v917 = vunpack.c.h.b16 %v23
  %v918 = vunpack.c.l.b16 %v24
  %v919 = vunpack.c.h.b16 %v24
  %v920 = vunpack.c.l.b16 %v25
  %v921 = vunpack.c.h.b16 %v25
  %v922 = vunpack.c.l.b16 %v26
  %v923 = vunpack.c.h.b16 %v26
  %v924 = vunpack.c.l.b16 %v27
  %v925 = vunpack.c.h.b16 %v27
  %v926 = vunpack.c.l.b16 %v28
  %v927 = vunpack.c.h.b16 %v28
  %v928 = vunpack.c.l.b16 %v29
  %v929 = vunpack.c.h.b16 %v29
  %v930 = vunpack.c.l.b16 %v30
  %v931 = vunpack.c.h.b16 %v30
  %v932 = vunpack.c.l.b16 %v31
  %v933 = vunpack.c.h.b16 %v31
  %v934 = vunpack.c.l.b16 %v32
  %v935 = vunpack.c.h.b16 %v32
  %v936 = vunpack.c.l.b16 %v33
  %v937 = vunpack.c.h.b16 %v33
  %v938 = vunpack.c.l.b16 %v34
  %v939 = vunpack.c.h.b16 %v34
  %v940 = vunpack.c.l.b16 %v35
  %v941 = vunpack.c.h.b16 %v35
  %v942 = vunpack.c.l.b16 %v36
  %v943 = vunpack.c.h.b16 %v36
  %v944 = vunpack.c.l.b16 %v37
  %v945 = vunpack.c.h.b16 %v37
  %v946 = vunpack.c.l.b16 %v38
  %v947 = vunpack.c.h.b16 %v38
  %v948 = vunpack.c.l.b16 %v39
  %v949 = vunpack.c.h.b16 %v39
  %v950 = vunpack.c.l.b16 %v40
  %v951 = vunpack.c.h.b16 %v40
  %v952 = vunpack.c.l.b16 %v41
  %v953 = vunpack.c.h.b16 %v41
  %v954 = vunpack.c.l.b16 %v42
  %v955 = vunpack.c.h.b16 %v42
  %v956 = vunpack.c.l.b16 %v43
  %v957 = vunpack.c.h.b16 %v43
  %v958 = vunpack.c.l.b16 %v44
  %v959 = vunpack.c.h.b16 %v44
  %v960 = vunpack.c.l.b16 %v45
  %v961 = vunpack.c.h.b16 %v45
  %v962 = vunpack.c.l.b16 %v46
  %v963 = vunpack.c.h.b16 %v46
  %v964 = vunpack.c.l.b16 %v47
  %v965 = vunpack.c.h.b16 %v47
  %v966 = vunpack.c.l.b16 %v48
  %v967 = vunpack.c.h.b16 %v48
  %v968 = vunpack.c.l.b16 %v49
  %v969 = vunpack.c.h.b16 %v49
  %v970 = vunpack.c.l.b16 %v50
  %v971 = vunpack.c.h.b16 %v50
  %v972 = vunpack.c.l.b16 %v51
  %v973 = vunpack.c.h.b16 %v51
  %v974 = vunpack.c.l.b16 %v52
  %v975 = vunpack.c.h.b16 %v52
  %v976 = vunpack.c.l.b16 %v53
  %v977 = vunpack.c.h.b16 %v53
  %v978 = vunpack.c.l.b16 %v54
  %v979 = vunpack.c.h.b16 %v54
  %v980 = vunpack.c.l.b16 %v55
  %v981 = vunpack.c.h.b16 %v55
  %v982 = vunpack.c.l.b16 %v56
  %v983 = vunpack.c.h.b16 %v56
  %v984 = vunpack.c.l.b16 %v57
  %v985 = vunpack.c.h.b16 %v57
  %v986 = vunpack.c.l.b16 %v58
  %v987 = vunpack.c.h.b16 %v58
  %v988 = vunpack.c.l.b16 %v59
  %v989 = vunpack.c.h.b16 %v59
  %v990 = vunpack.c.l.b16 %v60
  %v991 = vunpack.c.h.b16 %v60
  %v992 = vunpack.c.l.b16 %v61
  %v993 = vunpack.c.h.b16 %v61
  %v994 = vunpack.c.l.b16 %v62
  %v995 = vunpack.c.h.b16 %v62
  %v996 = vunpack.c.l.b16 %v63
  %v997 = vunpack.c.h.b16 %v63
  %v998 = vunpack.c.l.b16 %v64
  %v999 = vunpack.c.h.b16 %v64
  %v1000 = vunpack.c.l.b16 %v65
  %v1001 = vunpack.c.h.b16 %v65
  %v1002 = vunpack.c.l.b16 %v66
  %v1003 = vunpack.c.h.b16 %v66
  %v1004 = vunpack.c.l.b16 %v67
  %v1005 = vunpack.c.h.b16 %v67
  %v1006 = vunpack.c.l.b16 %v68
  %v1007 = vunpack.c.h.b16 %v68
  %v1008 = vunpack.c.l.b16 %v69
  %v1009 = vunpack.c.h.b16 %v69
  %v1010 = vunpack.c.l.b16 %v70
  %v1011 = vunpack.c.h.b16 %v70
  %v1012 = vunpack.c.l.b16 %v71
  %v1013 = vunpack.c.h.b16 %v71
  %v1014 = vunpack.c.l.b16 %v72
  %v1015 = vunpack.c.h.b16 %v72
  %v1016 = vunpack.c.l.b16 %v73
  %v1017 = vunpack.c.h.b16 %v73
  %v1018 = vunpack.c.l.b16 %v74
  %v1019 = vunpack.c.h.b16 %v74
  %v1020 = vunpack.c.l.b16 %v75
  %v1021 = vunpack.c.h.b16 %v75
  %v1022 = vunpack.c.l.b16 %v76
  %v1023 = vunpack.c.h.b16 %v76
  %v1024 = vunpack.c.l.b16 %v77
  %v1025 = vunpack.c.h.b16 %v77
  %v1026 = vunpack.c.l.b16 %v78
  %v1027 = vunpack.c.h.b16 %v78
  %v1028 = vunpack.c.l.b16 %v79
  %v1029 = vunpack.c.h.b16 %v79
  %v1030 = vunpack.c.l.b16 %v80
  %v1031 = vunpack.c.h.b16 %v80
  %v1032 = vunpack.c.l.b16 %v81
  %v1033 = vunpack.c.h.b16 %v81
  %v1034 = vunpack.c.l.b16 %v82
  %v1035 = vunpack.c.h.b16 %v82
  %v1036 = vunpack.c.l.b16 %v83
  %v1037 = vunpack.c.h.b16 %v83
  %v1038 = vunpack.c.l.b16 %v84
  %v1039 = vunpack.c.h.b16 %v84
  %v1040 = vunpack.c.l.b16 %v85
  %v1041 = vunpack.c.h.b16 %v85
  %v1042 = vunpack.c.l.b16 %v86
  %v1043 = vunpack.c.h.b16 %v86
  %v1044 = vunpack.c.l.b16 %v87
  %v1045 = vunpack.c.h.b16 %v87
  %v1046 = vunpack.c.l.b16 %v88
  %v1047 = vunpack.c.h.b16 %v88
  %v1048 = vunpack.c.l.b16 %v89
  %v1049 = vunpack.c.h.b16 %v89
  %v1050 = vunpack.c.l.b16 %v90
  %v1051 = vunpack.c.h.b16 %v90
  %v1052 = vunpack.c.l.b16 %v91
  %v1053 = vunpack.c.h.b16 %v91
  %v1054 = vunpack.c.l.b16 %v92
  %v1055 = vunpack.c.h.b16 %v92
  %v1056 = vunpack.c.l.b16 %v93
  %v1057 = vunpack.c.h.b16 %v93
  %v1058 = vunpack.c.l.b16 %v94
  %v1059 = vunpack.c.h.b16 %v94
  %v1060 = vunpack.c.l.b16 %v95
  %v1061 = vunpack.c.h.b16 %v95
  %v1062 = vunpack.c.l.b16 %v96
  %v1063 = vunpack.c.h.b16 %v96
  %v1064 = vunpack.c.l.b16 %v97
  %v1065 = vunpack.c.h.b16 %v97
  %v1066 = vunpack.c.l.b16 %v98
  %v1067 = vunpack.c.h.b16 %v98
  %v1068 = vunpack.c.l.b16 %v99
  %v1069 = vunpack.c.h.b16 %v99
  %v1070 = vunpack.c.l.b16 %v100
  %v1071 = vunpack.c.h.b16 %v100
  %v1072 = vunpack.c.l.b16 %v101
  %v1073 = vunpack.c.h.b16 %v101
  %v1074 = vunpack.c.l.b16 %v102
  %v1075 = vunpack.c.h.b16 %v102
  %v1076 = vunpack.c.l.b16 %v103
  %v1077 = vunpack.c.h.b16 %v103
  %v1078 = vunpack.c.l.b16 %v104
  %v1079 = vunpack.c.h.b16 %v104
  %v1080 = vunpack.c.l.b16 %v105
  %v1081 = vunpack.c.h.b16 %v105
  %v1082 = vunpack.c.l.b16 %v106
  %v1083 = vunpack.c.h.b16 %v106
  %v1084 = vunpack.c.l.b16 %v107
  %v1085 = vunpack.c.h.b16 %v107
  %v1086 = vunpack.c.l.b16 %v108
  %v1087 = vunpack.c.h.b16 %v108
  %v1088 = vunpack.c.l.b16 %v109
  %v1089 = vunpack.c.h.b16 %v109
  %v1090 = vunpack.c.l.b16 %v110
  %v1091 = vunpack.c.h.b16 %v110
  %v1092 = vunpack.c.l.b16 %v111
  %v1093 = vunpack.c.h.b16 %v111
  %v1094 = vunpack.c.l.b16 %v112
  %v1095 = vunpack.c.h.b16 %v112
  %v1096 = vunpack.c.l.b16 %v113
  %v1097 = vunpack.c.h.b16 %v113
  %v1098 = vunpack.c.l.b16 %v114
  %v1099 = vunpack.c.h.b16 %v114
  %v1100 = vunpack.c.l.b16 %v115
  %v1101 = vunpack.c.h.b16 %v115
  %v1102 = vunpack.c.l.b16 %v116
  %v1103 = vunpack.c.h.b16 %v116
  %v1104 = vunpack.c.l.b16 %v117
  %v1105 = vunpack.c.h.b16 %v117
  %v1106 = vunpack.c.l.b16 %v118
  %v1107 = vunpack.c.h.b16 %v118
  %v1108 = vunpack.c.l.b16 %v119
  %v1109 = vunpack.c.h.b16 %v119
  %v1110 = vunpack.c.l.b16 %v120
  %v1111 = vunpack.c.h.b16 %v120
  %v1112 = vunpack.c.l.b16 %v121
  %v1113 = vunpack.c.h.b16 %v121
  %v1114 = vunpack.c.l.b16 %v122
  %v1115 = vunpack.c.h.b16 %v122
  %v1116 = vunpack.c.l.b16 %v123
  %v1117 = vunpack.c.h.b16 %v123
  %v1118 = vunpack.c.l.b16 %v124
  %v1119 = vunpack.c.h.b16 %v124
  %v1120 = vunpack.c.l.b16 %v125
  %v1121 = vunpack.c.h.b16 %v125
  %v1122 = vunpack.c.l.b16 %v126
  %v1123 = vunpack.c.h.b16 %v126
  %v1124 = vunpack.c.l.b16 %v127
  %v1125 = vunpack.c.h.b16 %v127
  %v1126 = vunpack.c.l.b16 %v128
  %v1127 = vunpack.c.h.b16 %v128
  %v1128 = vunpack.c.l.b16 %v129
  %v1129 = vunpack.c.h.b16 %v129
  %v1130 = vunpack.c.l.b16 %v130
  %v1131 = vunpack.c.h.b16 %v130
  %v1132 = vunpack.c.l.b16 %v131
  %v1133 = vunpack.c.h.b16 %v131
  %v1134 = vunpack.c.l.b16 %v132
  %v1135 = vunpack.c.h.b16 %v132
  %v1136 = vunpack.c.l.b16 %v133
  %v1137 = vunpack.c.h.b16 %v133
  %v1138 = vunpack.c.l.b16 %v134
  %v1139 = vunpack.c.h.b16 %v134
  %v1140 = vunpack.c.l.b16 %v135
  %v1141 = vunpack.c.h.b16 %v135
  %v1142 = vunpack.c.l.b16 %v136
  %v1143 = vunpack.c.h.b16 %v136
  %v1144 = vunpack.c.l.b16 %v137
  %v1145 = vunpack.c.h.b16 %v137
  %v1146 = vunpack.c.l.b16 %v138
  %v1147 = vunpack.c.h.b16 %v138
  %v1148 = vunpack.c.l.b16 %v139
  %v1149 = vunpack.c.h.b16 %v139
  %v1150 = vunpack.c.l.b16 %v140
  %v1151 = vunpack.c.h.b16 %v140
  %v1152 = vunpack.c.l.b16 %v141
  %v1153 = vunpack.c.h.b16 %v141
  %v1154 = vunpack.c.l.b16 %v142
  %v1155 = vunpack.c.h.b16 %v142
  %v1156 = vunpack.c.l.b16 %v143
  %v1157 = vunpack.c.h.b16 %v143
  %v1158 = vunpack.c.l.b16 %v144
  %v1159 = vunpack.c.h.b16 %v144
  %v1160 = vunpack.c.l.b16 %v145
  %v1161 = vunpack.c.h.b16 %v145
  %v1162 = vunpack.c.l.b16 %v146
  %v1163 = vunpack.c.h.b16 %v146
  %v1164 = vunpack.c.l.b16 %v147
  %v1165 = vunpack.c.h.b16 %v147
  %v1166 = vunpack.c.l.b16 %v148
  %v1167 = vunpack.c.h.b16 %v148
  %v1168 = vunpack.c.l.b16 %v149
  %v1169 = vunpack.c.h.b16 %v149
  %v1170 = vunpack.c.l.b16 %v150
  %v1171 = vunpack.c.h.b16 %v150
  %v1172 = vunpack.c.l.b16 %v151
  %v1173 = vunpack.c.h.b16 %v151
  %v1174 = vunpack.c.l.b16 %v152
  %v1175 = vunpack.c.h.b16 %v152
  %v1176 = vunpack.c.l.b16 %v153
  %v1177 = vunpack.c.h.b16 %v153
  %v1178 = vunpack.c.l.b16 %v154
  %v1179 = vunpack.c.h.b16 %v154
  %v1180 = vunpack.c.l.b16 %v155
  %v1181 = vunpack.c.h.b16 %v155
  %v1182 = vunpack.c.l.b16 %v156
  %v1183 = vunpack.c.h.b16 %v156
  %v1184 = vunpack.c.l.b16 %v157
  %v1185 = vunpack.c.h.b16 %v157
  %v1186 = vpack.c.b16 %v916, %v898
  %v1187 = vpack.c.b16 %v917, %v899
  %v1188 = vpack.c.b16 %v918, %v900
  %v1189 = vpack.c.b16 %v919, %v901
  %v1190 = vpack.c.b16 %v920, %v902
  %v1191 = vpack.c.b16 %v921, %v903
  %v1192 = vpack.c.b16 %v922, %v904
  %v1193 = vpack.c.b16 %v923, %v905
  %v1194 = vpack.c.b16 %v924, %v906
  %v1195 = vpack.c.b16 %v925, %v907
  %v1196 = vpack.c.b16 %v926, %v908
  %v1197 = vpack.c.b16 %v927, %v909
  %v1198 = vpack.c.b16 %v928, %v910
  %v1199 = vpack.c.b16 %v929, %v911
  %v1200 = vpack.c.b16 %v930, %v912
  %v1201 = vpack.c.b16 %v931, %v913
  %v1202 = vpack.c.b16 %v932, %v914
  %v1203 = vpack.c.b16 %v933, %v915
  %v1204 = vpack.c.b16 %v952, %v934
  %v1205 = vpack.c.b16 %v953, %v935
  %v1206 = vpack.c.b16 %v954, %v936
  %v1207 = vpack.c.b16 %v955, %v937
  %v1208 = vpack.c.b16 %v956, %v938
  %v1209 = vpack.c.b16 %v957, %v939
  %v1210 = vpack.c.b16 %v958, %v940
  %v1211 = vpack.c.b16 %v959, %v941
  %v1212 = vpack.c.b16 %v960, %v942
  %v1213 = vpack.c.b16 %v961, %v943
  %v1214 = vpack.c.b16 %v962, %v944
  %v1215 = vpack.c.b16 %v963, %v945
  %v1216 = vpack.c.b16 %v964, %v946
  %v1217 = vpack.c.b16 %v965, %v947
  %v1218 = vpack.c.b16 %v966, %v948
  %v1219 = vpack.c.b16 %v967, %v949
  %v1220 = vpack.c.b16 %v968, %v950
  %v1221 = vpack.c.b16 %v969, %v951
  %v1222 = vpack.c.b16 %v988, %v970
  %v1223 = vpack.c.b16 %v989, %v971
  %v1224 = vpack.c.b16 %v990, %v972
  %v1225 = vpack.c.b16 %v991, %v973
  %v1226 = vpack.c.b16 %v992, %v974
  %v1227 = vpack.c.b16 %v993, %v975
  %v1228 = vpack.c.b16 %v994, %v976
  %v1229 = vpack.c.b16 %v995, %v977
  %v1230 = vpack.c.b16 %v996, %v978
  %v1231 = vpack.c.b16 %v997, %v979
  %v1232 = vpack.c.b16 %v998, %v980
  %v1233 = vpack.c.b16 %v999, %v981
  %v1234 = vpack.c.b16 %v1000, %v982
  %v1235 = vpack.c.b16 %v1001, %v983
  %v1236 = vpack.c.b16 %v1002, %v984
  %v1237 = vpack.c.b16 %v1003, %v985
  %v1238 = vpack.c.b16 %v1004, %v986
  %v1239 = vpack.c.b16 %v1005, %v987
  %v1240 = vpack.c.b16 %v1024, %v1006
  %v1241 = vpack.c.b16 %v1025, %v1007
  %v1242 = vpack.c.b16 %v1026, %v1008
  %v1243 = vpack.c.b16 %v1027, %v1009
  %v1244 = vpack.c.b16 %v1028, %v1010
  %v1245 = vpack.c.b16 %v1029, %v1011
  %v1246 = vpack.c.b16 %v1030, %v1012
  %v1247 = vpack.c.b16 %v1031, %v1013
  %v1248 = vpack.c.b16 %v1032, %v1014
  %v1249 = vpack.c.b16 %v1033, %v1015
  %v1250 = vpack.c.b16 %v1034, %v1016
  %v1251 = vpack.c.b16 %v1035, %v1017
  %v1252 = vpack.c.b16 %v1036, %v1018
  %v1253 = vpack.c.b16 %v1037, %v1019
  %v1254 = vpack.c.b16 %v1038, %v1020
  %v1255 = vpack.c.b16 %v1039, %v1021
  %v1256 = vpack.c.b16 %v1040, %v1022
  %v1257 = vpack.c.b16 %v1041, %v1023
  %v1258 = vpack.c.b16 %v1060, %v1042
  %v1259 = vpack.c.b16 %v1061, %v1043
  %v1260 = vpack.c.b16 %v1062, %v1044
  %v1261 = vpack.c.b16 %v1063, %v1045
  %v1262 = vpack.c.b16 %v1064, %v1046
  %v1263 = vpack.c.b16 %v1065, %v1047
  %v1264 = vpack.c.b16 %v1066, %v1048
  %v1265 = vpack.c.b16 %v1067, %v1049
  %v1266 = vpack.c.b16 %v1068, %v1050
  %v1267 = vpack.c.b16 %v1069, %v1051
  %v1268 = vpack.c.b16 %v1070, %v1052
  %v1269 = vpack.c.b16 %v1071, %v1053
  %v1270 = vpack.c.b16 %v1072, %v1054
  %v1271 = vpack.c.b16 %v1073, %v1055
  %v1272 = vpack.c.b16 %v1074, %v1056
  %v1273 = vpack.c.b16 %v1075, %v1057
  %v1274 = vpack.c.b16 %v1076, %v1058
  %v1275 = vpack.c.b16 %v1077, %v1059
  %v1276 = vpack.c.b16 %v1096, %v1078
  %v1277 = vpack.c.b16 %v1097, %v1079
  %v1278 = vpack.c.b16 %v1098, %v1080
  %v1279 = vpack.c.b16 %v1099, %v1081
  %v1280 = vpack.c.b16 %v1100, %v1082
  %v1281 = vpack.c.b16 %v1101, %v1083
  %v1282 = vpack.c.b16 %v1102, %v1084
  %v1283 = vpack.c.b16 %v1103, %v1085
  %v1284 = vpack.c.b16 %v1104, %v1086
  %v1285 = vpack.c.b16 %v1105, %v1087
  %v1286 = vpack.c.b16 %v1106, %v1088
  %v1287 = vpack.c.b16 %v1107, %v1089
  %v1288 = vpack.c.b16 %v1108, %v1090
  %v1289 = vpack.c.b16 %v1109, %v1091
  %v1290 = vpack.c.b16 %v1110, %v1092
  %v1291 = vpack.c.b16 %v1111, %v1093
  %v1292 = vpack.c.b16 %v1112, %v1094
  %v1293 = vpack.c.b16 %v1113, %v1095
  %v1294 = vpack.c.b16 %v1132, %v1114
  %v1295 = vpack.c.b16 %v1133, %v1115
  %v1296 = vpack.c.b16 %v1134, %v1116
  %v1297 = vpack.c.b16 %v1135, %v1117
  %v1298 = vpack.c.b16 %v1136, %v1118
  %v1299 = vpack.c.b16 %v1137, %v1119
  %v1300 = vpack.c.b16 %v1138, %v1120
  %v1301 = vpack.c.b16 %v1139, %v1121
  %v1302 = vpack.c.b16 %v1140, %v1122
  %v1303 = vpack.c.b16 %v1141, %v1123
  %v1304 = vpack.c.b16 %v1142, %v1124
  %v1305 = vpack.c.b16 %v1143, %v1125
  %v1306 = vpack.c.b16 %v1144, %v1126
  %v1307 = vpack.c.b16 %v1145, %v1127
  %v1308 = vpack.c.b16 %v1146, %v1128
  %v1309 = vpack.c.b16 %v1147, %v1129
  %v1310 = vpack.c.b16 %v1148, %v1130
  %v1311 = vpack.c.b16 %v1149, %v1131
  %v1312 = vpack.c.b16 %v1168, %v1150
  %v1313 = vpack.c.b16 %v1169, %v1151
  %v1314 = vpack.c.b16 %v1170, %v1152
  %v1315 = vpack.c.b16 %v1171, %v1153
  %v1316 = vpack.c.b16 %v1172, %v1154
  %v1317 = vpack.c.b16 %v1173, %v1155
  %v1318 = vpack.c.b16 %v1174, %v1156
  %v1319 = vpack.c.b16 %v1175, %v1157
  %v1320 = vpack.c.b16 %v1176, %v1158
  %v1321 = vpack.c.b16 %v1177, %v1159
  %v1322 = vpack.c.b16 %v1178, %v1160
  %v1323 = vpack.c.b16 %v1179, %v1161
  %v1324 = vpack.c.b16 %v1180, %v1162
  %v1325 = vpack.c.b16 %v1181, %v1163
  %v1326 = vpack.c.b16 %v1182, %v1164
  %v1327 = vpack.c.b16 %v1183, %v1165
  %v1328 = vpack.c.b16 %v1184, %v1166
  %v1329 = vpack.c.b16 %v1185, %v1167
  %v2050 = vunpack.c.l.b16 %v158
  %v2051 = vunpack.c.h.b16 %v158
  %v2052 = vunpack.c.l.b16 %v159
  %v2053 = vunpack.c.h.b16 %v159
  %v2054 = vunpack.c.l.b16 %v160
  %v2055 = vunpack.c.h.b16 %v160
  %v2056 = vunpack.c.l.b16 %v161
  %v2057 = vunpack.c.h.b16 %v161
  %v2058 = vunpack.c.l.b16 %v162
  %v2059 = vunpack.c.h.b16 %v162
  %v2060 = vunpack.c.l.b16 %v163
  %v2061 = vunpack.c.h.b16 %v163
  %v2062 = vunpack.c.l.b16 %v164
  %v2063 = vunpack.c.h.b16 %v164
  %v2064 = vunpack.c.l.b16 %v165
  %v2065 = vunpack.c.h.b16 %v165
  %v2066 = vunpack.c.l.b16 %v166
  %v2067 = vunpack.c.h.b16 %v166
  %v2068 = vunpack.c.l.b16 %v167
  %v2069 = vunpack.c.h.b16 %v167
  %v2070 = vunpack.c.l.b16 %v168
  %v2071 = vunpack.c.h.b16 %v168
  %v2072 = vunpack.c.l.b16 %v169
  %v2073 = vunpack.c.h.b16 %v169
  %v2074 = vunpack.c.l.b16 %v170
  %v2075 = vunpack.c.h.b16 %v170
  %v2076 = vunpack.c.l.b16 %v171
  %v2077 = vunpack.c.h.b16 %v171
  %v2078 = vunpack.c.l.b16 %v172
  %v2079 = vunpack.c.h.b16 %v172
  %v2080 = vunpack.c.l.b16 %v173
  %v2081 = vunpack.c.h.b16 %v173
  %v2082 = vunpack.c.l.b16 %v174
  %v2083 = vunpack.c.h.b16 %v174
  %v2084 = vunpack.c.l.b16 %v175
  %v2085 = vunpack.c.h.b16 %v175
  %v2086 = vunpack.c.l.b16 %v176
  %v2087 = vunpack.c.h.b16 %v176
  %v2088 = vunpack.c.l.b16 %v177
  %v2089 = vunpack.c.h.b16 %v177
  %v2090 = vunpack.c.l.b16 %v178
  %v2091 = vunpack.c.h.b16 %v178
  %v2092 = vunpack.c.l.b16 %v179
  %v2093 = vunpack.c.h.b16 %v179
  %v2094 = vunpack.c.l.b16 %v180
  %v2095 = vunpack.c.h.b16 %v180
  %v2096 = vunpack.c.l.b16 %v181
  %v2097 = vunpack.c.h.b16 %v181
  %v2098 = vunpack.c.l.b16 %v182
  %v2099 = vunpack.c.h.b16 %v182
  %v2100 = vunpack.c.l.b16 %v183
  %v2101 = vunpack.c.h.b16 %v183
  %v2102 = vunpack.c.l.b16 %v184
  %v2103 = vunpack.c.h.b16 %v184
  %v2104 = vunpack.c.l.b16 %v185
  %v2105 = vunpack.c.h.b16 %v185
  %v2106 = vunpack.c.l.b16 %v186
  %v2107 = vunpack.c.h.b16 %v186
  %v2108 = vunpack.c.l.b16 %v187
  %v2109 = vunpack.c.h.b16 %v187
  %v2110 = vunpack.c.l.b16 %v188
  %v2111 = vunpack.c.h.b16 %v188
  %v2112 = vunpack.c.l.b16 %v189
  %v2113 = vunpack.c.h.b16 %v189
  %v2114 = vunpack.c.l.b16 %v190
  %v2115 = vunpack.c.h.b16 %v190
  %v2116 = vunpack.c.l.b16 %v191
  %v2117 = vunpack.c.h.b16 %v191
  %v2118 = vunpack.c.l.b16 %v192
  %v2119 = vunpack.c.h.b16 %v192
  %v2120 = vunpack.c.l.b16 %v193
  %v2121 = vunpack.c.h.b16 %v193
  %v2122 = vunpack.c.l.b16 %v194
  %v2123 = vunpack.c.h.b16 %v194
  %v2124 = vunpack.c.l.b16 %v195
  %v2125 = vunpack.c.h.b16 %v195
  %v2126 = vunpack.c.l.b16 %v196
  %v2127 = vunpack.c.h.b16 %v196
  %v2128 = vunpack.c.l.b16 %v197
  %v2129 = vunpack.c.h.b16 %v197
  %v2130 = vunpack.c.l.b16 %v198
  %v2131 = vunpack.c.h.b16 %v198
  %v2132 = vunpack.c.l.b16 %v199
  %v2133 = vunpack.c.h.b16 %v199
  %v2134 = vunpack.c.l.b16 %v200
  %v2135 = vunpack.c.h.b16 %v200
  %v2136 = vunpack.c.l.b16 %v201
  %v2137 = vunpack.c.h.b16 %v201
  %v2138 = vunpack.c.l.b16 %v202
  %v2139 = vunpack.c.h.b16 %v202
  %v2140 = vunpack.c.l.b16 %v203
  %v2141 = vunpack.c.h.b16 %v203
  %v2142 = vunpack.c.l.b16 %v204
  %v2143 = vunpack.c.h.b16 %v204
  %v2144 = vunpack.c.l.b16 %v205
  %v2145 = vunpack.c.h.b16 %v205
  %v2146 = vunpack.c.l.b16 %v206
  %v2147 = vunpack.c.h.b16 %v206
  %v2148 = vunpack.c.l.b16 %v207
  %v2149 = vunpack.c.h.b16 %v207
  %v2150 = vunpack.c.l.b16 %v208
  %v2151 = vunpack.c.h.b16 %v208
  %v2152 = vunpack.c.l.b16 %v209
  %v2153 = vunpack.c.h.b16 %v209
  %v2154 = vunpack.c.l.b16 %v210
  %v2155 = vunpack.c.h.b16 %v210
  %v2156 = vunpack.c.l.b16 %v211
  %v2157 = vunpack.c.h.b16 %v211
  %v2158 = vunpack.c.l.b16 %v212
  %v2159 = vunpack.c.h.b16 %v212
  %v2160 = vunpack.c.l.b16 %v213
  %v2161 = vunpack.c.h.b16 %v213
  %v2162 = vunpack.c.l.b16 %v214
  %v2163 = vunpack.c.h.b16 %v214
  %v2164 = vunpack.c.l.b16 %v215
  %v2165 = vunpack.c.h.b16 %v215
  %v2166 = vunpack.c.l.b16 %v216
  %v2167 = vunpack.c.h.b16 %v216
  %v2168 = vunpack.c.l.b16 %v217
  %v2169 = vunpack.c.h.b16 %v217
  %v2170 = vunpack.c.l.b16 %v218
  %v2171 = vunpack.c.h.b16 %v218
  %v2172 = vunpack.c.l.b16 %v219
  %v2173 = vunpack.c.h.b16 %v219
  %v2174 = vunpack.c.l.b16 %v220
  %v2175 = vunpack.c.h.b16 %v220
  %v2176 = vunpack.c.l.b16 %v221
  %v2177 = vunpack.c.h.b16 %v221
  %v2178 = vunpack.c.l.b16 %v222
  %v2179 = vunpack.c.h.b16 %v222
  %v2180 = vunpack.c.l.b16 %v223
  %v2181 = vunpack.c.h.b16 %v223
  %v2182 = vunpack.c.l.b16 %v224
  %v2183 = vunpack.c.h.b16 %v224
  %v2184 = vunpack.c.l.b16 %v225
  %v2185 = vunpack.c.h.b16 %v225
  %v2186 = vunpack.c.l.b16 %v226
  %v2187 = vunpack.c.h.b16 %v226
  %v2188 = vunpack.c.l.b16 %v227
  %v2189 = vunpack.c.h.b16 %v227
  %v2190 = vunpack.c.l.b16 %v228
  %v2191 = vunpack.c.h.b16 %v228
  %v2192 = vunpack.c.l.b16 %v229
  %v2193 = vunpack.c.h.b16 %v229
  %v2194 = vunpack.c.l.b16 %v230
  %v2195 = vunpack.c.h.b16 %v230
  %v2196 = vunpack.c.l.b16 %v231
  %v2197 = vunpack.c.h.b16 %v231
  %v2198 = vunpack.c.l.b16 %v232
  %v2199 = vunpack.c.h.b16 %v232
  %v2200 = vunpack.c.l.b16 %v233
  %v2201 = vunpack.c.h.b16 %v233
  %v2202 = vunpack.c.l.b16 %v234
  %v2203 = vunpack.c.h.b16 %v234
  %v2204 = vunpack.c.l.b16 %v235
  %v2205 = vunpack.c.h.b16 %v235
  %v2206 = vunpack.c.l.b16 %v236
  %v2207 = vunpack.c.h.b16 %v236
  %v2208 = vunpack.c.l.b16 %v237
  %v2209 = vunpack.c.h.b16 %v237
  %v2210 = vunpack.c.l.b16 %v238
  %v2211 = vunpack.c.h.b16 %v238
  %v2212 = vunpack.c.l.b16 %v239
  %v2213 = vunpack.c.h.b16 %v239
  %v2214 = vunpack.c.l.b16 %v240
  %v2215 = vunpack.c.h.b16 %v240
  %v2216 = vunpack.c.l.b16 %v241
  %v2217 = vunpack.c.h.b16 %v241
  %v2218 = vunpack.c.l.b16 %v242
  %v2219 = vunpack.c.h.b16 %v242
  %v2220 = vunpack.c.l.b16 %v243
  %v2221 = vunpack.c.h.b16 %v243
  %v2222 = vunpack.c.l.b16 %v244
  %v2223 = vunpack.c.h.b16 %v244
  %v2224 = vunpack.c.l.b16 %v245
  %v2225 = vunpack.c.h.b16 %v245
  %v2226 = vunpack.c.l.b16 %v246
  %v2227 = vunpack.c.h.b16 %v246
  %v2228 = vunpack.c.l.b16 %v247
  %v2229 = vunpack.c.h.b16 %v247
  %v2230 = vunpack.c.l.b16 %v248
  %v2231 = vunpack.c.h.b16 %v248
  %v2232 = vunpack.c.l.b16 %v249
  %v2233 = vunpack.c.h.b16 %v249
  %v2234 = vunpack.c.l.b16 %v250
  %v2235 = vunpack.c.h.b16 %v250
  %v2236 = vunpack.c.l.b16 %v251
  %v2237 = vunpack.c.h.b16 %v251
  %v2238 = vunpack.c.l.b16 %v252
  %v2239 = vunpack.c.h.b16 %v252
  %v2240 = vunpack.c.l.b16 %v253
  %v2241 = vunpack.c.h.b16 %v253
  %v2242 = vunpack.c.l.b16 %v254
  %v2243 = vunpack.c.h.b16 %v254
  %v2244 = vunpack.c.l.b16 %v255
  %v2245 = vunpack.c.h.b16 %v255
  %v2246 = vunpack.c.l.b16 %v256
  %v2247 = vunpack.c.h.b16 %v256
  %v2248 = vunpack.c.l.b16 %v257
  %v2249 = vunpack.c.h.b16 %v257
  %v2250 = vunpack.c.l.b16 %v258
  %v2251 = vunpack.c.h.b16 %v258
  %v2252 = vunpack.c.l.b16 %v259
  %v2253 = vunpack.c.h.b16 %v259
  %v2254 = vunpack.c.l.b16 %v260
  %v2255 = vunpack.c.h.b16 %v260
  %v2256 = vunpack.c.l.b16 %v261
  %v2257 = vunpack.c.h.b16 %v261
  %v2258 = vunpack.c.l.b16 %v262
  %v2259 = vunpack.c.h.b16 %v262
  %v2260 = vunpack.c.l.b16 %v263
  %v2261 = vunpack.c.h.b16 %v263
  %v2262 = vunpack.c.l.b16 %v264
  %v2263 = vunpack.c.h.b16 %v264
  %v2264 = vunpack.c.l.b16 %v265
  %v2265 = vunpack.c.h.b16 %v265
  %v2266 = vunpack.c.l.b16 %v266
  %v2267 = vunpack.c.h.b16 %v266
  %v2268 = vunpack.c.l.b16 %v267
  %v2269 = vunpack.c.h.b16 %v267
  %v2270 = vunpack.c.l.b16 %v268
  %v2271 = vunpack.c.h.b16 %v268
  %v2272 = vunpack.c.l.b16 %v269
  %v2273 = vunpack.c.h.b16 %v269
  %v2274 = vunpack.c.l.b16 %v270
  %v2275 = vunpack.c.h.b16 %v270
  %v2276 = vunpack.c.l.b16 %v271
  %v2277 = vunpack.c.h.b16 %v271
  %v2278 = vunpack.c.l.b16 %v272
  %v2279 = vunpack.c.h.b16 %v272
  %v2280 = vunpack.c.l.b16 %v273
  %v2281 = vunpack.c.h.b16 %v273
  %v2282 = vunpack.c.l.b16 %v274
  %v2283 = vunpack.c.h.b16 %v274
  %v2284 = vunpack.c.l.b16 %v275
  %v2285 = vunpack.c.h.b16 %v275
  %v2286 = vunpack.c.l.b16 %v276
  %v2287 = vunpack.c.h.b16 %v276
  %v2288 = vunpack.c.l.b16 %v277
  %v2289 = vunpack.c.h.b16 %v277
  %v2290 = vunpack.c.l.b16 %v278
  %v2291 = vunpack.c.h.b16 %v278
  %v2292 = vunpack.c.l.b16 %v279
  %v2293 = vunpack.c.h.b16 %v279
  %v2294 = vunpack.c.l.b16 %v280
  %v2295 = vunpack.c.h.b16 %v280
  %v2296 = vunpack.c.l.b16 %v281
  %v2297 = vunpack.c.h.b16 %v281
  %v2298 = vunpack.c.l.b16 %v282
  %v2299 = vunpack.c.h.b16 %v282
  %v2300 = vunpack.c.l.b16 %v283
  %v2301 = vunpack.c.h.b16 %v283
  %v2302 = vunpack.c.l.b16 %v284
  %v2303 = vunpack.c.h.b16 %v284
  %v2304 = vunpack.c.l.b16 %v285
  %v2305 = vunpack.c.h.b16 %v285
  %v2306 = vunpack.c.l.b16 %v286
  %v2307 = vunpack.c.h.b16 %v286
  %v2308 = vunpack.c.l.b16 %v287
  %v2309 = vunpack.c.h.b16 %v287
  %v2310 = vunpack.c.l.b16 %v288
  %v2311 = vunpack.c.h.b16 %v288
  %v2312 = vunpack.c.l.b16 %v289
  %v2313 = vunpack.c.h.b16 %v289
  %v2314 = vunpack.c.l.b16 %v290
  %v2315 = vunpack.c.h.b16 %v290
  %v2316 = vunpack.c.l.b16 %v291
  %v2317 = vunpack.c.h.b16 %v291
  %v2318 = vunpack.c.l.b16 %v292
  %v2319 = vunpack.c.h.b16 %v292
  %v2320 = vunpack.c.l.b16 %v293
  %v2321 = vunpack.c.h.b16 %v293
  %v2322 = vunpack.c.l.b16 %v294
  %v2323 = vunpack.c.h.b16 %v294
  %v2324 = vunpack.c.l.b16 %v295
  %v2325 = vunpack.c.h.b16 %v295
  %v2326 = vunpack.c.l.b16 %v296
  %v2327 = vunpack.c.h.b16 %v296
  %v2328 = vunpack.c.l.b16 %v297
  %v2329 = vunpack.c.h.b16 %v297
  %v2330 = vunpack.c.l.b16 %v298
  %v2331 = vunpack.c.h.b16 %v298
  %v2332 = vunpack.c.l.b16 %v299
  %v2333 = vunpack.c.h.b16 %v299
  %v2334 = vunpack.c.l.b16 %v300
  %v2335 = vunpack.c.h.b16 %v300
  %v2336 = vunpack.c.l.b16 %v301
  %v2337 = vunpack.c.h.b16 %v301
  %v2338 = vunpack.c.l.b16 %v302
  %v2339 = vunpack.c.h.b16 %v302
  %v2340 = vunpack.c.l.b16 %v303
  %v2341 = vunpack.c.h.b16 %v303
  %v2342 = vunpack.c.l.b16 %v304
  %v2343 = vunpack.c.h.b16 %v304
  %v2344 = vunpack.c.l.b16 %v305
  %v2345 = vunpack.c.h.b16 %v305
  %v2346 = vunpack.c.l.b16 %v306
  %v2347 = vunpack.c.h.b16 %v306
  %v2348 = vunpack.c.l.b16 %v307
  %v2349 = vunpack.c.h.b16 %v307
  %v2350 = vunpack.c.l.b16 %v308
  %v2351 = vunpack.c.h.b16 %v308
  %v2352 = vunpack.c.l.b16 %v309
  %v2353 = vunpack.c.h.b16 %v309
  %v2354 = vunpack.c.l.b16 %v310
  %v2355 = vunpack.c.h.b16 %v310
  %v2356 = vunpack.c.l.b16 %v311
  %v2357 = vunpack.c.h.b16 %v311
  %v2358 = vunpack.c.l.b16 %v312
  %v2359 = vunpack.c.h.b16 %v312
  %v2360 = vunpack.c.l.b16 %v313
  %v2361 = vunpack.c.h.b16 %v313
  %v2362 = vunpack.c.l.b16 %v314
  %v2363 = vunpack.c.h.b16 %v314
  %v2364 = vunpack.c.l.b16 %v315
  %v2365 = vunpack.c.h.b16 %v315
  %v2366 = vunpack.c.l.b16 %v316
  %v2367 = vunpack.c.h.b16 %v316
  %v2368 = vunpack.c.l.b16 %v317
  %v2369 = vunpack.c.h.b16 %v317
  %v2370 = vunpack.c.l.b16 %v318
  %v2371 = vunpack.c.h.b16 %v318
  %v2372 = vunpack.c.l.b16 %v319
  %v2373 = vunpack.c.h.b16 %v319
  %v2374 = vunpack.c.l.b16 %v320
  %v2375 = vunpack.c.h.b16 %v320
  %v2376 = vunpack.c.l.b16 %v321
  %v2377 = vunpack.c.h.b16 %v321
  %v2378 = vunpack.c.l.b16 %v322
  %v2379 = vunpack.c.h.b16 %v322
  %v2380 = vunpack.c.l.b16 %v323
  %v2381 = vunpack.c.h.b16 %v323
  %v2382 = vunpack.c.l.b16 %v324
  %v2383 = vunpack.c.h.b16 %v324
  %v2384 = vunpack.c.l.b16 %v325
  %v2385 = vunpack.c.h.b16 %v325
  %v2386 = vunpack.c.l.b16 %v326
  %v2387 = vunpack.c.h.b16 %v326
  %v2388 = vunpack.c.l.b16 %v327
  %v2389 = vunpack.c.h.b16 %v327
  %v2390 = vunpack.c.l.b16 %v328
  %v2391 = vunpack.c.h.b16 %v328
  %v2392 = vunpack.c.l.b16 %v329
  %v2393 = vunpack.c.h.b16 %v329
  %v2394 = vunpack.c.l.b16 %v330
  %v2395 = vunpack.c.h.b16 %v330
  %v2396 = vunpack.c.l.b16 %v331
  %v2397 = vunpack.c.h.b16 %v331
  %v2398 = vunpack.c.l.b16 %v332
  %v2399 = vunpack.c.h.b16 %v332
  %v2400 = vunpack.c.l.b16 %v333
  %v2401 = vunpack.c.h.b16 %v333
  %v2402 = vunpack.c.l.b16 %v334
  %v2403 = vunpack.c.h.b16 %v334
  %v2404 = vunpack.c.l.b16 %v335
  %v2405 = vunpack.c.h.b16 %v335
  %v2406 = vunpack.c.l.b16 %v336
  %v2407 = vunpack.c.h.b16 %v336
  %v2408 = vunpack.c.l.b16 %v337
  %v2409 = vunpack.c.h.b16 %v337
  %v2410 = vunpack.c.l.b16 %v338
  %v2411 = vunpack.c.h.b16 %v338
  %v2412 = vunpack.c.l.b16 %v339
  %v2413 = vunpack.c.h.b16 %v339
  %v2414 = vunpack.c.l.b16 %v340
  %v2415 = vunpack.c.h.b16 %v340
  %v2416 = vunpack.c.l.b16 %v341
  %v2417 = vunpack.c.h.b16 %v341
  %v2418 = vunpack.c.l.b16 %v342
  %v2419 = vunpack.c.h.b16 %v342
  %v2420 = vunpack.c.l.b16 %v343
  %v2421 = vunpack.c.h.b16 %v343
  %v2422 = vunpack.c.l.b16 %v344
  %v2423 = vunpack.c.h.b16 %v344
  %v2424 = vunpack.c.l.b16 %v345
  %v2425 = vunpack.c.h.b16 %v345
  %v2426 = vunpack.c.l.b16 %v346
  %v2427 = vunpack.c.h.b16 %v346
  %v2428 = vunpack.c.l.b16 %v347
  %v2429 = vunpack.c.h.b16 %v347
  %v2430 = vunpack.c.l.b16 %v348
  %v2431 = vunpack.c.h.b16 %v348
  %v2432 = vunpack.c.l.b16 %v349
  %v2433 = vunpack.c.h.b16 %v349
  %v2434 = vunpack.c.l.b16 %v350
  %v2435 = vunpack.c.h.b16 %v350
  %v2436 = vunpack.c.l.b16 %v351
  %v2437 = vunpack.c.h.b16 %v351
  %v2438 = vunpack.c.l.b16 %v352
  %v2439 = vunpack.c.h.b16 %v352
  %v2440 = vunpack.c.l.b16 %v353
  %v2441 = vunpack.c.h.b16 %v353
  %v2442 = vunpack.c.l.b16 %v354
  %v2443 = vunpack.c.h.b16 %v354
  %v2444 = vunpack.c.l.b16 %v355
  %v2445 = vunpack.c.h.b16 %v355
  %v2446 = vunpack.c.l.b16 %v356
  %v2447 = vunpack.c.h.b16 %v356
  %v2448 = vunpack.c.l.b16 %v357
  %v2449 = vunpack.c.h.b16 %v357
  %v2450 = vunpack.c.l.b16 %v358
  %v2451 = vunpack.c.h.b16 %v358
  %v2452 = vunpack.c.l.b16 %v359
  %v2453 = vunpack.c.h.b16 %v359
  %v2454 = vunpack.c.l.b16 %v360
  %v2455 = vunpack.c.h.b16 %v360
  %v2456 = vunpack.c.l.b16 %v361
  %v2457 = vunpack.c.h.b16 %v361
  %v2458 = vunpack.c.l.b16 %v362
  %v2459 = vunpack.c.h.b16 %v362
  %v2460 = vunpack.c.l.b16 %v363
  %v2461 = vunpack.c.h.b16 %v363
  %v2462 = vunpack.c.l.b16 %v364
  %v2463 = vunpack.c.h.b16 %v364
  %v2464 = vunpack.c.l.b16 %v365
  %v2465 = vunpack.c.h.b16 %v365
  %v2466 = vunpack.c.l.b16 %v366
  %v2467 = vunpack.c.h.b16 %v366
  %v2468 = vunpack.c.l.b16 %v367
  %v2469 = vunpack.c.h.b16 %v367
  %v2470 = vunpack.c.l.b16 %v368
  %v2471 = vunpack.c.h.b16 %v368
  %v2472 = vunpack.c.l.b16 %v369
  %v2473 = vunpack.c.h.b16 %v369
  %v2474 = vunpack.c.l.b16 %v370
  %v2475 = vunpack.c.h.b16 %v370
  %v2476 = vunpack.c.l.b16 %v371
  %v2477 = vunpack.c.h.b16 %v371
  %v2478 = vunpack.c.l.b16 %v372
  %v2479 = vunpack.c.h.b16 %v372
  %v2480 = vunpack.c.l.b16 %v373
  %v2481 = vunpack.c.h.b16 %v373
  %v2482 = vunpack.c.l.b16 %v374
  %v2483 = vunpack.c.h.b16 %v374
  %v2484 = vunpack.c.l.b16 %v375
  %v2485 = vunpack.c.h.b16 %v375
  %v2486 = vunpack.c.l.b16 %v376
  %v2487 = vunpack.c.h.b16 %v376
  %v2488 = vunpack.c.l.b16 %v377
  %v2489 = vunpack.c.h.b16 %v377
  %v2490 = vunpack.c.l.b16 %v378
  %v2491 = vunpack.c.h.b16 %v378
  %v2492 = vunpack.c.l.b16 %v379
  %v2493 = vunpack.c.h.b16 %v379
  %v2494 = vunpack.c.l.b16 %v380
  %v2495 = vunpack.c.h.b16 %v380
  %v2496 = vunpack.c.l.b16 %v381
  %v2497 = vunpack.c.h.b16 %v381
  %v2498 = vunpack.c.l.b16 %v382
  %v2499 = vunpack.c.h.b16 %v382
  %v2500 = vunpack.c.l.b16 %v383
  %v2501 = vunpack.c.h.b16 %v383
  %v2502 = vunpack.c.l.b16 %v384
  %v2503 = vunpack.c.h.b16 %v384
  %v2504 = vunpack.c.l.b16 %v385
  %v2505 = vunpack.c.h.b16 %v385
  %v2506 = vunpack.c.l.b16 %v386
  %v2507 = vunpack.c.h.b16 %v386
  %v2508 = vunpack.c.l.b16 %v387
  %v2509 = vunpack.c.h.b16 %v387
  %v2510 = vunpack.c.l.b16 %v388
  %v2511 = vunpack.c.h.b16 %v388
  %v2512 = vunpack.c.l.b16 %v389
  %v2513 = vunpack.c.h.b16 %v389
  %v2514 = vunpack.c.l.b16 %v390
  %v2515 = vunpack.c.h.b16 %v390
  %v2516 = vunpack.c.l.b16 %v391
  %v2517 = vunpack.c.h.b16 %v391
  %v2518 = vunpack.c.l.b16 %v392
  %v2519 = vunpack.c.h.b16 %v392
  %v2520 = vunpack.c.l.b16 %v393
  %v2521 = vunpack.c.h.b16 %v393
  %v2522 = vunpack.c.l.b16 %v394
  %v2523 = vunpack.c.h.b16 %v394
  %v2524 = vunpack.c.l.b16 %v395
  %v2525 = vunpack.c.h.b16 %v395
  %v2526 = vunpack.c.l.b16 %v396
  %v2527 = vunpack.c.h.b16 %v396
  %v2528 = vunpack.c.l.b16 %v397
  %v2529 = vunpack.c.h.b16 %v397
  %v2530 = vunpack.c.l.b16 %v398
  %v2531 = vunpack.c.h.b16 %v398
  %v2532 = vunpack.c.l.b16 %v399
  %v2533 = vunpack.c.h.b16 %v399
  %v2534 = vunpack.c.l.b16 %v400
  %v2535 = vunpack.c.h.b16 %v400
  %v2536 = vunpack.c.l.b16 %v401
  %v2537 = vunpack.c.h.b16 %v401
  %v2538 = vunpack.c.l.b16 %v402
  %v2539 = vunpack.c.h.b16 %v402
  %v2540 = vunpack.c.l.b16 %v403
  %v2541 = vunpack.c.h.b16 %v403
  %v2542 = vunpack.c.l.b16 %v404
  %v2543 = vunpack.c.h.b16 %v404
  %v2544 = vunpack.c.l.b16 %v405
  %v2545 = vunpack.c.h.b16 %v405
  %v2546 = vunpack.c.l.b16 %v406
  %v2547 = vunpack.c.h.b16 %v406
  %v2548 = vunpack.c.l.b16 %v407
  %v2549 = vunpack.c.h.b16 %v407
  %v2550 = vunpack.c.l.b16 %v408
  %v2551 = vunpack.c.h.b16 %v408
  %v2552 = vunpack.c.l.b16 %v409
  %v2553 = vunpack.c.h.b16 %v409
  %v2554 = vunpack.c.l.b16 %v410
  %v2555 = vunpack.c.h.b16 %v410
  %v2556 = vunpack.c.l.b16 %v411
  %v2557 = vunpack.c.h.b16 %v411
  %v2558 = vunpack.c.l.b16 %v412
  %v2559 = vunpack.c.h.b16 %v412
  %v2560 = vunpack.c.l.b16 %v413
  %v2561 = vunpack.c.h.b16 %v413
  %v2562 = vunpack.c.l.b16 %v414
  %v2563 = vunpack.c.h.b16 %v414
  %v2564 = vunpack.c.l.b16 %v415
  %v2565 = vunpack.c.h.b16 %v415
  %v2566 = vunpack.c.l.b16 %v416
  %v2567 = vunpack.c.h.b16 %v416
  %v2568 = vunpack.c.l.b16 %v417
  %v2569 = vunpack.c.h.b16 %v417
  %v2570 = vunpack.c.l.b16 %v418
  %v2571 = vunpack.c.h.b16 %v418
  %v2572 = vunpack.c.l.b16 %v419
  %v2573 = vunpack.c.h.b16 %v419
  %v2574 = vunpack.c.l.b16 %v420
  %v2575 = vunpack.c.h.b16 %v420
  %v2576 = vunpack.c.l.b16 %v421
  %v2577 = vunpack.c.h.b16 %v421
  %v2578 = vunpack.c.l.b16 %v422
  %v2579 = vunpack.c.h.b16 %v422
  %v2580 = vunpack.c.l.b16 %v423
  %v2581 = vunpack.c.h.b16 %v423
  %v2582 = vunpack.c.l.b16 %v424
  %v2583 = vunpack.c.h.b16 %v424
  %v2584 = vunpack.c.l.b16 %v425
  %v2585 = vunpack.c.h.b16 %v425
  %v2586 = vunpack.c.l.b16 %v426
  %v2587 = vunpack.c.h.b16 %v426
  %v2588 = vunpack.c.l.b16 %v427
  %v2589 = vunpack.c.h.b16 %v427
  %v2590 = vunpack.c.l.b16 %v428
  %v2591 = vunpack.c.h.b16 %v428
  %v2592 = vunpack.c.l.b16 %v429
  %v2593 = vunpack.c.h.b16 %v429
  %v2594 = vunpack.c.l.b16 %v430
  %v2595 = vunpack.c.h.b16 %v430
  %v2596 = vunpack.c.l.b16 %v431
  %v2597 = vunpack.c.h.b16 %v431
  %v2598 = vunpack.c.l.b16 %v432
  %v2599 = vunpack.c.h.b16 %v432
  %v2600 = vunpack.c.l.b16 %v433
  %v2601 = vunpack.c.h.b16 %v433
  %v2602 = vunpack.c.l.b16 %v434
  %v2603 = vunpack.c.h.b16 %v434
  %v2604 = vunpack.c.l.b16 %v435
  %v2605 = vunpack.c.h.b16 %v435
  %v2606 = vunpack.c.l.b16 %v436
  %v2607 = vunpack.c.h.b16 %v436
  %v2608 = vunpack.c.l.b16 %v437
  %v2609 = vunpack.c.h.b16 %v437
  %v2610 = vunpack.c.l.b16 %v438
  %v2611 = vunpack.c.h.b16 %v438
  %v2612 = vunpack.c.l.b16 %v439
  %v2613 = vunpack.c.h.b16 %v439
  %v2614 = vunpack.c.l.b16 %v440
  %v2615 = vunpack.c.h.b16 %v440
  %v2616 = vunpack.c.l.b16 %v441
  %v2617 = vunpack.c.h.b16 %v441
  %v2618 = vunpack.c.l.b16 %v442
  %v2619 = vunpack.c.h.b16 %v442
  %v2620 = vunpack.c.l.b16 %v443
  %v2621 = vunpack.c.h.b16 %v443
  %v2622 = vunpack.c.l.b16 %v444
  %v2623 = vunpack.c.h.b16 %v444
  %v2624 = vunpack.c.l.b16 %v445
  %v2625 = vunpack.c.h.b16 %v445
  %v2626 = vunpack.c.l.b16 %v446
  %v2627 = vunpack.c.h.b16 %v446
  %v2628 = vunpack.c.l.b16 %v447
  %v2629 = vunpack.c.h.b16 %v447
  %v2630 = vunpack.c.l.b16 %v448
  %v2631 = vunpack.c.h.b16 %v448
  %v2632 = vunpack.c.l.b16 %v449
  %v2633 = vunpack.c.h.b16 %v449
  %v2634 = vunpack.c.l.b16 %v450
  %v2635 = vunpack.c.h.b16 %v450
  %v2636 = vunpack.c.l.b16 %v451
  %v2637 = vunpack.c.h.b16 %v451
  %v2638 = vunpack.c.l.b16 %v452
  %v2639 = vunpack.c.h.b16 %v452
  %v2640 = vunpack.c.l.b16 %v453
  %v2641 = vunpack.c.h.b16 %v453
  %v2642 = vunpack.c.l.b16 %v454
  %v2643 = vunpack.c.h.b16 %v454
  %v2644 = vunpack.c.l.b16 %v455
  %v2645 = vunpack.c.h.b16 %v455
  %v2646 = vunpack.c.l.b16 %v456
  %v2647 = vunpack.c.h.b16 %v456
  %v2648 = vunpack.c.l.b16 %v457
  %v2649 = vunpack.c.h.b16 %v457
  %v2650 = vunpack.c.l.b16 %v458
  %v2651 = vunpack.c.h.b16 %v458
  %v2652 = vunpack.c.l.b16 %v459
  %v2653 = vunpack.c.h.b16 %v459
  %v2654 = vunpack.c.l.b16 %v460
  %v2655 = vunpack.c.h.b16 %v460
  %v2656 = vunpack.c.l.b16 %v461
  %v2657 = vunpack.c.h.b16 %v461
  %v2658 = vunpack.c.l.b16 %v462
  %v2659 = vunpack.c.h.b16 %v462
  %v2660 = vunpack.c.l.b16 %v463
  %v2661 = vunpack.c.h.b16 %v463
  %v2662 = vunpack.c.l.b16 %v464
  %v2663 = vunpack.c.h.b16 %v464
  %v2664 = vunpack.c.l.b16 %v465
  %v2665 = vunpack.c.h.b16 %v465
  %v2666 = vunpack.c.l.b16 %v466
  %v2667 = vunpack.c.h.b16 %v466
  %v2668 = vunpack.c.l.b16 %v467
  %v2669 = vunpack.c.h.b16 %v467
  %v2670 = vunpack.c.l.b16 %v468
  %v2671 = vunpack.c.h.b16 %v468
  %v2672 = vunpack.c.l.b16 %v469
  %v2673 = vunpack.c.h.b16 %v469
  %v2674 = vunpack.c.l.b16 %v470
  %v2675 = vunpack.c.h.b16 %v470
  %v2676 = vunpack.c.l.b16 %v471
  %v2677 = vunpack.c.h.b16 %v471
  %v2678 = vunpack.c.l.b16 %v472
  %v2679 = vunpack.c.h.b16 %v472
  %v2680 = vunpack.c.l.b16 %v473
  %v2681 = vunpack.c.h.b16 %v473
  %v2682 = vunpack.c.l.b16 %v474
  %v2683 = vunpack.c.h.b16 %v474
  %v2684 = vunpack.c.l.b16 %v475
  %v2685 = vunpack.c.h.b16 %v475
  %v2686 = vunpack.c.l.b16 %v476
  %v2687 = vunpack.c.h.b16 %v476
  %v2688 = vunpack.c.l.b16 %v477
  %v2689 = vunpack.c.h.b16 %v477
  %v2690 = vunpack.c.l.b16 %v478
  %v2691 = vunpack.c.h.b16 %v478
  %v2692 = vunpack.c.l.b16 %v479
  %v2693 = vunpack.c.h.b16 %v479
  %v2694 = vunpack.c.l.b16 %v480
  %v2695 = vunpack.c.h.b16 %v480
  %v2696 = vunpack.c.l.b16 %v481
  %v2697 = vunpack.c.h.b16 %v481
  %v2698 = vunpack.c.l.b16 %v482
  %v2699 = vunpack.c.h.b16 %v482
  %v2700 = vunpack.c.l.b16 %v483
  %v2701 = vunpack.c.h.b16 %v483
  %v2702 = vunpack.c.l.b16 %v484
  %v2703 = vunpack.c.h.b16 %v484
  %v2704 = vunpack.c.l.b16 %v485
  %v2705 = vunpack.c.h.b16 %v485
  %v2706 = vunpack.c.l.b16 %v486
  %v2707 = vunpack.c.h.b16 %v486
  %v2708 = vunpack.c.l.b16 %v487
  %v2709 = vunpack.c.h.b16 %v487
  %v2710 = vunpack.c.l.b16 %v488
  %v2711 = vunpack.c.h.b16 %v488
  %v2712 = vunpack.c.l.b16 %v489
  %v2713 = vunpack.c.h.b16 %v489
  %v2714 = vunpack.c.l.b16 %v490
  %v2715 = vunpack.c.h.b16 %v490
  %v2716 = vunpack.c.l.b16 %v491
  %v2717 = vunpack.c.h.b16 %v491
  %v2718 = vunpack.c.l.b16 %v492
  %v2719 = vunpack.c.h.b16 %v492
  %v2720 = vunpack.c.l.b16 %v493
  %v2721 = vunpack.c.h.b16 %v493
  %v2722 = vunpack.c.l.b16 %v494
  %v2723 = vunpack.c.h.b16 %v494
  %v2724 = vunpack.c.l.b16 %v495
  %v2725 = vunpack.c.h.b16 %v495
  %v2726 = vunpack.c.l.b16 %v496
  %v2727 = vunpack.c.h.b16 %v496
  %v2728 = vunpack.c.l.b16 %v497
  %v2729 = vunpack.c.h.b16 %v497
  %v2730 = vunpack.c.l.b16 %v498
  %v2731 = vunpack.c.h.b16 %v498
  %v2732 = vunpack.c.l.b16 %v499
  %v2733 = vunpack.c.h.b16 %v499
  %v2734 = vunpack.c.l.b16 %v500
  %v2735 = vunpack.c.h.b16 %v500
  %v2736 = vunpack.c.l.b16 %v501
  %v2737 = vunpack.c.h.b16 %v501
  %v2738 = vunpack.c.l.b16 %v502
  %v2739 = vunpack.c.h.b16 %v502
  %v2740 = vunpack.c.l.b16 %v503
  %v2741 = vunpack.c.h.b16 %v503
  %v2742 = vunpack.c.l.b16 %v504
  %v2743 = vunpack.c.h.b16 %v504
  %v2744 = vunpack.c.l.b16 %v505
  %v2745 = vunpack.c.h.b16 %v505
  %v2746 = vunpack.c.l.b16 %v506
  %v2747 = vunpack.c.h.b16 %v506
  %v2748 = vunpack.c.l.b16 %v507
  %v2749 = vunpack.c.h.b16 %v507
  %v2750 = vunpack.c.l.b16 %v508
  %v2751 = vunpack.c.h.b16 %v508
  %v2752 = vunpack.c.l.b16 %v509
  %v2753 = vunpack.c.h.b16 %v509
  %v2754 = vunpack.c.l.b16 %v510
  %v2755 = vunpack.c.h.b16 %v510
  %v2756 = vunpack.c.l.b16 %v511
  %v2757 = vunpack.c.h.b16 %v511
  %v2758 = vunpack.c.l.b16 %v512
  %v2759 = vunpack.c.h.b16 %v512
  %v2760 = vunpack.c.l.b16 %v513
  %v2761 = vunpack.c.h.b16 %v513
  %v2762 = vunpack.c.l.b16 %v514
  %v2763 = vunpack.c.h.b16 %v514
  %v2764 = vunpack.c.l.b16 %v515
  %v2765 = vunpack.c.h.b16 %v515
  %v2766 = vunpack.c.l.b16 %v516
  %v2767 = vunpack.c.h.b16 %v516
  %v2768 = vunpack.c.l.b16 %v517
  %v2769 = vunpack.c.h.b16 %v517
  %v2770 = vunpack.c.l.b16 %v518
  %v2771 = vunpack.c.h.b16 %v518
  %v2772 = vunpack.c.l.b16 %v519
  %v2773 = vunpack.c.h.b16 %v519
  %v2774 = vunpack.c.l.b16 %v520
  %v2775 = vunpack.c.h.b16 %v520
  %v2776 = vunpack.c.l.b16 %v521
  %v2777 = vunpack.c.h.b16 %v521
  %v2778 = vunpack.c.l.b16 %v522
  %v2779 = vunpack.c.h.b16 %v522
  %v2780 = vunpack.c.l.b16 %v523
  %v2781 = vunpack.c.h.b16 %v523
  %v2782 = vunpack.c.l.b16 %v524
  %v2783 = vunpack.c.h.b16 %v524
  %v2784 = vunpack.c.l.b16 %v525
  %v2785 = vunpack.c.h.b16 %v525
  %v2786 = vunpack.c.l.b16 %v526
  %v2787 = vunpack.c.h.b16 %v526
  %v2788 = vunpack.c.l.b16 %v527
  %v2789 = vunpack.c.h.b16 %v527
  %v2790 = vunpack.c.l.b16 %v528
  %v2791 = vunpack.c.h.b16 %v528
  %v2792 = vunpack.c.l.b16 %v529
  %v2793 = vunpack.c.h.b16 %v529
  %v2794 = vunpack.c.l.b16 %v530
  %v2795 = vunpack.c.h.b16 %v530
  %v2796 = vunpack.c.l.b16 %v531
  %v2797 = vunpack.c.h.b16 %v531
  %v2798 = vunpack.c.l.b16 %v532
  %v2799 = vunpack.c.h.b16 %v532
  %v2800 = vunpack.c.l.b16 %v533
  %v2801 = vunpack.c.h.b16 %v533
  %v2802 = vunpack.c.l.b16 %v534
  %v2803 = vunpack.c.h.b16 %v534
  %v2804 = vunpack.c.l.b16 %v535
  %v2805 = vunpack.c.h.b16 %v535
  %v2806 = vunpack.c.l.b16 %v536
  %v2807 = vunpack.c.h.b16 %v536
  %v2808 = vunpack.c.l.b16 %v537
  %v2809 = vunpack.c.h.b16 %v537
  %v2810 = vunpack.c.l.b16 %v538
  %v2811 = vunpack.c.h.b16 %v538
  %v2812 = vunpack.c.l.b16 %v539
  %v2813 = vunpack.c.h.b16 %v539
  %v2814 = vunpack.c.l.b16 %v540
  %v2815 = vunpack.c.h.b16 %v540
  %v2816 = vunpack.c.l.b16 %v541
  %v2817 = vunpack.c.h.b16 %v541
  %v2818 = vunpack.c.l.b16 %v542
  %v2819 = vunpack.c.h.b16 %v542
  %v2820 = vunpack.c.l.b16 %v543
  %v2821 = vunpack.c.h.b16 %v543
  %v2822 = vunpack.c.l.b16 %v544
  %v2823 = vunpack.c.h.b16 %v544
  %v2824 = vunpack.c.l.b16 %v545
  %v2825 = vunpack.c.h.b16 %v545
  %v2826 = vunpack.c.l.b16 %v546
  %v2827 = vunpack.c.h.b16 %v546
  %v2828 = vunpack.c.l.b16 %v547
  %v2829 = vunpack.c.h.b16 %v547
  %v2830 = vunpack.c.l.b16 %v548
  %v2831 = vunpack.c.h.b16 %v548
  %v2832 = vunpack.c.l.b16 %v549
  %v2833 = vunpack.c.h.b16 %v549
  %v2834 = vunpack.c.l.b16 %v550
  %v2835 = vunpack.c.h.b16 %v550
  %v2836 = vunpack.c.l.b16 %v551
  %v2837 = vunpack.c.h.b16 %v551
  %v2838 = vunpack.c.l.b16 %v552
  %v2839 = vunpack.c.h.b16 %v552
  %v2840 = vunpack.c.l.b16 %v553
  %v2841 = vunpack.c.h.b16 %v553
  %v2842 = vunpack.c.l.b16 %v554
  %v2843 = vunpack.c.h.b16 %v554
  %v2844 = vunpack.c.l.b16 %v555
  %v2845 = vunpack.c.h.b16 %v555
  %v2846 = vunpack.c.l.b16 %v556
  %v2847 = vunpack.c.h.b16 %v556
  %v2848 = vunpack.c.l.b16 %v557
  %v2849 = vunpack.c.h.b16 %v557
  %v2850 = vunpack.c.l.b16 %v558
  %v2851 = vunpack.c.h.b16 %v558
  %v2852 = vunpack.c.l.b16 %v559
  %v2853 = vunpack.c.h.b16 %v559
  %v2854 = vunpack.c.l.b16 %v560
  %v2855 = vunpack.c.h.b16 %v560
  %v2856 = vunpack.c.l.b16 %v561
  %v2857 = vunpack.c.h.b16 %v561
  %v2858 = vunpack.c.l.b16 %v562
  %v2859 = vunpack.c.h.b16 %v562
  %v2860 = vunpack.c.l.b16 %v563
  %v2861 = vunpack.c.h.b16 %v563
  %v2862 = vunpack.c.l.b16 %v564
  %v2863 = vunpack.c.h.b16 %v564
  %v2864 = vunpack.c.l.b16 %v565
  %v2865 = vunpack.c.h.b16 %v565
  %v2866 = vunpack.c.l.b16 %v566
  %v2867 = vunpack.c.h.b16 %v566
  %v2868 = vunpack.c.l.b16 %v567
  %v2869 = vunpack.c.h.b16 %v567
  %v2870 = vunpack.c.l.b16 %v568
  %v2871 = vunpack.c.h.b16 %v568
  %v2872 = vunpack.c.l.b16 %v569
  %v2873 = vunpack.c.h.b16 %v569
  %v2874 = vunpack.c.l.b16 %v570
  %v2875 = vunpack.c.h.b16 %v570
  %v2876 = vunpack.c.l.b16 %v571
  %v2877 = vunpack.c.h.b16 %v571
  %v2878 = vunpack.c.l.b16 %v572
  %v2879 = vunpack.c.h.b16 %v572
  %v2880 = vunpack.c.l.b16 %v573
  %v2881 = vunpack.c.h.b16 %v573
  %v2882 = vunpack.c.l.b16 %v574
  %v2883 = vunpack.c.h.b16 %v574
  %v2884 = vunpack.c.l.b16 %v575
  %v2885 = vunpack.c.h.b16 %v575
  %v2886 = vunpack.c.l.b16 %v576
  %v2887 = vunpack.c.h.b16 %v576
  %v2888 = vunpack.c.l.b16 %v577
  %v2889 = vunpack.c.h.b16 %v577
  %v2890 = vunpack.c.l.b16 %v578
  %v2891 = vunpack.c.h.b16 %v578
  %v2892 = vunpack.c.l.b16 %v579
  %v2893 = vunpack.c.h.b16 %v579
  %v2894 = vunpack.c.l.b16 %v580
  %v2895 = vunpack.c.h.b16 %v580
  %v2896 = vunpack.c.l.b16 %v581
  %v2897 = vunpack.c.h.b16 %v581
  %v2898 = vunpack.c.l.b16 %v582
  %v2899 = vunpack.c.h.b16 %v582
  %v2900 = vunpack.c.l.b16 %v583
  %v2901 = vunpack.c.h.b16 %v583
  %v2902 = vunpack.c.l.b16 %v584
  %v2903 = vunpack.c.h.b16 %v584
  %v2904 = vunpack.c.l.b16 %v585
  %v2905 = vunpack.c.h.b16 %v585
  %v2906 = vunpack.c.l.b16 %v586
  %v2907 = vunpack.c.h.b16 %v586
  %v2908 = vunpack.c.l.b16 %v587
  %v2909 = vunpack.c.h.b16 %v587
  %v2910 = vunpack.c.l.b16 %v588
  %v2911 = vunpack.c.h.b16 %v588
  %v2912 = vunpack.c.l.b16 %v589
  %v2913 = vunpack.c.h.b16 %v589
  %v2914 = vunpack.c.l.b16 %v590
  %v2915 = vunpack.c.h.b16 %v590
  %v2916 = vunpack.c.l.b16 %v591
  %v2917 = vunpack.c.h.b16 %v591
  %v2918 = vunpack.c.l.b16 %v592
  %v2919 = vunpack.c.h.b16 %v592
  %v2920 = vunpack.c.l.b16 %v593
  %v2921 = vunpack.c.h.b16 %v593
  %v2922 = vunpack.c.l.b16 %v594
  %v2923 = vunpack.c.h.b16 %v594
  %v2924 = vunpack.c.l.b16 %v595
  %v2925 = vunpack.c.h.b16 %v595
  %v2926 = vunpack.c.l.b16 %v596
  %v2927 = vunpack.c.h.b16 %v596
  %v2928 = vunpack.c.l.b16 %v597
  %v2929 = vunpack.c.h.b16 %v597
  %v2930 = vunpack.c.l.b16 %v598
  %v2931 = vunpack.c.h.b16 %v598
  %v2932 = vunpack.c.l.b16 %v599
  %v2933 = vunpack.c.h.b16 %v599
  %v2934 = vunpack.c.l.b16 %v600
  %v2935 = vunpack.c.h.b16 %v600
  %v2936 = vunpack.c.l.b16 %v601
  %v2937 = vunpack.c.h.b16 %v601
  %v2938 = vunpack.c.l.b16 %v602
  %v2939 = vunpack.c.h.b16 %v602
  %v2940 = vunpack.c.l.b16 %v603
  %v2941 = vunpack.c.h.b16 %v603
  %v2942 = vunpack.c.l.b16 %v604
  %v2943 = vunpack.c.h.b16 %v604
  %v2944 = vunpack.c.l.b16 %v605
  %v2945 = vunpack.c.h.b16 %v605
  %v2946 = vunpack.c.l.b16 %v606
  %v2947 = vunpack.c.h.b16 %v606
  %v2948 = vunpack.c.l.b16 %v607
  %v2949 = vunpack.c.h.b16 %v607
  %v2950 = vunpack.c.l.b16 %v608
  %v2951 = vunpack.c.h.b16 %v608
  %v2952 = vunpack.c.l.b16 %v609
  %v2953 = vunpack.c.h.b16 %v609
  %v2954 = vunpack.c.l.b16 %v610
  %v2955 = vunpack.c.h.b16 %v610
  %v2956 = vunpack.c.l.b16 %v611
  %v2957 = vunpack.c.h.b16 %v611
  %v2958 = vunpack.c.l.b16 %v612
  %v2959 = vunpack.c.h.b16 %v612
  %v2960 = vunpack.c.l.b16 %v613
  %v2961 = vunpack.c.h.b16 %v613
  %v2962 = vunpack.c.l.b16 %v614
  %v2963 = vunpack.c.h.b16 %v614
  %v2964 = vunpack.c.l.b16 %v615
  %v2965 = vunpack.c.h.b16 %v615
  %v2966 = vunpack.c.l.b16 %v616
  %v2967 = vunpack.c.h.b16 %v616
  %v2968 = vunpack.c.l.b16 %v617
  %v2969 = vunpack.c.h.b16 %v617
  %v2970 = vunpack.c.l.b16 %v618
  %v2971 = vunpack.c.h.b16 %v618
  %v2972 = vunpack.c.l.b16 %v619
  %v2973 = vunpack.c.h.b16 %v619
  %v2974 = vunpack.c.l.b16 %v620
  %v2975 = vunpack.c.h.b16 %v620
  %v2976 = vunpack.c.l.b16 %v621
  %v2977 = vunpack.c.h.b16 %v621
  %v2978 = vunpack.c.l.b16 %v622
  %v2979 = vunpack.c.h.b16 %v622
  %v2980 = vunpack.c.l.b16 %v623
  %v2981 = vunpack.c.h.b16 %v623
  %v2982 = vunpack.c.l.b16 %v624
  %v2983 = vunpack.c.h.b16 %v624
  %v2984 = vunpack.c.l.b16 %v625
  %v2985 = vunpack.c.h.b16 %v625
  %v2986 = vunpack.c.l.b16 %v626
  %v2987 = vunpack.c.h.b16 %v626
  %v2988 = vunpack.c.l.b16 %v627
  %v2989 = vunpack.c.h.b16 %v627
  %v2990 = vunpack.c.l.b16 %v628
  %v2991 = vunpack.c.h.b16 %v628
  %v2992 = vunpack.c.l.b16 %v629
  %v2993 = vunpack.c.h.b16 %v629
  %v2994 = vunpack.c.l.b16 %v630
  %v2995 = vunpack.c.h.b16 %v630
  %v2996 = vunpack.c.l.b16 %v631
  %v2997 = vunpack.c.h.b16 %v631
  %v2998 = vunpack.c.l.b16 %v632
  %v2999 = vunpack.c.h.b16 %v632
  %v3000 = vunpack.c.l.b16 %v633
  %v3001 = vunpack.c.h.b16 %v633
  %v3002 = vunpack.c.l.b16 %v634
  %v3003 = vunpack.c.h.b16 %v634
  %v3004 = vunpack.c.l.b16 %v635
  %v3005 = vunpack.c.h.b16 %v635
  %v3006 = vunpack.c.l.b16 %v636
  %v3007 = vunpack.c.h.b16 %v636
  %v3008 = vunpack.c.l.b16 %v637
  %v3009 = vunpack.c.h.b16 %v637
  %v3010 = vunpack.c.l.b16 %v638
  %v3011 = vunpack.c.h.b16 %v638
  %v3012 = vunpack.c.l.b16 %v639
  %v3013 = vunpack.c.h.b16 %v639
  %v3014 = vunpack.c.l.b16 %v640
  %v3015 = vunpack.c.h.b16 %v640
  %v3016 = vunpack.c.l.b16 %v641
  %v3017 = vunpack.c.h.b16 %v641
  %v3018 = vunpack.c.l.b16 %v642
  %v3019 = vunpack.c.h.b16 %v642
  %v3020 = vunpack.c.l.b16 %v643
  %v3021 = vunpack.c.h.b16 %v643
  %v3022 = vunpack.c.l.b16 %v644
  %v3023 = vunpack.c.h.b16 %v644
  %v3024 = vunpack.c.l.b16 %v645
  %v3025 = vunpack.c.h.b16 %v645
  %v3026 = vunpack.c.l.b16 %v646
  %v3027 = vunpack.c.h.b16 %v646
  %v3028 = vunpack.c.l.b16 %v647
  %v3029 = vunpack.c.h.b16 %v647
  %v3030 = vunpack.c.l.b16 %v648
  %v3031 = vunpack.c.h.b16 %v648
  %v3032 = vunpack.c.l.b16 %v649
  %v3033 = vunpack.c.h.b16 %v649
  %v3034 = vunpack.c.l.b16 %v650
  %v3035 = vunpack.c.h.b16 %v650
  %v3036 = vunpack.c.l.b16 %v651
  %v3037 = vunpack.c.h.b16 %v651
  %v3038 = vunpack.c.l.b16 %v652
  %v3039 = vunpack.c.h.b16 %v652
  %v3040 = vunpack.c.l.b16 %v653
  %v3041 = vunpack.c.h.b16 %v653
  %v3042 = vunpack.c.l.b16 %v654
  %v3043 = vunpack.c.h.b16 %v654
  %v3044 = vunpack.c.l.b16 %v655
  %v3045 = vunpack.c.h.b16 %v655
  %v3046 = vunpack.c.l.b16 %v656
  %v3047 = vunpack.c.h.b16 %v656
  %v3048 = vunpack.c.l.b16 %v657
  %v3049 = vunpack.c.h.b16 %v657
  %v3050 = vunpack.c.l.b16 %v658
  %v3051 = vunpack.c.h.b16 %v658
  %v3052 = vunpack.c.l.b16 %v659
  %v3053 = vunpack.c.h.b16 %v659
  %v3054 = vunpack.c.l.b16 %v660
  %v3055 = vunpack.c.h.b16 %v660
  %v3056 = vunpack.c.l.b16 %v661
  %v3057 = vunpack.c.h.b16 %v661
  %v3058 = vunpack.c.l.b16 %v662
  %v3059 = vunpack.c.h.b16 %v662
  %v3060 = vunpack.c.l.b16 %v663
  %v3061 = vunpack.c.h.b16 %v663
  %v3062 = vunpack.c.l.b16 %v664
  %v3063 = vunpack.c.h.b16 %v664
  %v3064 = vunpack.c.l.b16 %v665
  %v3065 = vunpack.c.h.b16 %v665
  %v3066 = vunpack.c.l.b16 %v666
  %v3067 = vunpack.c.h.b16 %v666
  %v3068 = vunpack.c.l.b16 %v667
  %v3069 = vunpack.c.h.b16 %v667
  %v3070 = vunpack.c.l.b16 %v668
  %v3071 = vunpack.c.h.b16 %v668
  %v3072 = vunpack.c.l.b16 %v669
  %v3073 = vunpack.c.h.b16 %v669
  %v3074 = vunpack.c.l.b16 %v670
  %v3075 = vunpack.c.h.b16 %v670
  %v3076 = vunpack.c.l.b16 %v671
  %v3077 = vunpack.c.h.b16 %v671
  %v3078 = vunpack.c.l.b16 %v672
  %v3079 = vunpack.c.h.b16 %v672
  %v3080 = vunpack.c.l.b16 %v673
  %v3081 = vunpack.c.h.b16 %v673
  %v3082 = vunpack.c.l.b16 %v674
  %v3083 = vunpack.c.h.b16 %v674
  %v3084 = vunpack.c.l.b16 %v675
  %v3085 = vunpack.c.h.b16 %v675
  %v3086 = vunpack.c.l.b16 %v676
  %v3087 = vunpack.c.h.b16 %v676
  %v3088 = vunpack.c.l.b16 %v677
  %v3089 = vunpack.c.h.b16 %v677
  %v3090 = vunpack.c.l.b16 %v678
  %v3091 = vunpack.c.h.b16 %v678
  %v3092 = vunpack.c.l.b16 %v679
  %v3093 = vunpack.c.h.b16 %v679
  %v3094 = vunpack.c.l.b16 %v680
  %v3095 = vunpack.c.h.b16 %v680
  %v3096 = vunpack.c.l.b16 %v681
  %v3097 = vunpack.c.h.b16 %v681
  %v3098 = vunpack.c.l.b16 %v682
  %v3099 = vunpack.c.h.b16 %v682
  %v3100 = vunpack.c.l.b16 %v683
  %v3101 = vunpack.c.h.b16 %v683
  %v3102 = vunpack.c.l.b16 %v684
  %v3103 = vunpack.c.h.b16 %v684
  %v3104 = vunpack.c.l.b16 %v685
  %v3105 = vunpack.c.h.b16 %v685
  %v3106 = vunpack.c.l.b16 %v686
  %v3107 = vunpack.c.h.b16 %v686
  %v3108 = vunpack.c.l.b16 %v687
  %v3109 = vunpack.c.h.b16 %v687
  %v3110 = vunpack.c.l.b16 %v688
  %v3111 = vunpack.c.h.b16 %v688
  %v3112 = vunpack.c.l.b16 %v689
  %v3113 = vunpack.c.h.b16 %v689
  %v3114 = vunpack.c.l.b16 %v690
  %v3115 = vunpack.c.h.b16 %v690
  %v3116 = vunpack.c.l.b16 %v691
  %v3117 = vunpack.c.h.b16 %v691
  %v3118 = vunpack.c.l.b16 %v692
  %v3119 = vunpack.c.h.b16 %v692
  %v3120 = vunpack.c.l.b16 %v693
  %v3121 = vunpack.c.h.b16 %v693
  %v3122 = vunpack.c.l.b16 %v694
  %v3123 = vunpack.c.h.b16 %v694
  %v3124 = vunpack.c.l.b16 %v695
  %v3125 = vunpack.c.h.b16 %v695
  %v3126 = vunpack.c.l.b16 %v696
  %v3127 = vunpack.c.h.b16 %v696
  %v3128 = vunpack.c.l.b16 %v697
  %v3129 = vunpack.c.h.b16 %v697
  %v3130 = vunpack.c.l.b16 %v698
  %v3131 = vunpack.c.h.b16 %v698
  %v3132 = vunpack.c.l.b16 %v699
  %v3133 = vunpack.c.h.b16 %v699
  %v3134 = vunpack.c.l.b16 %v700
  %v3135 = vunpack.c.h.b16 %v700
  %v3136 = vunpack.c.l.b16 %v701
  %v3137 = vunpack.c.h.b16 %v701
  %v3138 = vunpack.c.l.b16 %v702
  %v3139 = vunpack.c.h.b16 %v702
  %v3140 = vunpack.c.l.b16 %v703
  %v3141 = vunpack.c.h.b16 %v703
  %v3142 = vunpack.c.l.b16 %v704
  %v3143 = vunpack.c.h.b16 %v704
  %v3144 = vunpack.c.l.b16 %v705
  %v3145 = vunpack.c.h.b16 %v705
  %v3146 = vunpack.c.l.b16 %v706
  %v3147 = vunpack.c.h.b16 %v706
  %v3148 = vunpack.c.l.b16 %v707
  %v3149 = vunpack.c.h.b16 %v707
  %v3150 = vunpack.c.l.b16 %v708
  %v3151 = vunpack.c.h.b16 %v708
  %v3152 = vunpack.c.l.b16 %v709
  %v3153 = vunpack.c.h.b16 %v709
  %v3154 = vunpack.c.l.b16 %v710
  %v3155 = vunpack.c.h.b16 %v710
  %v3156 = vunpack.c.l.b16 %v711
  %v3157 = vunpack.c.h.b16 %v711
  %v3158 = vunpack.c.l.b16 %v712
  %v3159 = vunpack.c.h.b16 %v712
  %v3160 = vunpack.c.l.b16 %v713
  %v3161 = vunpack.c.h.b16 %v713
  %v3162 = vunpack.c.l.b16 %v714
  %v3163 = vunpack.c.h.b16 %v714
  %v3164 = vunpack.c.l.b16 %v715
  %v3165 = vunpack.c.h.b16 %v715
  %v3166 = vunpack.c.l.b16 %v716
  %v3167 = vunpack.c.h.b16 %v716
  %v3168 = vunpack.c.l.b16 %v717
  %v3169 = vunpack.c.h.b16 %v717
  %v3170 = vunpack.c.l.b16 %v718
  %v3171 = vunpack.c.h.b16 %v718
  %v3172 = vunpack.c.l.b16 %v719
  %v3173 = vunpack.c.h.b16 %v719
  %v3174 = vunpack.c.l.b16 %v720
  %v3175 = vunpack.c.h.b16 %v720
  %v3176 = vunpack.c.l.b16 %v721
  %v3177 = vunpack.c.h.b16 %v721
  %v3178 = vunpack.c.l.b16 %v722
  %v3179 = vunpack.c.h.b16 %v722
  %v3180 = vunpack.c.l.b16 %v723
  %v3181 = vunpack.c.h.b16 %v723
  %v3182 = vunpack.c.l.b16 %v724
  %v3183 = vunpack.c.h.b16 %v724
  %v3184 = vunpack.c.l.b16 %v725
  %v3185 = vunpack.c.h.b16 %v725
  %v3186 = vunpack.c.l.b16 %v726
  %v3187 = vunpack.c.h.b16 %v726
  %v3188 = vunpack.c.l.b16 %v727
  %v3189 = vunpack.c.h.b16 %v727
  %v3190 = vunpack.c.l.b16 %v728
  %v3191 = vunpack.c.h.b16 %v728
  %v3192 = vunpack.c.l.b16 %v729
  %v3193 = vunpack.c.h.b16 %v729
  %v3194 = vunpack.c.l.b16 %v730
  %v3195 = vunpack.c.h.b16 %v730
  %v3196 = vunpack.c.l.b16 %v731
  %v3197 = vunpack.c.h.b16 %v731
  %v3198 = vunpack.c.l.b16 %v732
  %v3199 = vunpack.c.h.b16 %v732
  %v3200 = vunpack.c.l.b16 %v733
  %v3201 = vunpack.c.h.b16 %v733
  %v3202 = vpack.c.b16 %v2054, %v2050
  %v3203 = vpack.c.b16 %v2055, %v2051
  %v3204 = vpack.c.b16 %v2056, %v2052
  %v3205 = vpack.c.b16 %v2057, %v2053
  %v3206 = vpack.c.b16 %v2062, %v2058
  %v3207 = vpack.c.b16 %v2063, %v2059
  %v3208 = vpack.c.b16 %v2064, %v2060
  %v3209 = vpack.c.b16 %v2065, %v2061
  %v3210 = vpack.c.b16 %v2070, %v2066
  %v3211 = vpack.c.b16 %v2071, %v2067
  %v3212 = vpack.c.b16 %v2072, %v2068
  %v3213 = vpack.c.b16 %v2073, %v2069
  %v3214 = vpack.c.b16 %v2078, %v2074
  %v3215 = vpack.c.b16 %v2079, %v2075
  %v3216 = vpack.c.b16 %v2080, %v2076
  %v3217 = vpack.c.b16 %v2081, %v2077
  %v3218 = vpack.c.b16 %v2086, %v2082
  %v3219 = vpack.c.b16 %v2087, %v2083
  %v3220 = vpack.c.b16 %v2088, %v2084
  %v3221 = vpack.c.b16 %v2089, %v2085
  %v3222 = vpack.c.b16 %v2094, %v2090
  %v3223 = vpack.c.b16 %v2095, %v2091
  %v3224 = vpack.c.b16 %v2096, %v2092
  %v3225 = vpack.c.b16 %v2097, %v2093
  %v3226 = vpack.c.b16 %v2102, %v2098
  %v3227 = vpack.c.b16 %v2103, %v2099
  %v3228 = vpack.c.b16 %v2104, %v2100
  %v3229 = vpack.c.b16 %v2105, %v2101
  %v3230 = vpack.c.b16 %v2110, %v2106
  %v3231 = vpack.c.b16 %v2111, %v2107
  %v3232 = vpack.c.b16 %v2112, %v2108
  %v3233 = vpack.c.b16 %v2113, %v2109
  %v3234 = vpack.c.b16 %v2118, %v2114
  %v3235 = vpack.c.b16 %v2119, %v2115
  %v3236 = vpack.c.b16 %v2120, %v2116
  %v3237 = vpack.c.b16 %v2121, %v2117
  %v3238 = vpack.c.b16 %v2126, %v2122
  %v3239 = vpack.c.b16 %v2127, %v2123
  %v3240 = vpack.c.b16 %v2128, %v2124
  %v3241 = vpack.c.b16 %v2129, %v2125
  %v3242 = vpack.c.b16 %v2134, %v2130
  %v3243 = vpack.c.b16 %v2135, %v2131
  %v3244 = vpack.c.b16 %v2136, %v2132
  %v3245 = vpack.c.b16 %v2137, %v2133
  %v3246 = vpack.c.b16 %v2142, %v2138
  %v3247 = vpack.c.b16 %v2143, %v2139
  %v3248 = vpack.c.b16 %v2144, %v2140
  %v3249 = vpack.c.b16 %v2145, %v2141
  %v3250 = vpack.c.b16 %v2150, %v2146
  %v3251 = vpack.c.b16 %v2151, %v2147
  %v3252 = vpack.c.b16 %v2152, %v2148
  %v3253 = vpack.c.b16 %v2153, %v2149
  %v3254 = vpack.c.b16 %v2158, %v2154
  %v3255 = vpack.c.b16 %v2159, %v2155
  %v3256 = vpack.c.b16 %v2160, %v2156
  %v3257 = vpack.c.b16 %v2161, %v2157
  %v3258 = vpack.c.b16 %v2166, %v2162
  %v3259 = vpack.c.b16 %v2167, %v2163
  %v3260 = vpack.c.b16 %v2168, %v2164
  %v3261 = vpack.c.b16 %v2169, %v2165
  %v3262 = vpack.c.b16 %v2174, %v2170
  %v3263 = vpack.c.b16 %v2175, %v2171
  %v3264 = vpack.c.b16 %v2176, %v2172
  %v3265 = vpack.c.b16 %v2177, %v2173
  %v3266 = vpack.c.b16 %v2182, %v2178
  %v3267 = vpack.c.b16 %v2183, %v2179
  %v3268 = vpack.c.b16 %v2184, %v2180
  %v3269 = vpack.c.b16 %v2185, %v2181
  %v3270 = vpack.c.b16 %v2190, %v2186
  %v3271 = vpack.c.b16 %v2191, %v2187
  %v3272 = vpack.c.b16 %v2192, %v2188
  %v3273 = vpack.c.b16 %v2193, %v2189
  %v3274 = vpack.c.b16 %v2198, %v2194
  %v3275 = vpack.c.b16 %v2199, %v2195
  %v3276 = vpack.c.b16 %v2200, %v2196
  %v3277 = vpack.c.b16 %v2201, %v2197
  %v3278 = vpack.c.b16 %v2206, %v2202
  %v3279 = vpack.c.b16 %v2207, %v2203
  %v3280 = vpack.c.b16 %v2208, %v2204
  %v3281 = vpack.c.b16 %v2209, %v2205
  %v3282 = vpack.c.b16 %v2214, %v2210
  %v3283 = vpack.c.b16 %v2215, %v2211
  %v3284 = vpack.c.b16 %v2216, %v2212
  %v3285 = vpack.c.b16 %v2217, %v2213
  %v3286 = vpack.c.b16 %v2222, %v2218
  %v3287 = vpack.c.b16 %v2223, %v2219
  %v3288 = vpack.c.b16 %v2224, %v2220
  %v3289 = vpack.c.b16 %v2225, %v2221
  %v3290 = vpack.c.b16 %v2230, %v2226
  %v3291 = vpack.c.b16 %v2231, %v2227
  %v3292 = vpack.c.b16 %v2232, %v2228
  %v3293 = vpack.c.b16 %v2233, %v2229
  %v3294 = vpack.c.b16 %v2238, %v2234
  %v3295 = vpack.c.b16 %v2239, %v2235
  %v3296 = vpack.c.b16 %v2240, %v2236
  %v3297 = vpack.c.b16 %v2241, %v2237
  %v3298 = vpack.c.b16 %v2246, %v2242
  %v3299 = vpack.c.b16 %v2247, %v2243
  %v3300 = vpack.c.b16 %v2248, %v2244
  %v3301 = vpack.c.b16 %v2249, %v2245
  %v3302 = vpack.c.b16 %v2254, %v2250
  %v3303 = vpack.c.b16 %v2255, %v2251
  %v3304 = vpack.c.b16 %v2256, %v2252
  %v3305 = vpack.c.b16 %v2257, %v2253
  %v3306 = vpack.c.b16 %v2262, %v2258
  %v3307 = vpack.c.b16 %v2263, %v2259
  %v3308 = vpack.c.b16 %v2264, %v2260
  %v3309 = vpack.c.b16 %v2265, %v2261
  %v3310 = vpack.c.b16 %v2270, %v2266
  %v3311 = vpack.c.b16 %v2271, %v2267
  %v3312 = vpack.c.b16 %v2272, %v2268
  %v3313 = vpack.c.b16 %v2273, %v2269
  %v3314 = vpack.c.b16 %v2278, %v2274
  %v3315 = vpack.c.b16 %v2279, %v2275
  %v3316 = vpack.c.b16 %v2280, %v2276
  %v3317 = vpack.c.b16 %v2281, %v2277
  %v3318 = vpack.c.b16 %v2286, %v2282
  %v3319 = vpack.c.b16 %v2287, %v2283
  %v3320 = vpack.c.b16 %v2288, %v2284
  %v3321 = vpack.c.b16 %v2289, %v2285
  %v3322 = vpack.c.b16 %v2294, %v2290
  %v3323 = vpack.c.b16 %v2295, %v2291
  %v3324 = vpack.c.b16 %v2296, %v2292
  %v3325 = vpack.c.b16 %v2297, %v2293
  %v3326 = vpack.c.b16 %v2302, %v2298
  %v3327 = vpack.c.b16 %v2303, %v2299
  %v3328 = vpack.c.b16 %v2304, %v2300
  %v3329 = vpack.c.b16 %v2305, %v2301
  %v3330 = vpack.c.b16 %v2310, %v2306
  %v3331 = vpack.c.b16 %v2311, %v2307
  %v3332 = vpack.c.b16 %v2312, %v2308
  %v3333 = vpack.c.b16 %v2313, %v2309
  %v3334 = vpack.c.b16 %v2318, %v2314
  %v3335 = vpack.c.b16 %v2319, %v2315
  %v3336 = vpack.c.b16 %v2320, %v2316
  %v3337 = vpack.c.b16 %v2321, %v2317
  %v3338 = vpack.c.b16 %v2326, %v2322
  %v3339 = vpack.c.b16 %v2327, %v2323
  %v3340 = vpack.c.b16 %v2328, %v2324
  %v3341 = vpack.c.b16 %v2329, %v2325
  %v3342 = vpack.c.b16 %v2334, %v2330
  %v3343 = vpack.c.b16 %v2335, %v2331
  %v3344 = vpack.c.b16 %v2336, %v2332
  %v3345 = vpack.c.b16 %v2337, %v2333
  %v3346 = vpack.c.b16 %v2342, %v2338
  %v3347 = vpack.c.b16 %v2343, %v2339
  %v3348 = vpack.c.b16 %v2344, %v2340
  %v3349 = vpack.c.b16 %v2345, %v2341
  %v3350 = vpack.c.b16 %v2350, %v2346
  %v3351 = vpack.c.b16 %v2351, %v2347
  %v3352 = vpack.c.b16 %v2352, %v2348
  %v3353 = vpack.c.b16 %v2353, %v2349
  %v3354 = vpack.c.b16 %v2358, %v2354
  %v3355 = vpack.c.b16 %v2359, %v2355
  %v3356 = vpack.c.b16 %v2360, %v2356
  %v3357 = vpack.c.b16 %v2361, %v2357
  %v3358 = vpack.c.b16 %v2366, %v2362
  %v3359 = vpack.c.b16 %v2367, %v2363
  %v3360 = vpack.c.b16 %v2368, %v2364
  %v3361 = vpack.c.b16 %v2369, %v2365
  %v3362 = vpack.c.b16 %v2374, %v2370
  %v3363 = vpack.c.b16 %v2375, %v2371
  %v3364 = vpack.c.b16 %v2376, %v2372
  %v3365 = vpack.c.b16 %v2377, %v2373
  %v3366 = vpack.c.b16 %v2382, %v2378
  %v3367 = vpack.c.b16 %v2383, %v2379
  %v3368 = vpack.c.b16 %v2384, %v2380
  %v3369 = vpack.c.b16 %v2385, %v2381
  %v3370 = vpack.c.b16 %v2390, %v2386
  %v3371 = vpack.c.b16 %v2391, %v2387
  %v3372 = vpack.c.b16 %v2392, %v2388
  %v3373 = vpack.c.b16 %v2393, %v2389
  %v3374 = vpack.c.b16 %v2398, %v2394
  %v3375 = vpack.c.b16 %v2399, %v2395
  %v3376 = vpack.c.b16 %v2400, %v2396
  %v3377 = vpack.c.b16 %v2401, %v2397
  %v3378 = vpack.c.b16 %v2406, %v2402
  %v3379 = vpack.c.b16 %v2407, %v2403
  %v3380 = vpack.c.b16 %v2408, %v2404
  %v3381 = vpack.c.b16 %v2409, %v2405
  %v3382 = vpack.c.b16 %v2414, %v2410
  %v3383 = vpack.c.b16 %v2415, %v2411
  %v3384 = vpack.c.b16 %v2416, %v2412
  %v3385 = vpack.c.b16 %v2417, %v2413
  %v3386 = vpack.c.b16 %v2422, %v2418
  %v3387 = vpack.c.b16 %v2423, %v2419
  %v3388 = vpack.c.b16 %v2424, %v2420
  %v3389 = vpack.c.b16 %v2425, %v2421
  %v3390 = vpack.c.b16 %v2430, %v2426
  %v3391 = vpack.c.b16 %v2431, %v2427
  %v3392 = vpack.c.b16 %v2432, %v2428
  %v3393 = vpack.c.b16 %v2433, %v2429
  %v3394 = vpack.c.b16 %v2438, %v2434
  %v3395 = vpack.c.b16 %v2439, %v2435
  %v3396 = vpack.c.b16 %v2440, %v2436
  %v3397 = vpack.c.b16 %v2441, %v2437
  %v3398 = vpack.c.b16 %v2446, %v2442
  %v3399 = vpack.c.b16 %v2447, %v2443
  %v3400 = vpack.c.b16 %v2448, %v2444
  %v3401 = vpack.c.b16 %v2449, %v2445
  %v3402 = vpack.c.b16 %v2454, %v2450
  %v3403 = vpack.c.b16 %v2455, %v2451
  %v3404 = vpack.c.b16 %v2456, %v2452
  %v3405 = vpack.c.b16 %v2457, %v2453
  %v3406 = vpack.c.b16 %v2462, %v2458
  %v3407 = vpack.c.b16 %v2463, %v2459
  %v3408 = vpack.c.b16 %v2464, %v2460
  %v3409 = vpack.c.b16 %v2465, %v2461
  %v3410 = vpack.c.b16 %v2470, %v2466
  %v3411 = vpack.c.b16 %v2471, %v2467
  %v3412 = vpack.c.b16 %v2472, %v2468
  %v3413 = vpack.c.b16 %v2473, %v2469
  %v3414 = vpack.c.b16 %v2478, %v2474
  %v3415 = vpack.c.b16 %v2479, %v2475
  %v3416 = vpack.c.b16 %v2480, %v2476
  %v3417 = vpack.c.b16 %v2481, %v2477
  %v3418 = vpack.c.b16 %v2486, %v2482
  %v3419 = vpack.c.b16 %v2487, %v2483
  %v3420 = vpack.c.b16 %v2488, %v2484
  %v3421 = vpack.c.b16 %v2489, %v2485
  %v3422 = vpack.c.b16 %v2494, %v2490
  %v3423 = vpack.c.b16 %v2495, %v2491
  %v3424 = vpack.c.b16 %v2496, %v2492
  %v3425 = vpack.c.b16 %v2497, %v2493
  %v3426 = vpack.c.b16 %v2502, %v2498
  %v3427 = vpack.c.b16 %v2503, %v2499
  %v3428 = vpack.c.b16 %v2504, %v2500
  %v3429 = vpack.c.b16 %v2505, %v2501
  %v3430 = vpack.c.b16 %v2510, %v2506
  %v3431 = vpack.c.b16 %v2511, %v2507
  %v3432 = vpack.c.b16 %v2512, %v2508
  %v3433 = vpack.c.b16 %v2513, %v2509
  %v3434 = vpack.c.b16 %v2518, %v2514
  %v3435 = vpack.c.b16 %v2519, %v2515
  %v3436 = vpack.c.b16 %v2520, %v2516
  %v3437 = vpack.c.b16 %v2521, %v2517
  %v3438 = vpack.c.b16 %v2526, %v2522
  %v3439 = vpack.c.b16 %v2527, %v2523
  %v3440 = vpack.c.b16 %v2528, %v2524
  %v3441 = vpack.c.b16 %v2529, %v2525
  %v3442 = vpack.c.b16 %v2534, %v2530
  %v3443 = vpack.c.b16 %v2535, %v2531
  %v3444 = vpack.c.b16 %v2536, %v2532
  %v3445 = vpack.c.b16 %v2537, %v2533
  %v3446 = vpack.c.b16 %v2542, %v2538
  %v3447 = vpack.c.b16 %v2543, %v2539
  %v3448 = vpack.c.b16 %v2544, %v2540
  %v3449 = vpack.c.b16 %v2545, %v2541
  %v3450 = vpack.c.b16 %v2550, %v2546
  %v3451 = vpack.c.b16 %v2551, %v2547
  %v3452 = vpack.c.b16 %v2552, %v2548
  %v3453 = vpack.c.b16 %v2553, %v2549
  %v3454 = vpack.c.b16 %v2558, %v2554
  %v3455 = vpack.c.b16 %v2559, %v2555
  %v3456 = vpack.c.b16 %v2560, %v2556
  %v3457 = vpack.c.b16 %v2561, %v2557
  %v3458 = vpack.c.b16 %v2566, %v2562
  %v3459 = vpack.c.b16 %v2567, %v2563
  %v3460 = vpack.c.b16 %v2568, %v2564
  %v3461 = vpack.c.b16 %v2569, %v2565
  %v3462 = vpack.c.b16 %v2574, %v2570
  %v3463 = vpack.c.b16 %v2575, %v2571
  %v3464 = vpack.c.b16 %v2576, %v2572
  %v3465 = vpack.c.b16 %v2577, %v2573
  %v3466 = vpack.c.b16 %v2582, %v2578
  %v3467 = vpack.c.b16 %v2583, %v2579
  %v3468 = vpack.c.b16 %v2584, %v2580
  %v3469 = vpack.c.b16 %v2585, %v2581
  %v3470 = vpack.c.b16 %v2590, %v2586
  %v3471 = vpack.c.b16 %v2591, %v2587
  %v3472 = vpack.c.b16 %v2592, %v2588
  %v3473 = vpack.c.b16 %v2593, %v2589
  %v3474 = vpack.c.b16 %v2598, %v2594
  %v3475 = vpack.c.b16 %v2599, %v2595
  %v3476 = vpack.c.b16 %v2600, %v2596
  %v3477 = vpack.c.b16 %v2601, %v2597
  %v3478 = vpack.c.b16 %v2606, %v2602
  %v3479 = vpack.c.b16 %v2607, %v2603
  %v3480 = vpack.c.b16 %v2608, %v2604
  %v3481 = vpack.c.b16 %v2609, %v2605
  %v3482 = vpack.c.b16 %v2614, %v2610
  %v3483 = vpack.c.b16 %v2615, %v2611
  %v3484 = vpack.c.b16 %v2616, %v2612
  %v3485 = vpack.c.b16 %v2617, %v2613
  %v3486 = vpack.c.b16 %v2622, %v2618
  %v3487 = vpack.c.b16 %v2623, %v2619
  %v3488 = vpack.c.b16 %v2624, %v2620
  %v3489 = vpack.c.b16 %v2625, %v2621
  %v3490 = vpack.c.b16 %v2630, %v2626
  %v3491 = vpack.c.b16 %v2631, %v2627
  %v3492 = vpack.c.b16 %v2632, %v2628
  %v3493 = vpack.c.b16 %v2633, %v2629
  %v3494 = vpack.c.b16 %v2638, %v2634
  %v3495 = vpack.c.b16 %v2639, %v2635
  %v3496 = vpack.c.b16 %v2640, %v2636
  %v3497 = vpack.c.b16 %v2641, %v2637
  %v3498 = vpack.c.b16 %v2646, %v2642
  %v3499 = vpack.c.b16 %v2647, %v2643
  %v3500 = vpack.c.b16 %v2648, %v2644
  %v3501 = vpack.c.b16 %v2649, %v2645
  %v3502 = vpack.c.b16 %v2654, %v2650
  %v3503 = vpack.c.b16 %v2655, %v2651
  %v3504 = vpack.c.b16 %v2656, %v2652
  %v3505 = vpack.c.b16 %v2657, %v2653
  %v3506 = vpack.c.b16 %v2662, %v2658
  %v3507 = vpack.c.b16 %v2663, %v2659
  %v3508 = vpack.c.b16 %v2664, %v2660
  %v3509 = vpack.c.b16 %v2665, %v2661
  %v3510 = vpack.c.b16 %v2670, %v2666
  %v3511 = vpack.c.b16 %v2671, %v2667
  %v3512 = vpack.c.b16 %v2672, %v2668
  %v3513 = vpack.c.b16 %v2673, %v2669
  %v3514 = vpack.c.b16 %v2678, %v2674
  %v3515 = vpack.c.b16 %v2679, %v2675
  %v3516 = vpack.c.b16 %v2680, %v2676
  %v3517 = vpack.c.b16 %v2681, %v2677
  %v3518 = vpack.c.b16 %v2686, %v2682
  %v3519 = vpack.c.b16 %v2687, %v2683
  %v3520 = vpack.c.b16 %v2688, %v2684
  %v3521 = vpack.c.b16 %v2689, %v2685
  %v3522 = vpack.c.b16 %v2694, %v2690
  %v3523 = vpack.c.b16 %v2695, %v2691
  %v3524 = vpack.c.b16 %v2696, %v2692
  %v3525 = vpack.c.b16 %v2697, %v2693
  %v3526 = vpack.c.b16 %v2702, %v2698
  %v3527 = vpack.c.b16 %v2703, %v2699
  %v3528 = vpack.c.b16 %v2704, %v2700
  %v3529 = vpack.c.b16 %v2705, %v2701
  %v3530 = vpack.c.b16 %v2710, %v2706
  %v3531 = vpack.c.b16 %v2711, %v2707
  %v3532 = vpack.c.b16 %v2712, %v2708
  %v3533 = vpack.c.b16 %v2713, %v2709
  %v3534 = vpack.c.b16 %v2718, %v2714
  %v3535 = vpack.c.b16 %v2719, %v2715
  %v3536 = vpack.c.b16 %v2720, %v2716
  %v3537 = vpack.c.b16 %v2721, %v2717
  %v3538 = vpack.c.b16 %v2726, %v2722
  %v3539 = vpack.c.b16 %v2727, %v2723
  %v3540 = vpack.c.b16 %v2728, %v2724
  %v3541 = vpack.c.b16 %v2729, %v2725
  %v3542 = vpack.c.b16 %v2734, %v2730
  %v3543 = vpack.c.b16 %v2735, %v2731
  %v3544 = vpack.c.b16 %v2736, %v2732
  %v3545 = vpack.c.b16 %v2737, %v2733
  %v3546 = vpack.c.b16 %v2742, %v2738
  %v3547 = vpack.c.b16 %v2743, %v2739
  %v3548 = vpack.c.b16 %v2744, %v2740
  %v3549 = vpack.c.b16 %v2745, %v2741
  %v3550 = vpack.c.b16 %v2750, %v2746
  %v3551 = vpack.c.b16 %v2751, %v2747
  %v3552 = vpack.c.b16 %v2752, %v2748
  %v3553 = vpack.c.b16 %v2753, %v2749
  %v3554 = vpack.c.b16 %v2758, %v2754
  %v3555 = vpack.c.b16 %v2759, %v2755
  %v3556 = vpack.c.b16 %v2760, %v2756
  %v3557 = vpack.c.b16 %v2761, %v2757
  %v3558 = vpack.c.b16 %v2766, %v2762
  %v3559 = vpack.c.b16 %v2767, %v2763
  %v3560 = vpack.c.b16 %v2768, %v2764
  %v3561 = vpack.c.b16 %v2769, %v2765
  %v3562 = vpack.c.b16 %v2774, %v2770
  %v3563 = vpack.c.b16 %v2775, %v2771
  %v3564 = vpack.c.b16 %v2776, %v2772
  %v3565 = vpack.c.b16 %v2777, %v2773
  %v3566 = vpack.c.b16 %v2782, %v2778
  %v3567 = vpack.c.b16 %v2783, %v2779
  %v3568 = vpack.c.b16 %v2784, %v2780
  %v3569 = vpack.c.b16 %v2785, %v2781
  %v3570 = vpack.c.b16 %v2790, %v2786
  %v3571 = vpack.c.b16 %v2791, %v2787
  %v3572 = vpack.c.b16 %v2792, %v2788
  %v3573 = vpack.c.b16 %v2793, %v2789
  %v3574 = vpack.c.b16 %v2798, %v2794
  %v3575 = vpack.c.b16 %v2799, %v2795
  %v3576 = vpack.c.b16 %v2800, %v2796
  %v3577 = vpack.c.b16 %v2801, %v2797
  %v3578 = vpack.c.b16 %v2806, %v2802
  %v3579 = vpack.c.b16 %v2807, %v2803
  %v3580 = vpack.c.b16 %v2808, %v2804
  %v3581 = vpack.c.b16 %v2809, %v2805
  %v3582 = vpack.c.b16 %v2814, %v2810
  %v3583 = vpack.c.b16 %v2815, %v2811
  %v3584 = vpack.c.b16 %v2816, %v2812
  %v3585 = vpack.c.b16 %v2817, %v2813
  %v3586 = vpack.c.b16 %v2822, %v2818
  %v3587 = vpack.c.b16 %v2823, %v2819
  %v3588 = vpack.c.b16 %v2824, %v2820
  %v3589 = vpack.c.b16 %v2825, %v2821
  %v3590 = vpack.c.b16 %v2830, %v2826
  %v3591 = vpack.c.b16 %v2831, %v2827
  %v3592 = vpack.c.b16 %v2832, %v2828
  %v3593 = vpack.c.b16 %v2833, %v2829
  %v3594 = vpack.c.b16 %v2838, %v2834
  %v3595 = vpack.c.b16 %v2839, %v2835
  %v3596 = vpack.c.b16 %v2840, %v2836
  %v3597 = vpack.c.b16 %v2841, %v2837
  %v3598 = vpack.c.b16 %v2846, %v2842
  %v3599 = vpack.c.b16 %v2847, %v2843
  %v3600 = vpack.c.b16 %v2848, %v2844
  %v3601 = vpack.c.b16 %v2849, %v2845
  %v3602 = vpack.c.b16 %v2854, %v2850
  %v3603 = vpack.c.b16 %v2855, %v2851
  %v3604 = vpack.c.b16 %v2856, %v2852
  %v3605 = vpack.c.b16 %v2857, %v2853
  %v3606 = vpack.c.b16 %v2862, %v2858
  %v3607 = vpack.c.b16 %v2863, %v2859
  %v3608 = vpack.c.b16 %v2864, %v2860
  %v3609 = vpack.c.b16 %v2865, %v2861
  %v3610 = vpack.c.b16 %v2870, %v2866
  %v3611 = vpack.c.b16 %v2871, %v2867
  %v3612 = vpack.c.b16 %v2872, %v2868
  %v3613 = vpack.c.b16 %v2873, %v2869
  %v3614 = vpack.c.b16 %v2878, %v2874
  %v3615 = vpack.c.b16 %v2879, %v2875
  %v3616 = vpack.c.b16 %v2880, %v2876
  %v3617 = vpack.c.b16 %v2881, %v2877
  %v3618 = vpack.c.b16 %v2886, %v2882
  %v3619 = vpack.c.b16 %v2887, %v2883
  %v3620 = vpack.c.b16 %v2888, %v2884
  %v3621 = vpack.c.b16 %v2889, %v2885
  %v3622 = vpack.c.b16 %v2894, %v2890
  %v3623 = vpack.c.b16 %v2895, %v2891
  %v3624 = vpack.c.b16 %v2896, %v2892
  %v3625 = vpack.c.b16 %v2897, %v2893
  %v3626 = vpack.c.b16 %v2902, %v2898
  %v3627 = vpack.c.b16 %v2903, %v2899
  %v3628 = vpack.c.b16 %v2904, %v2900
  %v3629 = vpack.c.b16 %v2905, %v2901
  %v3630 = vpack.c.b16 %v2910, %v2906
  %v3631 = vpack.c.b16 %v2911, %v2907
  %v3632 = vpack.c.b16 %v2912, %v2908
  %v3633 = vpack.c.b16 %v2913, %v2909
  %v3634 = vpack.c.b16 %v2918, %v2914
  %v3635 = vpack.c.b16 %v2919, %v2915
  %v3636 = vpack.c.b16 %v2920, %v2916
  %v3637 = vpack.c.b16 %v2921, %v2917
  %v3638 = vpack.c.b16 %v2926, %v2922
  %v3639 = vpack.c.b16 %v2927, %v2923
  %v3640 = vpack.c.b16 %v2928, %v2924
  %v3641 = vpack.c.b16 %v2929, %v2925
  %v3642 = vpack.c.b16 %v2934, %v2930
  %v3643 = vpack.c.b16 %v2935, %v2931
  %v3644 = vpack.c.b16 %v2936, %v2932
  %v3645 = vpack.c.b16 %v2937, %v2933
  %v3646 = vpack.c.b16 %v2942, %v2938
  %v3647 = vpack.c.b16 %v2943, %v2939
  %v3648 = vpack.c.b16 %v2944, %v2940
  %v3649 = vpack.c.b16 %v2945, %v2941
  %v3650 = vpack.c.b16 %v2950, %v2946
  %v3651 = vpack.c.b16 %v2951, %v2947
  %v3652 = vpack.c.b16 %v2952, %v2948
  %v3653 = vpack.c.b16 %v2953, %v2949
  %v3654 = vpack.c.b16 %v2958, %v2954
  %v3655 = vpack.c.b16 %v2959, %v2955
  %v3656 = vpack.c.b16 %v2960, %v2956
  %v3657 = vpack.c.b16 %v2961, %v2957
  %v3658 = vpack.c.b16 %v2966, %v2962
  %v3659 = vpack.c.b16 %v2967, %v2963
  %v3660 = vpack.c.b16 %v2968, %v2964
  %v3661 = vpack.c.b16 %v2969, %v2965
  %v3662 = vpack.c.b16 %v2974, %v2970
  %v3663 = vpack.c.b16 %v2975, %v2971
  %v3664 = vpack.c.b16 %v2976, %v2972
  %v3665 = vpack.c.b16 %v2977, %v2973
  %v3666 = vpack.c.b16 %v2982, %v2978
  %v3667 = vpack.c.b16 %v2983, %v2979
  %v3668 = vpack.c.b16 %v2984, %v2980
  %v3669 = vpack.c.b16 %v2985, %v2981
  %v3670 = vpack.c.b16 %v2990, %v2986
  %v3671 = vpack.c.b16 %v2991, %v2987
  %v3672 = vpack.c.b16 %v2992, %v2988
  %v3673 = vpack.c.b16 %v2993, %v2989
  %v3674 = vpack.c.b16 %v2998, %v2994
  %v3675 = vpack.c.b16 %v2999, %v2995
  %v3676 = vpack.c.b16 %v3000, %v2996
  %v3677 = vpack.c.b16 %v3001, %v2997
  %v3678 = vpack.c.b16 %v3006, %v3002
  %v3679 = vpack.c.b16 %v3007, %v3003
  %v3680 = vpack.c.b16 %v3008, %v3004
  %v3681 = vpack.c.b16 %v3009, %v3005
  %v3682 = vpack.c.b16 %v3014, %v3010
  %v3683 = vpack.c.b16 %v3015, %v3011
  %v3684 = vpack.c.b16 %v3016, %v3012
  %v3685 = vpack.c.b16 %v3017, %v3013
  %v3686 = vpack.c.b16 %v3022, %v3018
  %v3687 = vpack.c.b16 %v3023, %v3019
  %v3688 = vpack.c.b16 %v3024, %v3020
  %v3689 = vpack.c.b16 %v3025, %v3021
  %v3690 = vpack.c.b16 %v3030, %v3026
  %v3691 = vpack.c.b16 %v3031, %v3027
  %v3692 = vpack.c.b16 %v3032, %v3028
  %v3693 = vpack.c.b16 %v3033, %v3029
  %v3694 = vpack.c.b16 %v3038, %v3034
  %v3695 = vpack.c.b16 %v3039, %v3035
  %v3696 = vpack.c.b16 %v3040, %v3036
  %v3697 = vpack.c.b16 %v3041, %v3037
  %v3698 = vpack.c.b16 %v3046, %v3042
  %v3699 = vpack.c.b16 %v3047, %v3043
  %v3700 = vpack.c.b16 %v3048, %v3044
  %v3701 = vpack.c.b16 %v3049, %v3045
  %v3702 = vpack.c.b16 %v3054, %v3050
  %v3703 = vpack.c.b16 %v3055, %v3051
  %v3704 = vpack.c.b16 %v3056, %v3052
  %v3705 = vpack.c.b16 %v3057, %v3053
  %v3706 = vpack.c.b16 %v3062, %v3058
  %v3707 = vpack.c.b16 %v3063, %v3059
  %v3708 = vpack.c.b16 %v3064, %v3060
  %v3709 = vpack.c.b16 %v3065, %v3061
  %v3710 = vpack.c.b16 %v3070, %v3066
  %v3711 = vpack.c.b16 %v3071, %v3067
  %v3712 = vpack.c.b16 %v3072, %v3068
  %v3713 = vpack.c.b16 %v3073, %v3069
  %v3714 = vpack.c.b16 %v3078, %v3074
  %v3715 = vpack.c.b16 %v3079, %v3075
  %v3716 = vpack.c.b16 %v3080, %v3076
  %v3717 = vpack.c.b16 %v3081, %v3077
  %v3718 = vpack.c.b16 %v3086, %v3082
  %v3719 = vpack.c.b16 %v3087, %v3083
  %v3720 = vpack.c.b16 %v3088, %v3084
  %v3721 = vpack.c.b16 %v3089, %v3085
  %v3722 = vpack.c.b16 %v3094, %v3090
  %v3723 = vpack.c.b16 %v3095, %v3091
  %v3724 = vpack.c.b16 %v3096, %v3092
  %v3725 = vpack.c.b16 %v3097, %v3093
  %v3726 = vpack.c.b16 %v3102, %v3098
  %v3727 = vpack.c.b16 %v3103, %v3099
  %v3728 = vpack.c.b16 %v3104, %v3100
  %v3729 = vpack.c.b16 %v3105, %v3101
  %v3730 = vpack.c.b16 %v3110, %v3106
  %v3731 = vpack.c.b16 %v3111, %v3107
  %v3732 = vpack.c.b16 %v3112, %v3108
  %v3733 = vpack.c.b16 %v3113, %v3109
  %v3734 = vpack.c.b16 %v3118, %v3114
  %v3735 = vpack.c.b16 %v3119, %v3115
  %v3736 = vpack.c.b16 %v3120, %v3116
  %v3737 = vpack.c.b16 %v3121, %v3117
  %v3738 = vpack.c.b16 %v3126, %v3122
  %v3739 = vpack.c.b16 %v3127, %v3123
  %v3740 = vpack.c.b16 %v3128, %v3124
  %v3741 = vpack.c.b16 %v3129, %v3125
  %v3742 = vpack.c.b16 %v3134, %v3130
  %v3743 = vpack.c.b16 %v3135, %v3131
  %v3744 = vpack.c.b16 %v3136, %v3132
  %v3745 = vpack.c.b16 %v3137, %v3133
  %v3746 = vpack.c.b16 %v3142, %v3138
  %v3747 = vpack.c.b16 %v3143, %v3139
  %v3748 = vpack.c.b16 %v3144, %v3140
  %v3749 = vpack.c.b16 %v3145, %v3141
  %v3750 = vpack.c.b16 %v3150, %v3146
  %v3751 = vpack.c.b16 %v3151, %v3147
  %v3752 = vpack.c.b16 %v3152, %v3148
  %v3753 = vpack.c.b16 %v3153, %v3149
  %v3754 = vpack.c.b16 %v3158, %v3154
  %v3755 = vpack.c.b16 %v3159, %v3155
  %v3756 = vpack.c.b16 %v3160, %v3156
  %v3757 = vpack.c.b16 %v3161, %v3157
  %v3758 = vpack.c.b16 %v3166, %v3162
  %v3759 = vpack.c.b16 %v3167, %v3163
  %v3760 = vpack.c.b16 %v3168, %v3164
  %v3761 = vpack.c.b16 %v3169, %v3165
  %v3762 = vpack.c.b16 %v3174, %v3170
  %v3763 = vpack.c.b16 %v3175, %v3171
  %v3764 = vpack.c.b16 %v3176, %v3172
  %v3765 = vpack.c.b16 %v3177, %v3173
  %v3766 = vpack.c.b16 %v3182, %v3178
  %v3767 = vpack.c.b16 %v3183, %v3179
  %v3768 = vpack.c.b16 %v3184, %v3180
  %v3769 = vpack.c.b16 %v3185, %v3181
  %v3770 = vpack.c.b16 %v3190, %v3186
  %v3771 = vpack.c.b16 %v3191, %v3187
  %v3772 = vpack.c.b16 %v3192, %v3188
  %v3773 = vpack.c.b16 %v3193, %v3189
  %v3774 = vpack.c.b16 %v3198, %v3194
  %v3775 = vpack.c.b16 %v3199, %v3195
  %v3776 = vpack.c.b16 %v3200, %v3196
  %v3777 = vpack.c.b16 %v3201, %v3197
  %4354 = vmatprep.subr.bf16.mxu0 %v3203
  %4355 = vmatpush1.bf16.msra.mxu0 %v3202
  %4356 = vmatprep.subr.bf16.mxu0 %v3207
  %4357 = vmatpush1.bf16.msra.mxu0 %v3206
  %4358 = vmatprep.subr.bf16.mxu0 %v3211
  %4359 = vmatpush1.bf16.msra.mxu0 %v3210
  %4360 = vmatprep.subr.bf16.mxu0 %v3215
  %4361 = vmatpush1.bf16.msra.mxu0 %v3214
  %4362 = vmatprep.subr.bf16.mxu0 %v3219
  %4363 = vmatpush1.bf16.msra.mxu0 %v3218
  %4364 = vmatprep.subr.bf16.mxu0 %v3223
  %4365 = vmatpush1.bf16.msra.mxu0 %v3222
  %4366 = vmatprep.subr.bf16.mxu0 %v3227
  %4367 = vmatpush1.bf16.msra.mxu0 %v3226
  %4368 = vmatprep.subr.bf16.mxu0 %v3231
  %4369 = vmatpush1.bf16.msra.mxu0 %v3230
  %4370 = vmatprep.subr.bf16.mxu0 %v3235
  %4371 = vmatpush1.bf16.msra.mxu0 %v3234
  %4372 = vmatprep.subr.bf16.mxu0 %v3239
  %4373 = vmatpush1.bf16.msra.mxu0 %v3238
  %4374 = vmatprep.subr.bf16.mxu0 %v3243
  %4375 = vmatpush1.bf16.msra.mxu0 %v3242
  %4376 = vmatprep.subr.bf16.mxu0 %v3247
  %4377 = vmatpush1.bf16.msra.mxu0 %v3246
  %4378 = vmatprep.subr.bf16.mxu0 %v3251
  %4379 = vmatpush1.bf16.msra.mxu0 %v3250
  %4380 = vmatprep.subr.bf16.mxu0 %v3255
  %4381 = vmatpush1.bf16.msra.mxu0 %v3254
  %4382 = vmatprep.subr.bf16.mxu0 %v3259
  %4383 = vmatpush1.bf16.msra.mxu0 %v3258
  %4384 = vmatprep.subr.bf16.mxu0 %v3263
  %4385 = vmatpush1.bf16.msra.mxu0 %v3262
  %4386 = vmatprep.mubr.bf16.mxu0 %v1187
  %4387 = vmatmul.mubr.bf16.gmra.mrb[0].mxu0 %v1186
  %v4388 = vpop.f32.mrb[0].mxu0
  %v4389 = vadd.f32 %v741, %v4388
  %v4390 = vpop.f32.mrb[0].mxu0
  %v4391 = vadd.f32 %v745, %v4390
  %v4392 = vpop.f32.mrb[0].mxu0
  %v4393 = vadd.f32 %v741, %v4392
  %v4394 = vpop.f32.mrb[0].mxu0
  %v4395 = vadd.f32 %v745, %v4394
  %4396 = vmatprep.mubr.bf16.mxu0 %v1205
  %4397 = vmatmul.mubr.bf16.gmra.mrb[0].mxu0 %v1204
  %v4398 = vpop.f32.mrb[0].mxu0
  %v4399 = vadd.f32 %v741, %v4398
  %v4400 = vpop.f32.mrb[0].mxu0
  %v4401 = vadd.f32 %v745, %v4400
  %v4402 = vpop.f32.mrb[0].mxu0
  %v4403 = vadd.f32 %v741, %v4402
  %v4404 = vpop.f32.mrb[0].mxu0
  %v4405 = vadd.f32 %v745, %v4404
  %4406 = vmatprep.mubr.bf16.mxu0 %v1223
  %4407 = vmatmul.mubr.bf16.gmra.mrb[0].mxu0 %v1222
  %v4408 = vpop.f32.mrb[0].mxu0
  %v4409 = vadd.f32 %v741, %v4408
  %v4410 = vpop.f32.mrb[0].mxu0
  %v4411 = vadd.f32 %v745, %v4410
  %v4412 = vpop.f32.mrb[0].mxu0
  %v4413 = vadd.f32 %v741, %v4412
  %v4414 = vpop.f32.mrb[0].mxu0
  %v4415 = vadd.f32 %v745, %v4414
  %4416 = vmatprep.mubr.bf16.mxu0 %v1241
  %4417 = vmatmul.mubr.bf16.gmra.mrb[0].mxu0 %v1240
  %v4418 = vpop.f32.mrb[0].mxu0
  %v4419 = vadd.f32 %v741, %v4418
  %v4420 = vpop.f32.mrb[0].mxu0
  %v4421 = vadd.f32 %v745, %v4420
  %v4422 = vpop.f32.mrb[0].mxu0
  %v4423 = vadd.f32 %v741, %v4422
  %v4424 = vpop.f32.mrb[0].mxu0
  %v4425 = vadd.f32 %v745, %v4424
  %4426 = vmatprep.mubr.bf16.mxu0 %v1259
  %4427 = vmatmul.mubr.bf16.gmra.mrb[0].mxu0 %v1258
  %v4428 = vpop.f32.mrb[0].mxu0
  %v4429 = vadd.f32 %v741, %v4428
  %v4430 = vpop.f32.mrb[0].mxu0
  %v4431 = vadd.f32 %v745, %v4430
  %v4432 = vpop.f32.mrb[0].mxu0
  %v4433 = vadd.f32 %v741, %v4432
  %v4434 = vpop.f32.mrb[0].mxu0
  %v4435 = vadd.f32 %v745, %v4434
  %4436 = vmatprep.mubr.bf16.mxu0 %v1277
  %4437 = vmatmul.mubr.bf16.gmra.mrb[0].mxu0 %v1276
  %v4438 = vpop.f32.mrb[0].mxu0
  %v4439 = vadd.f32 %v741, %v4438
  %v4440 = vpop.f32.mrb[0].mxu0
  %v4441 = vadd.f32 %v745, %v4440
  %v4442 = vpop.f32.mrb[0].mxu0
  %v4443 = vadd.f32 %v741, %v4442
  %v4444 = vpop.f32.mrb[0].mxu0
  %v4445 = vadd.f32 %v745, %v4444
  %4446 = vmatprep.mubr.bf16.mxu0 %v1295
  %4447 = vmatmul.mubr.bf16.gmra.mrb[0].mxu0 %v1294
  %v4448 = vpop.f32.mrb[0].mxu0
  %v4449 = vadd.f32 %v741, %v4448
  %v4450 = vpop.f32.mrb[0].mxu0
  %v4451 = vadd.f32 %v745, %v4450
  %v4452 = vpop.f32.mrb[0].mxu0
  %v4453 = vadd.f32 %v741, %v4452
  %v4454 = vpop.f32.mrb[0].mxu0
  %v4455 = vadd.f32 %v745, %v4454
  %4456 = vmatprep.mubr.bf16.mxu0 %v1313
  %4457 = vmatmul.mubr.bf16.gmra.mrb[0].mxu0 %v1312
  %v4458 = vpop.f32.mrb[0].mxu0
  %v4459 = vadd.f32 %v741, %v4458
  %v4460 = vpop.f32.mrb[0].mxu0
  %v4461 = vadd.f32 %v745, %v4460
  %v4462 = vpop.f32.mrb[0].mxu0
  %v4463 = vadd.f32 %v741, %v4462
  %v4464 = vpop.f32.mrb[0].mxu0
  %v4465 = vadd.f32 %v745, %v4464
  %4466 = vdwg.mxu0
  %4467 = vmatprep.subr.bf16.mxu0 %v3267
  %4468 = vmatpush1.bf16.msra.mxu0 %v3266
  %4469 = vmatprep.subr.bf16.mxu0 %v3271
  %4470 = vmatpush1.bf16.msra.mxu0 %v3270
  %4471 = vmatprep.subr.bf16.mxu0 %v3275
  %4472 = vmatpush1.bf16.msra.mxu0 %v3274
  %4473 = vmatprep.subr.bf16.mxu0 %v3279
  %4474 = vmatpush1.bf16.msra.mxu0 %v3278
  %4475 = vmatprep.subr.bf16.mxu0 %v3283
  %4476 = vmatpush1.bf16.msra.mxu0 %v3282
  %4477 = vmatprep.subr.bf16.mxu0 %v3287
  %4478 = vmatpush1.bf16.msra.mxu0 %v3286
  %4479 = vmatprep.subr.bf16.mxu0 %v3291
  %4480 = vmatpush1.bf16.msra.mxu0 %v3290
  %4481 = vmatprep.subr.bf16.mxu0 %v3295
  %4482 = vmatpush1.bf16.msra.mxu0 %v3294
  %4483 = vmatprep.subr.bf16.mxu0 %v3299
  %4484 = vmatpush1.bf16.msra.mxu0 %v3298
  %4485 = vmatprep.subr.bf16.mxu0 %v3303
  %4486 = vmatpush1.bf16.msra.mxu0 %v3302
  %4487 = vmatprep.subr.bf16.mxu0 %v3307
  %4488 = vmatpush1.bf16.msra.mxu0 %v3306
  %4489 = vmatprep.subr.bf16.mxu0 %v3311
  %4490 = vmatpush1.bf16.msra.mxu0 %v3310
  %4491 = vmatprep.subr.bf16.mxu0 %v3315
  %4492 = vmatpush1.bf16.msra.mxu0 %v3314
  %4493 = vmatprep.subr.bf16.mxu0 %v3319
  %4494 = vmatpush1.bf16.msra.mxu0 %v3318
  %4495 = vmatprep.subr.bf16.mxu0 %v3323
  %4496 = vmatpush1.bf16.msra.mxu0 %v3322
  %4497 = vmatprep.subr.bf16.mxu0 %v3327
  %4498 = vmatpush1.bf16.msra.mxu0 %v3326
  %4499 = vmatprep.mubr.bf16.mxu0 %v1189
  %4500 = vmatmul.mubr.bf16.gmra.mrb[0].mxu0 %v1188
  %v4501 = vpop.f32.mrb[0].mxu0
  %v4502 = vadd.f32 %v4389, %v4501
  %v4503 = vpop.f32.mrb[0].mxu0
  %v4504 = vadd.f32 %v4391, %v4503
  %v4505 = vpop.f32.mrb[0].mxu0
  %v4506 = vadd.f32 %v4393, %v4505
  %v4507 = vpop.f32.mrb[0].mxu0
  %v4508 = vadd.f32 %v4395, %v4507
  %4509 = vmatprep.mubr.bf16.mxu0 %v1207
  %4510 = vmatmul.mubr.bf16.gmra.mrb[0].mxu0 %v1206
  %v4511 = vpop.f32.mrb[0].mxu0
  %v4512 = vadd.f32 %v4399, %v4511
  %v4513 = vpop.f32.mrb[0].mxu0
  %v4514 = vadd.f32 %v4401, %v4513
  %v4515 = vpop.f32.mrb[0].mxu0
  %v4516 = vadd.f32 %v4403, %v4515
  %v4517 = vpop.f32.mrb[0].mxu0
  %v4518 = vadd.f32 %v4405, %v4517
  %4519 = vmatprep.mubr.bf16.mxu0 %v1225
  %4520 = vmatmul.mubr.bf16.gmra.mrb[0].mxu0 %v1224
  %v4521 = vpop.f32.mrb[0].mxu0
  %v4522 = vadd.f32 %v4409, %v4521
  %v4523 = vpop.f32.mrb[0].mxu0
  %v4524 = vadd.f32 %v4411, %v4523
  %v4525 = vpop.f32.mrb[0].mxu0
  %v4526 = vadd.f32 %v4413, %v4525
  %v4527 = vpop.f32.mrb[0].mxu0
  %v4528 = vadd.f32 %v4415, %v4527
  %4529 = vmatprep.mubr.bf16.mxu0 %v1243
  %4530 = vmatmul.mubr.bf16.gmra.mrb[0].mxu0 %v1242
  %v4531 = vpop.f32.mrb[0].mxu0
  %v4532 = vadd.f32 %v4419, %v4531
  %v4533 = vpop.f32.mrb[0].mxu0
  %v4534 = vadd.f32 %v4421, %v4533
  %v4535 = vpop.f32.mrb[0].mxu0
  %v4536 = vadd.f32 %v4423, %v4535
  %v4537 = vpop.f32.mrb[0].mxu0
  %v4538 = vadd.f32 %v4425, %v4537
  %4539 = vmatprep.mubr.bf16.mxu0 %v1261
  %4540 = vmatmul.mubr.bf16.gmra.mrb[0].mxu0 %v1260
  %v4541 = vpop.f32.mrb[0].mxu0
  %v4542 = vadd.f32 %v4429, %v4541
  %v4543 = vpop.f32.mrb[0].mxu0
  %v4544 = vadd.f32 %v4431, %v4543
  %v4545 = vpop.f32.mrb[0].mxu0
  %v4546 = vadd.f32 %v4433, %v4545
  %v4547 = vpop.f32.mrb[0].mxu0
  %v4548 = vadd.f32 %v4435, %v4547
  %4549 = vmatprep.mubr.bf16.mxu0 %v1279
  %4550 = vmatmul.mubr.bf16.gmra.mrb[0].mxu0 %v1278
  %v4551 = vpop.f32.mrb[0].mxu0
  %v4552 = vadd.f32 %v4439, %v4551
  %v4553 = vpop.f32.mrb[0].mxu0
  %v4554 = vadd.f32 %v4441, %v4553
  %v4555 = vpop.f32.mrb[0].mxu0
  %v4556 = vadd.f32 %v4443, %v4555
  %v4557 = vpop.f32.mrb[0].mxu0
  %v4558 = vadd.f32 %v4445, %v4557
  %4559 = vmatprep.mubr.bf16.mxu0 %v1297
  %4560 = vmatmul.mubr.bf16.gmra.mrb[0].mxu0 %v1296
  %v4561 = vpop.f32.mrb[0].mxu0
  %v4562 = vadd.f32 %v4449, %v4561
  %v4563 = vpop.f32.mrb[0].mxu0
  %v4564 = vadd.f32 %v4451, %v4563
  %v4565 = vpop.f32.mrb[0].mxu0
  %v4566 = vadd.f32 %v4453, %v4565
  %v4567 = vpop.f32.mrb[0].mxu0
  %v4568 = vadd.f32 %v4455, %v4567
  %4569 = vmatprep.mubr.bf16.mxu0 %v1315
  %4570 = vmatmul.mubr.bf16.gmra.mrb[0].mxu0 %v1314
  %v4571 = vpop.f32.mrb[0].mxu0
  %v4572 = vadd.f32 %v4459, %v4571
  %v4573 = vpop.f32.mrb[0].mxu0
  %v4574 = vadd.f32 %v4461, %v4573
  %v4575 = vpop.f32.mrb[0].mxu0
  %v4576 = vadd.f32 %v4463, %v4575
  %v4577 = vpop.f32.mrb[0].mxu0
  %v4578 = vadd.f32 %v4465, %v4577
  %4579 = vdwg.mxu0
  %4580 = vmatprep.subr.bf16.mxu0 %v3331
  %4581 = vmatpush1.bf16.msra.mxu0 %v3330
  %4582 = vmatprep.subr.bf16.mxu0 %v3335
  %4583 = vmatpush1.bf16.msra.mxu0 %v3334
  %4584 = vmatprep.subr.bf16.mxu0 %v3339
  %4585 = vmatpush1.bf16.msra.mxu0 %v3338
  %4586 = vmatprep.subr.bf16.mxu0 %v3343
  %4587 = vmatpush1.bf16.msra.mxu0 %v3342
  %4588 = vmatprep.subr.bf16.mxu0 %v3347
  %4589 = vmatpush1.bf16.msra.mxu0 %v3346
  %4590 = vmatprep.subr.bf16.mxu0 %v3351
  %4591 = vmatpush1.bf16.msra.mxu0 %v3350
  %4592 = vmatprep.subr.bf16.mxu0 %v3355
  %4593 = vmatpush1.bf16.msra.mxu0 %v3354
  %4594 = vmatprep.subr.bf16.mxu0 %v3359
  %4595 = vmatpush1.bf16.msra.mxu0 %v3358
  %4596 = vmatprep.subr.bf16.mxu0 %v3363
  %4597 = vmatpush1.bf16.msra.mxu0 %v3362
  %4598 = vmatprep.subr.bf16.mxu0 %v3367
  %4599 = vmatpush1.bf16.msra.mxu0 %v3366
  %4600 = vmatprep.subr.bf16.mxu0 %v3371
  %4601 = vmatpush1.bf16.msra.mxu0 %v3370
  %4602 = vmatprep.subr.bf16.mxu0 %v3375
  %4603 = vmatpush1.bf16.msra.mxu0 %v3374
  %4604 = vmatprep.subr.bf16.mxu0 %v3379
  %4605 = vmatpush1.bf16.msra.mxu0 %v3378
  %4606 = vmatprep.subr.bf16.mxu0 %v3383
  %4607 = vmatpush1.bf16.msra.mxu0 %v3382
  %4608 = vmatprep.subr.bf16.mxu0 %v3387
  %4609 = vmatpush1.bf16.msra.mxu0 %v3386
  %4610 = vmatprep.subr.bf16.mxu0 %v3391
  %4611 = vmatpush1.bf16.msra.mxu0 %v3390
  %4612 = vmatprep.mubr.bf16.mxu0 %v1191
  %4613 = vmatmul.mubr.bf16.gmra.mrb[0].mxu0 %v1190
  %v4614 = vpop.f32.mrb[0].mxu0
  %v4615 = vadd.f32 %v4502, %v4614
  %v4616 = vpop.f32.mrb[0].mxu0
  %v4617 = vadd.f32 %v4504, %v4616
  %v4618 = vpop.f32.mrb[0].mxu0
  %v4619 = vadd.f32 %v4506, %v4618
  %v4620 = vpop.f32.mrb[0].mxu0
  %v4621 = vadd.f32 %v4508, %v4620
  %4622 = vmatprep.mubr.bf16.mxu0 %v1209
  %4623 = vmatmul.mubr.bf16.gmra.mrb[0].mxu0 %v1208
  %v4624 = vpop.f32.mrb[0].mxu0
  %v4625 = vadd.f32 %v4512, %v4624
  %v4626 = vpop.f32.mrb[0].mxu0
  %v4627 = vadd.f32 %v4514, %v4626
  %v4628 = vpop.f32.mrb[0].mxu0
  %v4629 = vadd.f32 %v4516, %v4628
  %v4630 = vpop.f32.mrb[0].mxu0
  %v4631 = vadd.f32 %v4518, %v4630
  %4632 = vmatprep.mubr.bf16.mxu0 %v1227
  %4633 = vmatmul.mubr.bf16.gmra.mrb[0].mxu0 %v1226
  %v4634 = vpop.f32.mrb[0].mxu0
  %v4635 = vadd.f32 %v4522, %v4634
  %v4636 = vpop.f32.mrb[0].mxu0
  %v4637 = vadd.f32 %v4524, %v4636
  %v4638 = vpop.f32.mrb[0].mxu0
  %v4639 = vadd.f32 %v4526, %v4638
  %v4640 = vpop.f32.mrb[0].mxu0
  %v4641 = vadd.f32 %v4528, %v4640
  %4642 = vmatprep.mubr.bf16.mxu0 %v1245
  %4643 = vmatmul.mubr.bf16.gmra.mrb[0].mxu0 %v1244
  %v4644 = vpop.f32.mrb[0].mxu0
  %v4645 = vadd.f32 %v4532, %v4644
  %v4646 = vpop.f32.mrb[0].mxu0
  %v4647 = vadd.f32 %v4534, %v4646
  %v4648 = vpop.f32.mrb[0].mxu0
  %v4649 = vadd.f32 %v4536, %v4648
  %v4650 = vpop.f32.mrb[0].mxu0
  %v4651 = vadd.f32 %v4538, %v4650
  %4652 = vmatprep.mubr.bf16.mxu0 %v1263
  %4653 = vmatmul.mubr.bf16.gmra.mrb[0].mxu0 %v1262
  %v4654 = vpop.f32.mrb[0].mxu0
  %v4655 = vadd.f32 %v4542, %v4654
  %v4656 = vpop.f32.mrb[0].mxu0
  %v4657 = vadd.f32 %v4544, %v4656
  %v4658 = vpop.f32.mrb[0].mxu0
  %v4659 = vadd.f32 %v4546, %v4658
  %v4660 = vpop.f32.mrb[0].mxu0
  %v4661 = vadd.f32 %v4548, %v4660
  %4662 = vmatprep.mubr.bf16.mxu0 %v1281
  %4663 = vmatmul.mubr.bf16.gmra.mrb[0].mxu0 %v1280
  %v4664 = vpop.f32.mrb[0].mxu0
  %v4665 = vadd.f32 %v4552, %v4664
  %v4666 = vpop.f32.mrb[0].mxu0
  %v4667 = vadd.f32 %v4554, %v4666
  %v4668 = vpop.f32.mrb[0].mxu0
  %v4669 = vadd.f32 %v4556, %v4668
  %v4670 = vpop.f32.mrb[0].mxu0
  %v4671 = vadd.f32 %v4558, %v4670
  %4672 = vmatprep.mubr.bf16.mxu0 %v1299
  %4673 = vmatmul.mubr.bf16.gmra.mrb[0].mxu0 %v1298
  %v4674 = vpop.f32.mrb[0].mxu0
  %v4675 = vadd.f32 %v4562, %v4674
  %v4676 = vpop.f32.mrb[0].mxu0
  %v4677 = vadd.f32 %v4564, %v4676
  %v4678 = vpop.f32.mrb[0].mxu0
  %v4679 = vadd.f32 %v4566, %v4678
  %v4680 = vpop.f32.mrb[0].mxu0
  %v4681 = vadd.f32 %v4568, %v4680
  %4682 = vmatprep.mubr.bf16.mxu0 %v1317
  %4683 = vmatmul.mubr.bf16.gmra.mrb[0].mxu0 %v1316
  %v4684 = vpop.f32.mrb[0].mxu0
  %v4685 = vadd.f32 %v4572, %v4684
  %v4686 = vpop.f32.mrb[0].mxu0
  %v4687 = vadd.f32 %v4574, %v4686
  %v4688 = vpop.f32.mrb[0].mxu0
  %v4689 = vadd.f32 %v4576, %v4688
  %v4690 = vpop.f32.mrb[0].mxu0
  %v4691 = vadd.f32 %v4578, %v4690
  %4692 = vdwg.mxu0
  %4693 = vmatprep.subr.bf16.mxu0 %v3395
  %4694 = vmatpush1.bf16.msra.mxu0 %v3394
  %4695 = vmatprep.subr.bf16.mxu0 %v3399
  %4696 = vmatpush1.bf16.msra.mxu0 %v3398
  %4697 = vmatprep.subr.bf16.mxu0 %v3403
  %4698 = vmatpush1.bf16.msra.mxu0 %v3402
  %4699 = vmatprep.subr.bf16.mxu0 %v3407
  %4700 = vmatpush1.bf16.msra.mxu0 %v3406
  %4701 = vmatprep.subr.bf16.mxu0 %v3411
  %4702 = vmatpush1.bf16.msra.mxu0 %v3410
  %4703 = vmatprep.subr.bf16.mxu0 %v3415
  %4704 = vmatpush1.bf16.msra.mxu0 %v3414
  %4705 = vmatprep.subr.bf16.mxu0 %v3419
  %4706 = vmatpush1.bf16.msra.mxu0 %v3418
  %4707 = vmatprep.subr.bf16.mxu0 %v3423
  %4708 = vmatpush1.bf16.msra.mxu0 %v3422
  %4709 = vmatprep.subr.bf16.mxu0 %v3427
  %4710 = vmatpush1.bf16.msra.mxu0 %v3426
  %4711 = vmatprep.subr.bf16.mxu0 %v3431
  %4712 = vmatpush1.bf16.msra.mxu0 %v3430
  %4713 = vmatprep.subr.bf16.mxu0 %v3435
  %4714 = vmatpush1.bf16.msra.mxu0 %v3434
  %4715 = vmatprep.subr.bf16.mxu0 %v3439
  %4716 = vmatpush1.bf16.msra.mxu0 %v3438
  %4717 = vmatprep.subr.bf16.mxu0 %v3443
  %4718 = vmatpush1.bf16.msra.mxu0 %v3442
  %4719 = vmatprep.subr.bf16.mxu0 %v3447
  %4720 = vmatpush1.bf16.msra.mxu0 %v3446
  %4721 = vmatprep.subr.bf16.mxu0 %v3451
  %4722 = vmatpush1.bf16.msra.mxu0 %v3450
  %4723 = vmatprep.subr.bf16.mxu0 %v3455
  %4724 = vmatpush1.bf16.msra.mxu0 %v3454
  %4725 = vmatprep.mubr.bf16.mxu0 %v1193
  %4726 = vmatmul.mubr.bf16.gmra.mrb[0].mxu0 %v1192
  %v4727 = vpop.f32.mrb[0].mxu0
  %v4728 = vadd.f32 %v4615, %v4727
  %v4729 = vpop.f32.mrb[0].mxu0
  %v4730 = vadd.f32 %v4617, %v4729
  %v4731 = vpop.f32.mrb[0].mxu0
  %v4732 = vadd.f32 %v4619, %v4731
  %v4733 = vpop.f32.mrb[0].mxu0
  %v4734 = vadd.f32 %v4621, %v4733
  %4735 = vmatprep.mubr.bf16.mxu0 %v1211
  %4736 = vmatmul.mubr.bf16.gmra.mrb[0].mxu0 %v1210
  %v4737 = vpop.f32.mrb[0].mxu0
  %v4738 = vadd.f32 %v4625, %v4737
  %v4739 = vpop.f32.mrb[0].mxu0
  %v4740 = vadd.f32 %v4627, %v4739
  %v4741 = vpop.f32.mrb[0].mxu0
  %v4742 = vadd.f32 %v4629, %v4741
  %v4743 = vpop.f32.mrb[0].mxu0
  %v4744 = vadd.f32 %v4631, %v4743
  %4745 = vmatprep.mubr.bf16.mxu0 %v1229
  %4746 = vmatmul.mubr.bf16.gmra.mrb[0].mxu0 %v1228
  %v4747 = vpop.f32.mrb[0].mxu0
  %v4748 = vadd.f32 %v4635, %v4747
  %v4749 = vpop.f32.mrb[0].mxu0
  %v4750 = vadd.f32 %v4637, %v4749
  %v4751 = vpop.f32.mrb[0].mxu0
  %v4752 = vadd.f32 %v4639, %v4751
  %v4753 = vpop.f32.mrb[0].mxu0
  %v4754 = vadd.f32 %v4641, %v4753
  %4755 = vmatprep.mubr.bf16.mxu0 %v1247
  %4756 = vmatmul.mubr.bf16.gmra.mrb[0].mxu0 %v1246
  %v4757 = vpop.f32.mrb[0].mxu0
  %v4758 = vadd.f32 %v4645, %v4757
  %v4759 = vpop.f32.mrb[0].mxu0
  %v4760 = vadd.f32 %v4647, %v4759
  %v4761 = vpop.f32.mrb[0].mxu0
  %v4762 = vadd.f32 %v4649, %v4761
  %v4763 = vpop.f32.mrb[0].mxu0
  %v4764 = vadd.f32 %v4651, %v4763
  %4765 = vmatprep.mubr.bf16.mxu0 %v1265
  %4766 = vmatmul.mubr.bf16.gmra.mrb[0].mxu0 %v1264
  %v4767 = vpop.f32.mrb[0].mxu0
  %v4768 = vadd.f32 %v4655, %v4767
  %v4769 = vpop.f32.mrb[0].mxu0
  %v4770 = vadd.f32 %v4657, %v4769
  %v4771 = vpop.f32.mrb[0].mxu0
  %v4772 = vadd.f32 %v4659, %v4771
  %v4773 = vpop.f32.mrb[0].mxu0
  %v4774 = vadd.f32 %v4661, %v4773
  %4775 = vmatprep.mubr.bf16.mxu0 %v1283
  %4776 = vmatmul.mubr.bf16.gmra.mrb[0].mxu0 %v1282
  %v4777 = vpop.f32.mrb[0].mxu0
  %v4778 = vadd.f32 %v4665, %v4777
  %v4779 = vpop.f32.mrb[0].mxu0
  %v4780 = vadd.f32 %v4667, %v4779
  %v4781 = vpop.f32.mrb[0].mxu0
  %v4782 = vadd.f32 %v4669, %v4781
  %v4783 = vpop.f32.mrb[0].mxu0
  %v4784 = vadd.f32 %v4671, %v4783
  %4785 = vmatprep.mubr.bf16.mxu0 %v1301
  %4786 = vmatmul.mubr.bf16.gmra.mrb[0].mxu0 %v1300
  %v4787 = vpop.f32.mrb[0].mxu0
  %v4788 = vadd.f32 %v4675, %v4787
  %v4789 = vpop.f32.mrb[0].mxu0
  %v4790 = vadd.f32 %v4677, %v4789
  %v4791 = vpop.f32.mrb[0].mxu0
  %v4792 = vadd.f32 %v4679, %v4791
  %v4793 = vpop.f32.mrb[0].mxu0
  %v4794 = vadd.f32 %v4681, %v4793
  %4795 = vmatprep.mubr.bf16.mxu0 %v1319
  %4796 = vmatmul.mubr.bf16.gmra.mrb[0].mxu0 %v1318
  %v4797 = vpop.f32.mrb[0].mxu0
  %v4798 = vadd.f32 %v4685, %v4797
  %v4799 = vpop.f32.mrb[0].mxu0
  %v4800 = vadd.f32 %v4687, %v4799
  %v4801 = vpop.f32.mrb[0].mxu0
  %v4802 = vadd.f32 %v4689, %v4801
  %v4803 = vpop.f32.mrb[0].mxu0
  %v4804 = vadd.f32 %v4691, %v4803
  %4805 = vdwg.mxu0
  %4806 = vmatprep.subr.bf16.mxu0 %v3459
  %4807 = vmatpush1.bf16.msra.mxu0 %v3458
  %4808 = vmatprep.subr.bf16.mxu0 %v3463
  %4809 = vmatpush1.bf16.msra.mxu0 %v3462
  %4810 = vmatprep.subr.bf16.mxu0 %v3467
  %4811 = vmatpush1.bf16.msra.mxu0 %v3466
  %4812 = vmatprep.subr.bf16.mxu0 %v3471
  %4813 = vmatpush1.bf16.msra.mxu0 %v3470
  %4814 = vmatprep.subr.bf16.mxu0 %v3475
  %4815 = vmatpush1.bf16.msra.mxu0 %v3474
  %4816 = vmatprep.subr.bf16.mxu0 %v3479
  %4817 = vmatpush1.bf16.msra.mxu0 %v3478
  %4818 = vmatprep.subr.bf16.mxu0 %v3483
  %4819 = vmatpush1.bf16.msra.mxu0 %v3482
  %4820 = vmatprep.subr.bf16.mxu0 %v3487
  %4821 = vmatpush1.bf16.msra.mxu0 %v3486
  %4822 = vmatprep.subr.bf16.mxu0 %v3491
  %4823 = vmatpush1.bf16.msra.mxu0 %v3490
  %4824 = vmatprep.subr.bf16.mxu0 %v3495
  %4825 = vmatpush1.bf16.msra.mxu0 %v3494
  %4826 = vmatprep.subr.bf16.mxu0 %v3499
  %4827 = vmatpush1.bf16.msra.mxu0 %v3498
  %4828 = vmatprep.subr.bf16.mxu0 %v3503
  %4829 = vmatpush1.bf16.msra.mxu0 %v3502
  %4830 = vmatprep.subr.bf16.mxu0 %v3507
  %4831 = vmatpush1.bf16.msra.mxu0 %v3506
  %4832 = vmatprep.subr.bf16.mxu0 %v3511
  %4833 = vmatpush1.bf16.msra.mxu0 %v3510
  %4834 = vmatprep.subr.bf16.mxu0 %v3515
  %4835 = vmatpush1.bf16.msra.mxu0 %v3514
  %4836 = vmatprep.subr.bf16.mxu0 %v3519
  %4837 = vmatpush1.bf16.msra.mxu0 %v3518
  %4838 = vmatprep.mubr.bf16.mxu0 %v1195
  %4839 = vmatmul.mubr.bf16.gmra.mrb[0].mxu0 %v1194
  %v4840 = vpop.f32.mrb[0].mxu0
  %v4841 = vadd.f32 %v4728, %v4840
  %v4842 = vpop.f32.mrb[0].mxu0
  %v4843 = vadd.f32 %v4730, %v4842
  %v4844 = vpop.f32.mrb[0].mxu0
  %v4845 = vadd.f32 %v4732, %v4844
  %v4846 = vpop.f32.mrb[0].mxu0
  %v4847 = vadd.f32 %v4734, %v4846
  %4848 = vmatprep.mubr.bf16.mxu0 %v1213
  %4849 = vmatmul.mubr.bf16.gmra.mrb[0].mxu0 %v1212
  %v4850 = vpop.f32.mrb[0].mxu0
  %v4851 = vadd.f32 %v4738, %v4850
  %v4852 = vpop.f32.mrb[0].mxu0
  %v4853 = vadd.f32 %v4740, %v4852
  %v4854 = vpop.f32.mrb[0].mxu0
  %v4855 = vadd.f32 %v4742, %v4854
  %v4856 = vpop.f32.mrb[0].mxu0
  %v4857 = vadd.f32 %v4744, %v4856
  %4858 = vmatprep.mubr.bf16.mxu0 %v1231
  %4859 = vmatmul.mubr.bf16.gmra.mrb[0].mxu0 %v1230
  %v4860 = vpop.f32.mrb[0].mxu0
  %v4861 = vadd.f32 %v4748, %v4860
  %v4862 = vpop.f32.mrb[0].mxu0
  %v4863 = vadd.f32 %v4750, %v4862
  %v4864 = vpop.f32.mrb[0].mxu0
  %v4865 = vadd.f32 %v4752, %v4864
  %v4866 = vpop.f32.mrb[0].mxu0
  %v4867 = vadd.f32 %v4754, %v4866
  %4868 = vmatprep.mubr.bf16.mxu0 %v1249
  %4869 = vmatmul.mubr.bf16.gmra.mrb[0].mxu0 %v1248
  %v4870 = vpop.f32.mrb[0].mxu0
  %v4871 = vadd.f32 %v4758, %v4870
  %v4872 = vpop.f32.mrb[0].mxu0
  %v4873 = vadd.f32 %v4760, %v4872
  %v4874 = vpop.f32.mrb[0].mxu0
  %v4875 = vadd.f32 %v4762, %v4874
  %v4876 = vpop.f32.mrb[0].mxu0
  %v4877 = vadd.f32 %v4764, %v4876
  %4878 = vmatprep.mubr.bf16.mxu0 %v1267
  %4879 = vmatmul.mubr.bf16.gmra.mrb[0].mxu0 %v1266
  %v4880 = vpop.f32.mrb[0].mxu0
  %v4881 = vadd.f32 %v4768, %v4880
  %v4882 = vpop.f32.mrb[0].mxu0
  %v4883 = vadd.f32 %v4770, %v4882
  %v4884 = vpop.f32.mrb[0].mxu0
  %v4885 = vadd.f32 %v4772, %v4884
  %v4886 = vpop.f32.mrb[0].mxu0
  %v4887 = vadd.f32 %v4774, %v4886
  %4888 = vmatprep.mubr.bf16.mxu0 %v1285
  %4889 = vmatmul.mubr.bf16.gmra.mrb[0].mxu0 %v1284
  %v4890 = vpop.f32.mrb[0].mxu0
  %v4891 = vadd.f32 %v4778, %v4890
  %v4892 = vpop.f32.mrb[0].mxu0
  %v4893 = vadd.f32 %v4780, %v4892
  %v4894 = vpop.f32.mrb[0].mxu0
  %v4895 = vadd.f32 %v4782, %v4894
  %v4896 = vpop.f32.mrb[0].mxu0
  %v4897 = vadd.f32 %v4784, %v4896
  %4898 = vmatprep.mubr.bf16.mxu0 %v1303
  %4899 = vmatmul.mubr.bf16.gmra.mrb[0].mxu0 %v1302
  %v4900 = vpop.f32.mrb[0].mxu0
  %v4901 = vadd.f32 %v4788, %v4900
  %v4902 = vpop.f32.mrb[0].mxu0
  %v4903 = vadd.f32 %v4790, %v4902
  %v4904 = vpop.f32.mrb[0].mxu0
  %v4905 = vadd.f32 %v4792, %v4904
  %v4906 = vpop.f32.mrb[0].mxu0
  %v4907 = vadd.f32 %v4794, %v4906
  %4908 = vmatprep.mubr.bf16.mxu0 %v1321
  %4909 = vmatmul.mubr.bf16.gmra.mrb[0].mxu0 %v1320
  %v4910 = vpop.f32.mrb[0].mxu0
  %v4911 = vadd.f32 %v4798, %v4910
  %v4912 = vpop.f32.mrb[0].mxu0
  %v4913 = vadd.f32 %v4800, %v4912
  %v4914 = vpop.f32.mrb[0].mxu0
  %v4915 = vadd.f32 %v4802, %v4914
  %v4916 = vpop.f32.mrb[0].mxu0
  %v4917 = vadd.f32 %v4804, %v4916
  %4918 = vdwg.mxu0
  %4919 = vmatprep.subr.bf16.mxu0 %v3523
  %4920 = vmatpush1.bf16.msra.mxu0 %v3522
  %4921 = vmatprep.subr.bf16.mxu0 %v3527
  %4922 = vmatpush1.bf16.msra.mxu0 %v3526
  %4923 = vmatprep.subr.bf16.mxu0 %v3531
  %4924 = vmatpush1.bf16.msra.mxu0 %v3530
  %4925 = vmatprep.subr.bf16.mxu0 %v3535
  %4926 = vmatpush1.bf16.msra.mxu0 %v3534
  %4927 = vmatprep.subr.bf16.mxu0 %v3539
  %4928 = vmatpush1.bf16.msra.mxu0 %v3538
  %4929 = vmatprep.subr.bf16.mxu0 %v3543
  %4930 = vmatpush1.bf16.msra.mxu0 %v3542
  %4931 = vmatprep.subr.bf16.mxu0 %v3547
  %4932 = vmatpush1.bf16.msra.mxu0 %v3546
  %4933 = vmatprep.subr.bf16.mxu0 %v3551
  %4934 = vmatpush1.bf16.msra.mxu0 %v3550
  %4935 = vmatprep.subr.bf16.mxu0 %v3555
  %4936 = vmatpush1.bf16.msra.mxu0 %v3554
  %4937 = vmatprep.subr.bf16.mxu0 %v3559
  %4938 = vmatpush1.bf16.msra.mxu0 %v3558
  %4939 = vmatprep.subr.bf16.mxu0 %v3563
  %4940 = vmatpush1.bf16.msra.mxu0 %v3562
  %4941 = vmatprep.subr.bf16.mxu0 %v3567
  %4942 = vmatpush1.bf16.msra.mxu0 %v3566
  %4943 = vmatprep.subr.bf16.mxu0 %v3571
  %4944 = vmatpush1.bf16.msra.mxu0 %v3570
  %4945 = vmatprep.subr.bf16.mxu0 %v3575
  %4946 = vmatpush1.bf16.msra.mxu0 %v3574
  %4947 = vmatprep.subr.bf16.mxu0 %v3579
  %4948 = vmatpush1.bf16.msra.mxu0 %v3578
  %4949 = vmatprep.subr.bf16.mxu0 %v3583
  %4950 = vmatpush1.bf16.msra.mxu0 %v3582
  %4951 = vmatprep.mubr.bf16.mxu0 %v1197
  %4952 = vmatmul.mubr.bf16.gmra.mrb[0].mxu0 %v1196
  %v4953 = vpop.f32.mrb[0].mxu0
  %v4954 = vadd.f32 %v4841, %v4953
  %v4955 = vpop.f32.mrb[0].mxu0
  %v4956 = vadd.f32 %v4843, %v4955
  %v4957 = vpop.f32.mrb[0].mxu0
  %v4958 = vadd.f32 %v4845, %v4957
  %v4959 = vpop.f32.mrb[0].mxu0
  %v4960 = vadd.f32 %v4847, %v4959
  %4961 = vmatprep.mubr.bf16.mxu0 %v1215
  %4962 = vmatmul.mubr.bf16.gmra.mrb[0].mxu0 %v1214
  %v4963 = vpop.f32.mrb[0].mxu0
  %v4964 = vadd.f32 %v4851, %v4963
  %v4965 = vpop.f32.mrb[0].mxu0
  %v4966 = vadd.f32 %v4853, %v4965
  %v4967 = vpop.f32.mrb[0].mxu0
  %v4968 = vadd.f32 %v4855, %v4967
  %v4969 = vpop.f32.mrb[0].mxu0
  %v4970 = vadd.f32 %v4857, %v4969
  %4971 = vmatprep.mubr.bf16.mxu0 %v1233
  %4972 = vmatmul.mubr.bf16.gmra.mrb[0].mxu0 %v1232
  %v4973 = vpop.f32.mrb[0].mxu0
  %v4974 = vadd.f32 %v4861, %v4973
  %v4975 = vpop.f32.mrb[0].mxu0
  %v4976 = vadd.f32 %v4863, %v4975
  %v4977 = vpop.f32.mrb[0].mxu0
  %v4978 = vadd.f32 %v4865, %v4977
  %v4979 = vpop.f32.mrb[0].mxu0
  %v4980 = vadd.f32 %v4867, %v4979
  %4981 = vmatprep.mubr.bf16.mxu0 %v1251
  %4982 = vmatmul.mubr.bf16.gmra.mrb[0].mxu0 %v1250
  %v4983 = vpop.f32.mrb[0].mxu0
  %v4984 = vadd.f32 %v4871, %v4983
  %v4985 = vpop.f32.mrb[0].mxu0
  %v4986 = vadd.f32 %v4873, %v4985
  %v4987 = vpop.f32.mrb[0].mxu0
  %v4988 = vadd.f32 %v4875, %v4987
  %v4989 = vpop.f32.mrb[0].mxu0
  %v4990 = vadd.f32 %v4877, %v4989
  %4991 = vmatprep.mubr.bf16.mxu0 %v1269
  %4992 = vmatmul.mubr.bf16.gmra.mrb[0].mxu0 %v1268
  %v4993 = vpop.f32.mrb[0].mxu0
  %v4994 = vadd.f32 %v4881, %v4993
  %v4995 = vpop.f32.mrb[0].mxu0
  %v4996 = vadd.f32 %v4883, %v4995
  %v4997 = vpop.f32.mrb[0].mxu0
  %v4998 = vadd.f32 %v4885, %v4997
  %v4999 = vpop.f32.mrb[0].mxu0
  %v5000 = vadd.f32 %v4887, %v4999
  %5001 = vmatprep.mubr.bf16.mxu0 %v1287
  %5002 = vmatmul.mubr.bf16.gmra.mrb[0].mxu0 %v1286
  %v5003 = vpop.f32.mrb[0].mxu0
  %v5004 = vadd.f32 %v4891, %v5003
  %v5005 = vpop.f32.mrb[0].mxu0
  %v5006 = vadd.f32 %v4893, %v5005
  %v5007 = vpop.f32.mrb[0].mxu0
  %v5008 = vadd.f32 %v4895, %v5007
  %v5009 = vpop.f32.mrb[0].mxu0
  %v5010 = vadd.f32 %v4897, %v5009
  %5011 = vmatprep.mubr.bf16.mxu0 %v1305
  %5012 = vmatmul.mubr.bf16.gmra.mrb[0].mxu0 %v1304
  %v5013 = vpop.f32.mrb[0].mxu0
  %v5014 = vadd.f32 %v4901, %v5013
  %v5015 = vpop.f32.mrb[0].mxu0
  %v5016 = vadd.f32 %v4903, %v5015
  %v5017 = vpop.f32.mrb[0].mxu0
  %v5018 = vadd.f32 %v4905, %v5017
  %v5019 = vpop.f32.mrb[0].mxu0
  %v5020 = vadd.f32 %v4907, %v5019
  %5021 = vmatprep.mubr.bf16.mxu0 %v1323
  %5022 = vmatmul.mubr.bf16.gmra.mrb[0].mxu0 %v1322
  %v5023 = vpop.f32.mrb[0].mxu0
  %v5024 = vadd.f32 %v4911, %v5023
  %v5025 = vpop.f32.mrb[0].mxu0
  %v5026 = vadd.f32 %v4913, %v5025
  %v5027 = vpop.f32.mrb[0].mxu0
  %v5028 = vadd.f32 %v4915, %v5027
  %v5029 = vpop.f32.mrb[0].mxu0
  %v5030 = vadd.f32 %v4917, %v5029
  %5031 = vdwg.mxu0
  %5032 = vmatprep.subr.bf16.mxu0 %v3587
  %5033 = vmatpush1.bf16.msra.mxu0 %v3586
  %5034 = vmatprep.subr.bf16.mxu0 %v3591
  %5035 = vmatpush1.bf16.msra.mxu0 %v3590
  %5036 = vmatprep.subr.bf16.mxu0 %v3595
  %5037 = vmatpush1.bf16.msra.mxu0 %v3594
  %5038 = vmatprep.subr.bf16.mxu0 %v3599
  %5039 = vmatpush1.bf16.msra.mxu0 %v3598
  %5040 = vmatprep.subr.bf16.mxu0 %v3603
  %5041 = vmatpush1.bf16.msra.mxu0 %v3602
  %5042 = vmatprep.subr.bf16.mxu0 %v3607
  %5043 = vmatpush1.bf16.msra.mxu0 %v3606
  %5044 = vmatprep.subr.bf16.mxu0 %v3611
  %5045 = vmatpush1.bf16.msra.mxu0 %v3610
  %5046 = vmatprep.subr.bf16.mxu0 %v3615
  %5047 = vmatpush1.bf16.msra.mxu0 %v3614
  %5048 = vmatprep.subr.bf16.mxu0 %v3619
  %5049 = vmatpush1.bf16.msra.mxu0 %v3618
  %5050 = vmatprep.subr.bf16.mxu0 %v3623
  %5051 = vmatpush1.bf16.msra.mxu0 %v3622
  %5052 = vmatprep.subr.bf16.mxu0 %v3627
  %5053 = vmatpush1.bf16.msra.mxu0 %v3626
  %5054 = vmatprep.subr.bf16.mxu0 %v3631
  %5055 = vmatpush1.bf16.msra.mxu0 %v3630
  %5056 = vmatprep.subr.bf16.mxu0 %v3635
  %5057 = vmatpush1.bf16.msra.mxu0 %v3634
  %5058 = vmatprep.subr.bf16.mxu0 %v3639
  %5059 = vmatpush1.bf16.msra.mxu0 %v3638
  %5060 = vmatprep.subr.bf16.mxu0 %v3643
  %5061 = vmatpush1.bf16.msra.mxu0 %v3642
  %5062 = vmatprep.subr.bf16.mxu0 %v3647
  %5063 = vmatpush1.bf16.msra.mxu0 %v3646
  %5064 = vmatprep.mubr.bf16.mxu0 %v1199
  %5065 = vmatmul.mubr.bf16.gmra.mrb[0].mxu0 %v1198
  %v5066 = vpop.f32.mrb[0].mxu0
  %v5067 = vadd.f32 %v4954, %v5066
  %v5068 = vpop.f32.mrb[0].mxu0
  %v5069 = vadd.f32 %v4956, %v5068
  %v5070 = vpop.f32.mrb[0].mxu0
  %v5071 = vadd.f32 %v4958, %v5070
  %v5072 = vpop.f32.mrb[0].mxu0
  %v5073 = vadd.f32 %v4960, %v5072
  %5074 = vmatprep.mubr.bf16.mxu0 %v1217
  %5075 = vmatmul.mubr.bf16.gmra.mrb[0].mxu0 %v1216
  %v5076 = vpop.f32.mrb[0].mxu0
  %v5077 = vadd.f32 %v4964, %v5076
  %v5078 = vpop.f32.mrb[0].mxu0
  %v5079 = vadd.f32 %v4966, %v5078
  %v5080 = vpop.f32.mrb[0].mxu0
  %v5081 = vadd.f32 %v4968, %v5080
  %v5082 = vpop.f32.mrb[0].mxu0
  %v5083 = vadd.f32 %v4970, %v5082
  %5084 = vmatprep.mubr.bf16.mxu0 %v1235
  %5085 = vmatmul.mubr.bf16.gmra.mrb[0].mxu0 %v1234
  %v5086 = vpop.f32.mrb[0].mxu0
  %v5087 = vadd.f32 %v4974, %v5086
  %v5088 = vpop.f32.mrb[0].mxu0
  %v5089 = vadd.f32 %v4976, %v5088
  %v5090 = vpop.f32.mrb[0].mxu0
  %v5091 = vadd.f32 %v4978, %v5090
  %v5092 = vpop.f32.mrb[0].mxu0
  %v5093 = vadd.f32 %v4980, %v5092
  %5094 = vmatprep.mubr.bf16.mxu0 %v1253
  %5095 = vmatmul.mubr.bf16.gmra.mrb[0].mxu0 %v1252
  %v5096 = vpop.f32.mrb[0].mxu0
  %v5097 = vadd.f32 %v4984, %v5096
  %v5098 = vpop.f32.mrb[0].mxu0
  %v5099 = vadd.f32 %v4986, %v5098
  %v5100 = vpop.f32.mrb[0].mxu0
  %v5101 = vadd.f32 %v4988, %v5100
  %v5102 = vpop.f32.mrb[0].mxu0
  %v5103 = vadd.f32 %v4990, %v5102
  %5104 = vmatprep.mubr.bf16.mxu0 %v1271
  %5105 = vmatmul.mubr.bf16.gmra.mrb[0].mxu0 %v1270
  %v5106 = vpop.f32.mrb[0].mxu0
  %v5107 = vadd.f32 %v4994, %v5106
  %v5108 = vpop.f32.mrb[0].mxu0
  %v5109 = vadd.f32 %v4996, %v5108
  %v5110 = vpop.f32.mrb[0].mxu0
  %v5111 = vadd.f32 %v4998, %v5110
  %v5112 = vpop.f32.mrb[0].mxu0
  %v5113 = vadd.f32 %v5000, %v5112
  %5114 = vmatprep.mubr.bf16.mxu0 %v1289
  %5115 = vmatmul.mubr.bf16.gmra.mrb[0].mxu0 %v1288
  %v5116 = vpop.f32.mrb[0].mxu0
  %v5117 = vadd.f32 %v5004, %v5116
  %v5118 = vpop.f32.mrb[0].mxu0
  %v5119 = vadd.f32 %v5006, %v5118
  %v5120 = vpop.f32.mrb[0].mxu0
  %v5121 = vadd.f32 %v5008, %v5120
  %v5122 = vpop.f32.mrb[0].mxu0
  %v5123 = vadd.f32 %v5010, %v5122
  %5124 = vmatprep.mubr.bf16.mxu0 %v1307
  %5125 = vmatmul.mubr.bf16.gmra.mrb[0].mxu0 %v1306
  %v5126 = vpop.f32.mrb[0].mxu0
  %v5127 = vadd.f32 %v5014, %v5126
  %v5128 = vpop.f32.mrb[0].mxu0
  %v5129 = vadd.f32 %v5016, %v5128
  %v5130 = vpop.f32.mrb[0].mxu0
  %v5131 = vadd.f32 %v5018, %v5130
  %v5132 = vpop.f32.mrb[0].mxu0
  %v5133 = vadd.f32 %v5020, %v5132
  %5134 = vmatprep.mubr.bf16.mxu0 %v1325
  %5135 = vmatmul.mubr.bf16.gmra.mrb[0].mxu0 %v1324
  %v5136 = vpop.f32.mrb[0].mxu0
  %v5137 = vadd.f32 %v5024, %v5136
  %v5138 = vpop.f32.mrb[0].mxu0
  %v5139 = vadd.f32 %v5026, %v5138
  %v5140 = vpop.f32.mrb[0].mxu0
  %v5141 = vadd.f32 %v5028, %v5140
  %v5142 = vpop.f32.mrb[0].mxu0
  %v5143 = vadd.f32 %v5030, %v5142
  %5144 = vdwg.mxu0
  %5145 = vmatprep.subr.bf16.mxu0 %v3651
  %5146 = vmatpush1.bf16.msra.mxu0 %v3650
  %5147 = vmatprep.subr.bf16.mxu0 %v3655
  %5148 = vmatpush1.bf16.msra.mxu0 %v3654
  %5149 = vmatprep.subr.bf16.mxu0 %v3659
  %5150 = vmatpush1.bf16.msra.mxu0 %v3658
  %5151 = vmatprep.subr.bf16.mxu0 %v3663
  %5152 = vmatpush1.bf16.msra.mxu0 %v3662
  %5153 = vmatprep.subr.bf16.mxu0 %v3667
  %5154 = vmatpush1.bf16.msra.mxu0 %v3666
  %5155 = vmatprep.subr.bf16.mxu0 %v3671
  %5156 = vmatpush1.bf16.msra.mxu0 %v3670
  %5157 = vmatprep.subr.bf16.mxu0 %v3675
  %5158 = vmatpush1.bf16.msra.mxu0 %v3674
  %5159 = vmatprep.subr.bf16.mxu0 %v3679
  %5160 = vmatpush1.bf16.msra.mxu0 %v3678
  %5161 = vmatprep.subr.bf16.mxu0 %v3683
  %5162 = vmatpush1.bf16.msra.mxu0 %v3682
  %5163 = vmatprep.subr.bf16.mxu0 %v3687
  %5164 = vmatpush1.bf16.msra.mxu0 %v3686
  %5165 = vmatprep.subr.bf16.mxu0 %v3691
  %5166 = vmatpush1.bf16.msra.mxu0 %v3690
  %5167 = vmatprep.subr.bf16.mxu0 %v3695
  %5168 = vmatpush1.bf16.msra.mxu0 %v3694
  %5169 = vmatprep.subr.bf16.mxu0 %v3699
  %5170 = vmatpush1.bf16.msra.mxu0 %v3698
  %5171 = vmatprep.subr.bf16.mxu0 %v3703
  %5172 = vmatpush1.bf16.msra.mxu0 %v3702
  %5173 = vmatprep.subr.bf16.mxu0 %v3707
  %5174 = vmatpush1.bf16.msra.mxu0 %v3706
  %5175 = vmatprep.subr.bf16.mxu0 %v3711
  %5176 = vmatpush1.bf16.msra.mxu0 %v3710
  %5177 = vmatprep.mubr.bf16.mxu0 %v1201
  %5178 = vmatmul.mubr.bf16.gmra.mrb[0].mxu0 %v1200
  %v5179 = vpop.f32.mrb[0].mxu0
  %v5180 = vadd.f32 %v5067, %v5179
  %v5181 = vpop.f32.mrb[0].mxu0
  %v5182 = vadd.f32 %v5069, %v5181
  %v5183 = vpop.f32.mrb[0].mxu0
  %v5184 = vadd.f32 %v5071, %v5183
  %v5185 = vpop.f32.mrb[0].mxu0
  %v5186 = vadd.f32 %v5073, %v5185
  %5187 = vmatprep.mubr.bf16.mxu0 %v1219
  %5188 = vmatmul.mubr.bf16.gmra.mrb[0].mxu0 %v1218
  %v5189 = vpop.f32.mrb[0].mxu0
  %v5190 = vadd.f32 %v5077, %v5189
  %v5191 = vpop.f32.mrb[0].mxu0
  %v5192 = vadd.f32 %v5079, %v5191
  %v5193 = vpop.f32.mrb[0].mxu0
  %v5194 = vadd.f32 %v5081, %v5193
  %v5195 = vpop.f32.mrb[0].mxu0
  %v5196 = vadd.f32 %v5083, %v5195
  %5197 = vmatprep.mubr.bf16.mxu0 %v1237
  %5198 = vmatmul.mubr.bf16.gmra.mrb[0].mxu0 %v1236
  %v5199 = vpop.f32.mrb[0].mxu0
  %v5200 = vadd.f32 %v5087, %v5199
  %v5201 = vpop.f32.mrb[0].mxu0
  %v5202 = vadd.f32 %v5089, %v5201
  %v5203 = vpop.f32.mrb[0].mxu0
  %v5204 = vadd.f32 %v5091, %v5203
  %v5205 = vpop.f32.mrb[0].mxu0
  %v5206 = vadd.f32 %v5093, %v5205
  %5207 = vmatprep.mubr.bf16.mxu0 %v1255
  %5208 = vmatmul.mubr.bf16.gmra.mrb[0].mxu0 %v1254
  %v5209 = vpop.f32.mrb[0].mxu0
  %v5210 = vadd.f32 %v5097, %v5209
  %v5211 = vpop.f32.mrb[0].mxu0
  %v5212 = vadd.f32 %v5099, %v5211
  %v5213 = vpop.f32.mrb[0].mxu0
  %v5214 = vadd.f32 %v5101, %v5213
  %v5215 = vpop.f32.mrb[0].mxu0
  %v5216 = vadd.f32 %v5103, %v5215
  %5217 = vmatprep.mubr.bf16.mxu0 %v1273
  %5218 = vmatmul.mubr.bf16.gmra.mrb[0].mxu0 %v1272
  %v5219 = vpop.f32.mrb[0].mxu0
  %v5220 = vadd.f32 %v5107, %v5219
  %v5221 = vpop.f32.mrb[0].mxu0
  %v5222 = vadd.f32 %v5109, %v5221
  %v5223 = vpop.f32.mrb[0].mxu0
  %v5224 = vadd.f32 %v5111, %v5223
  %v5225 = vpop.f32.mrb[0].mxu0
  %v5226 = vadd.f32 %v5113, %v5225
  %5227 = vmatprep.mubr.bf16.mxu0 %v1291
  %5228 = vmatmul.mubr.bf16.gmra.mrb[0].mxu0 %v1290
  %v5229 = vpop.f32.mrb[0].mxu0
  %v5230 = vadd.f32 %v5117, %v5229
  %v5231 = vpop.f32.mrb[0].mxu0
  %v5232 = vadd.f32 %v5119, %v5231
  %v5233 = vpop.f32.mrb[0].mxu0
  %v5234 = vadd.f32 %v5121, %v5233
  %v5235 = vpop.f32.mrb[0].mxu0
  %v5236 = vadd.f32 %v5123, %v5235
  %5237 = vmatprep.mubr.bf16.mxu0 %v1309
  %5238 = vmatmul.mubr.bf16.gmra.mrb[0].mxu0 %v1308
  %v5239 = vpop.f32.mrb[0].mxu0
  %v5240 = vadd.f32 %v5127, %v5239
  %v5241 = vpop.f32.mrb[0].mxu0
  %v5242 = vadd.f32 %v5129, %v5241
  %v5243 = vpop.f32.mrb[0].mxu0
  %v5244 = vadd.f32 %v5131, %v5243
  %v5245 = vpop.f32.mrb[0].mxu0
  %v5246 = vadd.f32 %v5133, %v5245
  %5247 = vmatprep.mubr.bf16.mxu0 %v1327
  %5248 = vmatmul.mubr.bf16.gmra.mrb[0].mxu0 %v1326
  %v5249 = vpop.f32.mrb[0].mxu0
  %v5250 = vadd.f32 %v5137, %v5249
  %v5251 = vpop.f32.mrb[0].mxu0
  %v5252 = vadd.f32 %v5139, %v5251
  %v5253 = vpop.f32.mrb[0].mxu0
  %v5254 = vadd.f32 %v5141, %v5253
  %v5255 = vpop.f32.mrb[0].mxu0
  %v5256 = vadd.f32 %v5143, %v5255
  %5257 = vdwg.mxu0
  %5258 = vmatprep.subr.bf16.mxu0 %v3715
  %5259 = vmatpush1.bf16.msra.mxu0 %v3714
  %5260 = vmatprep.subr.bf16.mxu0 %v3719
  %5261 = vmatpush1.bf16.msra.mxu0 %v3718
  %5262 = vmatprep.subr.bf16.mxu0 %v3723
  %5263 = vmatpush1.bf16.msra.mxu0 %v3722
  %5264 = vmatprep.subr.bf16.mxu0 %v3727
  %5265 = vmatpush1.bf16.msra.mxu0 %v3726
  %5266 = vmatprep.subr.bf16.mxu0 %v3731
  %5267 = vmatpush1.bf16.msra.mxu0 %v3730
  %5268 = vmatprep.subr.bf16.mxu0 %v3735
  %5269 = vmatpush1.bf16.msra.mxu0 %v3734
  %5270 = vmatprep.subr.bf16.mxu0 %v3739
  %5271 = vmatpush1.bf16.msra.mxu0 %v3738
  %5272 = vmatprep.subr.bf16.mxu0 %v3743
  %5273 = vmatpush1.bf16.msra.mxu0 %v3742
  %5274 = vmatprep.subr.bf16.mxu0 %v3747
  %5275 = vmatpush1.bf16.msra.mxu0 %v3746
  %5276 = vmatprep.subr.bf16.mxu0 %v3751
  %5277 = vmatpush1.bf16.msra.mxu0 %v3750
  %5278 = vmatprep.subr.bf16.mxu0 %v3755
  %5279 = vmatpush1.bf16.msra.mxu0 %v3754
  %5280 = vmatprep.subr.bf16.mxu0 %v3759
  %5281 = vmatpush1.bf16.msra.mxu0 %v3758
  %5282 = vmatprep.subr.bf16.mxu0 %v3763
  %5283 = vmatpush1.bf16.msra.mxu0 %v3762
  %5284 = vmatprep.subr.bf16.mxu0 %v3767
  %5285 = vmatpush1.bf16.msra.mxu0 %v3766
  %5286 = vmatprep.subr.bf16.mxu0 %v3771
  %5287 = vmatpush1.bf16.msra.mxu0 %v3770
  %5288 = vmatprep.subr.bf16.mxu0 %v3775
  %5289 = vmatpush1.bf16.msra.mxu0 %v3774
  %5290 = vmatprep.mubr.bf16.mxu0 %v1203
  %5291 = vmatmul.mubr.bf16.gmra.mrb[0].mxu0 %v1202
  %v5292 = vpop.f32.mrb[0].mxu0
  %v5293 = vadd.f32 %v5180, %v5292
  %v5294 = vpop.f32.mrb[0].mxu0
  %v5295 = vadd.f32 %v5182, %v5294
  %v5296 = vpop.f32.mrb[0].mxu0
  %v5297 = vadd.f32 %v5184, %v5296
  %v5298 = vpop.f32.mrb[0].mxu0
  %v5299 = vadd.f32 %v5186, %v5298
  %5300 = vmatprep.mubr.bf16.mxu0 %v1221
  %5301 = vmatmul.mubr.bf16.gmra.mrb[0].mxu0 %v1220
  %v5302 = vpop.f32.mrb[0].mxu0
  %v5303 = vadd.f32 %v5190, %v5302
  %v5304 = vpop.f32.mrb[0].mxu0
  %v5305 = vadd.f32 %v5192, %v5304
  %v5306 = vpop.f32.mrb[0].mxu0
  %v5307 = vadd.f32 %v5194, %v5306
  %v5308 = vpop.f32.mrb[0].mxu0
  %v5309 = vadd.f32 %v5196, %v5308
  %5310 = vmatprep.mubr.bf16.mxu0 %v1239
  %5311 = vmatmul.mubr.bf16.gmra.mrb[0].mxu0 %v1238
  %v5312 = vpop.f32.mrb[0].mxu0
  %v5313 = vadd.f32 %v5200, %v5312
  %v5314 = vpop.f32.mrb[0].mxu0
  %v5315 = vadd.f32 %v5202, %v5314
  %v5316 = vpop.f32.mrb[0].mxu0
  %v5317 = vadd.f32 %v5204, %v5316
  %v5318 = vpop.f32.mrb[0].mxu0
  %v5319 = vadd.f32 %v5206, %v5318
  %5320 = vmatprep.mubr.bf16.mxu0 %v1257
  %5321 = vmatmul.mubr.bf16.gmra.mrb[0].mxu0 %v1256
  %v5322 = vpop.f32.mrb[0].mxu0
  %v5323 = vadd.f32 %v5210, %v5322
  %v5324 = vpop.f32.mrb[0].mxu0
  %v5325 = vadd.f32 %v5212, %v5324
  %v5326 = vpop.f32.mrb[0].mxu0
  %v5327 = vadd.f32 %v5214, %v5326
  %v5328 = vpop.f32.mrb[0].mxu0
  %v5329 = vadd.f32 %v5216, %v5328
  %5330 = vmatprep.mubr.bf16.mxu0 %v1275
  %5331 = vmatmul.mubr.bf16.gmra.mrb[0].mxu0 %v1274
  %v5332 = vpop.f32.mrb[0].mxu0
  %v5333 = vadd.f32 %v5220, %v5332
  %v5334 = vpop.f32.mrb[0].mxu0
  %v5335 = vadd.f32 %v5222, %v5334
  %v5336 = vpop.f32.mrb[0].mxu0
  %v5337 = vadd.f32 %v5224, %v5336
  %v5338 = vpop.f32.mrb[0].mxu0
  %v5339 = vadd.f32 %v5226, %v5338
  %5340 = vmatprep.mubr.bf16.mxu0 %v1293
  %5341 = vmatmul.mubr.bf16.gmra.mrb[0].mxu0 %v1292
  %v5342 = vpop.f32.mrb[0].mxu0
  %v5343 = vadd.f32 %v5230, %v5342
  %v5344 = vpop.f32.mrb[0].mxu0
  %v5345 = vadd.f32 %v5232, %v5344
  %v5346 = vpop.f32.mrb[0].mxu0
  %v5347 = vadd.f32 %v5234, %v5346
  %v5348 = vpop.f32.mrb[0].mxu0
  %v5349 = vadd.f32 %v5236, %v5348
  %5350 = vmatprep.mubr.bf16.mxu0 %v1311
  %5351 = vmatmul.mubr.bf16.gmra.mrb[0].mxu0 %v1310
  %v5352 = vpop.f32.mrb[0].mxu0
  %v5353 = vadd.f32 %v5240, %v5352
  %v5354 = vpop.f32.mrb[0].mxu0
  %v5355 = vadd.f32 %v5242, %v5354
  %v5356 = vpop.f32.mrb[0].mxu0
  %v5357 = vadd.f32 %v5244, %v5356
  %v5358 = vpop.f32.mrb[0].mxu0
  %v5359 = vadd.f32 %v5246, %v5358
  %5360 = vmatprep.mubr.bf16.mxu0 %v1329
  %5361 = vmatmul.mubr.bf16.gmra.mrb[0].mxu0 %v1328
  %v5362 = vpop.f32.mrb[0].mxu0
  %v5363 = vadd.f32 %v5250, %v5362
  %v5364 = vpop.f32.mrb[0].mxu0
  %v5365 = vadd.f32 %v5252, %v5364
  %v5366 = vpop.f32.mrb[0].mxu0
  %v5367 = vadd.f32 %v5254, %v5366
  %v5368 = vpop.f32.mrb[0].mxu0
  %v5369 = vadd.f32 %v5256, %v5368
  %5370 = vdwg.mxu0
  %5371 = vmatprep.subr.bf16.mxu0 %v3205
  %5372 = vmatpush1.bf16.msra.mxu0 %v3204
  %5373 = vmatprep.subr.bf16.mxu0 %v3209
  %5374 = vmatpush1.bf16.msra.mxu0 %v3208
  %5375 = vmatprep.subr.bf16.mxu0 %v3213
  %5376 = vmatpush1.bf16.msra.mxu0 %v3212
  %5377 = vmatprep.subr.bf16.mxu0 %v3217
  %5378 = vmatpush1.bf16.msra.mxu0 %v3216
  %5379 = vmatprep.subr.bf16.mxu0 %v3221
  %5380 = vmatpush1.bf16.msra.mxu0 %v3220
  %5381 = vmatprep.subr.bf16.mxu0 %v3225
  %5382 = vmatpush1.bf16.msra.mxu0 %v3224
  %5383 = vmatprep.subr.bf16.mxu0 %v3229
  %5384 = vmatpush1.bf16.msra.mxu0 %v3228
  %5385 = vmatprep.subr.bf16.mxu0 %v3233
  %5386 = vmatpush1.bf16.msra.mxu0 %v3232
  %5387 = vmatprep.subr.bf16.mxu0 %v3237
  %5388 = vmatpush1.bf16.msra.mxu0 %v3236
  %5389 = vmatprep.subr.bf16.mxu0 %v3241
  %5390 = vmatpush1.bf16.msra.mxu0 %v3240
  %5391 = vmatprep.subr.bf16.mxu0 %v3245
  %5392 = vmatpush1.bf16.msra.mxu0 %v3244
  %5393 = vmatprep.subr.bf16.mxu0 %v3249
  %5394 = vmatpush1.bf16.msra.mxu0 %v3248
  %5395 = vmatprep.subr.bf16.mxu0 %v3253
  %5396 = vmatpush1.bf16.msra.mxu0 %v3252
  %5397 = vmatprep.subr.bf16.mxu0 %v3257
  %5398 = vmatpush1.bf16.msra.mxu0 %v3256
  %5399 = vmatprep.subr.bf16.mxu0 %v3261
  %5400 = vmatpush1.bf16.msra.mxu0 %v3260
  %5401 = vmatprep.subr.bf16.mxu0 %v3265
  %5402 = vmatpush1.bf16.msra.mxu0 %v3264
  %5403 = vmatprep.mubr.bf16.mxu0 %v1187
  %5404 = vmatmul.mubr.bf16.gmra.mrb[0].mxu0 %v1186
  %v5405 = vpop.f32.mrb[0].mxu0
  %v5406 = vadd.f32 %v749, %v5405
  %v5407 = vpop.f32.mrb[0].mxu0
  %v5408 = vadd.f32 %v753, %v5407
  %v5409 = vpop.f32.mrb[0].mxu0
  %v5410 = vadd.f32 %v749, %v5409
  %v5411 = vpop.f32.mrb[0].mxu0
  %v5412 = vadd.f32 %v753, %v5411
  %5413 = vmatprep.mubr.bf16.mxu0 %v1205
  %5414 = vmatmul.mubr.bf16.gmra.mrb[0].mxu0 %v1204
  %v5415 = vpop.f32.mrb[0].mxu0
  %v5416 = vadd.f32 %v749, %v5415
  %v5417 = vpop.f32.mrb[0].mxu0
  %v5418 = vadd.f32 %v753, %v5417
  %v5419 = vpop.f32.mrb[0].mxu0
  %v5420 = vadd.f32 %v749, %v5419
  %v5421 = vpop.f32.mrb[0].mxu0
  %v5422 = vadd.f32 %v753, %v5421
  %5423 = vmatprep.mubr.bf16.mxu0 %v1223
  %5424 = vmatmul.mubr.bf16.gmra.mrb[0].mxu0 %v1222
  %v5425 = vpop.f32.mrb[0].mxu0
  %v5426 = vadd.f32 %v749, %v5425
  %v5427 = vpop.f32.mrb[0].mxu0
  %v5428 = vadd.f32 %v753, %v5427
  %v5429 = vpop.f32.mrb[0].mxu0
  %v5430 = vadd.f32 %v749, %v5429
  %v5431 = vpop.f32.mrb[0].mxu0
  %v5432 = vadd.f32 %v753, %v5431
  %5433 = vmatprep.mubr.bf16.mxu0 %v1241
  %5434 = vmatmul.mubr.bf16.gmra.mrb[0].mxu0 %v1240
  %v5435 = vpop.f32.mrb[0].mxu0
  %v5436 = vadd.f32 %v749, %v5435
  %v5437 = vpop.f32.mrb[0].mxu0
  %v5438 = vadd.f32 %v753, %v5437
  %v5439 = vpop.f32.mrb[0].mxu0
  %v5440 = vadd.f32 %v749, %v5439
  %v5441 = vpop.f32.mrb[0].mxu0
  %v5442 = vadd.f32 %v753, %v5441
  %5443 = vmatprep.mubr.bf16.mxu0 %v1259
  %5444 = vmatmul.mubr.bf16.gmra.mrb[0].mxu0 %v1258
  %v5445 = vpop.f32.mrb[0].mxu0
  %v5446 = vadd.f32 %v749, %v5445
  %v5447 = vpop.f32.mrb[0].mxu0
  %v5448 = vadd.f32 %v753, %v5447
  %v5449 = vpop.f32.mrb[0].mxu0
  %v5450 = vadd.f32 %v749, %v5449
  %v5451 = vpop.f32.mrb[0].mxu0
  %v5452 = vadd.f32 %v753, %v5451
  %5453 = vmatprep.mubr.bf16.mxu0 %v1277
  %5454 = vmatmul.mubr.bf16.gmra.mrb[0].mxu0 %v1276
  %v5455 = vpop.f32.mrb[0].mxu0
  %v5456 = vadd.f32 %v749, %v5455
  %v5457 = vpop.f32.mrb[0].mxu0
  %v5458 = vadd.f32 %v753, %v5457
  %v5459 = vpop.f32.mrb[0].mxu0
  %v5460 = vadd.f32 %v749, %v5459
  %v5461 = vpop.f32.mrb[0].mxu0
  %v5462 = vadd.f32 %v753, %v5461
  %5463 = vmatprep.mubr.bf16.mxu0 %v1295
  %5464 = vmatmul.mubr.bf16.gmra.mrb[0].mxu0 %v1294
  %v5465 = vpop.f32.mrb[0].mxu0
  %v5466 = vadd.f32 %v749, %v5465
  %v5467 = vpop.f32.mrb[0].mxu0
  %v5468 = vadd.f32 %v753, %v5467
  %v5469 = vpop.f32.mrb[0].mxu0
  %v5470 = vadd.f32 %v749, %v5469
  %v5471 = vpop.f32.mrb[0].mxu0
  %v5472 = vadd.f32 %v753, %v5471
  %5473 = vmatprep.mubr.bf16.mxu0 %v1313
  %5474 = vmatmul.mubr.bf16.gmra.mrb[0].mxu0 %v1312
  %v5475 = vpop.f32.mrb[0].mxu0
  %v5476 = vadd.f32 %v749, %v5475
  %v5477 = vpop.f32.mrb[0].mxu0
  %v5478 = vadd.f32 %v753, %v5477
  %v5479 = vpop.f32.mrb[0].mxu0
  %v5480 = vadd.f32 %v749, %v5479
  %v5481 = vpop.f32.mrb[0].mxu0
  %v5482 = vadd.f32 %v753, %v5481
  %5483 = vdwg.mxu0
  %5484 = vmatprep.subr.bf16.mxu0 %v3269
  %5485 = vmatpush1.bf16.msra.mxu0 %v3268
  %5486 = vmatprep.subr.bf16.mxu0 %v3273
  %5487 = vmatpush1.bf16.msra.mxu0 %v3272
  %5488 = vmatprep.subr.bf16.mxu0 %v3277
  %5489 = vmatpush1.bf16.msra.mxu0 %v3276
  %5490 = vmatprep.subr.bf16.mxu0 %v3281
  %5491 = vmatpush1.bf16.msra.mxu0 %v3280
  %5492 = vmatprep.subr.bf16.mxu0 %v3285
  %5493 = vmatpush1.bf16.msra.mxu0 %v3284
  %5494 = vmatprep.subr.bf16.mxu0 %v3289
  %5495 = vmatpush1.bf16.msra.mxu0 %v3288
  %5496 = vmatprep.subr.bf16.mxu0 %v3293
  %5497 = vmatpush1.bf16.msra.mxu0 %v3292
  %5498 = vmatprep.subr.bf16.mxu0 %v3297
  %5499 = vmatpush1.bf16.msra.mxu0 %v3296
  %5500 = vmatprep.subr.bf16.mxu0 %v3301
  %5501 = vmatpush1.bf16.msra.mxu0 %v3300
  %5502 = vmatprep.subr.bf16.mxu0 %v3305
  %5503 = vmatpush1.bf16.msra.mxu0 %v3304
  %5504 = vmatprep.subr.bf16.mxu0 %v3309
  %5505 = vmatpush1.bf16.msra.mxu0 %v3308
  %5506 = vmatprep.subr.bf16.mxu0 %v3313
  %5507 = vmatpush1.bf16.msra.mxu0 %v3312
  %5508 = vmatprep.subr.bf16.mxu0 %v3317
  %5509 = vmatpush1.bf16.msra.mxu0 %v3316
  %5510 = vmatprep.subr.bf16.mxu0 %v3321
  %5511 = vmatpush1.bf16.msra.mxu0 %v3320
  %5512 = vmatprep.subr.bf16.mxu0 %v3325
  %5513 = vmatpush1.bf16.msra.mxu0 %v3324
  %5514 = vmatprep.subr.bf16.mxu0 %v3329
  %5515 = vmatpush1.bf16.msra.mxu0 %v3328
  %5516 = vmatprep.mubr.bf16.mxu0 %v1189
  %5517 = vmatmul.mubr.bf16.gmra.mrb[0].mxu0 %v1188
  %v5518 = vpop.f32.mrb[0].mxu0
  %v5519 = vadd.f32 %v5406, %v5518
  %v5520 = vpop.f32.mrb[0].mxu0
  %v5521 = vadd.f32 %v5408, %v5520
  %v5522 = vpop.f32.mrb[0].mxu0
  %v5523 = vadd.f32 %v5410, %v5522
  %v5524 = vpop.f32.mrb[0].mxu0
  %v5525 = vadd.f32 %v5412, %v5524
  %5526 = vmatprep.mubr.bf16.mxu0 %v1207
  %5527 = vmatmul.mubr.bf16.gmra.mrb[0].mxu0 %v1206
  %v5528 = vpop.f32.mrb[0].mxu0
  %v5529 = vadd.f32 %v5416, %v5528
  %v5530 = vpop.f32.mrb[0].mxu0
  %v5531 = vadd.f32 %v5418, %v5530
  %v5532 = vpop.f32.mrb[0].mxu0
  %v5533 = vadd.f32 %v5420, %v5532
  %v5534 = vpop.f32.mrb[0].mxu0
  %v5535 = vadd.f32 %v5422, %v5534
  %5536 = vmatprep.mubr.bf16.mxu0 %v1225
  %5537 = vmatmul.mubr.bf16.gmra.mrb[0].mxu0 %v1224
  %v5538 = vpop.f32.mrb[0].mxu0
  %v5539 = vadd.f32 %v5426, %v5538
  %v5540 = vpop.f32.mrb[0].mxu0
  %v5541 = vadd.f32 %v5428, %v5540
  %v5542 = vpop.f32.mrb[0].mxu0
  %v5543 = vadd.f32 %v5430, %v5542
  %v5544 = vpop.f32.mrb[0].mxu0
  %v5545 = vadd.f32 %v5432, %v5544
  %5546 = vmatprep.mubr.bf16.mxu0 %v1243
  %5547 = vmatmul.mubr.bf16.gmra.mrb[0].mxu0 %v1242
  %v5548 = vpop.f32.mrb[0].mxu0
  %v5549 = vadd.f32 %v5436, %v5548
  %v5550 = vpop.f32.mrb[0].mxu0
  %v5551 = vadd.f32 %v5438, %v5550
  %v5552 = vpop.f32.mrb[0].mxu0
  %v5553 = vadd.f32 %v5440, %v5552
  %v5554 = vpop.f32.mrb[0].mxu0
  %v5555 = vadd.f32 %v5442, %v5554
  %5556 = vmatprep.mubr.bf16.mxu0 %v1261
  %5557 = vmatmul.mubr.bf16.gmra.mrb[0].mxu0 %v1260
  %v5558 = vpop.f32.mrb[0].mxu0
  %v5559 = vadd.f32 %v5446, %v5558
  %v5560 = vpop.f32.mrb[0].mxu0
  %v5561 = vadd.f32 %v5448, %v5560
  %v5562 = vpop.f32.mrb[0].mxu0
  %v5563 = vadd.f32 %v5450, %v5562
  %v5564 = vpop.f32.mrb[0].mxu0
  %v5565 = vadd.f32 %v5452, %v5564
  %5566 = vmatprep.mubr.bf16.mxu0 %v1279
  %5567 = vmatmul.mubr.bf16.gmra.mrb[0].mxu0 %v1278
  %v5568 = vpop.f32.mrb[0].mxu0
  %v5569 = vadd.f32 %v5456, %v5568
  %v5570 = vpop.f32.mrb[0].mxu0
  %v5571 = vadd.f32 %v5458, %v5570
  %v5572 = vpop.f32.mrb[0].mxu0
  %v5573 = vadd.f32 %v5460, %v5572
  %v5574 = vpop.f32.mrb[0].mxu0
  %v5575 = vadd.f32 %v5462, %v5574
  %5576 = vmatprep.mubr.bf16.mxu0 %v1297
  %5577 = vmatmul.mubr.bf16.gmra.mrb[0].mxu0 %v1296
  %v5578 = vpop.f32.mrb[0].mxu0
  %v5579 = vadd.f32 %v5466, %v5578
  %v5580 = vpop.f32.mrb[0].mxu0
  %v5581 = vadd.f32 %v5468, %v5580
  %v5582 = vpop.f32.mrb[0].mxu0
  %v5583 = vadd.f32 %v5470, %v5582
  %v5584 = vpop.f32.mrb[0].mxu0
  %v5585 = vadd.f32 %v5472, %v5584
  %5586 = vmatprep.mubr.bf16.mxu0 %v1315
  %5587 = vmatmul.mubr.bf16.gmra.mrb[0].mxu0 %v1314
  %v5588 = vpop.f32.mrb[0].mxu0
  %v5589 = vadd.f32 %v5476, %v5588
  %v5590 = vpop.f32.mrb[0].mxu0
  %v5591 = vadd.f32 %v5478, %v5590
  %v5592 = vpop.f32.mrb[0].mxu0
  %v5593 = vadd.f32 %v5480, %v5592
  %v5594 = vpop.f32.mrb[0].mxu0
  %v5595 = vadd.f32 %v5482, %v5594
  %5596 = vdwg.mxu0
  %5597 = vmatprep.subr.bf16.mxu0 %v3333
  %5598 = vmatpush1.bf16.msra.mxu0 %v3332
  %5599 = vmatprep.subr.bf16.mxu0 %v3337
  %5600 = vmatpush1.bf16.msra.mxu0 %v3336
  %5601 = vmatprep.subr.bf16.mxu0 %v3341
  %5602 = vmatpush1.bf16.msra.mxu0 %v3340
  %5603 = vmatprep.subr.bf16.mxu0 %v3345
  %5604 = vmatpush1.bf16.msra.mxu0 %v3344
  %5605 = vmatprep.subr.bf16.mxu0 %v3349
  %5606 = vmatpush1.bf16.msra.mxu0 %v3348
  %5607 = vmatprep.subr.bf16.mxu0 %v3353
  %5608 = vmatpush1.bf16.msra.mxu0 %v3352
  %5609 = vmatprep.subr.bf16.mxu0 %v3357
  %5610 = vmatpush1.bf16.msra.mxu0 %v3356
  %5611 = vmatprep.subr.bf16.mxu0 %v3361
  %5612 = vmatpush1.bf16.msra.mxu0 %v3360
  %5613 = vmatprep.subr.bf16.mxu0 %v3365
  %5614 = vmatpush1.bf16.msra.mxu0 %v3364
  %5615 = vmatprep.subr.bf16.mxu0 %v3369
  %5616 = vmatpush1.bf16.msra.mxu0 %v3368
  %5617 = vmatprep.subr.bf16.mxu0 %v3373
  %5618 = vmatpush1.bf16.msra.mxu0 %v3372
  %5619 = vmatprep.subr.bf16.mxu0 %v3377
  %5620 = vmatpush1.bf16.msra.mxu0 %v3376
  %5621 = vmatprep.subr.bf16.mxu0 %v3381
  %5622 = vmatpush1.bf16.msra.mxu0 %v3380
  %5623 = vmatprep.subr.bf16.mxu0 %v3385
  %5624 = vmatpush1.bf16.msra.mxu0 %v3384
  %5625 = vmatprep.subr.bf16.mxu0 %v3389
  %5626 = vmatpush1.bf16.msra.mxu0 %v3388
  %5627 = vmatprep.subr.bf16.mxu0 %v3393
  %5628 = vmatpush1.bf16.msra.mxu0 %v3392
  %5629 = vmatprep.mubr.bf16.mxu0 %v1191
  %5630 = vmatmul.mubr.bf16.gmra.mrb[0].mxu0 %v1190
  %v5631 = vpop.f32.mrb[0].mxu0
  %v5632 = vadd.f32 %v5519, %v5631
  %v5633 = vpop.f32.mrb[0].mxu0
  %v5634 = vadd.f32 %v5521, %v5633
  %v5635 = vpop.f32.mrb[0].mxu0
  %v5636 = vadd.f32 %v5523, %v5635
  %v5637 = vpop.f32.mrb[0].mxu0
  %v5638 = vadd.f32 %v5525, %v5637
  %5639 = vmatprep.mubr.bf16.mxu0 %v1209
  %5640 = vmatmul.mubr.bf16.gmra.mrb[0].mxu0 %v1208
  %v5641 = vpop.f32.mrb[0].mxu0
  %v5642 = vadd.f32 %v5529, %v5641
  %v5643 = vpop.f32.mrb[0].mxu0
  %v5644 = vadd.f32 %v5531, %v5643
  %v5645 = vpop.f32.mrb[0].mxu0
  %v5646 = vadd.f32 %v5533, %v5645
  %v5647 = vpop.f32.mrb[0].mxu0
  %v5648 = vadd.f32 %v5535, %v5647
  %5649 = vmatprep.mubr.bf16.mxu0 %v1227
  %5650 = vmatmul.mubr.bf16.gmra.mrb[0].mxu0 %v1226
  %v5651 = vpop.f32.mrb[0].mxu0
  %v5652 = vadd.f32 %v5539, %v5651
  %v5653 = vpop.f32.mrb[0].mxu0
  %v5654 = vadd.f32 %v5541, %v5653
  %v5655 = vpop.f32.mrb[0].mxu0
  %v5656 = vadd.f32 %v5543, %v5655
  %v5657 = vpop.f32.mrb[0].mxu0
  %v5658 = vadd.f32 %v5545, %v5657
  %5659 = vmatprep.mubr.bf16.mxu0 %v1245
  %5660 = vmatmul.mubr.bf16.gmra.mrb[0].mxu0 %v1244
  %v5661 = vpop.f32.mrb[0].mxu0
  %v5662 = vadd.f32 %v5549, %v5661
  %v5663 = vpop.f32.mrb[0].mxu0
  %v5664 = vadd.f32 %v5551, %v5663
  %v5665 = vpop.f32.mrb[0].mxu0
  %v5666 = vadd.f32 %v5553, %v5665
  %v5667 = vpop.f32.mrb[0].mxu0
  %v5668 = vadd.f32 %v5555, %v5667
  %5669 = vmatprep.mubr.bf16.mxu0 %v1263
  %5670 = vmatmul.mubr.bf16.gmra.mrb[0].mxu0 %v1262
  %v5671 = vpop.f32.mrb[0].mxu0
  %v5672 = vadd.f32 %v5559, %v5671
  %v5673 = vpop.f32.mrb[0].mxu0
  %v5674 = vadd.f32 %v5561, %v5673
  %v5675 = vpop.f32.mrb[0].mxu0
  %v5676 = vadd.f32 %v5563, %v5675
  %v5677 = vpop.f32.mrb[0].mxu0
  %v5678 = vadd.f32 %v5565, %v5677
  %5679 = vmatprep.mubr.bf16.mxu0 %v1281
  %5680 = vmatmul.mubr.bf16.gmra.mrb[0].mxu0 %v1280
  %v5681 = vpop.f32.mrb[0].mxu0
  %v5682 = vadd.f32 %v5569, %v5681
  %v5683 = vpop.f32.mrb[0].mxu0
  %v5684 = vadd.f32 %v5571, %v5683
  %v5685 = vpop.f32.mrb[0].mxu0
  %v5686 = vadd.f32 %v5573, %v5685
  %v5687 = vpop.f32.mrb[0].mxu0
  %v5688 = vadd.f32 %v5575, %v5687
  %5689 = vmatprep.mubr.bf16.mxu0 %v1299
  %5690 = vmatmul.mubr.bf16.gmra.mrb[0].mxu0 %v1298
  %v5691 = vpop.f32.mrb[0].mxu0
  %v5692 = vadd.f32 %v5579, %v5691
  %v5693 = vpop.f32.mrb[0].mxu0
  %v5694 = vadd.f32 %v5581, %v5693
  %v5695 = vpop.f32.mrb[0].mxu0
  %v5696 = vadd.f32 %v5583, %v5695
  %v5697 = vpop.f32.mrb[0].mxu0
  %v5698 = vadd.f32 %v5585, %v5697
  %5699 = vmatprep.mubr.bf16.mxu0 %v1317
  %5700 = vmatmul.mubr.bf16.gmra.mrb[0].mxu0 %v1316
  %v5701 = vpop.f32.mrb[0].mxu0
  %v5702 = vadd.f32 %v5589, %v5701
  %v5703 = vpop.f32.mrb[0].mxu0
  %v5704 = vadd.f32 %v5591, %v5703
  %v5705 = vpop.f32.mrb[0].mxu0
  %v5706 = vadd.f32 %v5593, %v5705
  %v5707 = vpop.f32.mrb[0].mxu0
  %v5708 = vadd.f32 %v5595, %v5707
  %5709 = vdwg.mxu0
  %5710 = vmatprep.subr.bf16.mxu0 %v3397
  %5711 = vmatpush1.bf16.msra.mxu0 %v3396
  %5712 = vmatprep.subr.bf16.mxu0 %v3401
  %5713 = vmatpush1.bf16.msra.mxu0 %v3400
  %5714 = vmatprep.subr.bf16.mxu0 %v3405
  %5715 = vmatpush1.bf16.msra.mxu0 %v3404
  %5716 = vmatprep.subr.bf16.mxu0 %v3409
  %5717 = vmatpush1.bf16.msra.mxu0 %v3408
  %5718 = vmatprep.subr.bf16.mxu0 %v3413
  %5719 = vmatpush1.bf16.msra.mxu0 %v3412
  %5720 = vmatprep.subr.bf16.mxu0 %v3417
  %5721 = vmatpush1.bf16.msra.mxu0 %v3416
  %5722 = vmatprep.subr.bf16.mxu0 %v3421
  %5723 = vmatpush1.bf16.msra.mxu0 %v3420
  %5724 = vmatprep.subr.bf16.mxu0 %v3425
  %5725 = vmatpush1.bf16.msra.mxu0 %v3424
  %5726 = vmatprep.subr.bf16.mxu0 %v3429
  %5727 = vmatpush1.bf16.msra.mxu0 %v3428
  %5728 = vmatprep.subr.bf16.mxu0 %v3433
  %5729 = vmatpush1.bf16.msra.mxu0 %v3432
  %5730 = vmatprep.subr.bf16.mxu0 %v3437
  %5731 = vmatpush1.bf16.msra.mxu0 %v3436
  %5732 = vmatprep.subr.bf16.mxu0 %v3441
  %5733 = vmatpush1.bf16.msra.mxu0 %v3440
  %5734 = vmatprep.subr.bf16.mxu0 %v3445
  %5735 = vmatpush1.bf16.msra.mxu0 %v3444
  %5736 = vmatprep.subr.bf16.mxu0 %v3449
  %5737 = vmatpush1.bf16.msra.mxu0 %v3448
  %5738 = vmatprep.subr.bf16.mxu0 %v3453
  %5739 = vmatpush1.bf16.msra.mxu0 %v3452
  %5740 = vmatprep.subr.bf16.mxu0 %v3457
  %5741 = vmatpush1.bf16.msra.mxu0 %v3456
  %5742 = vmatprep.mubr.bf16.mxu0 %v1193
  %5743 = vmatmul.mubr.bf16.gmra.mrb[0].mxu0 %v1192
  %v5744 = vpop.f32.mrb[0].mxu0
  %v5745 = vadd.f32 %v5632, %v5744
  %v5746 = vpop.f32.mrb[0].mxu0
  %v5747 = vadd.f32 %v5634, %v5746
  %v5748 = vpop.f32.mrb[0].mxu0
  %v5749 = vadd.f32 %v5636, %v5748
  %v5750 = vpop.f32.mrb[0].mxu0
  %v5751 = vadd.f32 %v5638, %v5750
  %5752 = vmatprep.mubr.bf16.mxu0 %v1211
  %5753 = vmatmul.mubr.bf16.gmra.mrb[0].mxu0 %v1210
  %v5754 = vpop.f32.mrb[0].mxu0
  %v5755 = vadd.f32 %v5642, %v5754
  %v5756 = vpop.f32.mrb[0].mxu0
  %v5757 = vadd.f32 %v5644, %v5756
  %v5758 = vpop.f32.mrb[0].mxu0
  %v5759 = vadd.f32 %v5646, %v5758
  %v5760 = vpop.f32.mrb[0].mxu0
  %v5761 = vadd.f32 %v5648, %v5760
  %5762 = vmatprep.mubr.bf16.mxu0 %v1229
  %5763 = vmatmul.mubr.bf16.gmra.mrb[0].mxu0 %v1228
  %v5764 = vpop.f32.mrb[0].mxu0
  %v5765 = vadd.f32 %v5652, %v5764
  %v5766 = vpop.f32.mrb[0].mxu0
  %v5767 = vadd.f32 %v5654, %v5766
  %v5768 = vpop.f32.mrb[0].mxu0
  %v5769 = vadd.f32 %v5656, %v5768
  %v5770 = vpop.f32.mrb[0].mxu0
  %v5771 = vadd.f32 %v5658, %v5770
  %5772 = vmatprep.mubr.bf16.mxu0 %v1247
  %5773 = vmatmul.mubr.bf16.gmra.mrb[0].mxu0 %v1246
  %v5774 = vpop.f32.mrb[0].mxu0
  %v5775 = vadd.f32 %v5662, %v5774
  %v5776 = vpop.f32.mrb[0].mxu0
  %v5777 = vadd.f32 %v5664, %v5776
  %v5778 = vpop.f32.mrb[0].mxu0
  %v5779 = vadd.f32 %v5666, %v5778
  %v5780 = vpop.f32.mrb[0].mxu0
  %v5781 = vadd.f32 %v5668, %v5780
  %5782 = vmatprep.mubr.bf16.mxu0 %v1265
  %5783 = vmatmul.mubr.bf16.gmra.mrb[0].mxu0 %v1264
  %v5784 = vpop.f32.mrb[0].mxu0
  %v5785 = vadd.f32 %v5672, %v5784
  %v5786 = vpop.f32.mrb[0].mxu0
  %v5787 = vadd.f32 %v5674, %v5786
  %v5788 = vpop.f32.mrb[0].mxu0
  %v5789 = vadd.f32 %v5676, %v5788
  %v5790 = vpop.f32.mrb[0].mxu0
  %v5791 = vadd.f32 %v5678, %v5790
  %5792 = vmatprep.mubr.bf16.mxu0 %v1283
  %5793 = vmatmul.mubr.bf16.gmra.mrb[0].mxu0 %v1282
  %v5794 = vpop.f32.mrb[0].mxu0
  %v5795 = vadd.f32 %v5682, %v5794
  %v5796 = vpop.f32.mrb[0].mxu0
  %v5797 = vadd.f32 %v5684, %v5796
  %v5798 = vpop.f32.mrb[0].mxu0
  %v5799 = vadd.f32 %v5686, %v5798
  %v5800 = vpop.f32.mrb[0].mxu0
  %v5801 = vadd.f32 %v5688, %v5800
  %5802 = vmatprep.mubr.bf16.mxu0 %v1301
  %5803 = vmatmul.mubr.bf16.gmra.mrb[0].mxu0 %v1300
  %v5804 = vpop.f32.mrb[0].mxu0
  %v5805 = vadd.f32 %v5692, %v5804
  %v5806 = vpop.f32.mrb[0].mxu0
  %v5807 = vadd.f32 %v5694, %v5806
  %v5808 = vpop.f32.mrb[0].mxu0
  %v5809 = vadd.f32 %v5696, %v5808
  %v5810 = vpop.f32.mrb[0].mxu0
  %v5811 = vadd.f32 %v5698, %v5810
  %5812 = vmatprep.mubr.bf16.mxu0 %v1319
  %5813 = vmatmul.mubr.bf16.gmra.mrb[0].mxu0 %v1318
  %v5814 = vpop.f32.mrb[0].mxu0
  %v5815 = vadd.f32 %v5702, %v5814
  %v5816 = vpop.f32.mrb[0].mxu0
  %v5817 = vadd.f32 %v5704, %v5816
  %v5818 = vpop.f32.mrb[0].mxu0
  %v5819 = vadd.f32 %v5706, %v5818
  %v5820 = vpop.f32.mrb[0].mxu0
  %v5821 = vadd.f32 %v5708, %v5820
  %5822 = vdwg.mxu0
  %5823 = vmatprep.subr.bf16.mxu0 %v3461
  %5824 = vmatpush1.bf16.msra.mxu0 %v3460
  %5825 = vmatprep.subr.bf16.mxu0 %v3465
  %5826 = vmatpush1.bf16.msra.mxu0 %v3464
  %5827 = vmatprep.subr.bf16.mxu0 %v3469
  %5828 = vmatpush1.bf16.msra.mxu0 %v3468
  %5829 = vmatprep.subr.bf16.mxu0 %v3473
  %5830 = vmatpush1.bf16.msra.mxu0 %v3472
  %5831 = vmatprep.subr.bf16.mxu0 %v3477
  %5832 = vmatpush1.bf16.msra.mxu0 %v3476
  %5833 = vmatprep.subr.bf16.mxu0 %v3481
  %5834 = vmatpush1.bf16.msra.mxu0 %v3480
  %5835 = vmatprep.subr.bf16.mxu0 %v3485
  %5836 = vmatpush1.bf16.msra.mxu0 %v3484
  %5837 = vmatprep.subr.bf16.mxu0 %v3489
  %5838 = vmatpush1.bf16.msra.mxu0 %v3488
  %5839 = vmatprep.subr.bf16.mxu0 %v3493
  %5840 = vmatpush1.bf16.msra.mxu0 %v3492
  %5841 = vmatprep.subr.bf16.mxu0 %v3497
  %5842 = vmatpush1.bf16.msra.mxu0 %v3496
  %5843 = vmatprep.subr.bf16.mxu0 %v3501
  %5844 = vmatpush1.bf16.msra.mxu0 %v3500
  %5845 = vmatprep.subr.bf16.mxu0 %v3505
  %5846 = vmatpush1.bf16.msra.mxu0 %v3504
  %5847 = vmatprep.subr.bf16.mxu0 %v3509
  %5848 = vmatpush1.bf16.msra.mxu0 %v3508
  %5849 = vmatprep.subr.bf16.mxu0 %v3513
  %5850 = vmatpush1.bf16.msra.mxu0 %v3512
  %5851 = vmatprep.subr.bf16.mxu0 %v3517
  %5852 = vmatpush1.bf16.msra.mxu0 %v3516
  %5853 = vmatprep.subr.bf16.mxu0 %v3521
  %5854 = vmatpush1.bf16.msra.mxu0 %v3520
  %5855 = vmatprep.mubr.bf16.mxu0 %v1195
  %5856 = vmatmul.mubr.bf16.gmra.mrb[0].mxu0 %v1194
  %v5857 = vpop.f32.mrb[0].mxu0
  %v5858 = vadd.f32 %v5745, %v5857
  %v5859 = vpop.f32.mrb[0].mxu0
  %v5860 = vadd.f32 %v5747, %v5859
  %v5861 = vpop.f32.mrb[0].mxu0
  %v5862 = vadd.f32 %v5749, %v5861
  %v5863 = vpop.f32.mrb[0].mxu0
  %v5864 = vadd.f32 %v5751, %v5863
  %5865 = vmatprep.mubr.bf16.mxu0 %v1213
  %5866 = vmatmul.mubr.bf16.gmra.mrb[0].mxu0 %v1212
  %v5867 = vpop.f32.mrb[0].mxu0
  %v5868 = vadd.f32 %v5755, %v5867
  %v5869 = vpop.f32.mrb[0].mxu0
  %v5870 = vadd.f32 %v5757, %v5869
  %v5871 = vpop.f32.mrb[0].mxu0
  %v5872 = vadd.f32 %v5759, %v5871
  %v5873 = vpop.f32.mrb[0].mxu0
  %v5874 = vadd.f32 %v5761, %v5873
  %5875 = vmatprep.mubr.bf16.mxu0 %v1231
  %5876 = vmatmul.mubr.bf16.gmra.mrb[0].mxu0 %v1230
  %v5877 = vpop.f32.mrb[0].mxu0
  %v5878 = vadd.f32 %v5765, %v5877
  %v5879 = vpop.f32.mrb[0].mxu0
  %v5880 = vadd.f32 %v5767, %v5879
  %v5881 = vpop.f32.mrb[0].mxu0
  %v5882 = vadd.f32 %v5769, %v5881
  %v5883 = vpop.f32.mrb[0].mxu0
  %v5884 = vadd.f32 %v5771, %v5883
  %5885 = vmatprep.mubr.bf16.mxu0 %v1249
  %5886 = vmatmul.mubr.bf16.gmra.mrb[0].mxu0 %v1248
  %v5887 = vpop.f32.mrb[0].mxu0
  %v5888 = vadd.f32 %v5775, %v5887
  %v5889 = vpop.f32.mrb[0].mxu0
  %v5890 = vadd.f32 %v5777, %v5889
  %v5891 = vpop.f32.mrb[0].mxu0
  %v5892 = vadd.f32 %v5779, %v5891
  %v5893 = vpop.f32.mrb[0].mxu0
  %v5894 = vadd.f32 %v5781, %v5893
  %5895 = vmatprep.mubr.bf16.mxu0 %v1267
  %5896 = vmatmul.mubr.bf16.gmra.mrb[0].mxu0 %v1266
  %v5897 = vpop.f32.mrb[0].mxu0
  %v5898 = vadd.f32 %v5785, %v5897
  %v5899 = vpop.f32.mrb[0].mxu0
  %v5900 = vadd.f32 %v5787, %v5899
  %v5901 = vpop.f32.mrb[0].mxu0
  %v5902 = vadd.f32 %v5789, %v5901
  %v5903 = vpop.f32.mrb[0].mxu0
  %v5904 = vadd.f32 %v5791, %v5903
  %5905 = vmatprep.mubr.bf16.mxu0 %v1285
  %5906 = vmatmul.mubr.bf16.gmra.mrb[0].mxu0 %v1284
  %v5907 = vpop.f32.mrb[0].mxu0
  %v5908 = vadd.f32 %v5795, %v5907
  %v5909 = vpop.f32.mrb[0].mxu0
  %v5910 = vadd.f32 %v5797, %v5909
  %v5911 = vpop.f32.mrb[0].mxu0
  %v5912 = vadd.f32 %v5799, %v5911
  %v5913 = vpop.f32.mrb[0].mxu0
  %v5914 = vadd.f32 %v5801, %v5913
  %5915 = vmatprep.mubr.bf16.mxu0 %v1303
  %5916 = vmatmul.mubr.bf16.gmra.mrb[0].mxu0 %v1302
  %v5917 = vpop.f32.mrb[0].mxu0
  %v5918 = vadd.f32 %v5805, %v5917
  %v5919 = vpop.f32.mrb[0].mxu0
  %v5920 = vadd.f32 %v5807, %v5919
  %v5921 = vpop.f32.mrb[0].mxu0
  %v5922 = vadd.f32 %v5809, %v5921
  %v5923 = vpop.f32.mrb[0].mxu0
  %v5924 = vadd.f32 %v5811, %v5923
  %5925 = vmatprep.mubr.bf16.mxu0 %v1321
  %5926 = vmatmul.mubr.bf16.gmra.mrb[0].mxu0 %v1320
  %v5927 = vpop.f32.mrb[0].mxu0
  %v5928 = vadd.f32 %v5815, %v5927
  %v5929 = vpop.f32.mrb[0].mxu0
  %v5930 = vadd.f32 %v5817, %v5929
  %v5931 = vpop.f32.mrb[0].mxu0
  %v5932 = vadd.f32 %v5819, %v5931
  %v5933 = vpop.f32.mrb[0].mxu0
  %v5934 = vadd.f32 %v5821, %v5933
  %5935 = vdwg.mxu0
  %5936 = vmatprep.subr.bf16.mxu0 %v3525
  %5937 = vmatpush1.bf16.msra.mxu0 %v3524
  %5938 = vmatprep.subr.bf16.mxu0 %v3529
  %5939 = vmatpush1.bf16.msra.mxu0 %v3528
  %5940 = vmatprep.subr.bf16.mxu0 %v3533
  %5941 = vmatpush1.bf16.msra.mxu0 %v3532
  %5942 = vmatprep.subr.bf16.mxu0 %v3537
  %5943 = vmatpush1.bf16.msra.mxu0 %v3536
  %5944 = vmatprep.subr.bf16.mxu0 %v3541
  %5945 = vmatpush1.bf16.msra.mxu0 %v3540
  %5946 = vmatprep.subr.bf16.mxu0 %v3545
  %5947 = vmatpush1.bf16.msra.mxu0 %v3544
  %5948 = vmatprep.subr.bf16.mxu0 %v3549
  %5949 = vmatpush1.bf16.msra.mxu0 %v3548
  %5950 = vmatprep.subr.bf16.mxu0 %v3553
  %5951 = vmatpush1.bf16.msra.mxu0 %v3552
  %5952 = vmatprep.subr.bf16.mxu0 %v3557
  %5953 = vmatpush1.bf16.msra.mxu0 %v3556
  %5954 = vmatprep.subr.bf16.mxu0 %v3561
  %5955 = vmatpush1.bf16.msra.mxu0 %v3560
  %5956 = vmatprep.subr.bf16.mxu0 %v3565
  %5957 = vmatpush1.bf16.msra.mxu0 %v3564
  %5958 = vmatprep.subr.bf16.mxu0 %v3569
  %5959 = vmatpush1.bf16.msra.mxu0 %v3568
  %5960 = vmatprep.subr.bf16.mxu0 %v3573
  %5961 = vmatpush1.bf16.msra.mxu0 %v3572
  %5962 = vmatprep.subr.bf16.mxu0 %v3577
  %5963 = vmatpush1.bf16.msra.mxu0 %v3576
  %5964 = vmatprep.subr.bf16.mxu0 %v3581
  %5965 = vmatpush1.bf16.msra.mxu0 %v3580
  %5966 = vmatprep.subr.bf16.mxu0 %v3585
  %5967 = vmatpush1.bf16.msra.mxu0 %v3584
  %5968 = vmatprep.mubr.bf16.mxu0 %v1197
  %5969 = vmatmul.mubr.bf16.gmra.mrb[0].mxu0 %v1196
  %v5970 = vpop.f32.mrb[0].mxu0
  %v5971 = vadd.f32 %v5858, %v5970
  %v5972 = vpop.f32.mrb[0].mxu0
  %v5973 = vadd.f32 %v5860, %v5972
  %v5974 = vpop.f32.mrb[0].mxu0
  %v5975 = vadd.f32 %v5862, %v5974
  %v5976 = vpop.f32.mrb[0].mxu0
  %v5977 = vadd.f32 %v5864, %v5976
  %5978 = vmatprep.mubr.bf16.mxu0 %v1215
  %5979 = vmatmul.mubr.bf16.gmra.mrb[0].mxu0 %v1214
  %v5980 = vpop.f32.mrb[0].mxu0
  %v5981 = vadd.f32 %v5868, %v5980
  %v5982 = vpop.f32.mrb[0].mxu0
  %v5983 = vadd.f32 %v5870, %v5982
  %v5984 = vpop.f32.mrb[0].mxu0
  %v5985 = vadd.f32 %v5872, %v5984
  %v5986 = vpop.f32.mrb[0].mxu0
  %v5987 = vadd.f32 %v5874, %v5986
  %5988 = vmatprep.mubr.bf16.mxu0 %v1233
  %5989 = vmatmul.mubr.bf16.gmra.mrb[0].mxu0 %v1232
  %v5990 = vpop.f32.mrb[0].mxu0
  %v5991 = vadd.f32 %v5878, %v5990
  %v5992 = vpop.f32.mrb[0].mxu0
  %v5993 = vadd.f32 %v5880, %v5992
  %v5994 = vpop.f32.mrb[0].mxu0
  %v5995 = vadd.f32 %v5882, %v5994
  %v5996 = vpop.f32.mrb[0].mxu0
  %v5997 = vadd.f32 %v5884, %v5996
  %5998 = vmatprep.mubr.bf16.mxu0 %v1251
  %5999 = vmatmul.mubr.bf16.gmra.mrb[0].mxu0 %v1250
  %v6000 = vpop.f32.mrb[0].mxu0
  %v6001 = vadd.f32 %v5888, %v6000
  %v6002 = vpop.f32.mrb[0].mxu0
  %v6003 = vadd.f32 %v5890, %v6002
  %v6004 = vpop.f32.mrb[0].mxu0
  %v6005 = vadd.f32 %v5892, %v6004
  %v6006 = vpop.f32.mrb[0].mxu0
  %v6007 = vadd.f32 %v5894, %v6006
  %6008 = vmatprep.mubr.bf16.mxu0 %v1269
  %6009 = vmatmul.mubr.bf16.gmra.mrb[0].mxu0 %v1268
  %v6010 = vpop.f32.mrb[0].mxu0
  %v6011 = vadd.f32 %v5898, %v6010
  %v6012 = vpop.f32.mrb[0].mxu0
  %v6013 = vadd.f32 %v5900, %v6012
  %v6014 = vpop.f32.mrb[0].mxu0
  %v6015 = vadd.f32 %v5902, %v6014
  %v6016 = vpop.f32.mrb[0].mxu0
  %v6017 = vadd.f32 %v5904, %v6016
  %6018 = vmatprep.mubr.bf16.mxu0 %v1287
  %6019 = vmatmul.mubr.bf16.gmra.mrb[0].mxu0 %v1286
  %v6020 = vpop.f32.mrb[0].mxu0
  %v6021 = vadd.f32 %v5908, %v6020
  %v6022 = vpop.f32.mrb[0].mxu0
  %v6023 = vadd.f32 %v5910, %v6022
  %v6024 = vpop.f32.mrb[0].mxu0
  %v6025 = vadd.f32 %v5912, %v6024
  %v6026 = vpop.f32.mrb[0].mxu0
  %v6027 = vadd.f32 %v5914, %v6026
  %6028 = vmatprep.mubr.bf16.mxu0 %v1305
  %6029 = vmatmul.mubr.bf16.gmra.mrb[0].mxu0 %v1304
  %v6030 = vpop.f32.mrb[0].mxu0
  %v6031 = vadd.f32 %v5918, %v6030
  %v6032 = vpop.f32.mrb[0].mxu0
  %v6033 = vadd.f32 %v5920, %v6032
  %v6034 = vpop.f32.mrb[0].mxu0
  %v6035 = vadd.f32 %v5922, %v6034
  %v6036 = vpop.f32.mrb[0].mxu0
  %v6037 = vadd.f32 %v5924, %v6036
  %6038 = vmatprep.mubr.bf16.mxu0 %v1323
  %6039 = vmatmul.mubr.bf16.gmra.mrb[0].mxu0 %v1322
  %v6040 = vpop.f32.mrb[0].mxu0
  %v6041 = vadd.f32 %v5928, %v6040
  %v6042 = vpop.f32.mrb[0].mxu0
  %v6043 = vadd.f32 %v5930, %v6042
  %v6044 = vpop.f32.mrb[0].mxu0
  %v6045 = vadd.f32 %v5932, %v6044
  %v6046 = vpop.f32.mrb[0].mxu0
  %v6047 = vadd.f32 %v5934, %v6046
  %6048 = vdwg.mxu0
  %6049 = vmatprep.subr.bf16.mxu0 %v3589
  %6050 = vmatpush1.bf16.msra.mxu0 %v3588
  %6051 = vmatprep.subr.bf16.mxu0 %v3593
  %6052 = vmatpush1.bf16.msra.mxu0 %v3592
  %6053 = vmatprep.subr.bf16.mxu0 %v3597
  %6054 = vmatpush1.bf16.msra.mxu0 %v3596
  %6055 = vmatprep.subr.bf16.mxu0 %v3601
  %6056 = vmatpush1.bf16.msra.mxu0 %v3600
  %6057 = vmatprep.subr.bf16.mxu0 %v3605
  %6058 = vmatpush1.bf16.msra.mxu0 %v3604
  %6059 = vmatprep.subr.bf16.mxu0 %v3609
  %6060 = vmatpush1.bf16.msra.mxu0 %v3608
  %6061 = vmatprep.subr.bf16.mxu0 %v3613
  %6062 = vmatpush1.bf16.msra.mxu0 %v3612
  %6063 = vmatprep.subr.bf16.mxu0 %v3617
  %6064 = vmatpush1.bf16.msra.mxu0 %v3616
  %6065 = vmatprep.subr.bf16.mxu0 %v3621
  %6066 = vmatpush1.bf16.msra.mxu0 %v3620
  %6067 = vmatprep.subr.bf16.mxu0 %v3625
  %6068 = vmatpush1.bf16.msra.mxu0 %v3624
  %6069 = vmatprep.subr.bf16.mxu0 %v3629
  %6070 = vmatpush1.bf16.msra.mxu0 %v3628
  %6071 = vmatprep.subr.bf16.mxu0 %v3633
  %6072 = vmatpush1.bf16.msra.mxu0 %v3632
  %6073 = vmatprep.subr.bf16.mxu0 %v3637
  %6074 = vmatpush1.bf16.msra.mxu0 %v3636
  %6075 = vmatprep.subr.bf16.mxu0 %v3641
  %6076 = vmatpush1.bf16.msra.mxu0 %v3640
  %6077 = vmatprep.subr.bf16.mxu0 %v3645
  %6078 = vmatpush1.bf16.msra.mxu0 %v3644
  %6079 = vmatprep.subr.bf16.mxu0 %v3649
  %6080 = vmatpush1.bf16.msra.mxu0 %v3648
  %6081 = vmatprep.mubr.bf16.mxu0 %v1199
  %6082 = vmatmul.mubr.bf16.gmra.mrb[0].mxu0 %v1198
  %v6083 = vpop.f32.mrb[0].mxu0
  %v6084 = vadd.f32 %v5971, %v6083
  %v6085 = vpop.f32.mrb[0].mxu0
  %v6086 = vadd.f32 %v5973, %v6085
  %v6087 = vpop.f32.mrb[0].mxu0
  %v6088 = vadd.f32 %v5975, %v6087
  %v6089 = vpop.f32.mrb[0].mxu0
  %v6090 = vadd.f32 %v5977, %v6089
  %6091 = vmatprep.mubr.bf16.mxu0 %v1217
  %6092 = vmatmul.mubr.bf16.gmra.mrb[0].mxu0 %v1216
  %v6093 = vpop.f32.mrb[0].mxu0
  %v6094 = vadd.f32 %v5981, %v6093
  %v6095 = vpop.f32.mrb[0].mxu0
  %v6096 = vadd.f32 %v5983, %v6095
  %v6097 = vpop.f32.mrb[0].mxu0
  %v6098 = vadd.f32 %v5985, %v6097
  %v6099 = vpop.f32.mrb[0].mxu0
  %v6100 = vadd.f32 %v5987, %v6099
  %6101 = vmatprep.mubr.bf16.mxu0 %v1235
  %6102 = vmatmul.mubr.bf16.gmra.mrb[0].mxu0 %v1234
  %v6103 = vpop.f32.mrb[0].mxu0
  %v6104 = vadd.f32 %v5991, %v6103
  %v6105 = vpop.f32.mrb[0].mxu0
  %v6106 = vadd.f32 %v5993, %v6105
  %v6107 = vpop.f32.mrb[0].mxu0
  %v6108 = vadd.f32 %v5995, %v6107
  %v6109 = vpop.f32.mrb[0].mxu0
  %v6110 = vadd.f32 %v5997, %v6109
  %6111 = vmatprep.mubr.bf16.mxu0 %v1253
  %6112 = vmatmul.mubr.bf16.gmra.mrb[0].mxu0 %v1252
  %v6113 = vpop.f32.mrb[0].mxu0
  %v6114 = vadd.f32 %v6001, %v6113
  %v6115 = vpop.f32.mrb[0].mxu0
  %v6116 = vadd.f32 %v6003, %v6115
  %v6117 = vpop.f32.mrb[0].mxu0
  %v6118 = vadd.f32 %v6005, %v6117
  %v6119 = vpop.f32.mrb[0].mxu0
  %v6120 = vadd.f32 %v6007, %v6119
  %6121 = vmatprep.mubr.bf16.mxu0 %v1271
  %6122 = vmatmul.mubr.bf16.gmra.mrb[0].mxu0 %v1270
  %v6123 = vpop.f32.mrb[0].mxu0
  %v6124 = vadd.f32 %v6011, %v6123
  %v6125 = vpop.f32.mrb[0].mxu0
  %v6126 = vadd.f32 %v6013, %v6125
  %v6127 = vpop.f32.mrb[0].mxu0
  %v6128 = vadd.f32 %v6015, %v6127
  %v6129 = vpop.f32.mrb[0].mxu0
  %v6130 = vadd.f32 %v6017, %v6129
  %6131 = vmatprep.mubr.bf16.mxu0 %v1289
  %6132 = vmatmul.mubr.bf16.gmra.mrb[0].mxu0 %v1288
  %v6133 = vpop.f32.mrb[0].mxu0
  %v6134 = vadd.f32 %v6021, %v6133
  %v6135 = vpop.f32.mrb[0].mxu0
  %v6136 = vadd.f32 %v6023, %v6135
  %v6137 = vpop.f32.mrb[0].mxu0
  %v6138 = vadd.f32 %v6025, %v6137
  %v6139 = vpop.f32.mrb[0].mxu0
  %v6140 = vadd.f32 %v6027, %v6139
  %6141 = vmatprep.mubr.bf16.mxu0 %v1307
  %6142 = vmatmul.mubr.bf16.gmra.mrb[0].mxu0 %v1306
  %v6143 = vpop.f32.mrb[0].mxu0
  %v6144 = vadd.f32 %v6031, %v6143
  %v6145 = vpop.f32.mrb[0].mxu0
  %v6146 = vadd.f32 %v6033, %v6145
  %v6147 = vpop.f32.mrb[0].mxu0
  %v6148 = vadd.f32 %v6035, %v6147
  %v6149 = vpop.f32.mrb[0].mxu0
  %v6150 = vadd.f32 %v6037, %v6149
  %6151 = vmatprep.mubr.bf16.mxu0 %v1325
  %6152 = vmatmul.mubr.bf16.gmra.mrb[0].mxu0 %v1324
  %v6153 = vpop.f32.mrb[0].mxu0
  %v6154 = vadd.f32 %v6041, %v6153
  %v6155 = vpop.f32.mrb[0].mxu0
  %v6156 = vadd.f32 %v6043, %v6155
  %v6157 = vpop.f32.mrb[0].mxu0
  %v6158 = vadd.f32 %v6045, %v6157
  %v6159 = vpop.f32.mrb[0].mxu0
  %v6160 = vadd.f32 %v6047, %v6159
  %6161 = vdwg.mxu0
  %6162 = vmatprep.subr.bf16.mxu0 %v3653
  %6163 = vmatpush1.bf16.msra.mxu0 %v3652
  %6164 = vmatprep.subr.bf16.mxu0 %v3657
  %6165 = vmatpush1.bf16.msra.mxu0 %v3656
  %6166 = vmatprep.subr.bf16.mxu0 %v3661
  %6167 = vmatpush1.bf16.msra.mxu0 %v3660
  %6168 = vmatprep.subr.bf16.mxu0 %v3665
  %6169 = vmatpush1.bf16.msra.mxu0 %v3664
  %6170 = vmatprep.subr.bf16.mxu0 %v3669
  %6171 = vmatpush1.bf16.msra.mxu0 %v3668
  %6172 = vmatprep.subr.bf16.mxu0 %v3673
  %6173 = vmatpush1.bf16.msra.mxu0 %v3672
  %6174 = vmatprep.subr.bf16.mxu0 %v3677
  %6175 = vmatpush1.bf16.msra.mxu0 %v3676
  %6176 = vmatprep.subr.bf16.mxu0 %v3681
  %6177 = vmatpush1.bf16.msra.mxu0 %v3680
  %6178 = vmatprep.subr.bf16.mxu0 %v3685
  %6179 = vmatpush1.bf16.msra.mxu0 %v3684
  %6180 = vmatprep.subr.bf16.mxu0 %v3689
  %6181 = vmatpush1.bf16.msra.mxu0 %v3688
  %6182 = vmatprep.subr.bf16.mxu0 %v3693
  %6183 = vmatpush1.bf16.msra.mxu0 %v3692
  %6184 = vmatprep.subr.bf16.mxu0 %v3697
  %6185 = vmatpush1.bf16.msra.mxu0 %v3696
  %6186 = vmatprep.subr.bf16.mxu0 %v3701
  %6187 = vmatpush1.bf16.msra.mxu0 %v3700
  %6188 = vmatprep.subr.bf16.mxu0 %v3705
  %6189 = vmatpush1.bf16.msra.mxu0 %v3704
  %6190 = vmatprep.subr.bf16.mxu0 %v3709
  %6191 = vmatpush1.bf16.msra.mxu0 %v3708
  %6192 = vmatprep.subr.bf16.mxu0 %v3713
  %6193 = vmatpush1.bf16.msra.mxu0 %v3712
  %6194 = vmatprep.mubr.bf16.mxu0 %v1201
  %6195 = vmatmul.mubr.bf16.gmra.mrb[0].mxu0 %v1200
  %v6196 = vpop.f32.mrb[0].mxu0
  %v6197 = vadd.f32 %v6084, %v6196
  %v6198 = vpop.f32.mrb[0].mxu0
  %v6199 = vadd.f32 %v6086, %v6198
  %v6200 = vpop.f32.mrb[0].mxu0
  %v6201 = vadd.f32 %v6088, %v6200
  %v6202 = vpop.f32.mrb[0].mxu0
  %v6203 = vadd.f32 %v6090, %v6202
  %6204 = vmatprep.mubr.bf16.mxu0 %v1219
  %6205 = vmatmul.mubr.bf16.gmra.mrb[0].mxu0 %v1218
  %v6206 = vpop.f32.mrb[0].mxu0
  %v6207 = vadd.f32 %v6094, %v6206
  %v6208 = vpop.f32.mrb[0].mxu0
  %v6209 = vadd.f32 %v6096, %v6208
  %v6210 = vpop.f32.mrb[0].mxu0
  %v6211 = vadd.f32 %v6098, %v6210
  %v6212 = vpop.f32.mrb[0].mxu0
  %v6213 = vadd.f32 %v6100, %v6212
  %6214 = vmatprep.mubr.bf16.mxu0 %v1237
  %6215 = vmatmul.mubr.bf16.gmra.mrb[0].mxu0 %v1236
  %v6216 = vpop.f32.mrb[0].mxu0
  %v6217 = vadd.f32 %v6104, %v6216
  %v6218 = vpop.f32.mrb[0].mxu0
  %v6219 = vadd.f32 %v6106, %v6218
  %v6220 = vpop.f32.mrb[0].mxu0
  %v6221 = vadd.f32 %v6108, %v6220
  %v6222 = vpop.f32.mrb[0].mxu0
  %v6223 = vadd.f32 %v6110, %v6222
  %6224 = vmatprep.mubr.bf16.mxu0 %v1255
  %6225 = vmatmul.mubr.bf16.gmra.mrb[0].mxu0 %v1254
  %v6226 = vpop.f32.mrb[0].mxu0
  %v6227 = vadd.f32 %v6114, %v6226
  %v6228 = vpop.f32.mrb[0].mxu0
  %v6229 = vadd.f32 %v6116, %v6228
  %v6230 = vpop.f32.mrb[0].mxu0
  %v6231 = vadd.f32 %v6118, %v6230
  %v6232 = vpop.f32.mrb[0].mxu0
  %v6233 = vadd.f32 %v6120, %v6232
  %6234 = vmatprep.mubr.bf16.mxu0 %v1273
  %6235 = vmatmul.mubr.bf16.gmra.mrb[0].mxu0 %v1272
  %v6236 = vpop.f32.mrb[0].mxu0
  %v6237 = vadd.f32 %v6124, %v6236
  %v6238 = vpop.f32.mrb[0].mxu0
  %v6239 = vadd.f32 %v6126, %v6238
  %v6240 = vpop.f32.mrb[0].mxu0
  %v6241 = vadd.f32 %v6128, %v6240
  %v6242 = vpop.f32.mrb[0].mxu0
  %v6243 = vadd.f32 %v6130, %v6242
  %6244 = vmatprep.mubr.bf16.mxu0 %v1291
  %6245 = vmatmul.mubr.bf16.gmra.mrb[0].mxu0 %v1290
  %v6246 = vpop.f32.mrb[0].mxu0
  %v6247 = vadd.f32 %v6134, %v6246
  %v6248 = vpop.f32.mrb[0].mxu0
  %v6249 = vadd.f32 %v6136, %v6248
  %v6250 = vpop.f32.mrb[0].mxu0
  %v6251 = vadd.f32 %v6138, %v6250
  %v6252 = vpop.f32.mrb[0].mxu0
  %v6253 = vadd.f32 %v6140, %v6252
  %6254 = vmatprep.mubr.bf16.mxu0 %v1309
  %6255 = vmatmul.mubr.bf16.gmra.mrb[0].mxu0 %v1308
  %v6256 = vpop.f32.mrb[0].mxu0
  %v6257 = vadd.f32 %v6144, %v6256
  %v6258 = vpop.f32.mrb[0].mxu0
  %v6259 = vadd.f32 %v6146, %v6258
  %v6260 = vpop.f32.mrb[0].mxu0
  %v6261 = vadd.f32 %v6148, %v6260
  %v6262 = vpop.f32.mrb[0].mxu0
  %v6263 = vadd.f32 %v6150, %v6262
  %6264 = vmatprep.mubr.bf16.mxu0 %v1327
  %6265 = vmatmul.mubr.bf16.gmra.mrb[0].mxu0 %v1326
  %v6266 = vpop.f32.mrb[0].mxu0
  %v6267 = vadd.f32 %v6154, %v6266
  %v6268 = vpop.f32.mrb[0].mxu0
  %v6269 = vadd.f32 %v6156, %v6268
  %v6270 = vpop.f32.mrb[0].mxu0
  %v6271 = vadd.f32 %v6158, %v6270
  %v6272 = vpop.f32.mrb[0].mxu0
  %v6273 = vadd.f32 %v6160, %v6272
  %6274 = vdwg.mxu0
  %6275 = vmatprep.subr.bf16.mxu0 %v3717
  %6276 = vmatpush1.bf16.msra.mxu0 %v3716
  %6277 = vmatprep.subr.bf16.mxu0 %v3721
  %6278 = vmatpush1.bf16.msra.mxu0 %v3720
  %6279 = vmatprep.subr.bf16.mxu0 %v3725
  %6280 = vmatpush1.bf16.msra.mxu0 %v3724
  %6281 = vmatprep.subr.bf16.mxu0 %v3729
  %6282 = vmatpush1.bf16.msra.mxu0 %v3728
  %6283 = vmatprep.subr.bf16.mxu0 %v3733
  %6284 = vmatpush1.bf16.msra.mxu0 %v3732
  %6285 = vmatprep.subr.bf16.mxu0 %v3737
  %6286 = vmatpush1.bf16.msra.mxu0 %v3736
  %6287 = vmatprep.subr.bf16.mxu0 %v3741
  %6288 = vmatpush1.bf16.msra.mxu0 %v3740
  %6289 = vmatprep.subr.bf16.mxu0 %v3745
  %6290 = vmatpush1.bf16.msra.mxu0 %v3744
  %6291 = vmatprep.subr.bf16.mxu0 %v3749
  %6292 = vmatpush1.bf16.msra.mxu0 %v3748
  %6293 = vmatprep.subr.bf16.mxu0 %v3753
  %6294 = vmatpush1.bf16.msra.mxu0 %v3752
  %6295 = vmatprep.subr.bf16.mxu0 %v3757
  %6296 = vmatpush1.bf16.msra.mxu0 %v3756
  %6297 = vmatprep.subr.bf16.mxu0 %v3761
  %6298 = vmatpush1.bf16.msra.mxu0 %v3760
  %6299 = vmatprep.subr.bf16.mxu0 %v3765
  %6300 = vmatpush1.bf16.msra.mxu0 %v3764
  %6301 = vmatprep.subr.bf16.mxu0 %v3769
  %6302 = vmatpush1.bf16.msra.mxu0 %v3768
  %6303 = vmatprep.subr.bf16.mxu0 %v3773
  %6304 = vmatpush1.bf16.msra.mxu0 %v3772
  %6305 = vmatprep.subr.bf16.mxu0 %v3777
  %6306 = vmatpush1.bf16.msra.mxu0 %v3776
  %6307 = vmatprep.mubr.bf16.mxu0 %v1203
  %6308 = vmatmul.mubr.bf16.gmra.mrb[0].mxu0 %v1202
  %v6309 = vpop.f32.mrb[0].mxu0
  %v6310 = vadd.f32 %v6197, %v6309
  %v6311 = vpop.f32.mrb[0].mxu0
  %v6312 = vadd.f32 %v6199, %v6311
  %v6313 = vpop.f32.mrb[0].mxu0
  %v6314 = vadd.f32 %v6201, %v6313
  %v6315 = vpop.f32.mrb[0].mxu0
  %v6316 = vadd.f32 %v6203, %v6315
  %6317 = vmatprep.mubr.bf16.mxu0 %v1221
  %6318 = vmatmul.mubr.bf16.gmra.mrb[0].mxu0 %v1220
  %v6319 = vpop.f32.mrb[0].mxu0
  %v6320 = vadd.f32 %v6207, %v6319
  %v6321 = vpop.f32.mrb[0].mxu0
  %v6322 = vadd.f32 %v6209, %v6321
  %v6323 = vpop.f32.mrb[0].mxu0
  %v6324 = vadd.f32 %v6211, %v6323
  %v6325 = vpop.f32.mrb[0].mxu0
  %v6326 = vadd.f32 %v6213, %v6325
  %6327 = vmatprep.mubr.bf16.mxu0 %v1239
  %6328 = vmatmul.mubr.bf16.gmra.mrb[0].mxu0 %v1238
  %v6329 = vpop.f32.mrb[0].mxu0
  %v6330 = vadd.f32 %v6217, %v6329
  %v6331 = vpop.f32.mrb[0].mxu0
  %v6332 = vadd.f32 %v6219, %v6331
  %v6333 = vpop.f32.mrb[0].mxu0
  %v6334 = vadd.f32 %v6221, %v6333
  %v6335 = vpop.f32.mrb[0].mxu0
  %v6336 = vadd.f32 %v6223, %v6335
  %6337 = vmatprep.mubr.bf16.mxu0 %v1257
  %6338 = vmatmul.mubr.bf16.gmra.mrb[0].mxu0 %v1256
  %v6339 = vpop.f32.mrb[0].mxu0
  %v6340 = vadd.f32 %v6227, %v6339
  %v6341 = vpop.f32.mrb[0].mxu0
  %v6342 = vadd.f32 %v6229, %v6341
  %v6343 = vpop.f32.mrb[0].mxu0
  %v6344 = vadd.f32 %v6231, %v6343
  %v6345 = vpop.f32.mrb[0].mxu0
  %v6346 = vadd.f32 %v6233, %v6345
  %6347 = vmatprep.mubr.bf16.mxu0 %v1275
  %6348 = vmatmul.mubr.bf16.gmra.mrb[0].mxu0 %v1274
  %v6349 = vpop.f32.mrb[0].mxu0
  %v6350 = vadd.f32 %v6237, %v6349
  %v6351 = vpop.f32.mrb[0].mxu0
  %v6352 = vadd.f32 %v6239, %v6351
  %v6353 = vpop.f32.mrb[0].mxu0
  %v6354 = vadd.f32 %v6241, %v6353
  %v6355 = vpop.f32.mrb[0].mxu0
  %v6356 = vadd.f32 %v6243, %v6355
  %6357 = vmatprep.mubr.bf16.mxu0 %v1293
  %6358 = vmatmul.mubr.bf16.gmra.mrb[0].mxu0 %v1292
  %v6359 = vpop.f32.mrb[0].mxu0
  %v6360 = vadd.f32 %v6247, %v6359
  %v6361 = vpop.f32.mrb[0].mxu0
  %v6362 = vadd.f32 %v6249, %v6361
  %v6363 = vpop.f32.mrb[0].mxu0
  %v6364 = vadd.f32 %v6251, %v6363
  %v6365 = vpop.f32.mrb[0].mxu0
  %v6366 = vadd.f32 %v6253, %v6365
  %6367 = vmatprep.mubr.bf16.mxu0 %v1311
  %6368 = vmatmul.mubr.bf16.gmra.mrb[0].mxu0 %v1310
  %v6369 = vpop.f32.mrb[0].mxu0
  %v6370 = vadd.f32 %v6257, %v6369
  %v6371 = vpop.f32.mrb[0].mxu0
  %v6372 = vadd.f32 %v6259, %v6371
  %v6373 = vpop.f32.mrb[0].mxu0
  %v6374 = vadd.f32 %v6261, %v6373
  %v6375 = vpop.f32.mrb[0].mxu0
  %v6376 = vadd.f32 %v6263, %v6375
  %6377 = vmatprep.mubr.bf16.mxu0 %v1329
  %6378 = vmatmul.mubr.bf16.gmra.mrb[0].mxu0 %v1328
  %v6379 = vpop.f32.mrb[0].mxu0
  %v6380 = vadd.f32 %v6267, %v6379
  %v6381 = vpop.f32.mrb[0].mxu0
  %v6382 = vadd.f32 %v6269, %v6381
  %v6383 = vpop.f32.mrb[0].mxu0
  %v6384 = vadd.f32 %v6271, %v6383
  %v6385 = vpop.f32.mrb[0].mxu0
  %v6386 = vadd.f32 %v6273, %v6385
  %6387 = vdwg.mxu0
  %v6388 = vmax.f32 %v5293, 0.0
  %v6389 = vmax.f32 %v5295, 0.0
  %v6390 = vmax.f32 %v6310, 0.0
  %v6391 = vmax.f32 %v6312, 0.0
  %v6392 = vmax.f32 %v5297, 0.0
  %v6393 = vmax.f32 %v5299, 0.0
  %v6394 = vmax.f32 %v6314, 0.0
  %v6395 = vmax.f32 %v6316, 0.0
  %v6396 = vmax.f32 %v5303, 0.0
  %v6397 = vmax.f32 %v5305, 0.0
  %v6398 = vmax.f32 %v6320, 0.0
  %v6399 = vmax.f32 %v6322, 0.0
  %v6400 = vmax.f32 %v5307, 0.0
  %v6401 = vmax.f32 %v5309, 0.0
  %v6402 = vmax.f32 %v6324, 0.0
  %v6403 = vmax.f32 %v6326, 0.0
  %v6404 = vmax.f32 %v5313, 0.0
  %v6405 = vmax.f32 %v5315, 0.0
  %v6406 = vmax.f32 %v6330, 0.0
  %v6407 = vmax.f32 %v6332, 0.0
  %v6408 = vmax.f32 %v5317, 0.0
  %v6409 = vmax.f32 %v5319, 0.0
  %v6410 = vmax.f32 %v6334, 0.0
  %v6411 = vmax.f32 %v6336, 0.0
  %v6412 = vmax.f32 %v5323, 0.0
  %v6413 = vmax.f32 %v5325, 0.0
  %v6414 = vmax.f32 %v6340, 0.0
  %v6415 = vmax.f32 %v6342, 0.0
  %v6416 = vmax.f32 %v5327, 0.0
  %v6417 = vmax.f32 %v5329, 0.0
  %v6418 = vmax.f32 %v6344, 0.0
  %v6419 = vmax.f32 %v6346, 0.0
  %v6420 = vmax.f32 %v5333, 0.0
  %v6421 = vmax.f32 %v5335, 0.0
  %v6422 = vmax.f32 %v6350, 0.0
  %v6423 = vmax.f32 %v6352, 0.0
  %v6424 = vmax.f32 %v5337, 0.0
  %v6425 = vmax.f32 %v5339, 0.0
  %v6426 = vmax.f32 %v6354, 0.0
  %v6427 = vmax.f32 %v6356, 0.0
  %v6428 = vmax.f32 %v5343, 0.0
  %v6429 = vmax.f32 %v5345, 0.0
  %v6430 = vmax.f32 %v6360, 0.0
  %v6431 = vmax.f32 %v6362, 0.0
  %v6432 = vmax.f32 %v5347, 0.0
  %v6433 = vmax.f32 %v5349, 0.0
  %v6434 = vmax.f32 %v6364, 0.0
  %v6435 = vmax.f32 %v6366, 0.0
  %v6436 = vmax.f32 %v5353, 0.0
  %v6437 = vmax.f32 %v5355, 0.0
  %v6438 = vmax.f32 %v6370, 0.0
  %v6439 = vmax.f32 %v6372, 0.0
  %v6440 = vmax.f32 %v5357, 0.0
  %v6441 = vmax.f32 %v5359, 0.0
  %v6442 = vmax.f32 %v6374, 0.0
  %v6443 = vmax.f32 %v6376, 0.0
  %v6444 = vmax.f32 %v5363, 0.0
  %v6445 = vmax.f32 %v5365, 0.0
  %v6446 = vmax.f32 %v6380, 0.0
  %v6447 = vmax.f32 %v6382, 0.0
  %v6448 = vmax.f32 %v5367, 0.0
  %v6449 = vmax.f32 %v5369, 0.0
  %v6450 = vmax.f32 %v6384, 0.0
  %v6451 = vmax.f32 %v6386, 0.0
  %v6452 = vlaneseq
  %v6453 = vshrl.u32 %v6452, 7
  %v6454 = vsub.s32 1, %v6453
  %v6455 = vrot.slane %v734, %v6454
  %v6456 = vlaneseq
  %v6457 = vshrl.u32 %v6456, 7
  %v6458 = vsub.s32 1, %v6457
  %v6459 = vrot.slane %v735, %v6458
  %v6460 = vlaneseq
  %v6461 = vshrl.u32 %v6460, 7
  %v6462 = vsub.s32 1, %v6461
  %v6463 = vrot.slane %v736, %v6462
  %v6464 = vlaneseq
  %v6465 = vshrl.u32 %v6464, 7
  %v6466 = vsub.s32 1, %v6465
  %v6467 = vrot.slane %v737, %v6466
  %v6468 = vmul.f32 %v6388, %v6455
  %v6469 = vmul.f32 %v6389, %v6459
  %v6470 = vmul.f32 %v6390, %v6463
  %v6471 = vmul.f32 %v6391, %v6467
  %v6472 = vmul.f32 %v6392, %v6455
  %v6473 = vmul.f32 %v6393, %v6459
  %v6474 = vmul.f32 %v6394, %v6463
  %v6475 = vmul.f32 %v6395, %v6467
  %v6476 = vmul.f32 %v6396, %v6455
  %v6477 = vmul.f32 %v6397, %v6459
  %v6478 = vmul.f32 %v6398, %v6463
  %v6479 = vmul.f32 %v6399, %v6467
  %v6480 = vmul.f32 %v6400, %v6455
  %v6481 = vmul.f32 %v6401, %v6459
  %v6482 = vmul.f32 %v6402, %v6463
  %v6483 = vmul.f32 %v6403, %v6467
  %v6484 = vmul.f32 %v6404, %v6455
  %v6485 = vmul.f32 %v6405, %v6459
  %v6486 = vmul.f32 %v6406, %v6463
  %v6487 = vmul.f32 %v6407, %v6467
  %v6488 = vmul.f32 %v6408, %v6455
  %v6489 = vmul.f32 %v6409, %v6459
  %v6490 = vmul.f32 %v6410, %v6463
  %v6491 = vmul.f32 %v6411, %v6467
  %v6492 = vmul.f32 %v6412, %v6455
  %v6493 = vmul.f32 %v6413, %v6459
  %v6494 = vmul.f32 %v6414, %v6463
  %v6495 = vmul.f32 %v6415, %v6467
  %v6496 = vmul.f32 %v6416, %v6455
  %v6497 = vmul.f32 %v6417, %v6459
  %v6498 = vmul.f32 %v6418, %v6463
  %v6499 = vmul.f32 %v6419, %v6467
  %v6500 = vmul.f32 %v6420, %v6455
  %v6501 = vmul.f32 %v6421, %v6459
  %v6502 = vmul.f32 %v6422, %v6463
  %v6503 = vmul.f32 %v6423, %v6467
  %v6504 = vmul.f32 %v6424, %v6455
  %v6505 = vmul.f32 %v6425, %v6459
  %v6506 = vmul.f32 %v6426, %v6463
  %v6507 = vmul.f32 %v6427, %v6467
  %v6508 = vmul.f32 %v6428, %v6455
  %v6509 = vmul.f32 %v6429, %v6459
  %v6510 = vmul.f32 %v6430, %v6463
  %v6511 = vmul.f32 %v6431, %v6467
  %v6512 = vmul.f32 %v6432, %v6455
  %v6513 = vmul.f32 %v6433, %v6459
  %v6514 = vmul.f32 %v6434, %v6463
  %v6515 = vmul.f32 %v6435, %v6467
  %v6516 = vmul.f32 %v6436, %v6455
  %v6517 = vmul.f32 %v6437, %v6459
  %v6518 = vmul.f32 %v6438, %v6463
  %v6519 = vmul.f32 %v6439, %v6467
  %v6520 = vmul.f32 %v6440, %v6455
  %v6521 = vmul.f32 %v6441, %v6459
  %v6522 = vmul.f32 %v6442, %v6463
  %v6523 = vmul.f32 %v6443, %v6467
  %v6524 = vmul.f32 %v6444, %v6455
  %v6525 = vmul.f32 %v6445, %v6459
  %v6526 = vmul.f32 %v6446, %v6463
  %v6527 = vmul.f32 %v6447, %v6467
  %v6528 = vmul.f32 %v6448, %v6455
  %v6529 = vmul.f32 %v6449, %v6459
  %v6530 = vmul.f32 %v6450, %v6463
  %v6531 = vmul.f32 %v6451, %v6467
  %v6532 = vlaneseq
  %v6533 = vshrl.u32 %v6532, 7
  %v6534 = vsub.s32 2, %v6533
  %v6535 = vrot.slane %v734, %v6534
  %v6536 = vlaneseq
  %v6537 = vshrl.u32 %v6536, 7
  %v6538 = vsub.s32 2, %v6537
  %v6539 = vrot.slane %v735, %v6538
  %v6540 = vlaneseq
  %v6541 = vshrl.u32 %v6540, 7
  %v6542 = vsub.s32 2, %v6541
  %v6543 = vrot.slane %v736, %v6542
  %v6544 = vlaneseq
  %v6545 = vshrl.u32 %v6544, 7
  %v6546 = vsub.s32 2, %v6545
  %v6547 = vrot.slane %v737, %v6546
  %v6548 = vadd.f32 %v6468, %v6535
  %v6549 = vadd.f32 %v6469, %v6539
  %v6550 = vadd.f32 %v6470, %v6543
  %v6551 = vadd.f32 %v6471, %v6547
  %v6552 = vadd.f32 %v6472, %v6535
  %v6553 = vadd.f32 %v6473, %v6539
  %v6554 = vadd.f32 %v6474, %v6543
  %v6555 = vadd.f32 %v6475, %v6547
  %v6556 = vadd.f32 %v6476, %v6535
  %v6557 = vadd.f32 %v6477, %v6539
  %v6558 = vadd.f32 %v6478, %v6543
  %v6559 = vadd.f32 %v6479, %v6547
  %v6560 = vadd.f32 %v6480, %v6535
  %v6561 = vadd.f32 %v6481, %v6539
  %v6562 = vadd.f32 %v6482, %v6543
  %v6563 = vadd.f32 %v6483, %v6547
  %v6564 = vadd.f32 %v6484, %v6535
  %v6565 = vadd.f32 %v6485, %v6539
  %v6566 = vadd.f32 %v6486, %v6543
  %v6567 = vadd.f32 %v6487, %v6547
  %v6568 = vadd.f32 %v6488, %v6535
  %v6569 = vadd.f32 %v6489, %v6539
  %v6570 = vadd.f32 %v6490, %v6543
  %v6571 = vadd.f32 %v6491, %v6547
  %v6572 = vadd.f32 %v6492, %v6535
  %v6573 = vadd.f32 %v6493, %v6539
  %v6574 = vadd.f32 %v6494, %v6543
  %v6575 = vadd.f32 %v6495, %v6547
  %v6576 = vadd.f32 %v6496, %v6535
  %v6577 = vadd.f32 %v6497, %v6539
  %v6578 = vadd.f32 %v6498, %v6543
  %v6579 = vadd.f32 %v6499, %v6547
  %v6580 = vadd.f32 %v6500, %v6535
  %v6581 = vadd.f32 %v6501, %v6539
  %v6582 = vadd.f32 %v6502, %v6543
  %v6583 = vadd.f32 %v6503, %v6547
  %v6584 = vadd.f32 %v6504, %v6535
  %v6585 = vadd.f32 %v6505, %v6539
  %v6586 = vadd.f32 %v6506, %v6543
  %v6587 = vadd.f32 %v6507, %v6547
  %v6588 = vadd.f32 %v6508, %v6535
  %v6589 = vadd.f32 %v6509, %v6539
  %v6590 = vadd.f32 %v6510, %v6543
  %v6591 = vadd.f32 %v6511, %v6547
  %v6592 = vadd.f32 %v6512, %v6535
  %v6593 = vadd.f32 %v6513, %v6539
  %v6594 = vadd.f32 %v6514, %v6543
  %v6595 = vadd.f32 %v6515, %v6547
  %v6596 = vadd.f32 %v6516, %v6535
  %v6597 = vadd.f32 %v6517, %v6539
  %v6598 = vadd.f32 %v6518, %v6543
  %v6599 = vadd.f32 %v6519, %v6547
  %v6600 = vadd.f32 %v6520, %v6535
  %v6601 = vadd.f32 %v6521, %v6539
  %v6602 = vadd.f32 %v6522, %v6543
  %v6603 = vadd.f32 %v6523, %v6547
  %v6604 = vadd.f32 %v6524, %v6535
  %v6605 = vadd.f32 %v6525, %v6539
  %v6606 = vadd.f32 %v6526, %v6543
  %v6607 = vadd.f32 %v6527, %v6547
  %v6608 = vadd.f32 %v6528, %v6535
  %v6609 = vadd.f32 %v6529, %v6539
  %v6610 = vadd.f32 %v6530, %v6543
  %v6611 = vadd.f32 %v6531, %v6547
  %v6612 = vpack.c.bf16 %v6552, %v6548
  %v6613 = vpack.c.bf16 %v6553, %v6549
  %v6614 = vpack.c.bf16 %v6554, %v6550
  %v6615 = vpack.c.bf16 %v6555, %v6551
  %v6616 = vpack.c.bf16 %v6560, %v6556
  %v6617 = vpack.c.bf16 %v6561, %v6557
  %v6618 = vpack.c.bf16 %v6562, %v6558
  %v6619 = vpack.c.bf16 %v6563, %v6559
  %v6620 = vpack.c.bf16 %v6568, %v6564
  %v6621 = vpack.c.bf16 %v6569, %v6565
  %v6622 = vpack.c.bf16 %v6570, %v6566
  %v6623 = vpack.c.bf16 %v6571, %v6567
  %v6624 = vpack.c.bf16 %v6576, %v6572
  %v6625 = vpack.c.bf16 %v6577, %v6573
  %v6626 = vpack.c.bf16 %v6578, %v6574
  %v6627 = vpack.c.bf16 %v6579, %v6575
  %v6628 = vpack.c.bf16 %v6584, %v6580
  %v6629 = vpack.c.bf16 %v6585, %v6581
  %v6630 = vpack.c.bf16 %v6586, %v6582
  %v6631 = vpack.c.bf16 %v6587, %v6583
  %v6632 = vpack.c.bf16 %v6592, %v6588
  %v6633 = vpack.c.bf16 %v6593, %v6589
  %v6634 = vpack.c.bf16 %v6594, %v6590
  %v6635 = vpack.c.bf16 %v6595, %v6591
  %v6636 = vpack.c.bf16 %v6600, %v6596
  %v6637 = vpack.c.bf16 %v6601, %v6597
  %v6638 = vpack.c.bf16 %v6602, %v6598
  %v6639 = vpack.c.bf16 %v6603, %v6599
  %v6640 = vpack.c.bf16 %v6608, %v6604
  %v6641 = vpack.c.bf16 %v6609, %v6605
  %v6642 = vpack.c.bf16 %v6610, %v6606
  %v6643 = vpack.c.bf16 %v6611, %v6607
  %v6676 = vunpack.c.l.b16 %v6612
  %v6677 = vunpack.c.l.b16 %v6613
  %v6678 = vunpack.c.l.b16 %v6614
  %v6679 = vunpack.c.l.b16 %v6615
  %v6680 = vunpack.c.h.b16 %v6612
  %v6681 = vunpack.c.h.b16 %v6613
  %v6682 = vunpack.c.h.b16 %v6614
  %v6683 = vunpack.c.h.b16 %v6615
  %v6684 = vunpack.c.l.b16 %v6616
  %v6685 = vunpack.c.l.b16 %v6617
  %v6686 = vunpack.c.l.b16 %v6618
  %v6687 = vunpack.c.l.b16 %v6619
  %v6688 = vunpack.c.h.b16 %v6616
  %v6689 = vunpack.c.h.b16 %v6617
  %v6690 = vunpack.c.h.b16 %v6618
  %v6691 = vunpack.c.h.b16 %v6619
  %v6692 = vunpack.c.l.b16 %v6620
  %v6693 = vunpack.c.l.b16 %v6621
  %v6694 = vunpack.c.l.b16 %v6622
  %v6695 = vunpack.c.l.b16 %v6623
  %v6696 = vunpack.c.h.b16 %v6620
  %v6697 = vunpack.c.h.b16 %v6621
  %v6698 = vunpack.c.h.b16 %v6622
  %v6699 = vunpack.c.h.b16 %v6623
  %v6700 = vunpack.c.l.b16 %v6624
  %v6701 = vunpack.c.l.b16 %v6625
  %v6702 = vunpack.c.l.b16 %v6626
  %v6703 = vunpack.c.l.b16 %v6627
  %v6704 = vunpack.c.h.b16 %v6624
  %v6705 = vunpack.c.h.b16 %v6625
  %v6706 = vunpack.c.h.b16 %v6626
  %v6707 = vunpack.c.h.b16 %v6627
  %v6708 = vunpack.c.l.b16 %v6628
  %v6709 = vunpack.c.l.b16 %v6629
  %v6710 = vunpack.c.l.b16 %v6630
  %v6711 = vunpack.c.l.b16 %v6631
  %v6712 = vunpack.c.h.b16 %v6628
  %v6713 = vunpack.c.h.b16 %v6629
  %v6714 = vunpack.c.h.b16 %v6630
  %v6715 = vunpack.c.h.b16 %v6631
  %v6716 = vunpack.c.l.b16 %v6632
  %v6717 = vunpack.c.l.b16 %v6633
  %v6718 = vunpack.c.l.b16 %v6634
  %v6719 = vunpack.c.l.b16 %v6635
  %v6720 = vunpack.c.h.b16 %v6632
  %v6721 = vunpack.c.h.b16 %v6633
  %v6722 = vunpack.c.h.b16 %v6634
  %v6723 = vunpack.c.h.b16 %v6635
  %v6724 = vunpack.c.l.b16 %v6636
  %v6725 = vunpack.c.l.b16 %v6637
  %v6726 = vunpack.c.l.b16 %v6638
  %v6727 = vunpack.c.l.b16 %v6639
  %v6728 = vunpack.c.h.b16 %v6636
  %v6729 = vunpack.c.h.b16 %v6637
  %v6730 = vunpack.c.h.b16 %v6638
  %v6731 = vunpack.c.h.b16 %v6639
  %v6732 = vunpack.c.l.b16 %v6640
  %v6733 = vunpack.c.l.b16 %v6641
  %v6734 = vunpack.c.l.b16 %v6642
  %v6735 = vunpack.c.l.b16 %v6643
  %v6736 = vunpack.c.h.b16 %v6640
  %v6737 = vunpack.c.h.b16 %v6641
  %v6738 = vunpack.c.h.b16 %v6642
  %v6739 = vunpack.c.h.b16 %v6643
  %v6740 = vpack.c.b16 %v6677, %v6676
  %v6741 = vpack.c.b16 %v6679, %v6678
  %v6742 = vpack.c.b16 %v6681, %v6680
  %v6743 = vpack.c.b16 %v6683, %v6682
  %v6744 = vpack.c.b16 %v6685, %v6684
  %v6745 = vpack.c.b16 %v6687, %v6686
  %v6746 = vpack.c.b16 %v6689, %v6688
  %v6747 = vpack.c.b16 %v6691, %v6690
  %v6748 = vpack.c.b16 %v6693, %v6692
  %v6749 = vpack.c.b16 %v6695, %v6694
  %v6750 = vpack.c.b16 %v6697, %v6696
  %v6751 = vpack.c.b16 %v6699, %v6698
  %v6752 = vpack.c.b16 %v6701, %v6700
  %v6753 = vpack.c.b16 %v6703, %v6702
  %v6754 = vpack.c.b16 %v6705, %v6704
  %v6755 = vpack.c.b16 %v6707, %v6706
  %v6756 = vpack.c.b16 %v6709, %v6708
  %v6757 = vpack.c.b16 %v6711, %v6710
  %v6758 = vpack.c.b16 %v6713, %v6712
  %v6759 = vpack.c.b16 %v6715, %v6714
  %v6760 = vpack.c.b16 %v6717, %v6716
  %v6761 = vpack.c.b16 %v6719, %v6718
  %v6762 = vpack.c.b16 %v6721, %v6720
  %v6763 = vpack.c.b16 %v6723, %v6722
  %v6764 = vpack.c.b16 %v6725, %v6724
  %v6765 = vpack.c.b16 %v6727, %v6726
  %v6766 = vpack.c.b16 %v6729, %v6728
  %v6767 = vpack.c.b16 %v6731, %v6730
  %v6768 = vpack.c.b16 %v6733, %v6732
  %v6769 = vpack.c.b16 %v6735, %v6734
  %v6770 = vpack.c.b16 %v6737, %v6736
  %v6771 = vpack.c.b16 %v6739, %v6738
  %6804 = vst [vmem:[%s3] sm:$0xff] %v6740
  %6805 = vst [vmem:[%s3 + $0x8] sm:$0xff] %v6741
  %6806 = vst [vmem:[%s3 + $0x10] sm:$0xff] %v6742
  %6807 = vst [vmem:[%s3 + $0x18] sm:$0xff] %v6743
  %6808 = vst [vmem:[%s3 + $0x20] sm:$0xff] %v6744
  %6809 = vst [vmem:[%s3 + $0x28] sm:$0xff] %v6745
  %6810 = vst [vmem:[%s3 + $0x30] sm:$0xff] %v6746
  %6811 = vst [vmem:[%s3 + $0x38] sm:$0xff] %v6747
  %6812 = vst [vmem:[%s3 + $0x40] sm:$0xff] %v6748
  %6813 = vst [vmem:[%s3 + $0x48] sm:$0xff] %v6749
  %6814 = vst [vmem:[%s3 + $0x50] sm:$0xff] %v6750
  %6815 = vst [vmem:[%s3 + $0x58] sm:$0xff] %v6751
  %6816 = vst [vmem:[%s3 + $0x60] sm:$0xff] %v6752
  %6817 = vst [vmem:[%s3 + $0x68] sm:$0xff] %v6753
  %6818 = vst [vmem:[%s3 + $0x70] sm:$0xff] %v6754
  %6819 = vst [vmem:[%s3 + $0x78] sm:$0xff] %v6755
  %6820 = vst [vmem:[%s3 + $0x80] sm:$0xff] %v6756
  %6821 = vst [vmem:[%s3 + $0x88] sm:$0xff] %v6757
  %6822 = vst [vmem:[%s3 + $0x90] sm:$0xff] %v6758
  %6823 = vst [vmem:[%s3 + $0x98] sm:$0xff] %v6759
  %6824 = vst [vmem:[%s3 + $0xa0] sm:$0xff] %v6760
  %6825 = vst [vmem:[%s3 + $0xa8] sm:$0xff] %v6761
  %6826 = vst [vmem:[%s3 + $0xb0] sm:$0xff] %v6762
  %6827 = vst [vmem:[%s3 + $0xb8] sm:$0xff] %v6763
  %6828 = vst [vmem:[%s3 + $0xc0] sm:$0xff] %v6764
  %6829 = vst [vmem:[%s3 + $0xc8] sm:$0xff] %v6765
  %6830 = vst [vmem:[%s3 + $0xd0] sm:$0xff] %v6766
  %6831 = vst [vmem:[%s3 + $0xd8] sm:$0xff] %v6767
  %6832 = vst [vmem:[%s3 + $0xe0] sm:$0xff] %v6768
  %6833 = vst [vmem:[%s3 + $0xe8] sm:$0xff] %v6769
  %6834 = vst [vmem:[%s3 + $0xf0] sm:$0xff] %v6770
  %6835 = vst [vmem:[%s3 + $0xf8] sm:$0xff] %v6771
  // Predicated region
  $region14: #{classification_network_forward.7} parent=0 // pred_check
    _
  $region15: #{classification_network_forward.7} parent=0 // pred_check_branch
    %6837 = sbr.rel (0) target = $region17
  $region16: #{classification_network_forward.7} parent=0 // pred_region
    _
  $region17: #{classification_network_forward.7} parent=0 // pred_fallthru
    _
  // Predicated region
  $region18: #{classification_network_forward.7} parent=0 // pred_check
    _
  $region19: #{classification_network_forward.7} parent=0 // pred_check_branch
    %6839 = sbr.rel (0) target = $region21
  $region20: #{classification_network_forward.7} parent=0 // pred_region
    _
  $region21: #{classification_network_forward.7} parent=0 // pred_fallthru
    _

</llo_original>
